<compile_context>
chip_gen: v7x
topology: tpu7x:2x2x1
jax: 0.10.0
libtpu: 0.0.40
codegen_flags: <defaults>
</compile_context>

<pallas_src>
import functools

import jax
import jax.numpy as jnp
from jax.experimental import pallas as pl
from jax.experimental.pallas import tpu as pltpu

EPS = 1e-5


def _round_up(x, m):
    return ((x + m - 1) // m) * m


def _pick_th(h, w, target_rows=2048):
    """Largest row-tile height th dividing h with th*w <= target_rows."""
    best = 1
    for cand in range(1, h + 1):
        if h % cand == 0 and cand * w <= target_rows:
            best = cand
    return best


def _block_rows_with_halo(x_nhwc, th):
    """Zero-pad spatially by 1 and stack overlapping row blocks.

    (N, H, W, C) -> (N * NB, TH + 2, W + 2, C); only 2 halo rows per block are
    duplicated (vs. the previous 9x im2col blowup).
    """
    n, h, w, c = x_nhwc.shape
    nb = h // th
    xp = jnp.pad(x_nhwc, ((0, 0), (1, 1), (1, 1), (0, 0)))
    blocks = [xp[:, i * th:i * th + th + 2] for i in range(nb)]
    xb = jnp.stack(blocks, axis=1)  # (N, NB, TH+2, W+2, C)
    return xb.reshape(n * nb, th + 2, w + 2, c)


# ----------------------------- Pallas kernels ------------------------------

def _matmul_bias_kernel(a_ref, w_ref, b_ref, o_ref):
    """ConvTranspose2d(k=2,s=2) as matmul + bias. a:(TM,K) bf16, w:(K,NL) bf16."""
    o_ref[...] = (
        jnp.dot(a_ref[...], w_ref[...], preferred_element_type=jnp.float32)
        + b_ref[...]
    )


def _conv_stats_kernel(xb_ref, w_ref, y_ref, stat_ref, *, th, wd, cin):
    """3x3 conv (pad=1) on one row-block tile + per-tile BN partial stats.

    xb_ref:   (1, TH+2, W+2, Cin)  f32 tile with halo
    w_ref:    (9, Cin, CoutP)      bf16 (zero-padded output channels)
    y_ref:    (TH*W, CoutP)        f32 raw conv output (lane-dense)
    stat_ref: (8, CoutP)           row0 = sum(y), row1 = sum(y*y), rest zero
    """
    coutp = y_ref.shape[-1]
    y_ref[...] = jnp.zeros_like(y_ref)
    for ky in range(3):
        for kx in range(3):
            win = xb_ref[0, ky:ky + th, kx:kx + wd, :]          # (TH, W, Cin)
            win = win.reshape(th * wd, cin).astype(jnp.bfloat16)
            y_ref[...] += jnp.dot(win, w_ref[ky * 3 + kx],
                                  preferred_element_type=jnp.float32)
    acc = y_ref[...]
    s = jnp.sum(acc, axis=0, keepdims=True)
    ss = jnp.sum(acc * acc, axis=0, keepdims=True)
    stat_ref[...] = jnp.concatenate(
        [s, ss, jnp.zeros((6, coutp), jnp.float32)], axis=0)


def _bn_relu_kernel(y_ref, scale_ref, shift_ref, o_ref):
    """BN(train) apply with folded affine + ReLU: one FMA + max per element."""
    o_ref[...] = jnp.maximum(y_ref[...] * scale_ref[...] + shift_ref[...], 0.0)


# ------------------------------ layer wrappers ------------------------------

def _upsample_conv_transpose(x_nchw, wt, bt):
    """ConvTranspose2d(in_ch, out_ch, kernel=2, stride=2) + bias, NHWC output."""
    n, cin, hin, win = x_nchw.shape
    cout = wt.shape[1]
    coutp = _round_up(cout, 32)       # 4*coutp is a multiple of 128 (lane dense)
    nl = 4 * coutp
    m = n * hin * win

    x2d = jnp.transpose(x_nchw, (0, 2, 3, 1)).reshape(m, cin)

    # (Cin, Cout, 2, 2) -> (Cin, 2, 2, CoutP) -> (Cin, NL); column = (ky,kx,co)
    wmat = jnp.transpose(wt, (0, 2, 3, 1))
    wmat = jnp.pad(wmat, ((0, 0), (0, 0), (0, 0), (0, coutp - cout)))
    wmat = wmat.reshape(cin, nl).astype(jnp.bfloat16)
    bias = jnp.tile(jnp.pad(bt, (0, coutp - cout)), (4,)).reshape(1, nl)
    bias = bias.astype(jnp.float32)

    if m >= 512:
        tm = 512
        m_pad = _round_up(m, tm)
    else:
        tm = _round_up(m, 8)
        m_pad = tm
    if m_pad != m:
        x2d = jnp.pad(x2d, ((0, m_pad - m), (0, 0)))

    y = pl.pallas_call(
        _matmul_bias_kernel,
        out_shape=jax.ShapeDtypeStruct((m_pad, nl), jnp.float32),
        grid=(m_pad // tm,),
        in_specs=[
            pl.BlockSpec((tm, cin), lambda i: (i, 0)),
            pl.BlockSpec((cin, nl), lambda i: (0, 0)),
            pl.BlockSpec((1, nl), lambda i: (0, 0)),
        ],
        out_specs=pl.BlockSpec((tm, nl), lambda i: (i, 0)),
        compiler_params=pltpu.CompilerParams(
            dimension_semantics=("parallel",)),
        cost_estimate=pl.CostEstimate(
            flops=2 * m_pad * cin * nl,
            transcendentals=0,
            bytes_accessed=m_pad * cin * 2 + cin * nl * 2 + m_pad * nl * 4),
    )(x2d.astype(jnp.bfloat16), wmat, bias)

    # Pixel interleave: (M, (ky,kx,co)) -> (N, 2*Hin, 2*Win, Cout)
    y = y[:m].reshape(n, hin, win, 2, 2, coutp)
    y = jnp.transpose(y, (0, 1, 3, 2, 4, 5)).reshape(n, 2 * hin, 2 * win, coutp)
    return y[..., :cout]


def _conv3x3_bn_relu(x_nhwc, w_oihw, gamma, beta):
    """Conv2d(3x3, pad=1, no bias needed) + BatchNorm2d(train) + ReLU, NHWC."""
    n, h, w, cin = x_nhwc.shape
    cout = w_oihw.shape[0]
    coutp = _round_up(cout, 128)          # lane-dense output stores
    th = _pick_th(h, w)                   # th | h, th*w <= 2048 rows per tile
    nb = h // th
    t = n * nb
    mrows = th * w
    assert mrows % 8 == 0, "row-tile size must be a multiple of 8 sublanes"

    xb = _block_rows_with_halo(x_nhwc, th)            # (T, TH+2, W+2, Cin) f32

    # OIHW -> (ky, kx, Cin, Cout) -> (9, Cin, CoutP), bf16, zero-padded channels
    wk = jnp.transpose(w_oihw, (2, 3, 1, 0)).reshape(9, cin, cout)
    wk = jnp.pad(wk, ((0, 0), (0, 0), (0, coutp - cout))).astype(jnp.bfloat16)

    # ---- pass 1: conv + per-tile partial stats (parallel over row blocks) ----
    kernel = functools.partial(_conv_stats_kernel, th=th, wd=w, cin=cin)
    y, part = pl.pallas_call(
        kernel,
        out_shape=(jax.ShapeDtypeStruct((t * mrows, coutp), jnp.float32),
                   jax.ShapeDtypeStruct((t * 8, coutp), jnp.float32)),
        grid=(t,),
        in_specs=[
            pl.BlockSpec((1, th + 2, w + 2, cin), lambda i: (i, 0, 0, 0)),
            pl.BlockSpec((9, cin, coutp), lambda i: (0, 0, 0)),
        ],
        out_specs=(
            pl.BlockSpec((mrows, coutp), lambda i: (i, 0)),
            pl.BlockSpec((8, coutp), lambda i: (i, 0)),
        ),
        compiler_params=pltpu.CompilerParams(
            dimension_semantics=("parallel",)),
        cost_estimate=pl.CostEstimate(
            flops=2 * t * mrows * 9 * cin * coutp,
            transcendentals=0,
            bytes_accessed=xb.size * 4 + wk.size * 2 + t * mrows * coutp * 4),
    )(xb, wk)

    # ---- finalize BN(train) stats on host (tiny) and fold the affine --------
    cnt = jnp.float32(n * h * w)
    part = part.reshape(t, 8, coutp)
    s = jnp.sum(part[:, 0, :], axis=0)
    ss = jnp.sum(part[:, 1, :], axis=0)
    mean = s / cnt
    var = jnp.maximum(ss / cnt - mean * mean, 0.0)     # biased var (PyTorch BN)
    gamma_p = jnp.pad(gamma, (0, coutp - cout))
    beta_p = jnp.pad(beta, (0, coutp - cout))
    scale = gamma_p * jax.lax.rsqrt(var + EPS)
    shift = beta_p - mean * scale

    # ---- pass 2: y * scale + shift + ReLU (parallel, lane-dense) ------------
    out = pl.pallas_call(
        _bn_relu_kernel,
        out_shape=jax.ShapeDtypeStruct((t * mrows, coutp), jnp.float32),
        grid=(t,),
        in_specs=[
            pl.BlockSpec((mrows, coutp), lambda i: (i, 0)),
            pl.BlockSpec((1, coutp), lambda i: (0, 0)),
            pl.BlockSpec((1, coutp), lambda i: (0, 0)),
        ],
        out_specs=pl.BlockSpec((mrows, coutp), lambda i: (i, 0)),
        compiler_params=pltpu.CompilerParams(
            dimension_semantics=("parallel",)),
    )(y, scale.reshape(1, coutp), shift.reshape(1, coutp))

    return out.reshape(n, h, w, coutp)[..., :cout]


def init_params(key, in_ch, out_ch):
    ks = jax.random.split(key, 10)
    s_up = 1.0 / jnp.sqrt(in_ch * 4.0)
    s1 = 1.0 / jnp.sqrt(2 * out_ch * 9.0)
    s2 = 1.0 / jnp.sqrt(out_ch * 9.0)
    return {
        "wt": jax.random.normal(ks[0], (in_ch, out_ch, 2, 2), jnp.float32) * s_up,
        "bt": 0.1 * jax.random.normal(ks[1], (out_ch,), jnp.float32),
        "w1": jax.random.normal(ks[2], (out_ch, 2 * out_ch, 3, 3), jnp.float32) * s1,
        "b1": 0.1 * jax.random.normal(ks[3], (out_ch,), jnp.float32),
        "g1": 1.0 + 0.1 * jax.random.normal(ks[4], (out_ch,), jnp.float32),
        "be1": 0.1 * jax.random.normal(ks[5], (out_ch,), jnp.float32),
        "w2": jax.random.normal(ks[6], (out_ch, out_ch, 3, 3), jnp.float32) * s2,
        "b2": 0.1 * jax.random.normal(ks[7], (out_ch,), jnp.float32),
        "g2": 1.0 + 0.1 * jax.random.normal(ks[8], (out_ch,), jnp.float32),
        "be2": 0.1 * jax.random.normal(ks[9], (out_ch,), jnp.float32),
    }


@jax.jit
def decoder_block_forward(x_nchw, skip_nchw, params):
    """DecoderBlock forward: up(x), cat([up, skip], C), ConvBlock. NCHW in/out."""
    # 1) ConvTranspose2d(k=2, s=2) as a tiled Pallas matmul (NHWC output).
    x_up = _upsample_conv_transpose(x_nchw, params["wt"], params["bt"])
    # 2) channel concat with the skip connection (up channels first, as torch.cat).
    skip_nhwc = jnp.transpose(skip_nchw, (0, 2, 3, 1))
    z = jnp.concatenate([x_up, skip_nhwc], axis=-1)
    # 3) ConvBlock: two fused conv3x3 + BN(train) + ReLU layers.
    #    Note: params["b1"]/["b2"] (conv biases) are intentionally unused here —
    #    train-mode BatchNorm's mean subtraction cancels them exactly.
    z = _conv3x3_bn_relu(z, params["w1"], params["g1"], params["be1"])
    z = _conv3x3_bn_relu(z, params["w2"], params["g2"], params["be2"])
    return jnp.transpose(z, (0, 3, 1, 2))


# ---------------- pure-JAX f32 reference (for correctness check) ------------
def _ref_conv_bn_relu(x, w, b, gamma, beta):
    y = jax.lax.conv_general_dilated(
        x, w, window_strides=(1, 1), padding=((1, 1), (1, 1)),
        dimension_numbers=("NCHW", "OIHW", "NCHW"))
    y = y + b[None, :, None, None]
    mean = jnp.mean(y, axis=(0, 2, 3), keepdims=True)
    var = jnp.mean(jnp.square(y - mean), axis=(0, 2, 3), keepdims=True)
    y = (y - mean) * jax.lax.rsqrt(var + EPS)
    y = y * gamma[None, :, None, None] + beta[None, :, None, None]
    return jnp.maximum(y, 0.0)


def decoder_block_reference(x, skip, p):
    n, ci, hi, wi = x.shape
    co = p["wt"].shape[1]
    up = jnp.einsum("nihw,iokl->nohkwl", x, p["wt"]).reshape(n, co, 2 * hi, 2 * wi)
    up = up + p["bt"][None, :, None, None]
    z = jnp.concatenate([up, skip], axis=1)
    z = _ref_conv_bn_relu(z, p["w1"], p["b1"], p["g1"], p["be1"])
    z = _ref_conv_bn_relu(z, p["w2"], p["b2"], p["g2"], p["be2"])
    return z


if __name__ == "__main__":
    key = jax.random.PRNGKey(0)
    k_x, k_s, k_p = jax.random.split(key, 3)

    batch, in_ch, out_ch, hw = 2, 8, 4, 16
    # DecoderBlock: x comes from the deeper level (half spatial size), skip from
    # the encoder at full size.
    x = jax.random.normal(k_x, (batch, in_ch, hw // 2, hw // 2), jnp.float32)
    skip = jax.random.normal(k_s, (batch, out_ch, hw, hw), jnp.float32)
    params = init_params(k_p, in_ch, out_ch)

    out = jax.block_until_ready(decoder_block_forward(x, skip, params))
    ref = decoder_block_reference(x, skip, params)

    assert out.shape == (batch, out_ch, hw, hw), out.shape
    # Tolerance accounts for bf16 MXU inputs (f32 accumulation) in the kernel
    # path vs. the all-f32 reference.
    assert jnp.allclose(out, ref, atol=5e-2, rtol=5e-2), \
        float(jnp.max(jnp.abs(out - ref)))

    print("KERNEL_OK")
</pallas_src>

<mosaic_0001>
module attributes {stable_mosaic.version = 11 : i64} {
  func.func @_matmul_bias_kernel(%arg0: i32, %arg1: memref<128x8xbf16, #tpu.memory_space<vmem>>, %arg2: memref<8x128xbf16, #tpu.memory_space<vmem>>, %arg3: memref<1x128xf32, #tpu.memory_space<vmem>>, %arg4: memref<128x128xf32, #tpu.memory_space<vmem>>) attributes {dimension_semantics = [#tpu.dimension_semantics<parallel>], iteration_bounds = array<i64: 1>, scalar_prefetch = 0 : i64, scratch_operands = 0 : i64, tpu.core_type = #tpu.core_type<tc>, window_params = [{transform_indices = @transform_0, window_bounds = array<i64: 128, 8>}, {pipeline_mode = #tpu.pipeline_mode<synchronous>, transform_indices = @transform_1, window_bounds = array<i64: 8, 128>}, {pipeline_mode = #tpu.pipeline_mode<synchronous>, transform_indices = @transform_2, window_bounds = array<i64: 1, 128>}, {transform_indices = @transform_3, window_bounds = array<i64: 128, 128>}]} {
    %c0 = arith.constant 0 : index
    %c0_0 = arith.constant 0 : index
    %0 = vector.load %arg1[%c0, %c0_0] : memref<128x8xbf16, #tpu.memory_space<vmem>>, vector<128x8xbf16>
    %c0_1 = arith.constant 0 : index
    %c0_2 = arith.constant 0 : index
    %1 = vector.load %arg2[%c0_1, %c0_2] : memref<8x128xbf16, #tpu.memory_space<vmem>>, vector<8x128xbf16>
    %cst = arith.constant dense<0.000000e+00> : vector<128x128xf32>
    %2 = tpu.matmul %0, %1, %cst {dimension_numbers = #tpu.dot_dimension_numbers<[1], [0], [0], [1], [0, 0, 1, 1], [], []>} : vector<128x8xbf16>, vector<8x128xbf16>, vector<128x128xf32> -> vector<128x128xf32>
    %c0_3 = arith.constant 0 : index
    %c0_4 = arith.constant 0 : index
    %3 = vector.load %arg3[%c0_3, %c0_4] : memref<1x128xf32, #tpu.memory_space<vmem>>, vector<1x128xf32>
    %4 = vector.broadcast %3 : vector<1x128xf32> to vector<128x128xf32>
    %5 = arith.addf %2, %4 : vector<128x128xf32>
    %c0_5 = arith.constant 0 : index
    %c0_6 = arith.constant 0 : index
    %6 = vector.load %arg4[%c0_5, %c0_6] : memref<128x128xf32, #tpu.memory_space<vmem>>, vector<128x128xf32>
    tpu.vector_store %arg4[%c0_5, %c0_6], %5 {strides = array<i32>} : memref<128x128xf32, #tpu.memory_space<vmem>>, vector<128x128xf32>,
    return
  }
  func.func @transform_0(%arg0: i32) -> (i32, i32) {
    %c0_i32 = arith.constant 0 : i32
    %c0_i32_0 = arith.constant 0 : i32
    return %arg0, %c0_i32 : i32, i32
  }
  func.func @transform_1(%arg0: i32) -> (i32, i32) {
    %c0_i32 = arith.constant 0 : i32
    %c0_i32_0 = arith.constant 0 : i32
    %c0_i32_1 = arith.constant 0 : i32
    return %c0_i32, %c0_i32_0 : i32, i32
  }
  func.func @transform_2(%arg0: i32) -> (i32, i32) {
    %c0_i32 = arith.constant 0 : i32
    %c0_i32_0 = arith.constant 0 : i32
    %c0_i32_1 = arith.constant 0 : i32
    return %c0_i32, %c0_i32_0 : i32, i32
  }
  func.func @transform_3(%arg0: i32) -> (i32, i32) {
    %c0_i32 = arith.constant 0 : i32
    %c0_i32_0 = arith.constant 0 : i32
    return %arg0, %c0_i32 : i32, i32
  }
}

module attributes {stable_mosaic.version = 11 : i64} {
  func.func @_conv_stats_kernel(%arg0: i32, %arg1: memref<1x18x18x8xf32, #tpu.memory_space<vmem>>, %arg2: memref<9x8x128xbf16, #tpu.memory_space<vmem>>, %arg3: memref<256x128xf32, #tpu.memory_space<vmem>>, %arg4: memref<8x128xf32, #tpu.memory_space<vmem>>) attributes {dimension_semantics = [#tpu.dimension_semantics<parallel>], iteration_bounds = array<i64: 2>, scalar_prefetch = 0 : i64, scratch_operands = 0 : i64, tpu.core_type = #tpu.core_type<tc>, window_params = [{transform_indices = @transform_0, window_bounds = array<i64: 1, 18, 18, 8>}, {pipeline_mode = #tpu.pipeline_mode<synchronous>, transform_indices = @transform_1, window_bounds = array<i64: 9, 8, 128>}, {transform_indices = @transform_2, window_bounds = array<i64: 256, 128>}, {transform_indices = @transform_3, window_bounds = array<i64: 8, 128>}]} {
    %cst = arith.constant 0.000000e+00 : f32
    %0 = vector.broadcast %cst : f32 to vector<256x128xf32>
    %c0 = arith.constant 0 : index
    %c0_0 = arith.constant 0 : index
    %1 = vector.load %arg3[%c0, %c0_0] : memref<256x128xf32, #tpu.memory_space<vmem>>, vector<256x128xf32>
    tpu.vector_store %arg3[%c0, %c0_0], %0 {strides = array<i32>} : memref<256x128xf32, #tpu.memory_space<vmem>>, vector<256x128xf32>,
    %c0_1 = arith.constant 0 : index
    %c0_2 = arith.constant 0 : index
    %c0_3 = arith.constant 0 : index
    %c0_4 = arith.constant 0 : index
    %2 = vector.load %arg1[%c0_1, %c0_2, %c0_3, %c0_4] : memref<1x18x18x8xf32, #tpu.memory_space<vmem>>, vector<1x16x16x8xf32>
    %3 = vector.shape_cast %2 : vector<1x16x16x8xf32> to vector<16x16x8xf32>
    %4 = vector.shape_cast %3 : vector<16x16x8xf32> to vector<256x8xf32>
    %5 = arith.truncf %4 : vector<256x8xf32> to vector<256x8xbf16>
    %c0_5 = arith.constant 0 : index
    %c0_6 = arith.constant 0 : index
    %6 = vector.load %arg3[%c0_5, %c0_6] : memref<256x128xf32, #tpu.memory_space<vmem>>, vector<256x128xf32>
    %c0_7 = arith.constant 0 : index
    %c0_8 = arith.constant 0 : index
    %c0_9 = arith.constant 0 : index
    %7 = vector.load %arg2[%c0_7, %c0_8, %c0_9] : memref<9x8x128xbf16, #tpu.memory_space<vmem>>, vector<1x8x128xbf16>
    %8 = vector.shape_cast %7 : vector<1x8x128xbf16> to vector<8x128xbf16>
    %cst_10 = arith.constant dense<0.000000e+00> : vector<256x128xf32>
    %9 = tpu.matmul %5, %8, %cst_10 {dimension_numbers = #tpu.dot_dimension_numbers<[1], [0], [0], [1], [0, 0, 1, 1], [], []>} : vector<256x8xbf16>, vector<8x128xbf16>, vector<256x128xf32> -> vector<256x128xf32>
    %10 = arith.addf %6, %9 : vector<256x128xf32>
    %c0_11 = arith.constant 0 : index
    %c0_12 = arith.constant 0 : index
    %11 = vector.load %arg3[%c0_11, %c0_12] : memref<256x128xf32, #tpu.memory_space<vmem>>, vector<256x128xf32>
    tpu.vector_store %arg3[%c0_11, %c0_12], %10 {strides = array<i32>} : memref<256x128xf32, #tpu.memory_space<vmem>>, vector<256x128xf32>,
    %c0_13 = arith.constant 0 : index
    %c0_14 = arith.constant 0 : index
    %c1 = arith.constant 1 : index
    %c0_15 = arith.constant 0 : index
    %12 = vector.load %arg1[%c0_13, %c0_14, %c1, %c0_15] : memref<1x18x18x8xf32, #tpu.memory_space<vmem>>, vector<1x16x16x8xf32>
    %13 = vector.shape_cast %12 : vector<1x16x16x8xf32> to vector<16x16x8xf32>
    %14 = vector.shape_cast %13 : vector<16x16x8xf32> to vector<256x8xf32>
    %15 = arith.truncf %14 : vector<256x8xf32> to vector<256x8xbf16>
    %c0_16 = arith.constant 0 : index
    %c0_17 = arith.constant 0 : index
    %16 = vector.load %arg3[%c0_16, %c0_17] : memref<256x128xf32, #tpu.memory_space<vmem>>, vector<256x128xf32>
    %c1_18 = arith.constant 1 : index
    %c0_19 = arith.constant 0 : index
    %c0_20 = arith.constant 0 : index
    %17 = vector.load %arg2[%c1_18, %c0_19, %c0_20] : memref<9x8x128xbf16, #tpu.memory_space<vmem>>, vector<1x8x128xbf16>
    %18 = vector.shape_cast %17 : vector<1x8x128xbf16> to vector<8x128xbf16>
    %cst_21 = arith.constant dense<0.000000e+00> : vector<256x128xf32>
    %19 = tpu.matmul %15, %18, %cst_21 {dimension_numbers = #tpu.dot_dimension_numbers<[1], [0], [0], [1], [0, 0, 1, 1], [], []>} : vector<256x8xbf16>, vector<8x128xbf16>, vector<256x128xf32> -> vector<256x128xf32>
    %20 = arith.addf %16, %19 : vector<256x128xf32>
    %c0_22 = arith.constant 0 : index
    %c0_23 = arith.constant 0 : index
    %21 = vector.load %arg3[%c0_22, %c0_23] : memref<256x128xf32, #tpu.memory_space<vmem>>, vector<256x128xf32>
    tpu.vector_store %arg3[%c0_22, %c0_23], %20 {strides = array<i32>} : memref<256x128xf32, #tpu.memory_space<vmem>>, vector<256x128xf32>,
    %c0_24 = arith.constant 0 : index
    %c0_25 = arith.constant 0 : index
    %c2 = arith.constant 2 : index
    %c0_26 = arith.constant 0 : index
    %22 = vector.load %arg1[%c0_24, %c0_25, %c2, %c0_26] : memref<1x18x18x8xf32, #tpu.memory_space<vmem>>, vector<1x16x16x8xf32>
    %23 = vector.shape_cast %22 : vector<1x16x16x8xf32> to vector<16x16x8xf32>
    %24 = vector.shape_cast %23 : vector<16x16x8xf32> to vector<256x8xf32>
    %25 = arith.truncf %24 : vector<256x8xf32> to vector<256x8xbf16>
    %c0_27 = arith.constant 0 : index
    %c0_28 = arith.constant 0 : index
    %26 = vector.load %arg3[%c0_27, %c0_28] : memref<256x128xf32, #tpu.memory_space<vmem>>, vector<256x128xf32>
    %c2_29 = arith.constant 2 : index
    %c0_30 = arith.constant 0 : index
    %c0_31 = arith.constant 0 : index
    %27 = vector.load %arg2[%c2_29, %c0_30, %c0_31] : memref<9x8x128xbf16, #tpu.memory_space<vmem>>, vector<1x8x128xbf16>
    %28 = vector.shape_cast %27 : vector<1x8x128xbf16> to vector<8x128xbf16>
    %cst_32 = arith.constant dense<0.000000e+00> : vector<256x128xf32>
    %29 = tpu.matmul %25, %28, %cst_32 {dimension_numbers = #tpu.dot_dimension_numbers<[1], [0], [0], [1], [0, 0, 1, 1], [], []>} : vector<256x8xbf16>, vector<8x128xbf16>, vector<256x128xf32> -> vector<256x128xf32>
    %30 = arith.addf %26, %29 : vector<256x128xf32>
    %c0_33 = arith.constant 0 : index
    %c0_34 = arith.constant 0 : index
    %31 = vector.load %arg3[%c0_33, %c0_34] : memref<256x128xf32, #tpu.memory_space<vmem>>, vector<256x128xf32>
    tpu.vector_store %arg3[%c0_33, %c0_34], %30 {strides = array<i32>} : memref<256x128xf32, #tpu.memory_space<vmem>>, vector<256x128xf32>,
    %c0_35 = arith.constant 0 : index
    %c1_36 = arith.constant 1 : index
    %c0_37 = arith.constant 0 : index
    %c0_38 = arith.constant 0 : index
    %32 = vector.load %arg1[%c0_35, %c1_36, %c0_37, %c0_38] : memref<1x18x18x8xf32, #tpu.memory_space<vmem>>, vector<1x16x16x8xf32>
    %33 = vector.shape_cast %32 : vector<1x16x16x8xf32> to vector<16x16x8xf32>
    %34 = vector.shape_cast %33 : vector<16x16x8xf32> to vector<256x8xf32>
    %35 = arith.truncf %34 : vector<256x8xf32> to vector<256x8xbf16>
    %c0_39 = arith.constant 0 : index
    %c0_40 = arith.constant 0 : index
    %36 = vector.load %arg3[%c0_39, %c0_40] : memref<256x128xf32, #tpu.memory_space<vmem>>, vector<256x128xf32>
    %c3 = arith.constant 3 : index
    %c0_41 = arith.constant 0 : index
    %c0_42 = arith.constant 0 : index
    %37 = vector.load %arg2[%c3, %c0_41, %c0_42] : memref<9x8x128xbf16, #tpu.memory_space<vmem>>, vector<1x8x128xbf16>
    %38 = vector.shape_cast %37 : vector<1x8x128xbf16> to vector<8x128xbf16>
    %cst_43 = arith.constant dense<0.000000e+00> : vector<256x128xf32>
    %39 = tpu.matmul %35, %38, %cst_43 {dimension_numbers = #tpu.dot_dimension_numbers<[1], [0], [0], [1], [0, 0, 1, 1], [], []>} : vector<256x8xbf16>, vector<8x128xbf16>, vector<256x128xf32> -> vector<256x128xf32>
    %40 = arith.addf %36, %39 : vector<256x128xf32>
    %c0_44 = arith.constant 0 : index
    %c0_45 = arith.constant 0 : index
    %41 = vector.load %arg3[%c0_44, %c0_45] : memref<256x128xf32, #tpu.memory_space<vmem>>, vector<256x128xf32>
    tpu.vector_store %arg3[%c0_44, %c0_45], %40 {strides = array<i32>} : memref<256x128xf32, #tpu.memory_space<vmem>>, vector<256x128xf32>,
    %c0_46 = arith.constant 0 : index
    %c1_47 = arith.constant 1 : index
    %c1_48 = arith.constant 1 : index
    %c0_49 = arith.constant 0 : index
    %42 = vector.load %arg1[%c0_46, %c1_47, %c1_48, %c0_49] : memref<1x18x18x8xf32, #tpu.memory_space<vmem>>, vector<1x16x16x8xf32>
    %43 = vector.shape_cast %42 : vector<1x16x16x8xf32> to vector<16x16x8xf32>
    %44 = vector.shape_cast %43 : vector<16x16x8xf32> to vector<256x8xf32>
    %45 = arith.truncf %44 : vector<256x8xf32> to vector<256x8xbf16>
    %c0_50 = arith.constant 0 : index
    %c0_51 = arith.constant 0 : index
    %46 = vector.load %arg3[%c0_50, %c0_51] : memref<256x128xf32, #tpu.memory_space<vmem>>, vector<256x128xf32>
    %c4 = arith.constant 4 : index
    %c0_52 = arith.constant 0 : index
    %c0_53 = arith.constant 0 : index
    %47 = vector.load %arg2[%c4, %c0_52, %c0_53] : memref<9x8x128xbf16, #tpu.memory_space<vmem>>, vector<1x8x128xbf16>
    %48 = vector.shape_cast %47 : vector<1x8x128xbf16> to vector<8x128xbf16>
    %cst_54 = arith.constant dense<0.000000e+00> : vector<256x128xf32>
    %49 = tpu.matmul %45, %48, %cst_54 {dimension_numbers = #tpu.dot_dimension_numbers<[1], [0], [0], [1], [0, 0, 1, 1], [], []>} : vector<256x8xbf16>, vector<8x128xbf16>, vector<256x128xf32> -> vector<256x128xf32>
    %50 = arith.addf %46, %49 : vector<256x128xf32>
    %c0_55 = arith.constant 0 : index
    %c0_56 = arith.constant 0 : index
    %51 = vector.load %arg3[%c0_55, %c0_56] : memref<256x128xf32, #tpu.memory_space<vmem>>, vector<256x128xf32>
    tpu.vector_store %arg3[%c0_55, %c0_56], %50 {strides = array<i32>} : memref<256x128xf32, #tpu.memory_space<vmem>>, vector<256x128xf32>,
    %c0_57 = arith.constant 0 : index
    %c1_58 = arith.constant 1 : index
    %c2_59 = arith.constant 2 : index
    %c0_60 = arith.constant 0 : index
    %52 = vector.load %arg1[%c0_57, %c1_58, %c2_59, %c0_60] : memref<1x18x18x8xf32, #tpu.memory_space<vmem>>, vector<1x16x16x8xf32>
    %53 = vector.shape_cast %52 : vector<1x16x16x8xf32> to vector<16x16x8xf32>
    %54 = vector.shape_cast %53 : vector<16x16x8xf32> to vector<256x8xf32>
    %55 = arith.truncf %54 : vector<256x8xf32> to vector<256x8xbf16>
    %c0_61 = arith.constant 0 : index
    %c0_62 = arith.constant 0 : index
    %56 = vector.load %arg3[%c0_61, %c0_62] : memref<256x128xf32, #tpu.memory_space<vmem>>, vector<256x128xf32>
    %c5 = arith.constant 5 : index
    %c0_63 = arith.constant 0 : index
    %c0_64 = arith.constant 0 : index
    %57 = vector.load %arg2[%c5, %c0_63, %c0_64] : memref<9x8x128xbf16, #tpu.memory_space<vmem>>, vector<1x8x128xbf16>
    %58 = vector.shape_cast %57 : vector<1x8x128xbf16> to vector<8x128xbf16>
    %cst_65 = arith.constant dense<0.000000e+00> : vector<256x128xf32>
    %59 = tpu.matmul %55, %58, %cst_65 {dimension_numbers = #tpu.dot_dimension_numbers<[1], [0], [0], [1], [0, 0, 1, 1], [], []>} : vector<256x8xbf16>, vector<8x128xbf16>, vector<256x128xf32> -> vector<256x128xf32>
    %60 = arith.addf %56, %59 : vector<256x128xf32>
    %c0_66 = arith.constant 0 : index
    %c0_67 = arith.constant 0 : index
    %61 = vector.load %arg3[%c0_66, %c0_67] : memref<256x128xf32, #tpu.memory_space<vmem>>, vector<256x128xf32>
    tpu.vector_store %arg3[%c0_66, %c0_67], %60 {strides = array<i32>} : memref<256x128xf32, #tpu.memory_space<vmem>>, vector<256x128xf32>,
    %c0_68 = arith.constant 0 : index
    %c2_69 = arith.constant 2 : index
    %c0_70 = arith.constant 0 : index
    %c0_71 = arith.constant 0 : index
    %62 = vector.load %arg1[%c0_68, %c2_69, %c0_70, %c0_71] : memref<1x18x18x8xf32, #tpu.memory_space<vmem>>, vector<1x16x16x8xf32>
    %63 = vector.shape_cast %62 : vector<1x16x16x8xf32> to vector<16x16x8xf32>
    %64 = vector.shape_cast %63 : vector<16x16x8xf32> to vector<256x8xf32>
    %65 = arith.truncf %64 : vector<256x8xf32> to vector<256x8xbf16>
    %c0_72 = arith.constant 0 : index
    %c0_73 = arith.constant 0 : index
    %66 = vector.load %arg3[%c0_72, %c0_73] : memref<256x128xf32, #tpu.memory_space<vmem>>, vector<256x128xf32>
    %c6 = arith.constant 6 : index
    %c0_74 = arith.constant 0 : index
    %c0_75 = arith.constant 0 : index
    %67 = vector.load %arg2[%c6, %c0_74, %c0_75] : memref<9x8x128xbf16, #tpu.memory_space<vmem>>, vector<1x8x128xbf16>
    %68 = vector.shape_cast %67 : vector<1x8x128xbf16> to vector<8x128xbf16>
    %cst_76 = arith.constant dense<0.000000e+00> : vector<256x128xf32>
    %69 = tpu.matmul %65, %68, %cst_76 {dimension_numbers = #tpu.dot_dimension_numbers<[1], [0], [0], [1], [0, 0, 1, 1], [], []>} : vector<256x8xbf16>, vector<8x128xbf16>, vector<256x128xf32> -> vector<256x128xf32>
    %70 = arith.addf %66, %69 : vector<256x128xf32>
    %c0_77 = arith.constant 0 : index
    %c0_78 = arith.constant 0 : index
    %71 = vector.load %arg3[%c0_77, %c0_78] : memref<256x128xf32, #tpu.memory_space<vmem>>, vector<256x128xf32>
    tpu.vector_store %arg3[%c0_77, %c0_78], %70 {strides = array<i32>} : memref<256x128xf32, #tpu.memory_space<vmem>>, vector<256x128xf32>,
    %c0_79 = arith.constant 0 : index
    %c2_80 = arith.constant 2 : index
    %c1_81 = arith.constant 1 : index
    %c0_82 = arith.constant 0 : index
    %72 = vector.load %arg1[%c0_79, %c2_80, %c1_81, %c0_82] : memref<1x18x18x8xf32, #tpu.memory_space<vmem>>, vector<1x16x16x8xf32>
    %73 = vector.shape_cast %72 : vector<1x16x16x8xf32> to vector<16x16x8xf32>
    %74 = vector.shape_cast %73 : vector<16x16x8xf32> to vector<256x8xf32>
    %75 = arith.truncf %74 : vector<256x8xf32> to vector<256x8xbf16>
    %c0_83 = arith.constant 0 : index
    %c0_84 = arith.constant 0 : index
    %76 = vector.load %arg3[%c0_83, %c0_84] : memref<256x128xf32, #tpu.memory_space<vmem>>, vector<256x128xf32>
    %c7 = arith.constant 7 : index
    %c0_85 = arith.constant 0 : index
    %c0_86 = arith.constant 0 : index
    %77 = vector.load %arg2[%c7, %c0_85, %c0_86] : memref<9x8x128xbf16, #tpu.memory_space<vmem>>, vector<1x8x128xbf16>
    %78 = vector.shape_cast %77 : vector<1x8x128xbf16> to vector<8x128xbf16>
    %cst_87 = arith.constant dense<0.000000e+00> : vector<256x128xf32>
    %79 = tpu.matmul %75, %78, %cst_87 {dimension_numbers = #tpu.dot_dimension_numbers<[1], [0], [0], [1], [0, 0, 1, 1], [], []>} : vector<256x8xbf16>, vector<8x128xbf16>, vector<256x128xf32> -> vector<256x128xf32>
    %80 = arith.addf %76, %79 : vector<256x128xf32>
    %c0_88 = arith.constant 0 : index
    %c0_89 = arith.constant 0 : index
    %81 = vector.load %arg3[%c0_88, %c0_89] : memref<256x128xf32, #tpu.memory_space<vmem>>, vector<256x128xf32>
    tpu.vector_store %arg3[%c0_88, %c0_89], %80 {strides = array<i32>} : memref<256x128xf32, #tpu.memory_space<vmem>>, vector<256x128xf32>,
    %c0_90 = arith.constant 0 : index
    %c2_91 = arith.constant 2 : index
    %c2_92 = arith.constant 2 : index
    %c0_93 = arith.constant 0 : index
    %82 = vector.load %arg1[%c0_90, %c2_91, %c2_92, %c0_93] : memref<1x18x18x8xf32, #tpu.memory_space<vmem>>, vector<1x16x16x8xf32>
    %83 = vector.shape_cast %82 : vector<1x16x16x8xf32> to vector<16x16x8xf32>
    %84 = vector.shape_cast %83 : vector<16x16x8xf32> to vector<256x8xf32>
    %85 = arith.truncf %84 : vector<256x8xf32> to vector<256x8xbf16>
    %c0_94 = arith.constant 0 : index
    %c0_95 = arith.constant 0 : index
    %86 = vector.load %arg3[%c0_94, %c0_95] : memref<256x128xf32, #tpu.memory_space<vmem>>, vector<256x128xf32>
    %c8 = arith.constant 8 : index
    %c0_96 = arith.constant 0 : index
    %c0_97 = arith.constant 0 : index
    %87 = vector.load %arg2[%c8, %c0_96, %c0_97] : memref<9x8x128xbf16, #tpu.memory_space<vmem>>, vector<1x8x128xbf16>
    %88 = vector.shape_cast %87 : vector<1x8x128xbf16> to vector<8x128xbf16>
    %cst_98 = arith.constant dense<0.000000e+00> : vector<256x128xf32>
    %89 = tpu.matmul %85, %88, %cst_98 {dimension_numbers = #tpu.dot_dimension_numbers<[1], [0], [0], [1], [0, 0, 1, 1], [], []>} : vector<256x8xbf16>, vector<8x128xbf16>, vector<256x128xf32> -> vector<256x128xf32>
    %90 = arith.addf %86, %89 : vector<256x128xf32>
    %c0_99 = arith.constant 0 : index
    %c0_100 = arith.constant 0 : index
    %91 = vector.load %arg3[%c0_99, %c0_100] : memref<256x128xf32, #tpu.memory_space<vmem>>, vector<256x128xf32>
    tpu.vector_store %arg3[%c0_99, %c0_100], %90 {strides = array<i32>} : memref<256x128xf32, #tpu.memory_space<vmem>>, vector<256x128xf32>,
    %c0_101 = arith.constant 0 : index
    %c0_102 = arith.constant 0 : index
    %92 = vector.load %arg3[%c0_101, %c0_102] : memref<256x128xf32, #tpu.memory_space<vmem>>, vector<256x128xf32>
    %cst_103 = arith.constant dense<0.000000e+00> : vector<128xf32>
    %93 = vector.multi_reduction <add>, %92, %cst_103 [0] : vector<256x128xf32> to vector<128xf32>
    %94 = vector.shape_cast %93 : vector<128xf32> to vector<1x128xf32>
    %95 = arith.mulf %92, %92 : vector<256x128xf32>
    %cst_104 = arith.constant dense<0.000000e+00> : vector<128xf32>
    %96 = vector.multi_reduction <add>, %95, %cst_104 [0] : vector<256x128xf32> to vector<128xf32>
    %97 = vector.shape_cast %96 : vector<128xf32> to vector<1x128xf32>
    %cst_105 = arith.constant 0.000000e+00 : f32
    %98 = vector.broadcast %cst_105 : f32 to vector<6x128xf32>
    %99 = tpu.concatenate %94, %97, %98 in 0 : vector<1x128xf32>, vector<1x128xf32>, vector<6x128xf32> -> vector<8x128xf32>
    %c0_106 = arith.constant 0 : index
    %c0_107 = arith.constant 0 : index
    %100 = vector.load %arg4[%c0_106, %c0_107] : memref<8x128xf32, #tpu.memory_space<vmem>>, vector<8x128xf32>
    tpu.vector_store %arg4[%c0_106, %c0_107], %99 {strides = array<i32>} : memref<8x128xf32, #tpu.memory_space<vmem>>, vector<8x128xf32>,
    return
  }
  func.func @transform_0(%arg0: i32) -> (i32, i32, i32, i32) {
    %c0_i32 = arith.constant 0 : i32
    %c0_i32_0 = arith.constant 0 : i32
    %c0_i32_1 = arith.constant 0 : i32
    %c0_i32_2 = arith.constant 0 : i32
    return %arg0, %c0_i32, %c0_i32_0, %c0_i32_1 : i32, i32, i32, i32
  }
  func.func @transform_1(%arg0: i32) -> (i32, i32, i32) {
    %c0_i32 = arith.constant 0 : i32
    %c0_i32_0 = arith.constant 0 : i32
    %c0_i32_1 = arith.constant 0 : i32
    %c0_i32_2 = arith.constant 0 : i32
    return %c0_i32, %c0_i32_0, %c0_i32_1 : i32, i32, i32
  }
  func.func @transform_2(%arg0: i32) -> (i32, i32) {
    %c0_i32 = arith.constant 0 : i32
    %c0_i32_0 = arith.constant 0 : i32
    return %arg0, %c0_i32 : i32, i32
  }
  func.func @transform_3(%arg0: i32) -> (i32, i32) {
    %c0_i32 = arith.constant 0 : i32
    %c0_i32_0 = arith.constant 0 : i32
    return %arg0, %c0_i32 : i32, i32
  }
}

module attributes {stable_mosaic.version = 11 : i64} {
  func.func @_bn_relu_kernel(%arg0: i32, %arg1: memref<256x128xf32, #tpu.memory_space<vmem>>, %arg2: memref<1x128xf32, #tpu.memory_space<vmem>>, %arg3: memref<1x128xf32, #tpu.memory_space<vmem>>, %arg4: memref<256x128xf32, #tpu.memory_space<vmem>>) attributes {dimension_semantics = [#tpu.dimension_semantics<parallel>], iteration_bounds = array<i64: 2>, scalar_prefetch = 0 : i64, scratch_operands = 0 : i64, tpu.core_type = #tpu.core_type<tc>, window_params = [{transform_indices = @transform_0, window_bounds = array<i64: 256, 128>}, {pipeline_mode = #tpu.pipeline_mode<synchronous>, transform_indices = @transform_1, window_bounds = array<i64: 1, 128>}, {pipeline_mode = #tpu.pipeline_mode<synchronous>, transform_indices = @transform_2, window_bounds = array<i64: 1, 128>}, {transform_indices = @transform_3, window_bounds = array<i64: 256, 128>}]} {
    %c0 = arith.constant 0 : index
    %c0_0 = arith.constant 0 : index
    %0 = vector.load %arg1[%c0, %c0_0] : memref<256x128xf32, #tpu.memory_space<vmem>>, vector<256x128xf32>
    %c0_1 = arith.constant 0 : index
    %c0_2 = arith.constant 0 : index
    %1 = vector.load %arg2[%c0_1, %c0_2] : memref<1x128xf32, #tpu.memory_space<vmem>>, vector<1x128xf32>
    %2 = vector.broadcast %1 : vector<1x128xf32> to vector<256x128xf32>
    %3 = arith.mulf %0, %2 : vector<256x128xf32>
    %c0_3 = arith.constant 0 : index
    %c0_4 = arith.constant 0 : index
    %4 = vector.load %arg3[%c0_3, %c0_4] : memref<1x128xf32, #tpu.memory_space<vmem>>, vector<1x128xf32>
    %5 = vector.broadcast %4 : vector<1x128xf32> to vector<256x128xf32>
    %6 = arith.addf %3, %5 : vector<256x128xf32>
    %cst = arith.constant 0.000000e+00 : f32
    %7 = vector.broadcast %cst : f32 to vector<256x128xf32>
    %8 = arith.maximumf %6, %7 : vector<256x128xf32>
    %c0_5 = arith.constant 0 : index
    %c0_6 = arith.constant 0 : index
    %9 = vector.load %arg4[%c0_5, %c0_6] : memref<256x128xf32, #tpu.memory_space<vmem>>, vector<256x128xf32>
    tpu.vector_store %arg4[%c0_5, %c0_6], %8 {strides = array<i32>} : memref<256x128xf32, #tpu.memory_space<vmem>>, vector<256x128xf32>,
    return
  }
  func.func @transform_0(%arg0: i32) -> (i32, i32) {
    %c0_i32 = arith.constant 0 : i32
    %c0_i32_0 = arith.constant 0 : i32
    return %arg0, %c0_i32 : i32, i32
  }
  func.func @transform_1(%arg0: i32) -> (i32, i32) {
    %c0_i32 = arith.constant 0 : i32
    %c0_i32_0 = arith.constant 0 : i32
    %c0_i32_1 = arith.constant 0 : i32
    return %c0_i32, %c0_i32_0 : i32, i32
  }
  func.func @transform_2(%arg0: i32) -> (i32, i32) {
    %c0_i32 = arith.constant 0 : i32
    %c0_i32_0 = arith.constant 0 : i32
    %c0_i32_1 = arith.constant 0 : i32
    return %c0_i32, %c0_i32_0 : i32, i32
  }
  func.func @transform_3(%arg0: i32) -> (i32, i32) {
    %c0_i32 = arith.constant 0 : i32
    %c0_i32_0 = arith.constant 0 : i32
    return %arg0, %c0_i32 : i32, i32
  }
}

module attributes {stable_mosaic.version = 11 : i64} {
  func.func @_conv_stats_kernel(%arg0: i32, %arg1: memref<1x18x18x4xf32, #tpu.memory_space<vmem>>, %arg2: memref<9x4x128xbf16, #tpu.memory_space<vmem>>, %arg3: memref<256x128xf32, #tpu.memory_space<vmem>>, %arg4: memref<8x128xf32, #tpu.memory_space<vmem>>) attributes {dimension_semantics = [#tpu.dimension_semantics<parallel>], iteration_bounds = array<i64: 2>, scalar_prefetch = 0 : i64, scratch_operands = 0 : i64, tpu.core_type = #tpu.core_type<tc>, window_params = [{transform_indices = @transform_0, window_bounds = array<i64: 1, 18, 18, 4>}, {pipeline_mode = #tpu.pipeline_mode<synchronous>, transform_indices = @transform_1, window_bounds = array<i64: 9, 4, 128>}, {transform_indices = @transform_2, window_bounds = array<i64: 256, 128>}, {transform_indices = @transform_3, window_bounds = array<i64: 8, 128>}]} {
    %cst = arith.constant 0.000000e+00 : f32
    %0 = vector.broadcast %cst : f32 to vector<256x128xf32>
    %c0 = arith.constant 0 : index
    %c0_0 = arith.constant 0 : index
    %1 = vector.load %arg3[%c0, %c0_0] : memref<256x128xf32, #tpu.memory_space<vmem>>, vector<256x128xf32>
    tpu.vector_store %arg3[%c0, %c0_0], %0 {strides = array<i32>} : memref<256x128xf32, #tpu.memory_space<vmem>>, vector<256x128xf32>,
    %c0_1 = arith.constant 0 : index
    %c0_2 = arith.constant 0 : index
    %c0_3 = arith.constant 0 : index
    %c0_4 = arith.constant 0 : index
    %2 = vector.load %arg1[%c0_1, %c0_2, %c0_3, %c0_4] : memref<1x18x18x4xf32, #tpu.memory_space<vmem>>, vector<1x16x16x4xf32>
    %3 = vector.shape_cast %2 : vector<1x16x16x4xf32> to vector<16x16x4xf32>
    %4 = vector.shape_cast %3 : vector<16x16x4xf32> to vector<256x4xf32>
    %5 = arith.truncf %4 : vector<256x4xf32> to vector<256x4xbf16>
    %c0_5 = arith.constant 0 : index
    %c0_6 = arith.constant 0 : index
    %6 = vector.load %arg3[%c0_5, %c0_6] : memref<256x128xf32, #tpu.memory_space<vmem>>, vector<256x128xf32>
    %c0_7 = arith.constant 0 : index
    %c0_8 = arith.constant 0 : index
    %c0_9 = arith.constant 0 : index
    %7 = vector.load %arg2[%c0_7, %c0_8, %c0_9] : memref<9x4x128xbf16, #tpu.memory_space<vmem>>, vector<1x4x128xbf16>
    %8 = vector.shape_cast %7 : vector<1x4x128xbf16> to vector<4x128xbf16>
    %cst_10 = arith.constant dense<0.000000e+00> : vector<256x128xf32>
    %9 = tpu.matmul %5, %8, %cst_10 {dimension_numbers = #tpu.dot_dimension_numbers<[1], [0], [0], [1], [0, 0, 1, 1], [], []>} : vector<256x4xbf16>, vector<4x128xbf16>, vector<256x128xf32> -> vector<256x128xf32>
    %10 = arith.addf %6, %9 : vector<256x128xf32>
    %c0_11 = arith.constant 0 : index
    %c0_12 = arith.constant 0 : index
    %11 = vector.load %arg3[%c0_11, %c0_12] : memref<256x128xf32, #tpu.memory_space<vmem>>, vector<256x128xf32>
    tpu.vector_store %arg3[%c0_11, %c0_12], %10 {strides = array<i32>} : memref<256x128xf32, #tpu.memory_space<vmem>>, vector<256x128xf32>,
    %c0_13 = arith.constant 0 : index
    %c0_14 = arith.constant 0 : index
    %c1 = arith.constant 1 : index
    %c0_15 = arith.constant 0 : index
    %12 = vector.load %arg1[%c0_13, %c0_14, %c1, %c0_15] : memref<1x18x18x4xf32, #tpu.memory_space<vmem>>, vector<1x16x16x4xf32>
    %13 = vector.shape_cast %12 : vector<1x16x16x4xf32> to vector<16x16x4xf32>
    %14 = vector.shape_cast %13 : vector<16x16x4xf32> to vector<256x4xf32>
    %15 = arith.truncf %14 : vector<256x4xf32> to vector<256x4xbf16>
    %c0_16 = arith.constant 0 : index
    %c0_17 = arith.constant 0 : index
    %16 = vector.load %arg3[%c0_16, %c0_17] : memref<256x128xf32, #tpu.memory_space<vmem>>, vector<256x128xf32>
    %c1_18 = arith.constant 1 : index
    %c0_19 = arith.constant 0 : index
    %c0_20 = arith.constant 0 : index
    %17 = vector.load %arg2[%c1_18, %c0_19, %c0_20] : memref<9x4x128xbf16, #tpu.memory_space<vmem>>, vector<1x4x128xbf16>
    %18 = vector.shape_cast %17 : vector<1x4x128xbf16> to vector<4x128xbf16>
    %cst_21 = arith.constant dense<0.000000e+00> : vector<256x128xf32>
    %19 = tpu.matmul %15, %18, %cst_21 {dimension_numbers = #tpu.dot_dimension_numbers<[1], [0], [0], [1], [0, 0, 1, 1], [], []>} : vector<256x4xbf16>, vector<4x128xbf16>, vector<256x128xf32> -> vector<256x128xf32>
    %20 = arith.addf %16, %19 : vector<256x128xf32>
    %c0_22 = arith.constant 0 : index
    %c0_23 = arith.constant 0 : index
    %21 = vector.load %arg3[%c0_22, %c0_23] : memref<256x128xf32, #tpu.memory_space<vmem>>, vector<256x128xf32>
    tpu.vector_store %arg3[%c0_22, %c0_23], %20 {strides = array<i32>} : memref<256x128xf32, #tpu.memory_space<vmem>>, vector<256x128xf32>,
    %c0_24 = arith.constant 0 : index
    %c0_25 = arith.constant 0 : index
    %c2 = arith.constant 2 : index
    %c0_26 = arith.constant 0 : index
    %22 = vector.load %arg1[%c0_24, %c0_25, %c2, %c0_26] : memref<1x18x18x4xf32, #tpu.memory_space<vmem>>, vector<1x16x16x4xf32>
    %23 = vector.shape_cast %22 : vector<1x16x16x4xf32> to vector<16x16x4xf32>
    %24 = vector.shape_cast %23 : vector<16x16x4xf32> to vector<256x4xf32>
    %25 = arith.truncf %24 : vector<256x4xf32> to vector<256x4xbf16>
    %c0_27 = arith.constant 0 : index
    %c0_28 = arith.constant 0 : index
    %26 = vector.load %arg3[%c0_27, %c0_28] : memref<256x128xf32, #tpu.memory_space<vmem>>, vector<256x128xf32>
    %c2_29 = arith.constant 2 : index
    %c0_30 = arith.constant 0 : index
    %c0_31 = arith.constant 0 : index
    %27 = vector.load %arg2[%c2_29, %c0_30, %c0_31] : memref<9x4x128xbf16, #tpu.memory_space<vmem>>, vector<1x4x128xbf16>
    %28 = vector.shape_cast %27 : vector<1x4x128xbf16> to vector<4x128xbf16>
    %cst_32 = arith.constant dense<0.000000e+00> : vector<256x128xf32>
    %29 = tpu.matmul %25, %28, %cst_32 {dimension_numbers = #tpu.dot_dimension_numbers<[1], [0], [0], [1], [0, 0, 1, 1], [], []>} : vector<256x4xbf16>, vector<4x128xbf16>, vector<256x128xf32> -> vector<256x128xf32>
    %30 = arith.addf %26, %29 : vector<256x128xf32>
    %c0_33 = arith.constant 0 : index
    %c0_34 = arith.constant 0 : index
    %31 = vector.load %arg3[%c0_33, %c0_34] : memref<256x128xf32, #tpu.memory_space<vmem>>, vector<256x128xf32>
    tpu.vector_store %arg3[%c0_33, %c0_34], %30 {strides = array<i32>} : memref<256x128xf32, #tpu.memory_space<vmem>>, vector<256x128xf32>,
    %c0_35 = arith.constant 0 : index
    %c1_36 = arith.constant 1 : index
    %c0_37 = arith.constant 0 : index
    %c0_38 = arith.constant 0 : index
    %32 = vector.load %arg1[%c0_35, %c1_36, %c0_37, %c0_38] : memref<1x18x18x4xf32, #tpu.memory_space<vmem>>, vector<1x16x16x4xf32>
    %33 = vector.shape_cast %32 : vector<1x16x16x4xf32> to vector<16x16x4xf32>
    %34 = vector.shape_cast %33 : vector<16x16x4xf32> to vector<256x4xf32>
    %35 = arith.truncf %34 : vector<256x4xf32> to vector<256x4xbf16>
    %c0_39 = arith.constant 0 : index
    %c0_40 = arith.constant 0 : index
    %36 = vector.load %arg3[%c0_39, %c0_40] : memref<256x128xf32, #tpu.memory_space<vmem>>, vector<256x128xf32>
    %c3 = arith.constant 3 : index
    %c0_41 = arith.constant 0 : index
    %c0_42 = arith.constant 0 : index
    %37 = vector.load %arg2[%c3, %c0_41, %c0_42] : memref<9x4x128xbf16, #tpu.memory_space<vmem>>, vector<1x4x128xbf16>
    %38 = vector.shape_cast %37 : vector<1x4x128xbf16> to vector<4x128xbf16>
    %cst_43 = arith.constant dense<0.000000e+00> : vector<256x128xf32>
    %39 = tpu.matmul %35, %38, %cst_43 {dimension_numbers = #tpu.dot_dimension_numbers<[1], [0], [0], [1], [0, 0, 1, 1], [], []>} : vector<256x4xbf16>, vector<4x128xbf16>, vector<256x128xf32> -> vector<256x128xf32>
    %40 = arith.addf %36, %39 : vector<256x128xf32>
    %c0_44 = arith.constant 0 : index
    %c0_45 = arith.constant 0 : index
    %41 = vector.load %arg3[%c0_44, %c0_45] : memref<256x128xf32, #tpu.memory_space<vmem>>, vector<256x128xf32>
    tpu.vector_store %arg3[%c0_44, %c0_45], %40 {strides = array<i32>} : memref<256x128xf32, #tpu.memory_space<vmem>>, vector<256x128xf32>,
    %c0_46 = arith.constant 0 : index
    %c1_47 = arith.constant 1 : index
    %c1_48 = arith.constant 1 : index
    %c0_49 = arith.constant 0 : index
    %42 = vector.load %arg1[%c0_46, %c1_47, %c1_48, %c0_49] : memref<1x18x18x4xf32, #tpu.memory_space<vmem>>, vector<1x16x16x4xf32>
    %43 = vector.shape_cast %42 : vector<1x16x16x4xf32> to vector<16x16x4xf32>
    %44 = vector.shape_cast %43 : vector<16x16x4xf32> to vector<256x4xf32>
    %45 = arith.truncf %44 : vector<256x4xf32> to vector<256x4xbf16>
    %c0_50 = arith.constant 0 : index
    %c0_51 = arith.constant 0 : index
    %46 = vector.load %arg3[%c0_50, %c0_51] : memref<256x128xf32, #tpu.memory_space<vmem>>, vector<256x128xf32>
    %c4 = arith.constant 4 : index
    %c0_52 = arith.constant 0 : index
    %c0_53 = arith.constant 0 : index
    %47 = vector.load %arg2[%c4, %c0_52, %c0_53] : memref<9x4x128xbf16, #tpu.memory_space<vmem>>, vector<1x4x128xbf16>
    %48 = vector.shape_cast %47 : vector<1x4x128xbf16> to vector<4x128xbf16>
    %cst_54 = arith.constant dense<0.000000e+00> : vector<256x128xf32>
    %49 = tpu.matmul %45, %48, %cst_54 {dimension_numbers = #tpu.dot_dimension_numbers<[1], [0], [0], [1], [0, 0, 1, 1], [], []>} : vector<256x4xbf16>, vector<4x128xbf16>, vector<256x128xf32> -> vector<256x128xf32>
    %50 = arith.addf %46, %49 : vector<256x128xf32>
    %c0_55 = arith.constant 0 : index
    %c0_56 = arith.constant 0 : index
    %51 = vector.load %arg3[%c0_55, %c0_56] : memref<256x128xf32, #tpu.memory_space<vmem>>, vector<256x128xf32>
    tpu.vector_store %arg3[%c0_55, %c0_56], %50 {strides = array<i32>} : memref<256x128xf32, #tpu.memory_space<vmem>>, vector<256x128xf32>,
    %c0_57 = arith.constant 0 : index
    %c1_58 = arith.constant 1 : index
    %c2_59 = arith.constant 2 : index
    %c0_60 = arith.constant 0 : index
    %52 = vector.load %arg1[%c0_57, %c1_58, %c2_59, %c0_60] : memref<1x18x18x4xf32, #tpu.memory_space<vmem>>, vector<1x16x16x4xf32>
    %53 = vector.shape_cast %52 : vector<1x16x16x4xf32> to vector<16x16x4xf32>
    %54 = vector.shape_cast %53 : vector<16x16x4xf32> to vector<256x4xf32>
    %55 = arith.truncf %54 : vector<256x4xf32> to vector<256x4xbf16>
    %c0_61 = arith.constant 0 : index
    %c0_62 = arith.constant 0 : index
    %56 = vector.load %arg3[%c0_61, %c0_62] : memref<256x128xf32, #tpu.memory_space<vmem>>, vector<256x128xf32>
    %c5 = arith.constant 5 : index
    %c0_63 = arith.constant 0 : index
    %c0_64 = arith.constant 0 : index
    %57 = vector.load %arg2[%c5, %c0_63, %c0_64] : memref<9x4x128xbf16, #tpu.memory_space<vmem>>, vector<1x4x128xbf16>
    %58 = vector.shape_cast %57 : vector<1x4x128xbf16> to vector<4x128xbf16>
    %cst_65 = arith.constant dense<0.000000e+00> : vector<256x128xf32>
    %59 = tpu.matmul %55, %58, %cst_65 {dimension_numbers = #tpu.dot_dimension_numbers<[1], [0], [0], [1], [0, 0, 1, 1], [], []>} : vector<256x4xbf16>, vector<4x128xbf16>, vector<256x128xf32> -> vector<256x128xf32>
    %60 = arith.addf %56, %59 : vector<256x128xf32>
    %c0_66 = arith.constant 0 : index
    %c0_67 = arith.constant 0 : index
    %61 = vector.load %arg3[%c0_66, %c0_67] : memref<256x128xf32, #tpu.memory_space<vmem>>, vector<256x128xf32>
    tpu.vector_store %arg3[%c0_66, %c0_67], %60 {strides = array<i32>} : memref<256x128xf32, #tpu.memory_space<vmem>>, vector<256x128xf32>,
    %c0_68 = arith.constant 0 : index
    %c2_69 = arith.constant 2 : index
    %c0_70 = arith.constant 0 : index
    %c0_71 = arith.constant 0 : index
    %62 = vector.load %arg1[%c0_68, %c2_69, %c0_70, %c0_71] : memref<1x18x18x4xf32, #tpu.memory_space<vmem>>, vector<1x16x16x4xf32>
    %63 = vector.shape_cast %62 : vector<1x16x16x4xf32> to vector<16x16x4xf32>
    %64 = vector.shape_cast %63 : vector<16x16x4xf32> to vector<256x4xf32>
    %65 = arith.truncf %64 : vector<256x4xf32> to vector<256x4xbf16>
    %c0_72 = arith.constant 0 : index
    %c0_73 = arith.constant 0 : index
    %66 = vector.load %arg3[%c0_72, %c0_73] : memref<256x128xf32, #tpu.memory_space<vmem>>, vector<256x128xf32>
    %c6 = arith.constant 6 : index
    %c0_74 = arith.constant 0 : index
    %c0_75 = arith.constant 0 : index
    %67 = vector.load %arg2[%c6, %c0_74, %c0_75] : memref<9x4x128xbf16, #tpu.memory_space<vmem>>, vector<1x4x128xbf16>
    %68 = vector.shape_cast %67 : vector<1x4x128xbf16> to vector<4x128xbf16>
    %cst_76 = arith.constant dense<0.000000e+00> : vector<256x128xf32>
    %69 = tpu.matmul %65, %68, %cst_76 {dimension_numbers = #tpu.dot_dimension_numbers<[1], [0], [0], [1], [0, 0, 1, 1], [], []>} : vector<256x4xbf16>, vector<4x128xbf16>, vector<256x128xf32> -> vector<256x128xf32>
    %70 = arith.addf %66, %69 : vector<256x128xf32>
    %c0_77 = arith.constant 0 : index
    %c0_78 = arith.constant 0 : index
    %71 = vector.load %arg3[%c0_77, %c0_78] : memref<256x128xf32, #tpu.memory_space<vmem>>, vector<256x128xf32>
    tpu.vector_store %arg3[%c0_77, %c0_78], %70 {strides = array<i32>} : memref<256x128xf32, #tpu.memory_space<vmem>>, vector<256x128xf32>,
    %c0_79 = arith.constant 0 : index
    %c2_80 = arith.constant 2 : index
    %c1_81 = arith.constant 1 : index
    %c0_82 = arith.constant 0 : index
    %72 = vector.load %arg1[%c0_79, %c2_80, %c1_81, %c0_82] : memref<1x18x18x4xf32, #tpu.memory_space<vmem>>, vector<1x16x16x4xf32>
    %73 = vector.shape_cast %72 : vector<1x16x16x4xf32> to vector<16x16x4xf32>
    %74 = vector.shape_cast %73 : vector<16x16x4xf32> to vector<256x4xf32>
    %75 = arith.truncf %74 : vector<256x4xf32> to vector<256x4xbf16>
    %c0_83 = arith.constant 0 : index
    %c0_84 = arith.constant 0 : index
    %76 = vector.load %arg3[%c0_83, %c0_84] : memref<256x128xf32, #tpu.memory_space<vmem>>, vector<256x128xf32>
    %c7 = arith.constant 7 : index
    %c0_85 = arith.constant 0 : index
    %c0_86 = arith.constant 0 : index
    %77 = vector.load %arg2[%c7, %c0_85, %c0_86] : memref<9x4x128xbf16, #tpu.memory_space<vmem>>, vector<1x4x128xbf16>
    %78 = vector.shape_cast %77 : vector<1x4x128xbf16> to vector<4x128xbf16>
    %cst_87 = arith.constant dense<0.000000e+00> : vector<256x128xf32>
    %79 = tpu.matmul %75, %78, %cst_87 {dimension_numbers = #tpu.dot_dimension_numbers<[1], [0], [0], [1], [0, 0, 1, 1], [], []>} : vector<256x4xbf16>, vector<4x128xbf16>, vector<256x128xf32> -> vector<256x128xf32>
    %80 = arith.addf %76, %79 : vector<256x128xf32>
    %c0_88 = arith.constant 0 : index
    %c0_89 = arith.constant 0 : index
    %81 = vector.load %arg3[%c0_88, %c0_89] : memref<256x128xf32, #tpu.memory_space<vmem>>, vector<256x128xf32>
    tpu.vector_store %arg3[%c0_88, %c0_89], %80 {strides = array<i32>} : memref<256x128xf32, #tpu.memory_space<vmem>>, vector<256x128xf32>,
    %c0_90 = arith.constant 0 : index
    %c2_91 = arith.constant 2 : index
    %c2_92 = arith.constant 2 : index
    %c0_93 = arith.constant 0 : index
    %82 = vector.load %arg1[%c0_90, %c2_91, %c2_92, %c0_93] : memref<1x18x18x4xf32, #tpu.memory_space<vmem>>, vector<1x16x16x4xf32>
    %83 = vector.shape_cast %82 : vector<1x16x16x4xf32> to vector<16x16x4xf32>
    %84 = vector.shape_cast %83 : vector<16x16x4xf32> to vector<256x4xf32>
    %85 = arith.truncf %84 : vector<256x4xf32> to vector<256x4xbf16>
    %c0_94 = arith.constant 0 : index
    %c0_95 = arith.constant 0 : index
    %86 = vector.load %arg3[%c0_94, %c0_95] : memref<256x128xf32, #tpu.memory_space<vmem>>, vector<256x128xf32>
    %c8 = arith.constant 8 : index
    %c0_96 = arith.constant 0 : index
    %c0_97 = arith.constant 0 : index
    %87 = vector.load %arg2[%c8, %c0_96, %c0_97] : memref<9x4x128xbf16, #tpu.memory_space<vmem>>, vector<1x4x128xbf16>
    %88 = vector.shape_cast %87 : vector<1x4x128xbf16> to vector<4x128xbf16>
    %cst_98 = arith.constant dense<0.000000e+00> : vector<256x128xf32>
    %89 = tpu.matmul %85, %88, %cst_98 {dimension_numbers = #tpu.dot_dimension_numbers<[1], [0], [0], [1], [0, 0, 1, 1], [], []>} : vector<256x4xbf16>, vector<4x128xbf16>, vector<256x128xf32> -> vector<256x128xf32>
    %90 = arith.addf %86, %89 : vector<256x128xf32>
    %c0_99 = arith.constant 0 : index
    %c0_100 = arith.constant 0 : index
    %91 = vector.load %arg3[%c0_99, %c0_100] : memref<256x128xf32, #tpu.memory_space<vmem>>, vector<256x128xf32>
    tpu.vector_store %arg3[%c0_99, %c0_100], %90 {strides = array<i32>} : memref<256x128xf32, #tpu.memory_space<vmem>>, vector<256x128xf32>,
    %c0_101 = arith.constant 0 : index
    %c0_102 = arith.constant 0 : index
    %92 = vector.load %arg3[%c0_101, %c0_102] : memref<256x128xf32, #tpu.memory_space<vmem>>, vector<256x128xf32>
    %cst_103 = arith.constant dense<0.000000e+00> : vector<128xf32>
    %93 = vector.multi_reduction <add>, %92, %cst_103 [0] : vector<256x128xf32> to vector<128xf32>
    %94 = vector.shape_cast %93 : vector<128xf32> to vector<1x128xf32>
    %95 = arith.mulf %92, %92 : vector<256x128xf32>
    %cst_104 = arith.constant dense<0.000000e+00> : vector<128xf32>
    %96 = vector.multi_reduction <add>, %95, %cst_104 [0] : vector<256x128xf32> to vector<128xf32>
    %97 = vector.shape_cast %96 : vector<128xf32> to vector<1x128xf32>
    %cst_105 = arith.constant 0.000000e+00 : f32
    %98 = vector.broadcast %cst_105 : f32 to vector<6x128xf32>
    %99 = tpu.concatenate %94, %97, %98 in 0 : vector<1x128xf32>, vector<1x128xf32>, vector<6x128xf32> -> vector<8x128xf32>
    %c0_106 = arith.constant 0 : index
    %c0_107 = arith.constant 0 : index
    %100 = vector.load %arg4[%c0_106, %c0_107] : memref<8x128xf32, #tpu.memory_space<vmem>>, vector<8x128xf32>
    tpu.vector_store %arg4[%c0_106, %c0_107], %99 {strides = array<i32>} : memref<8x128xf32, #tpu.memory_space<vmem>>, vector<8x128xf32>,
    return
  }
  func.func @transform_0(%arg0: i32) -> (i32, i32, i32, i32) {
    %c0_i32 = arith.constant 0 : i32
    %c0_i32_0 = arith.constant 0 : i32
    %c0_i32_1 = arith.constant 0 : i32
    %c0_i32_2 = arith.constant 0 : i32
    return %arg0, %c0_i32, %c0_i32_0, %c0_i32_1 : i32, i32, i32, i32
  }
  func.func @transform_1(%arg0: i32) -> (i32, i32, i32) {
    %c0_i32 = arith.constant 0 : i32
    %c0_i32_0 = arith.constant 0 : i32
    %c0_i32_1 = arith.constant 0 : i32
    %c0_i32_2 = arith.constant 0 : i32
    return %c0_i32, %c0_i32_0, %c0_i32_1 : i32, i32, i32
  }
  func.func @transform_2(%arg0: i32) -> (i32, i32) {
    %c0_i32 = arith.constant 0 : i32
    %c0_i32_0 = arith.constant 0 : i32
    return %arg0, %c0_i32 : i32, i32
  }
  func.func @transform_3(%arg0: i32) -> (i32, i32) {
    %c0_i32 = arith.constant 0 : i32
    %c0_i32_0 = arith.constant 0 : i32
    return %arg0, %c0_i32 : i32, i32
  }
}

</mosaic_0001>

<llo_original>
// kernel: tile.8
$region0: #{tile.8}
  #allocation0 [shape = 's32[1]{0}', space=sflag, size = 0x4, scoped, tag = 'scoped memory for tile.8']
  %s0 = inlined_call_operand.vmem [shape: f32[32], index: 0, kind: input, shape index: {}]
  %s1 = inlined_call_operand.vmem [shape: f32[4,32], index: 1, kind: output, shape index: {}]
  // Predicated region
  $region2: #{tile.8} parent=0 // pred_check
    _
  $region3: #{tile.8} parent=0 // pred_check_branch
    %3 = sbr.rel (0) target = $region5
  $region4: #{tile.8} parent=0 // pred_region
    _
  $region5: #{tile.8} parent=0 // pred_fallthru
    _
  %v4 = vld [vmem:[%s0] ss:$0 sm:$0xff]
  %5 = vst [vmem:[%s1] sm:$0xf] %v4

// kernel: tile.9
$region0: #{tile.9}
  %s0 = inlined_call_operand.vmem [shape: f32[4,32], index: 0, kind: input, shape index: {}]
  %s1 = inlined_call_operand.vmem [shape: f32[1,128], index: 1, kind: output, shape index: {}]
  $region1: #{tile.9} parent=0
    #allocation0 [shape = 'u8[4096]{0}', space=vmem, size = 0x1000, scoped, tag = 'scoped mem for output reshape']
    #allocation1 [shape = 'u8[4096]{0}', space=vmem, size = 0x1000, scoped, tag = 'scoped mem for input reshape']
    %s3 = sshllo.u32 0, 4
    %v4 = vld [vmem:[%s0] sm:%s3]
    %5 = vst [vmem:[#allocation1] sm:%s3] %v4
    %v6 = vld [vmem:[#allocation1] sm:$0x1]
    %vm7 = vcmask 261120
    %8 = vst.msk [vmem:[#allocation0] sm:$0x1] %vm7, %v6
    %s9 = scalar_lea.vmem [#allocation1], 3
    %v10 = vld [vmem:[%s9] sm:$0x1]
    %11 = vrot.lane.b32.xlu0 %v10, 96
    %v12 = vpop.permute.xlu0 %11
    %vm13 = vcmask 1048320
    %14 = vst.msk [vmem:[#allocation0] sm:$0x1] %vm13, %v12
    %s15 = scalar_lea.vmem [#allocation1], 2
    %v16 = vld [vmem:[%s15] sm:$0x1]
    %17 = vrot.lane.b32.xlu0 %v16, 64
    %v18 = vpop.permute.xlu0 %17
    %vm19 = vcmask 785920
    %20 = vst.msk [vmem:[#allocation0] sm:$0x1] %vm19, %v18
    %s21 = scalar_lea.vmem [#allocation1], 1
    %v22 = vld [vmem:[%s21] sm:$0x1]
    %23 = vrot.lane.b32.xlu0 %v22, 32
    %v24 = vpop.permute.xlu0 %23
    %vm25 = vcmask 523520
    %26 = vst.msk [vmem:[#allocation0] sm:$0x1] %vm25, %v24
    %s28 = sshllo.u32 0, 1
    %v30 = vld [vmem:[#allocation0] sm:%s28]
    %s31 = sshllo.u32 0, 1
    %32 = vst [vmem:[%s1] sm:%s31] %v30

// kernel: decoder_block_forward.5
$region0: #{decoder_block_forward.5}
  #allocation0 [shape = 'u32[]', space=smem, size = 0x4, offset = 0x4, fixed_abs, tag = 'smem constant byte address 0x4 - core index']
  #allocation1 [shape = 'u32[144,128]{1,0:T(1,128)}', space=vmem, size = 0x12000, scoped, tag = 'internal scratch']
  %s0 = inlined_call_operand.vmem [shape: bf16[128,8], index: 0, kind: input, shape index: {}]
  %s1 = inlined_call_operand.vmem [shape: bf16[8,128], index: 1, kind: input, shape index: {}]
  %s2 = inlined_call_operand.vmem [shape: f32[1,128], index: 2, kind: input, shape index: {}]
  %s3 = inlined_call_operand.vmem [shape: f32[128,128], index: 3, kind: output, shape index: {}]
  %s4 = sld [smem:[#allocation0]]
  $region22: #{decoder_block_forward.5} parent=0
    _
  %s6 = ssub.s32 1, %s4
  %s7 = scalar_select 0, %s6, %s4
  // Predicated region
  $region2: #{decoder_block_forward.5} parent=0 // pred_check
    _
  $region3: #{decoder_block_forward.5} parent=0 // pred_check_branch
    %9 = sbr.rel (0) target = $region5
  $region4: #{decoder_block_forward.5} parent=0 // pred_region
    _
  $region5: #{decoder_block_forward.5} parent=0 // pred_fallthru
    _
  // Predicated region
  $region6: #{decoder_block_forward.5} parent=0 // pred_check
    _
  $region7: #{decoder_block_forward.5} parent=0 // pred_check_branch
    %11 = sbr.rel (0) target = $region9
  $region8: #{decoder_block_forward.5} parent=0 // pred_region
    _
  $region9: #{decoder_block_forward.5} parent=0 // pred_fallthru
    _
  // Predicated region
  $region10: #{decoder_block_forward.5} parent=0 // pred_check
    _
  $region11: #{decoder_block_forward.5} parent=0 // pred_check_branch
    %13 = sbr.rel (0) target = $region13
  $region12: #{decoder_block_forward.5} parent=0 // pred_region
    _
  $region13: #{decoder_block_forward.5} parent=0 // pred_fallthru
    _
  %v15 = vld [vmem:[%s0] sm:$0xf]
  %v16 = vld [vmem:[%s0 + $0x4] sm:$0xf]
  %v17 = vld [vmem:[%s0 + $0x8] sm:$0xf]
  %v18 = vld [vmem:[%s0 + $0xc] sm:$0xf]
  %v19 = vld [vmem:[%s0 + $0x10] sm:$0xf]
  %v20 = vld [vmem:[%s0 + $0x14] sm:$0xf]
  %v21 = vld [vmem:[%s0 + $0x18] sm:$0xf]
  %v22 = vld [vmem:[%s0 + $0x1c] sm:$0xf]
  %v23 = vld [vmem:[%s0 + $0x20] sm:$0xf]
  %v24 = vld [vmem:[%s0 + $0x24] sm:$0xf]
  %v25 = vld [vmem:[%s0 + $0x28] sm:$0xf]
  %v26 = vld [vmem:[%s0 + $0x2c] sm:$0xf]
  %v27 = vld [vmem:[%s0 + $0x30] sm:$0xf]
  %v28 = vld [vmem:[%s0 + $0x34] sm:$0xf]
  %v29 = vld [vmem:[%s0 + $0x38] sm:$0xf]
  %v30 = vld [vmem:[%s0 + $0x3c] sm:$0xf]
  %v31 = vld [vmem:[%s1] sm:$0xf]
  %v32 = vld [vmem:[%s2] sm:$0x1]
  %v34 = vlaneseq
  %v35 = vshrl.u32 %v34, 7
  %v36 = vsub.s32 0, %v35
  %v37 = vrot.slane %v32, %v36
  %v55 = vunpack.c.l.b16 %v15
  %v56 = vunpack.c.l.b16 %v16
  %v57 = vunpack.c.l.b16 %v17
  %v58 = vunpack.c.l.b16 %v18
  %v59 = vunpack.c.l.b16 %v19
  %v60 = vunpack.c.l.b16 %v20
  %v61 = vunpack.c.l.b16 %v21
  %v62 = vunpack.c.l.b16 %v22
  %v63 = vunpack.c.l.b16 %v23
  %v64 = vunpack.c.l.b16 %v24
  %v65 = vunpack.c.l.b16 %v25
  %v66 = vunpack.c.l.b16 %v26
  %v67 = vunpack.c.l.b16 %v27
  %v68 = vunpack.c.l.b16 %v28
  %v69 = vunpack.c.l.b16 %v29
  %v70 = vunpack.c.l.b16 %v30
  %v71 = vpack.c.b16 %v56, %v55
  %v72 = vpack.c.b16 %v58, %v57
  %v73 = vpack.c.b16 %v60, %v59
  %v74 = vpack.c.b16 %v62, %v61
  %v75 = vpack.c.b16 %v64, %v63
  %v76 = vpack.c.b16 %v66, %v65
  %v77 = vpack.c.b16 %v68, %v67
  %v78 = vpack.c.b16 %v70, %v69
  %vm79 = vcmask 64512
  %v81 = vsel %vm79, %v71, 0
  %v84 = vsel %vm79, %v72, 0
  %v87 = vsel %vm79, %v73, 0
  %v90 = vsel %vm79, %v74, 0
  %v93 = vsel %vm79, %v75, 0
  %v96 = vsel %vm79, %v76, 0
  %v99 = vsel %vm79, %v77, 0
  %v102 = vsel %vm79, %v78, 0
  %vm104 = vcmask 1043456
  %v106 = vsel %vm104, %v31, 0
  %108 = vmatprep.subr.bf16.mxu0 0
  %109 = vmatpush1.bf16.msra.mxu0 %v106
  %110 = vmatprep.subr.bf16.mxu0 0
  %111 = vmatpush1.bf16.msra.mxu0 0
  %112 = vmatprep.subr.bf16.mxu0 0
  %113 = vmatpush1.bf16.msra.mxu0 0
  %114 = vmatprep.subr.bf16.mxu0 0
  %115 = vmatpush1.bf16.msra.mxu0 0
  %116 = vmatprep.subr.bf16.mxu0 0
  %117 = vmatpush1.bf16.msra.mxu0 0
  %118 = vmatprep.subr.bf16.mxu0 0
  %119 = vmatpush1.bf16.msra.mxu0 0
  %120 = vmatprep.subr.bf16.mxu0 0
  %121 = vmatpush1.bf16.msra.mxu0 0
  %122 = vmatprep.subr.bf16.mxu0 0
  %123 = vmatpush1.bf16.msra.mxu0 0
  %124 = vmatprep.subr.bf16.mxu0 0
  %125 = vmatpush1.bf16.msra.mxu0 0
  %126 = vmatprep.subr.bf16.mxu0 0
  %127 = vmatpush1.bf16.msra.mxu0 0
  %128 = vmatprep.subr.bf16.mxu0 0
  %129 = vmatpush1.bf16.msra.mxu0 0
  %130 = vmatprep.subr.bf16.mxu0 0
  %131 = vmatpush1.bf16.msra.mxu0 0
  %132 = vmatprep.subr.bf16.mxu0 0
  %133 = vmatpush1.bf16.msra.mxu0 0
  %134 = vmatprep.subr.bf16.mxu0 0
  %135 = vmatpush1.bf16.msra.mxu0 0
  %136 = vmatprep.subr.bf16.mxu0 0
  %137 = vmatpush1.bf16.msra.mxu0 0
  %138 = vmatprep.subr.bf16.mxu0 0
  %139 = vmatpush1.bf16.msra.mxu0 0
  %140 = vmatprep.mubr.bf16.mxu0 0
  %141 = vmatmul.mubr.bf16.gmra.mrb[0].mxu0 %v81
  %v142 = vpop.f32.mrb[0].mxu0
  %v143 = vadd.f32 %v37, %v142
  %v144 = vpop.f32.mrb[0].mxu0
  %v145 = vpop.f32.mrb[0].mxu0
  %v146 = vadd.f32 %v37, %v145
  %v147 = vpop.f32.mrb[0].mxu0
  %148 = vmatprep.mubr.bf16.mxu0 0
  %149 = vmatmul.mubr.bf16.gmra.mrb[0].mxu0 %v84
  %v150 = vpop.f32.mrb[0].mxu0
  %v151 = vadd.f32 %v37, %v150
  %v152 = vpop.f32.mrb[0].mxu0
  %v153 = vpop.f32.mrb[0].mxu0
  %v154 = vadd.f32 %v37, %v153
  %v155 = vpop.f32.mrb[0].mxu0
  %156 = vmatprep.mubr.bf16.mxu0 0
  %157 = vmatmul.mubr.bf16.gmra.mrb[0].mxu0 %v87
  %v158 = vpop.f32.mrb[0].mxu0
  %v159 = vadd.f32 %v37, %v158
  %v160 = vpop.f32.mrb[0].mxu0
  %v161 = vpop.f32.mrb[0].mxu0
  %v162 = vadd.f32 %v37, %v161
  %v163 = vpop.f32.mrb[0].mxu0
  %164 = vmatprep.mubr.bf16.mxu0 0
  %165 = vmatmul.mubr.bf16.gmra.mrb[0].mxu0 %v90
  %v166 = vpop.f32.mrb[0].mxu0
  %v167 = vadd.f32 %v37, %v166
  %v168 = vpop.f32.mrb[0].mxu0
  %v169 = vpop.f32.mrb[0].mxu0
  %v170 = vadd.f32 %v37, %v169
  %v171 = vpop.f32.mrb[0].mxu0
  %172 = vmatprep.mubr.bf16.mxu0 0
  %173 = vmatmul.mubr.bf16.gmra.mrb[0].mxu0 %v93
  %v174 = vpop.f32.mrb[0].mxu0
  %v175 = vadd.f32 %v37, %v174
  %v176 = vpop.f32.mrb[0].mxu0
  %v177 = vpop.f32.mrb[0].mxu0
  %v178 = vadd.f32 %v37, %v177
  %v179 = vpop.f32.mrb[0].mxu0
  %180 = vmatprep.mubr.bf16.mxu0 0
  %181 = vmatmul.mubr.bf16.gmra.mrb[0].mxu0 %v96
  %v182 = vpop.f32.mrb[0].mxu0
  %v183 = vadd.f32 %v37, %v182
  %v184 = vpop.f32.mrb[0].mxu0
  %v185 = vpop.f32.mrb[0].mxu0
  %v186 = vadd.f32 %v37, %v185
  %v187 = vpop.f32.mrb[0].mxu0
  %188 = vmatprep.mubr.bf16.mxu0 0
  %189 = vmatmul.mubr.bf16.gmra.mrb[0].mxu0 %v99
  %v190 = vpop.f32.mrb[0].mxu0
  %v191 = vadd.f32 %v37, %v190
  %v192 = vpop.f32.mrb[0].mxu0
  %v193 = vpop.f32.mrb[0].mxu0
  %v194 = vadd.f32 %v37, %v193
  %v195 = vpop.f32.mrb[0].mxu0
  %196 = vmatprep.mubr.bf16.mxu0 0
  %197 = vmatmul.mubr.bf16.gmra.mrb[0].mxu0 %v102
  %v198 = vpop.f32.mrb[0].mxu0
  %v199 = vadd.f32 %v37, %v198
  %v200 = vpop.f32.mrb[0].mxu0
  %v201 = vpop.f32.mrb[0].mxu0
  %v202 = vadd.f32 %v37, %v201
  %v203 = vpop.f32.mrb[0].mxu0
  %204 = vdwg.mxu0
  %205 = vst [vmem:[%s3] sm:$0xff] %v143
  %206 = vst [vmem:[%s3 + $0x8] sm:$0xff] %v146
  %207 = vst [vmem:[%s3 + $0x10] sm:$0xff] %v151
  %208 = vst [vmem:[%s3 + $0x18] sm:$0xff] %v154
  %209 = vst [vmem:[%s3 + $0x20] sm:$0xff] %v159
  %210 = vst [vmem:[%s3 + $0x28] sm:$0xff] %v162
  %211 = vst [vmem:[%s3 + $0x30] sm:$0xff] %v167
  %212 = vst [vmem:[%s3 + $0x38] sm:$0xff] %v170
  %213 = vst [vmem:[%s3 + $0x40] sm:$0xff] %v175
  %214 = vst [vmem:[%s3 + $0x48] sm:$0xff] %v178
  %215 = vst [vmem:[%s3 + $0x50] sm:$0xff] %v183
  %216 = vst [vmem:[%s3 + $0x58] sm:$0xff] %v186
  %217 = vst [vmem:[%s3 + $0x60] sm:$0xff] %v191
  %218 = vst [vmem:[%s3 + $0x68] sm:$0xff] %v194
  %219 = vst [vmem:[%s3 + $0x70] sm:$0xff] %v199
  %220 = vst [vmem:[%s3 + $0x78] sm:$0xff] %v202
  // Predicated region
  $region14: #{decoder_block_forward.5} parent=0 // pred_check
    _
  $region15: #{decoder_block_forward.5} parent=0 // pred_check_branch
    %222 = sbr.rel (0) target = $region17
  $region16: #{decoder_block_forward.5} parent=0 // pred_region
    _
  $region17: #{decoder_block_forward.5} parent=0 // pred_fallthru
    _
  // Predicated region
  $region18: #{decoder_block_forward.5} parent=0 // pred_check
    _
  $region19: #{decoder_block_forward.5} parent=0 // pred_check_branch
    %224 = sbr.rel (0) target = $region21
  $region20: #{decoder_block_forward.5} parent=0 // pred_region
    _
  $region21: #{decoder_block_forward.5} parent=0 // pred_fallthru
    _

// kernel: decoder_block_forward.7
$region0: #{decoder_block_forward.7}
  #allocation0 [shape = 'u32[]', space=smem, size = 0x4, offset = 0x4, fixed_abs, tag = 'smem constant byte address 0x4 - core index']
  #allocation1 [shape = 'u32[144,128]{1,0:T(1,128)}', space=vmem, size = 0x12000, scoped, tag = 'internal scratch']
  %s0 = inlined_call_operand.vmem [shape: f32[512,128], index: 0, kind: input, shape index: {}]
  %s1 = inlined_call_operand.vmem [shape: f32[1,128], index: 1, kind: input, shape index: {}]
  %s2 = inlined_call_operand.vmem [shape: f32[1,128], index: 2, kind: input, shape index: {}]
  %s3 = inlined_call_operand.vmem [shape: f32[512,128], index: 3, kind: output, shape index: {}]
  %s4 = sld [smem:[#allocation0]]
  $region45: #{decoder_block_forward.7} parent=0
    _
  %s6 = ssub.s32 1, %s4
  %s7 = scalar_select 0, %s6, %s4
  loop: start=0, step=1, limit=4
  $region2: #{decoder_block_forward.7} parent=0 // loop_pre_header
    _
  $region3: #{decoder_block_forward.7} parent=0 // loop_header
    %s9 = sphi 0, %s13
    %p10 = scmp.ge.s32.totalorder %s9, 4
    %s19 = sphi 0, %s21
    %s22 = sphi 0, %s19
    %s23 = sphi 0, %s22
    %s39 = sphi 0, %s23
    %s43 = sphi 0, %s43
    %s45 = sphi 0, %s43
    %s46 = sphi 0, %s45
    %s60 = sphi 0, %s46
    %s64 = sphi 0, %s64
    %s66 = sphi 0, %s64
    %s67 = sphi 0, %s66
    %s81 = sphi 0, %s67
    %s87 = sphi 0, %s89
    %s90 = sphi 0, %s87
    %s91 = sphi 0, %s90
    %s107 = sphi 0, %s91
  $region4: #{decoder_block_forward.7} parent=0 // loop_header_branch
    %12 = sbr.rel (%p10) target = $region8
  $region5: #{decoder_block_forward.7} parent=0 // loop_body
    %s14 = ssub.s32 %s9, 1
    %s15 = ssub.s32 %s9, 2
    %s16 = sadd.s32 %s9, 1
    %s17 = ssub.s32 %s9, %s16
    %p18 = scmp.eq.s32.totalorder %s17, 0
    %s20 = sadd.s32 %s19, 1
    %s21 = scalar_select %p18, %s19, %s20
    %p24 = pneg %p18
    %p25 = scmp.eq.s32.totalorder %s9, 1
    %p26 = por %p24, %p25
    %p27 = scmp.ne.s32.totalorder %s19, %s22
    %p28 = scmp.eq.s32.totalorder %s9, 0
    %p29 = por %p27, %p28
    %p30 = scmp.ne.s32.totalorder %s19, %s22
    %p31 = scmp.eq.s32.totalorder %s14, 1
    %p32 = por %p30, %p31
    %p33 = scmp.ne.s32.totalorder %s22, %s23
    %p34 = scmp.eq.s32.totalorder %s14, 0
    %p35 = por %p33, %p34
    %p36 = scmp.ne.s32.totalorder %s22, %s23
    %p37 = scmp.eq.s32.totalorder %s15, 1
    %p38 = por %p36, %p37
    %p40 = scmp.ne.s32.totalorder %s23, %s39
    %p41 = scmp.eq.s32.totalorder %s15, 0
    %p42 = por %p40, %p41
    %s44 = sadd.s32 %s43, 1
    %p47 = scmp.eq.s32.totalorder %s9, 1
    %p48 = scmp.ne.s32.totalorder %s43, %s45
    %p49 = scmp.eq.s32.totalorder %s9, 0
    %p50 = por %p48, %p49
    %p51 = scmp.ne.s32.totalorder %s43, %s45
    %p52 = scmp.eq.s32.totalorder %s14, 1
    %p53 = por %p51, %p52
    %p54 = scmp.ne.s32.totalorder %s45, %s46
    %p55 = scmp.eq.s32.totalorder %s14, 0
    %p56 = por %p54, %p55
    %p57 = scmp.ne.s32.totalorder %s45, %s46
    %p58 = scmp.eq.s32.totalorder %s15, 1
    %p59 = por %p57, %p58
    %p61 = scmp.ne.s32.totalorder %s46, %s60
    %p62 = scmp.eq.s32.totalorder %s15, 0
    %p63 = por %p61, %p62
    %s65 = sadd.s32 %s64, 1
    %p68 = scmp.eq.s32.totalorder %s9, 1
    %p69 = scmp.ne.s32.totalorder %s64, %s66
    %p70 = scmp.eq.s32.totalorder %s9, 0
    %p71 = por %p69, %p70
    %p72 = scmp.ne.s32.totalorder %s64, %s66
    %p73 = scmp.eq.s32.totalorder %s14, 1
    %p74 = por %p72, %p73
    %p75 = scmp.ne.s32.totalorder %s66, %s67
    %p76 = scmp.eq.s32.totalorder %s14, 0
    %p77 = por %p75, %p76
    %p78 = scmp.ne.s32.totalorder %s66, %s67
    %p79 = scmp.eq.s32.totalorder %s15, 1
    %p80 = por %p78, %p79
    %p82 = scmp.ne.s32.totalorder %s67, %s81
    %p83 = scmp.eq.s32.totalorder %s15, 0
    %p84 = por %p82, %p83
    %s85 = ssub.s32 %s9, %s16
    %p86 = scmp.eq.s32.totalorder %s85, 0
    %s88 = sadd.s32 %s87, 1
    %s89 = scalar_select %p86, %s87, %s88
    %p92 = pneg %p86
    %p93 = scmp.eq.s32.totalorder %s9, 1
    %p94 = por %p92, %p93
    %p95 = scmp.ne.s32.totalorder %s87, %s90
    %p96 = scmp.eq.s32.totalorder %s9, 0
    %p97 = por %p95, %p96
    %p98 = scmp.ne.s32.totalorder %s87, %s90
    %p99 = scmp.eq.s32.totalorder %s14, 1
    %p100 = por %p98, %p99
    %p101 = scmp.ne.s32.totalorder %s90, %s91
    %p102 = scmp.eq.s32.totalorder %s14, 0
    %p103 = por %p101, %p102
    %p104 = scmp.ne.s32.totalorder %s90, %s91
    %p105 = scmp.eq.s32.totalorder %s15, 1
    %p106 = por %p104, %p105
    %p108 = scmp.ne.s32.totalorder %s91, %s107
    %p109 = scmp.eq.s32.totalorder %s15, 0
    %p110 = por %p108, %p109
    %p111 = scmp.le.s32.totalorder 1, %s9
    %p112 = scmp.lt.s32.totalorder %s9, 3
    %p113 = pnand %p111, %p112
    %p114 = pneg %p113
    // Predicated region
    $region9: #{decoder_block_forward.7} parent=5 // pred_check
      _
    $region10: #{decoder_block_forward.7} parent=5 // pred_check_branch
      %116 = sbr.rel (%p113) target = $region12
    $region11: #{decoder_block_forward.7} parent=5 // pred_region
      %s117 = ssub.s32 %s9, 1
      // Predicated region
      $region13: #{decoder_block_forward.7} parent=11 // pred_check
        %p118 = pneg %p56
      $region14: #{decoder_block_forward.7} parent=11 // pred_check_branch
        %120 = sbr.rel (%p118) target = $region16
      $region15: #{decoder_block_forward.7} parent=11 // pred_region
        _
      $region16: #{decoder_block_forward.7} parent=11 // pred_fallthru
        _
      // Predicated region
      $region17: #{decoder_block_forward.7} parent=11 // pred_check
        %p121 = pneg %p77
      $region18: #{decoder_block_forward.7} parent=11 // pred_check_branch
        %123 = sbr.rel (%p121) target = $region20
      $region19: #{decoder_block_forward.7} parent=11 // pred_region
        _
      $region20: #{decoder_block_forward.7} parent=11 // pred_fallthru
        _
    $region12: #{decoder_block_forward.7} parent=5 // pred_fallthru
      _
    %p124 = scmp.lt.s32.totalorder %s9, 2
    // Predicated region
    $region21: #{decoder_block_forward.7} parent=5 // pred_check
      %p125 = pneg %p124
    $region22: #{decoder_block_forward.7} parent=5 // pred_check_branch
      %127 = sbr.rel (%p125) target = $region24
    $region23: #{decoder_block_forward.7} parent=5 // pred_region
      // Predicated region
      $region25: #{decoder_block_forward.7} parent=23 // pred_check
        %p128 = pneg %p29
      $region26: #{decoder_block_forward.7} parent=23 // pred_check_branch
        %130 = sbr.rel (%p128) target = $region28
      $region27: #{decoder_block_forward.7} parent=23 // pred_region
        %s131 = smul.u32 32, %s9
        %p132 = scmp.lt.s32.totalorder %s131, 63
        %s133 = scalar_select %p132, %s131, 63
        %s134 = smul.addr %s133, 8
        %s135 = scalar_lea.vmem %s0, %s134
        %s136 = smul.u32 32, %s9
      $region28: #{decoder_block_forward.7} parent=23 // pred_fallthru
        _
    $region24: #{decoder_block_forward.7} parent=5 // pred_fallthru
      _
    %p137 = scmp.le.s32.totalorder 1, %s9
    %p138 = scmp.lt.s32.totalorder %s9, 3
    %p139 = pnand %p137, %p138
    %p140 = pneg %p139
    // Predicated region
    $region29: #{decoder_block_forward.7} parent=5 // pred_check
      _
    $region30: #{decoder_block_forward.7} parent=5 // pred_check_branch
      %142 = sbr.rel (%p139) target = $region32
    $region31: #{decoder_block_forward.7} parent=5 // pred_region
      %s143 = ssub.s32 %s9, 1
      %s144 = smul.u32 32, %s14
      %p145 = scmp.lt.s32.totalorder %s144, 63
      %s146 = scalar_select %p145, %s144, 63
      %s147 = smul.addr %s146, 8
      %s148 = scalar_lea.vmem %s0, %s147
      %p149 = pneg %p35
      %p150 = pneg %p32
      %p151 = pneg %p56
      %p152 = pneg %p53
      %p153 = pneg %p77
      %p154 = pneg %p74
      %p155 = pneg %p103
      %p156 = pneg %p100
      %s157 = smul.u32 32, %s14
      %p158 = scmp.lt.s32.totalorder %s157, 63
      %s159 = scalar_select %p158, %s157, 63
      %s160 = smul.addr %s159, 8
      %s161 = scalar_lea.vmem %s3, %s160
      %s162 = smul.u32 32, %s14
      %p163 = scmp.lt.s32.totalorder %s162, 63
      %s164 = scalar_select %p163, %s162, 63
      %s165 = smul.addr %s164, 8
      %s166 = scalar_lea.vmem %s0, %s165
      %s167 = smul.u32 32, %s14
      %s168 = smul.u32 32, %s14
      %p169 = scmp.lt.s32.totalorder %s168, 63
      %s170 = scalar_select %p169, %s168, 63
      %s171 = smul.addr %s170, 8
      %s172 = scalar_lea.vmem %s3, %s171
      %s173 = smul.u32 32, %s14
      %v174 = vld [vmem:[%s166] sm:$0xff]
      %v175 = vld [vmem:[%s166 + $0x8] sm:$0xff]
      %v176 = vld [vmem:[%s166 + $0x10] sm:$0xff]
      %v177 = vld [vmem:[%s166 + $0x18] sm:$0xff]
      %v178 = vld [vmem:[%s166 + $0x20] sm:$0xff]
      %v179 = vld [vmem:[%s166 + $0x28] sm:$0xff]
      %v180 = vld [vmem:[%s166 + $0x30] sm:$0xff]
      %v181 = vld [vmem:[%s166 + $0x38] sm:$0xff]
      %v182 = vld [vmem:[%s166 + $0x40] sm:$0xff]
      %v183 = vld [vmem:[%s166 + $0x48] sm:$0xff]
      %v184 = vld [vmem:[%s166 + $0x50] sm:$0xff]
      %v185 = vld [vmem:[%s166 + $0x58] sm:$0xff]
      %v186 = vld [vmem:[%s166 + $0x60] sm:$0xff]
      %v187 = vld [vmem:[%s166 + $0x68] sm:$0xff]
      %v188 = vld [vmem:[%s166 + $0x70] sm:$0xff]
      %v189 = vld [vmem:[%s166 + $0x78] sm:$0xff]
      %v190 = vld [vmem:[%s166 + $0x80] sm:$0xff]
      %v191 = vld [vmem:[%s166 + $0x88] sm:$0xff]
      %v192 = vld [vmem:[%s166 + $0x90] sm:$0xff]
      %v193 = vld [vmem:[%s166 + $0x98] sm:$0xff]
      %v194 = vld [vmem:[%s166 + $0xa0] sm:$0xff]
      %v195 = vld [vmem:[%s166 + $0xa8] sm:$0xff]
      %v196 = vld [vmem:[%s166 + $0xb0] sm:$0xff]
      %v197 = vld [vmem:[%s166 + $0xb8] sm:$0xff]
      %v198 = vld [vmem:[%s166 + $0xc0] sm:$0xff]
      %v199 = vld [vmem:[%s166 + $0xc8] sm:$0xff]
      %v200 = vld [vmem:[%s166 + $0xd0] sm:$0xff]
      %v201 = vld [vmem:[%s166 + $0xd8] sm:$0xff]
      %v202 = vld [vmem:[%s166 + $0xe0] sm:$0xff]
      %v203 = vld [vmem:[%s166 + $0xe8] sm:$0xff]
      %v204 = vld [vmem:[%s166 + $0xf0] sm:$0xff]
      %v205 = vld [vmem:[%s166 + $0xf8] sm:$0xff]
      %v206 = vld [vmem:[%s1] sm:$0x1]
      %v208 = vlaneseq
      %v209 = vshrl.u32 %v208, 7
      %v210 = vsub.s32 0, %v209
      %v211 = vrot.slane %v206, %v210
      %v213 = vmul.f32 %v174, %v211
      %v214 = vmul.f32 %v175, %v211
      %v215 = vmul.f32 %v176, %v211
      %v216 = vmul.f32 %v177, %v211
      %v217 = vmul.f32 %v178, %v211
      %v218 = vmul.f32 %v179, %v211
      %v219 = vmul.f32 %v180, %v211
      %v220 = vmul.f32 %v181, %v211
      %v221 = vmul.f32 %v182, %v211
      %v222 = vmul.f32 %v183, %v211
      %v223 = vmul.f32 %v184, %v211
      %v224 = vmul.f32 %v185, %v211
      %v225 = vmul.f32 %v186, %v211
      %v226 = vmul.f32 %v187, %v211
      %v227 = vmul.f32 %v188, %v211
      %v228 = vmul.f32 %v189, %v211
      %v229 = vmul.f32 %v190, %v211
      %v230 = vmul.f32 %v191, %v211
      %v231 = vmul.f32 %v192, %v211
      %v232 = vmul.f32 %v193, %v211
      %v233 = vmul.f32 %v194, %v211
      %v234 = vmul.f32 %v195, %v211
      %v235 = vmul.f32 %v196, %v211
      %v236 = vmul.f32 %v197, %v211
      %v237 = vmul.f32 %v198, %v211
      %v238 = vmul.f32 %v199, %v211
      %v239 = vmul.f32 %v200, %v211
      %v240 = vmul.f32 %v201, %v211
      %v241 = vmul.f32 %v202, %v211
      %v242 = vmul.f32 %v203, %v211
      %v243 = vmul.f32 %v204, %v211
      %v244 = vmul.f32 %v205, %v211
      %v245 = vld [vmem:[%s2] sm:$0x1]
      %v247 = vlaneseq
      %v248 = vshrl.u32 %v247, 7
      %v249 = vsub.s32 0, %v248
      %v250 = vrot.slane %v245, %v249
      %v252 = vadd.f32 %v213, %v250
      %v253 = vadd.f32 %v214, %v250
      %v254 = vadd.f32 %v215, %v250
      %v255 = vadd.f32 %v216, %v250
      %v256 = vadd.f32 %v217, %v250
      %v257 = vadd.f32 %v218, %v250
      %v258 = vadd.f32 %v219, %v250
      %v259 = vadd.f32 %v220, %v250
      %v260 = vadd.f32 %v221, %v250
      %v261 = vadd.f32 %v222, %v250
      %v262 = vadd.f32 %v223, %v250
      %v263 = vadd.f32 %v224, %v250
      %v264 = vadd.f32 %v225, %v250
      %v265 = vadd.f32 %v226, %v250
      %v266 = vadd.f32 %v227, %v250
      %v267 = vadd.f32 %v228, %v250
      %v268 = vadd.f32 %v229, %v250
      %v269 = vadd.f32 %v230, %v250
      %v270 = vadd.f32 %v231, %v250
      %v271 = vadd.f32 %v232, %v250
      %v272 = vadd.f32 %v233, %v250
      %v273 = vadd.f32 %v234, %v250
      %v274 = vadd.f32 %v235, %v250
      %v275 = vadd.f32 %v236, %v250
      %v276 = vadd.f32 %v237, %v250
      %v277 = vadd.f32 %v238, %v250
      %v278 = vadd.f32 %v239, %v250
      %v279 = vadd.f32 %v240, %v250
      %v280 = vadd.f32 %v241, %v250
      %v281 = vadd.f32 %v242, %v250
      %v282 = vadd.f32 %v243, %v250
      %v283 = vadd.f32 %v244, %v250
      %v284 = vmax.f32 %v252, 0.0
      %v285 = vmax.f32 %v253, 0.0
      %v286 = vmax.f32 %v254, 0.0
      %v287 = vmax.f32 %v255, 0.0
      %v288 = vmax.f32 %v256, 0.0
      %v289 = vmax.f32 %v257, 0.0
      %v290 = vmax.f32 %v258, 0.0
      %v291 = vmax.f32 %v259, 0.0
      %v292 = vmax.f32 %v260, 0.0
      %v293 = vmax.f32 %v261, 0.0
      %v294 = vmax.f32 %v262, 0.0
      %v295 = vmax.f32 %v263, 0.0
      %v296 = vmax.f32 %v264, 0.0
      %v297 = vmax.f32 %v265, 0.0
      %v298 = vmax.f32 %v266, 0.0
      %v299 = vmax.f32 %v267, 0.0
      %v300 = vmax.f32 %v268, 0.0
      %v301 = vmax.f32 %v269, 0.0
      %v302 = vmax.f32 %v270, 0.0
      %v303 = vmax.f32 %v271, 0.0
      %v304 = vmax.f32 %v272, 0.0
      %v305 = vmax.f32 %v273, 0.0
      %v306 = vmax.f32 %v274, 0.0
      %v307 = vmax.f32 %v275, 0.0
      %v308 = vmax.f32 %v276, 0.0
      %v309 = vmax.f32 %v277, 0.0
      %v310 = vmax.f32 %v278, 0.0
      %v311 = vmax.f32 %v279, 0.0
      %v312 = vmax.f32 %v280, 0.0
      %v313 = vmax.f32 %v281, 0.0
      %v314 = vmax.f32 %v282, 0.0
      %v315 = vmax.f32 %v283, 0.0
      %316 = vst [vmem:[%s172] sm:$0xff] %v284
      %317 = vst [vmem:[%s172 + $0x8] sm:$0xff] %v285
      %318 = vst [vmem:[%s172 + $0x10] sm:$0xff] %v286
      %319 = vst [vmem:[%s172 + $0x18] sm:$0xff] %v287
      %320 = vst [vmem:[%s172 + $0x20] sm:$0xff] %v288
      %321 = vst [vmem:[%s172 + $0x28] sm:$0xff] %v289
      %322 = vst [vmem:[%s172 + $0x30] sm:$0xff] %v290
      %323 = vst [vmem:[%s172 + $0x38] sm:$0xff] %v291
      %324 = vst [vmem:[%s172 + $0x40] sm:$0xff] %v292
      %325 = vst [vmem:[%s172 + $0x48] sm:$0xff] %v293
      %326 = vst [vmem:[%s172 + $0x50] sm:$0xff] %v294
      %327 = vst [vmem:[%s172 + $0x58] sm:$0xff] %v295
      %328 = vst [vmem:[%s172 + $0x60] sm:$0xff] %v296
      %329 = vst [vmem:[%s172 + $0x68] sm:$0xff] %v297
      %330 = vst [vmem:[%s172 + $0x70] sm:$0xff] %v298
      %331 = vst [vmem:[%s172 + $0x78] sm:$0xff] %v299
      %332 = vst [vmem:[%s172 + $0x80] sm:$0xff] %v300
      %333 = vst [vmem:[%s172 + $0x88] sm:$0xff] %v301
      %334 = vst [vmem:[%s172 + $0x90] sm:$0xff] %v302
      %335 = vst [vmem:[%s172 + $0x98] sm:$0xff] %v303
      %336 = vst [vmem:[%s172 + $0xa0] sm:$0xff] %v304
      %337 = vst [vmem:[%s172 + $0xa8] sm:$0xff] %v305
      %338 = vst [vmem:[%s172 + $0xb0] sm:$0xff] %v306
      %339 = vst [vmem:[%s172 + $0xb8] sm:$0xff] %v307
      %340 = vst [vmem:[%s172 + $0xc0] sm:$0xff] %v308
      %341 = vst [vmem:[%s172 + $0xc8] sm:$0xff] %v309
      %342 = vst [vmem:[%s172 + $0xd0] sm:$0xff] %v310
      %343 = vst [vmem:[%s172 + $0xd8] sm:$0xff] %v311
      %344 = vst [vmem:[%s172 + $0xe0] sm:$0xff] %v312
      %345 = vst [vmem:[%s172 + $0xe8] sm:$0xff] %v313
      %346 = vst [vmem:[%s172 + $0xf0] sm:$0xff] %v314
      %347 = vst [vmem:[%s172 + $0xf8] sm:$0xff] %v315
      %s348 = smul.u32 32, %s14
      %p349 = scmp.lt.s32.totalorder %s348, 63
      %s350 = scalar_select %p349, %s348, 63
      %s351 = smul.addr %s350, 8
      %s352 = scalar_lea.vmem %s3, %s351
      // Predicated region
      $region33: #{decoder_block_forward.7} parent=31 // pred_check
        %p353 = pneg %p100
      $region34: #{decoder_block_forward.7} parent=31 // pred_check_branch
        %355 = sbr.rel (%p353) target = $region36
      $region35: #{decoder_block_forward.7} parent=31 // pred_region
        %s356 = smul.u32 32, %s14
      $region36: #{decoder_block_forward.7} parent=31 // pred_fallthru
        _
    $region32: #{decoder_block_forward.7} parent=5 // pred_fallthru
      _
    %p357 = scmp.le.s32.totalorder 2, %s9
    // Predicated region
    $region37: #{decoder_block_forward.7} parent=5 // pred_check
      %p358 = pneg %p357
    $region38: #{decoder_block_forward.7} parent=5 // pred_check_branch
      %360 = sbr.rel (%p358) target = $region40
    $region39: #{decoder_block_forward.7} parent=5 // pred_region
      %s361 = ssub.s32 %s9, 2
      // Predicated region
      $region41: #{decoder_block_forward.7} parent=39 // pred_check
        %p362 = pneg %p106
      $region42: #{decoder_block_forward.7} parent=39 // pred_check_branch
        %364 = sbr.rel (%p362) target = $region44
      $region43: #{decoder_block_forward.7} parent=39 // pred_region
        %s365 = smul.u32 32, %s15
        %p366 = scmp.lt.s32.totalorder %s365, 63
        %s367 = scalar_select %p366, %s365, 63
        %s368 = smul.addr %s367, 8
        %s369 = scalar_lea.vmem %s3, %s368
      $region44: #{decoder_block_forward.7} parent=39 // pred_fallthru
        _
    $region40: #{decoder_block_forward.7} parent=5 // pred_fallthru
      _
  $region6: #{decoder_block_forward.7} parent=0 // loop_footer
    %s13 = sadd.s32 1, %s9
  $region7: #{decoder_block_forward.7} parent=0 // loop_footer_branch
    %8 = sbr.rel target = $region3
  $region8: #{decoder_block_forward.7} parent=0 // loop_exit
    _

// kernel: decoder_block_forward.6
$region0: #{decoder_block_forward.6}
  #allocation0 [shape = 'u32[]', space=smem, size = 0x4, offset = 0x4, fixed_abs, tag = 'smem constant byte address 0x4 - core index']
  #allocation1 [shape = 'u32[144,128]{1,0:T(1,128)}', space=vmem, size = 0x12000, scoped, tag = 'internal scratch']
  %s0 = inlined_call_operand.vmem [shape: f32[2,18,18,8], index: 0, kind: input, shape index: {}]
  %s1 = inlined_call_operand.vmem [shape: bf16[9,8,128], index: 1, kind: input, shape index: {}]
  %s2 = inlined_call_operand.vmem [shape: f32[512,128], index: 2, kind: output, shape index: {0}]
  %s3 = inlined_call_operand.vmem [shape: f32[16,128], index: 3, kind: output, shape index: {1}]
  %4 = xla_tuple %s2, %s3
  %s5 = sld [smem:[#allocation0]]
  $region49: #{decoder_block_forward.6} parent=0
    _
  %s7 = ssub.s32 1, %s5
  %s8 = scalar_select 0, %s7, %s5
  loop: start=0, step=1, limit=4
  $region2: #{decoder_block_forward.6} parent=0 // loop_pre_header
    _
  $region3: #{decoder_block_forward.6} parent=0 // loop_header
    %s10 = sphi 0, %s14
    %p11 = scmp.ge.s32.totalorder %s10, 4
    %s20 = sphi 0, %s22
    %s23 = sphi 0, %s20
    %s24 = sphi 0, %s23
    %s40 = sphi 0, %s24
    %s44 = sphi 0, %s44
    %s46 = sphi 0, %s44
    %s47 = sphi 0, %s46
    %s61 = sphi 0, %s47
    %s67 = sphi 0, %s69
    %s70 = sphi 0, %s67
    %s71 = sphi 0, %s70
    %s87 = sphi 0, %s71
    %s93 = sphi 0, %s95
    %s96 = sphi 0, %s93
    %s97 = sphi 0, %s96
    %s113 = sphi 0, %s97
  $region4: #{decoder_block_forward.6} parent=0 // loop_header_branch
    %13 = sbr.rel (%p11) target = $region8
  $region5: #{decoder_block_forward.6} parent=0 // loop_body
    %s15 = ssub.s32 %s10, 1
    %s16 = ssub.s32 %s10, 2
    %s17 = sadd.s32 %s10, 1
    %s18 = ssub.s32 %s10, %s17
    %p19 = scmp.eq.s32.totalorder %s18, 0
    %s21 = sadd.s32 %s20, 1
    %s22 = scalar_select %p19, %s20, %s21
    %p25 = pneg %p19
    %p26 = scmp.eq.s32.totalorder %s10, 1
    %p27 = por %p25, %p26
    %p28 = scmp.ne.s32.totalorder %s20, %s23
    %p29 = scmp.eq.s32.totalorder %s10, 0
    %p30 = por %p28, %p29
    %p31 = scmp.ne.s32.totalorder %s20, %s23
    %p32 = scmp.eq.s32.totalorder %s15, 1
    %p33 = por %p31, %p32
    %p34 = scmp.ne.s32.totalorder %s23, %s24
    %p35 = scmp.eq.s32.totalorder %s15, 0
    %p36 = por %p34, %p35
    %p37 = scmp.ne.s32.totalorder %s23, %s24
    %p38 = scmp.eq.s32.totalorder %s16, 1
    %p39 = por %p37, %p38
    %p41 = scmp.ne.s32.totalorder %s24, %s40
    %p42 = scmp.eq.s32.totalorder %s16, 0
    %p43 = por %p41, %p42
    %s45 = sadd.s32 %s44, 1
    %p48 = scmp.eq.s32.totalorder %s10, 1
    %p49 = scmp.ne.s32.totalorder %s44, %s46
    %p50 = scmp.eq.s32.totalorder %s10, 0
    %p51 = por %p49, %p50
    %p52 = scmp.ne.s32.totalorder %s44, %s46
    %p53 = scmp.eq.s32.totalorder %s15, 1
    %p54 = por %p52, %p53
    %p55 = scmp.ne.s32.totalorder %s46, %s47
    %p56 = scmp.eq.s32.totalorder %s15, 0
    %p57 = por %p55, %p56
    %p58 = scmp.ne.s32.totalorder %s46, %s47
    %p59 = scmp.eq.s32.totalorder %s16, 1
    %p60 = por %p58, %p59
    %p62 = scmp.ne.s32.totalorder %s47, %s61
    %p63 = scmp.eq.s32.totalorder %s16, 0
    %p64 = por %p62, %p63
    %s65 = ssub.s32 %s10, %s17
    %p66 = scmp.eq.s32.totalorder %s65, 0
    %s68 = sadd.s32 %s67, 1
    %s69 = scalar_select %p66, %s67, %s68
    %p72 = pneg %p66
    %p73 = scmp.eq.s32.totalorder %s10, 1
    %p74 = por %p72, %p73
    %p75 = scmp.ne.s32.totalorder %s67, %s70
    %p76 = scmp.eq.s32.totalorder %s10, 0
    %p77 = por %p75, %p76
    %p78 = scmp.ne.s32.totalorder %s67, %s70
    %p79 = scmp.eq.s32.totalorder %s15, 1
    %p80 = por %p78, %p79
    %p81 = scmp.ne.s32.totalorder %s70, %s71
    %p82 = scmp.eq.s32.totalorder %s15, 0
    %p83 = por %p81, %p82
    %p84 = scmp.ne.s32.totalorder %s70, %s71
    %p85 = scmp.eq.s32.totalorder %s16, 1
    %p86 = por %p84, %p85
    %p88 = scmp.ne.s32.totalorder %s71, %s87
    %p89 = scmp.eq.s32.totalorder %s16, 0
    %p90 = por %p88, %p89
    %s91 = ssub.s32 %s10, %s17
    %p92 = scmp.eq.s32.totalorder %s91, 0
    %s94 = sadd.s32 %s93, 1
    %s95 = scalar_select %p92, %s93, %s94
    %p98 = pneg %p92
    %p99 = scmp.eq.s32.totalorder %s10, 1
    %p100 = por %p98, %p99
    %p101 = scmp.ne.s32.totalorder %s93, %s96
    %p102 = scmp.eq.s32.totalorder %s10, 0
    %p103 = por %p101, %p102
    %p104 = scmp.ne.s32.totalorder %s93, %s96
    %p105 = scmp.eq.s32.totalorder %s15, 1
    %p106 = por %p104, %p105
    %p107 = scmp.ne.s32.totalorder %s96, %s97
    %p108 = scmp.eq.s32.totalorder %s15, 0
    %p109 = por %p107, %p108
    %p110 = scmp.ne.s32.totalorder %s96, %s97
    %p111 = scmp.eq.s32.totalorder %s16, 1
    %p112 = por %p110, %p111
    %p114 = scmp.ne.s32.totalorder %s97, %s113
    %p115 = scmp.eq.s32.totalorder %s16, 0
    %p116 = por %p114, %p115
    %p117 = scmp.le.s32.totalorder 1, %s10
    %p118 = scmp.lt.s32.totalorder %s10, 3
    %p119 = pnand %p117, %p118
    %p120 = pneg %p119
    // Predicated region
    $region9: #{decoder_block_forward.6} parent=5 // pred_check
      _
    $region10: #{decoder_block_forward.6} parent=5 // pred_check_branch
      %122 = sbr.rel (%p119) target = $region12
    $region11: #{decoder_block_forward.6} parent=5 // pred_region
      %s123 = ssub.s32 %s10, 1
      // Predicated region
      $region13: #{decoder_block_forward.6} parent=11 // pred_check
        %p124 = pneg %p57
      $region14: #{decoder_block_forward.6} parent=11 // pred_check_branch
        %126 = sbr.rel (%p124) target = $region16
      $region15: #{decoder_block_forward.6} parent=11 // pred_region
        _
      $region16: #{decoder_block_forward.6} parent=11 // pred_fallthru
        _
    $region12: #{decoder_block_forward.6} parent=5 // pred_fallthru
      _
    %p127 = scmp.lt.s32.totalorder %s10, 2
    // Predicated region
    $region17: #{decoder_block_forward.6} parent=5 // pred_check
      %p128 = pneg %p127
    $region18: #{decoder_block_forward.6} parent=5 // pred_check_branch
      %130 = sbr.rel (%p128) target = $region20
    $region19: #{decoder_block_forward.6} parent=5 // pred_region
      // Predicated region
      $region21: #{decoder_block_forward.6} parent=19 // pred_check
        %p131 = pneg %p30
      $region22: #{decoder_block_forward.6} parent=19 // pred_check_branch
        %133 = sbr.rel (%p131) target = $region24
      $region23: #{decoder_block_forward.6} parent=19 // pred_region
        %p134 = scmp.lt.s32.totalorder %s10, 1
        %s135 = scalar_select %p134, %s10, 1
        %s136 = smul.addr %s135, 54
        %s137 = smul.addr %s136, 8
        %s138 = scalar_lea.vmem %s0, %s137
      $region24: #{decoder_block_forward.6} parent=19 // pred_fallthru
        _
    $region20: #{decoder_block_forward.6} parent=5 // pred_fallthru
      _
    %p139 = scmp.le.s32.totalorder 1, %s10
    %p140 = scmp.lt.s32.totalorder %s10, 3
    %p141 = pnand %p139, %p140
    %p142 = pneg %p141
    // Predicated region
    $region25: #{decoder_block_forward.6} parent=5 // pred_check
      _
    $region26: #{decoder_block_forward.6} parent=5 // pred_check_branch
      %144 = sbr.rel (%p141) target = $region28
    $region27: #{decoder_block_forward.6} parent=5 // pred_region
      %s145 = ssub.s32 %s10, 1
      %p146 = scmp.lt.s32.totalorder %s15, 1
      %s147 = scalar_select %p146, %s15, 1
      %s148 = smul.addr %s147, 54
      %s149 = smul.addr %s148, 8
      %s150 = scalar_lea.vmem %s0, %s149
      %p151 = pneg %p36
      %p152 = pneg %p33
      %p153 = pneg %p57
      %p154 = pneg %p54
      %p155 = pneg %p83
      %p156 = pneg %p80
      %s157 = smul.u32 32, %s15
      %p158 = scmp.lt.s32.totalorder %s157, 63
      %s159 = scalar_select %p158, %s157, 63
      %s160 = smul.addr %s159, 8
      %s161 = scalar_lea.vmem %s2, %s160
      %p162 = pneg %p109
      %p163 = pneg %p106
      %p164 = scmp.lt.s32.totalorder %s15, 1
      %s165 = scalar_select %p164, %s15, 1
      %s166 = smul.addr %s165, 8
      %s167 = scalar_lea.vmem %s3, %s166
      %p168 = scmp.lt.s32.totalorder %s15, 1
      %s169 = scalar_select %p168, %s15, 1
      %s170 = smul.addr %s169, 54
      %s171 = smul.addr %s170, 8
      %s172 = scalar_lea.vmem %s0, %s171
      %s173 = smul.u32 32, %s15
      %p174 = scmp.lt.s32.totalorder %s173, 63
      %s175 = scalar_select %p174, %s173, 63
      %s176 = smul.addr %s175, 8
      %s177 = scalar_lea.vmem %s2, %s176
      %s178 = smul.u32 32, %s15
      %p179 = scmp.lt.s32.totalorder %s15, 1
      %s180 = scalar_select %p179, %s15, 1
      %s181 = smul.addr %s180, 8
      %s182 = scalar_lea.vmem %s3, %s181
      %184 = vst [vmem:[%s177] sm:$0xff] 0.0
      %185 = vst [vmem:[%s177 + $0x8] sm:$0xff] 0.0
      %186 = vst [vmem:[%s177 + $0x10] sm:$0xff] 0.0
      %187 = vst [vmem:[%s177 + $0x18] sm:$0xff] 0.0
      %188 = vst [vmem:[%s177 + $0x20] sm:$0xff] 0.0
      %189 = vst [vmem:[%s177 + $0x28] sm:$0xff] 0.0
      %190 = vst [vmem:[%s177 + $0x30] sm:$0xff] 0.0
      %191 = vst [vmem:[%s177 + $0x38] sm:$0xff] 0.0
      %192 = vst [vmem:[%s177 + $0x40] sm:$0xff] 0.0
      %193 = vst [vmem:[%s177 + $0x48] sm:$0xff] 0.0
      %194 = vst [vmem:[%s177 + $0x50] sm:$0xff] 0.0
      %195 = vst [vmem:[%s177 + $0x58] sm:$0xff] 0.0
      %196 = vst [vmem:[%s177 + $0x60] sm:$0xff] 0.0
      %197 = vst [vmem:[%s177 + $0x68] sm:$0xff] 0.0
      %198 = vst [vmem:[%s177 + $0x70] sm:$0xff] 0.0
      %199 = vst [vmem:[%s177 + $0x78] sm:$0xff] 0.0
      %200 = vst [vmem:[%s177 + $0x80] sm:$0xff] 0.0
      %201 = vst [vmem:[%s177 + $0x88] sm:$0xff] 0.0
      %202 = vst [vmem:[%s177 + $0x90] sm:$0xff] 0.0
      %203 = vst [vmem:[%s177 + $0x98] sm:$0xff] 0.0
      %204 = vst [vmem:[%s177 + $0xa0] sm:$0xff] 0.0
      %205 = vst [vmem:[%s177 + $0xa8] sm:$0xff] 0.0
      %206 = vst [vmem:[%s177 + $0xb0] sm:$0xff] 0.0
      %207 = vst [vmem:[%s177 + $0xb8] sm:$0xff] 0.0
      %208 = vst [vmem:[%s177 + $0xc0] sm:$0xff] 0.0
      %209 = vst [vmem:[%s177 + $0xc8] sm:$0xff] 0.0
      %210 = vst [vmem:[%s177 + $0xd0] sm:$0xff] 0.0
      %211 = vst [vmem:[%s177 + $0xd8] sm:$0xff] 0.0
      %212 = vst [vmem:[%s177 + $0xe0] sm:$0xff] 0.0
      %213 = vst [vmem:[%s177 + $0xe8] sm:$0xff] 0.0
      %214 = vst [vmem:[%s177 + $0xf0] sm:$0xff] 0.0
      %215 = vst [vmem:[%s177 + $0xf8] sm:$0xff] 0.0
      %v216 = vld [vmem:[%s172] sm:$0xff]
      %v217 = vld [vmem:[%s172 + $0x8] sm:$0xff]
      %v218 = vld [vmem:[%s172 + $0x18] sm:$0xff]
      %v219 = vld [vmem:[%s172 + $0x20] sm:$0xff]
      %v220 = vld [vmem:[%s172 + $0x30] sm:$0xff]
      %v221 = vld [vmem:[%s172 + $0x38] sm:$0xff]
      %v222 = vld [vmem:[%s172 + $0x48] sm:$0xff]
      %v223 = vld [vmem:[%s172 + $0x50] sm:$0xff]
      %v224 = vld [vmem:[%s172 + $0x60] sm:$0xff]
      %v225 = vld [vmem:[%s172 + $0x68] sm:$0xff]
      %v226 = vld [vmem:[%s172 + $0x78] sm:$0xff]
      %v227 = vld [vmem:[%s172 + $0x80] sm:$0xff]
      %v228 = vld [vmem:[%s172 + $0x90] sm:$0xff]
      %v229 = vld [vmem:[%s172 + $0x98] sm:$0xff]
      %v230 = vld [vmem:[%s172 + $0xa8] sm:$0xff]
      %v231 = vld [vmem:[%s172 + $0xb0] sm:$0xff]
      %v232 = vld [vmem:[%s172 + $0xc0] sm:$0xff]
      %v233 = vld [vmem:[%s172 + $0xc8] sm:$0xff]
      %v234 = vld [vmem:[%s172 + $0xd8] sm:$0xff]
      %v235 = vld [vmem:[%s172 + $0xe0] sm:$0xff]
      %v236 = vld [vmem:[%s172 + $0xf0] sm:$0xff]
      %v237 = vld [vmem:[%s172 + $0xf8] sm:$0xff]
      %v238 = vld [vmem:[%s172 + $0x108] sm:$0xff]
      %v239 = vld [vmem:[%s172 + $0x110] sm:$0xff]
      %v240 = vld [vmem:[%s172 + $0x120] sm:$0xff]
      %v241 = vld [vmem:[%s172 + $0x128] sm:$0xff]
      %v242 = vld [vmem:[%s172 + $0x138] sm:$0xff]
      %v243 = vld [vmem:[%s172 + $0x140] sm:$0xff]
      %v244 = vld [vmem:[%s172 + $0x150] sm:$0xff]
      %v245 = vld [vmem:[%s172 + $0x158] sm:$0xff]
      %v246 = vld [vmem:[%s172 + $0x168] sm:$0xff]
      %v247 = vld [vmem:[%s172 + $0x170] sm:$0xff]
      %v248 = vpack.c.bf16 %v217, %v216
      %v249 = vpack.c.bf16 %v219, %v218
      %v250 = vpack.c.bf16 %v221, %v220
      %v251 = vpack.c.bf16 %v223, %v222
      %v252 = vpack.c.bf16 %v225, %v224
      %v253 = vpack.c.bf16 %v227, %v226
      %v254 = vpack.c.bf16 %v229, %v228
      %v255 = vpack.c.bf16 %v231, %v230
      %v256 = vpack.c.bf16 %v233, %v232
      %v257 = vpack.c.bf16 %v235, %v234
      %v258 = vpack.c.bf16 %v237, %v236
      %v259 = vpack.c.bf16 %v239, %v238
      %v260 = vpack.c.bf16 %v241, %v240
      %v261 = vpack.c.bf16 %v243, %v242
      %v262 = vpack.c.bf16 %v245, %v244
      %v263 = vpack.c.bf16 %v247, %v246
      %v264 = vld [vmem:[%s177] sm:$0xff]
      %v265 = vld [vmem:[%s177 + $0x8] sm:$0xff]
      %v266 = vld [vmem:[%s177 + $0x10] sm:$0xff]
      %v267 = vld [vmem:[%s177 + $0x18] sm:$0xff]
      %v268 = vld [vmem:[%s177 + $0x20] sm:$0xff]
      %v269 = vld [vmem:[%s177 + $0x28] sm:$0xff]
      %v270 = vld [vmem:[%s177 + $0x30] sm:$0xff]
      %v271 = vld [vmem:[%s177 + $0x38] sm:$0xff]
      %v272 = vld [vmem:[%s177 + $0x40] sm:$0xff]
      %v273 = vld [vmem:[%s177 + $0x48] sm:$0xff]
      %v274 = vld [vmem:[%s177 + $0x50] sm:$0xff]
      %v275 = vld [vmem:[%s177 + $0x58] sm:$0xff]
      %v276 = vld [vmem:[%s177 + $0x60] sm:$0xff]
      %v277 = vld [vmem:[%s177 + $0x68] sm:$0xff]
      %v278 = vld [vmem:[%s177 + $0x70] sm:$0xff]
      %v279 = vld [vmem:[%s177 + $0x78] sm:$0xff]
      %v280 = vld [vmem:[%s177 + $0x80] sm:$0xff]
      %v281 = vld [vmem:[%s177 + $0x88] sm:$0xff]
      %v282 = vld [vmem:[%s177 + $0x90] sm:$0xff]
      %v283 = vld [vmem:[%s177 + $0x98] sm:$0xff]
      %v284 = vld [vmem:[%s177 + $0xa0] sm:$0xff]
      %v285 = vld [vmem:[%s177 + $0xa8] sm:$0xff]
      %v286 = vld [vmem:[%s177 + $0xb0] sm:$0xff]
      %v287 = vld [vmem:[%s177 + $0xb8] sm:$0xff]
      %v288 = vld [vmem:[%s177 + $0xc0] sm:$0xff]
      %v289 = vld [vmem:[%s177 + $0xc8] sm:$0xff]
      %v290 = vld [vmem:[%s177 + $0xd0] sm:$0xff]
      %v291 = vld [vmem:[%s177 + $0xd8] sm:$0xff]
      %v292 = vld [vmem:[%s177 + $0xe0] sm:$0xff]
      %v293 = vld [vmem:[%s177 + $0xe8] sm:$0xff]
      %v294 = vld [vmem:[%s177 + $0xf0] sm:$0xff]
      %v295 = vld [vmem:[%s177 + $0xf8] sm:$0xff]
      %v296 = vld [vmem:[%s1] sm:$0xf]
      %vm297 = vcmask 64512
      %v299 = vsel %vm297, %v248, 0
      %v302 = vsel %vm297, %v249, 0
      %v305 = vsel %vm297, %v250, 0
      %v308 = vsel %vm297, %v251, 0
      %v311 = vsel %vm297, %v252, 0
      %v314 = vsel %vm297, %v253, 0
      %v317 = vsel %vm297, %v254, 0
      %v320 = vsel %vm297, %v255, 0
      %v323 = vsel %vm297, %v256, 0
      %v326 = vsel %vm297, %v257, 0
      %v329 = vsel %vm297, %v258, 0
      %v332 = vsel %vm297, %v259, 0
      %v335 = vsel %vm297, %v260, 0
      %v338 = vsel %vm297, %v261, 0
      %v341 = vsel %vm297, %v262, 0
      %v344 = vsel %vm297, %v263, 0
      %vm346 = vcmask 1043456
      %v348 = vsel %vm346, %v296, 0
      %350 = vmatprep.subr.bf16.mxu0 0
      %351 = vmatpush1.bf16.msra.mxu0 %v348
      %352 = vmatprep.subr.bf16.mxu0 0
      %353 = vmatpush1.bf16.msra.mxu0 0
      %354 = vmatprep.subr.bf16.mxu0 0
      %355 = vmatpush1.bf16.msra.mxu0 0
      %356 = vmatprep.subr.bf16.mxu0 0
      %357 = vmatpush1.bf16.msra.mxu0 0
      %358 = vmatprep.subr.bf16.mxu0 0
      %359 = vmatpush1.bf16.msra.mxu0 0
      %360 = vmatprep.subr.bf16.mxu0 0
      %361 = vmatpush1.bf16.msra.mxu0 0
      %362 = vmatprep.subr.bf16.mxu0 0
      %363 = vmatpush1.bf16.msra.mxu0 0
      %364 = vmatprep.subr.bf16.mxu0 0
      %365 = vmatpush1.bf16.msra.mxu0 0
      %366 = vmatprep.subr.bf16.mxu0 0
      %367 = vmatpush1.bf16.msra.mxu0 0
      %368 = vmatprep.subr.bf16.mxu0 0
      %369 = vmatpush1.bf16.msra.mxu0 0
      %370 = vmatprep.subr.bf16.mxu0 0
      %371 = vmatpush1.bf16.msra.mxu0 0
      %372 = vmatprep.subr.bf16.mxu0 0
      %373 = vmatpush1.bf16.msra.mxu0 0
      %374 = vmatprep.subr.bf16.mxu0 0
      %375 = vmatpush1.bf16.msra.mxu0 0
      %376 = vmatprep.subr.bf16.mxu0 0
      %377 = vmatpush1.bf16.msra.mxu0 0
      %378 = vmatprep.subr.bf16.mxu0 0
      %379 = vmatpush1.bf16.msra.mxu0 0
      %380 = vmatprep.subr.bf16.mxu0 0
      %381 = vmatpush1.bf16.msra.mxu0 0
      %382 = vmatprep.mubr.bf16.mxu0 0
      %383 = vmatmul.mubr.bf16.gmra.mrb[0].mxu0 %v299
      %v384 = vpop.f32.mrb[0].mxu0
      %v385 = vadd.f32 0.0, %v384
      %v386 = vpop.f32.mrb[0].mxu0
      %v387 = vpop.f32.mrb[0].mxu0
      %v388 = vadd.f32 0.0, %v387
      %v389 = vpop.f32.mrb[0].mxu0
      %390 = vmatprep.mubr.bf16.mxu0 0
      %391 = vmatmul.mubr.bf16.gmra.mrb[0].mxu0 %v302
      %v392 = vpop.f32.mrb[0].mxu0
      %v393 = vadd.f32 0.0, %v392
      %v394 = vpop.f32.mrb[0].mxu0
      %v395 = vpop.f32.mrb[0].mxu0
      %v396 = vadd.f32 0.0, %v395
      %v397 = vpop.f32.mrb[0].mxu0
      %398 = vmatprep.mubr.bf16.mxu0 0
      %399 = vmatmul.mubr.bf16.gmra.mrb[0].mxu0 %v305
      %v400 = vpop.f32.mrb[0].mxu0
      %v401 = vadd.f32 0.0, %v400
      %v402 = vpop.f32.mrb[0].mxu0
      %v403 = vpop.f32.mrb[0].mxu0
      %v404 = vadd.f32 0.0, %v403
      %v405 = vpop.f32.mrb[0].mxu0
      %406 = vmatprep.mubr.bf16.mxu0 0
      %407 = vmatmul.mubr.bf16.gmra.mrb[0].mxu0 %v308
      %v408 = vpop.f32.mrb[0].mxu0
      %v409 = vadd.f32 0.0, %v408
      %v410 = vpop.f32.mrb[0].mxu0
      %v411 = vpop.f32.mrb[0].mxu0
      %v412 = vadd.f32 0.0, %v411
      %v413 = vpop.f32.mrb[0].mxu0
      %414 = vmatprep.mubr.bf16.mxu0 0
      %415 = vmatmul.mubr.bf16.gmra.mrb[0].mxu0 %v311
      %v416 = vpop.f32.mrb[0].mxu0
      %v417 = vadd.f32 0.0, %v416
      %v418 = vpop.f32.mrb[0].mxu0
      %v419 = vpop.f32.mrb[0].mxu0
      %v420 = vadd.f32 0.0, %v419
      %v421 = vpop.f32.mrb[0].mxu0
      %422 = vmatprep.mubr.bf16.mxu0 0
      %423 = vmatmul.mubr.bf16.gmra.mrb[0].mxu0 %v314
      %v424 = vpop.f32.mrb[0].mxu0
      %v425 = vadd.f32 0.0, %v424
      %v426 = vpop.f32.mrb[0].mxu0
      %v427 = vpop.f32.mrb[0].mxu0
      %v428 = vadd.f32 0.0, %v427
      %v429 = vpop.f32.mrb[0].mxu0
      %430 = vmatprep.mubr.bf16.mxu0 0
      %431 = vmatmul.mubr.bf16.gmra.mrb[0].mxu0 %v317
      %v432 = vpop.f32.mrb[0].mxu0
      %v433 = vadd.f32 0.0, %v432
      %v434 = vpop.f32.mrb[0].mxu0
      %v435 = vpop.f32.mrb[0].mxu0
      %v436 = vadd.f32 0.0, %v435
      %v437 = vpop.f32.mrb[0].mxu0
      %438 = vmatprep.mubr.bf16.mxu0 0
      %439 = vmatmul.mubr.bf16.gmra.mrb[0].mxu0 %v320
      %v440 = vpop.f32.mrb[0].mxu0
      %v441 = vadd.f32 0.0, %v440
      %v442 = vpop.f32.mrb[0].mxu0
      %v443 = vpop.f32.mrb[0].mxu0
      %v444 = vadd.f32 0.0, %v443
      %v445 = vpop.f32.mrb[0].mxu0
      %446 = vmatprep.mubr.bf16.mxu0 0
      %447 = vmatmul.mubr.bf16.gmra.mrb[0].mxu0 %v323
      %v448 = vpop.f32.mrb[0].mxu0
      %v449 = vadd.f32 0.0, %v448
      %v450 = vpop.f32.mrb[0].mxu0
      %v451 = vpop.f32.mrb[0].mxu0
      %v452 = vadd.f32 0.0, %v451
      %v453 = vpop.f32.mrb[0].mxu0
      %454 = vmatprep.mubr.bf16.mxu0 0
      %455 = vmatmul.mubr.bf16.gmra.mrb[0].mxu0 %v326
      %v456 = vpop.f32.mrb[0].mxu0
      %v457 = vadd.f32 0.0, %v456
      %v458 = vpop.f32.mrb[0].mxu0
      %v459 = vpop.f32.mrb[0].mxu0
      %v460 = vadd.f32 0.0, %v459
      %v461 = vpop.f32.mrb[0].mxu0
      %462 = vmatprep.mubr.bf16.mxu0 0
      %463 = vmatmul.mubr.bf16.gmra.mrb[0].mxu0 %v329
      %v464 = vpop.f32.mrb[0].mxu0
      %v465 = vadd.f32 0.0, %v464
      %v466 = vpop.f32.mrb[0].mxu0
      %v467 = vpop.f32.mrb[0].mxu0
      %v468 = vadd.f32 0.0, %v467
      %v469 = vpop.f32.mrb[0].mxu0
      %470 = vmatprep.mubr.bf16.mxu0 0
      %471 = vmatmul.mubr.bf16.gmra.mrb[0].mxu0 %v332
      %v472 = vpop.f32.mrb[0].mxu0
      %v473 = vadd.f32 0.0, %v472
      %v474 = vpop.f32.mrb[0].mxu0
      %v475 = vpop.f32.mrb[0].mxu0
      %v476 = vadd.f32 0.0, %v475
      %v477 = vpop.f32.mrb[0].mxu0
      %478 = vmatprep.mubr.bf16.mxu0 0
      %479 = vmatmul.mubr.bf16.gmra.mrb[0].mxu0 %v335
      %v480 = vpop.f32.mrb[0].mxu0
      %v481 = vadd.f32 0.0, %v480
      %v482 = vpop.f32.mrb[0].mxu0
      %v483 = vpop.f32.mrb[0].mxu0
      %v484 = vadd.f32 0.0, %v483
      %v485 = vpop.f32.mrb[0].mxu0
      %486 = vmatprep.mubr.bf16.mxu0 0
      %487 = vmatmul.mubr.bf16.gmra.mrb[0].mxu0 %v338
      %v488 = vpop.f32.mrb[0].mxu0
      %v489 = vadd.f32 0.0, %v488
      %v490 = vpop.f32.mrb[0].mxu0
      %v491 = vpop.f32.mrb[0].mxu0
      %v492 = vadd.f32 0.0, %v491
      %v493 = vpop.f32.mrb[0].mxu0
      %494 = vmatprep.mubr.bf16.mxu0 0
      %495 = vmatmul.mubr.bf16.gmra.mrb[0].mxu0 %v341
      %v496 = vpop.f32.mrb[0].mxu0
      %v497 = vadd.f32 0.0, %v496
      %v498 = vpop.f32.mrb[0].mxu0
      %v499 = vpop.f32.mrb[0].mxu0
      %v500 = vadd.f32 0.0, %v499
      %v501 = vpop.f32.mrb[0].mxu0
      %502 = vmatprep.mubr.bf16.mxu0 0
      %503 = vmatmul.mubr.bf16.gmra.mrb[0].mxu0 %v344
      %v504 = vpop.f32.mrb[0].mxu0
      %v505 = vadd.f32 0.0, %v504
      %v506 = vpop.f32.mrb[0].mxu0
      %v507 = vpop.f32.mrb[0].mxu0
      %v508 = vadd.f32 0.0, %v507
      %v509 = vpop.f32.mrb[0].mxu0
      %510 = vdwg.mxu0
      %v511 = vadd.f32 %v264, %v385
      %v512 = vadd.f32 %v265, %v388
      %v513 = vadd.f32 %v266, %v393
      %v514 = vadd.f32 %v267, %v396
      %v515 = vadd.f32 %v268, %v401
      %v516 = vadd.f32 %v269, %v404
      %v517 = vadd.f32 %v270, %v409
      %v518 = vadd.f32 %v271, %v412
      %v519 = vadd.f32 %v272, %v417
      %v520 = vadd.f32 %v273, %v420
      %v521 = vadd.f32 %v274, %v425
      %v522 = vadd.f32 %v275, %v428
      %v523 = vadd.f32 %v276, %v433
      %v524 = vadd.f32 %v277, %v436
      %v525 = vadd.f32 %v278, %v441
      %v526 = vadd.f32 %v279, %v444
      %v527 = vadd.f32 %v280, %v449
      %v528 = vadd.f32 %v281, %v452
      %v529 = vadd.f32 %v282, %v457
      %v530 = vadd.f32 %v283, %v460
      %v531 = vadd.f32 %v284, %v465
      %v532 = vadd.f32 %v285, %v468
      %v533 = vadd.f32 %v286, %v473
      %v534 = vadd.f32 %v287, %v476
      %v535 = vadd.f32 %v288, %v481
      %v536 = vadd.f32 %v289, %v484
      %v537 = vadd.f32 %v290, %v489
      %v538 = vadd.f32 %v291, %v492
      %v539 = vadd.f32 %v292, %v497
      %v540 = vadd.f32 %v293, %v500
      %v541 = vadd.f32 %v294, %v505
      %v542 = vadd.f32 %v295, %v508
      %543 = vst [vmem:[%s177] sm:$0xff] %v511
      %544 = vst [vmem:[%s177 + $0x8] sm:$0xff] %v512
      %545 = vst [vmem:[%s177 + $0x10] sm:$0xff] %v513
      %546 = vst [vmem:[%s177 + $0x18] sm:$0xff] %v514
      %547 = vst [vmem:[%s177 + $0x20] sm:$0xff] %v515
      %548 = vst [vmem:[%s177 + $0x28] sm:$0xff] %v516
      %549 = vst [vmem:[%s177 + $0x30] sm:$0xff] %v517
      %550 = vst [vmem:[%s177 + $0x38] sm:$0xff] %v518
      %551 = vst [vmem:[%s177 + $0x40] sm:$0xff] %v519
      %552 = vst [vmem:[%s177 + $0x48] sm:$0xff] %v520
      %553 = vst [vmem:[%s177 + $0x50] sm:$0xff] %v521
      %554 = vst [vmem:[%s177 + $0x58] sm:$0xff] %v522
      %555 = vst [vmem:[%s177 + $0x60] sm:$0xff] %v523
      %556 = vst [vmem:[%s177 + $0x68] sm:$0xff] %v524
      %557 = vst [vmem:[%s177 + $0x70] sm:$0xff] %v525
      %558 = vst [vmem:[%s177 + $0x78] sm:$0xff] %v526
      %559 = vst [vmem:[%s177 + $0x80] sm:$0xff] %v527
      %560 = vst [vmem:[%s177 + $0x88] sm:$0xff] %v528
      %561 = vst [vmem:[%s177 + $0x90] sm:$0xff] %v529
      %562 = vst [vmem:[%s177 + $0x98] sm:$0xff] %v530
      %563 = vst [vmem:[%s177 + $0xa0] sm:$0xff] %v531
      %564 = vst [vmem:[%s177 + $0xa8] sm:$0xff] %v532
      %565 = vst [vmem:[%s177 + $0xb0] sm:$0xff] %v533
      %566 = vst [vmem:[%s177 + $0xb8] sm:$0xff] %v534
      %567 = vst [vmem:[%s177 + $0xc0] sm:$0xff] %v535
      %568 = vst [vmem:[%s177 + $0xc8] sm:$0xff] %v536
      %569 = vst [vmem:[%s177 + $0xd0] sm:$0xff] %v537
      %570 = vst [vmem:[%s177 + $0xd8] sm:$0xff] %v538
      %571 = vst [vmem:[%s177 + $0xe0] sm:$0xff] %v539
      %572 = vst [vmem:[%s177 + $0xe8] sm:$0xff] %v540
      %573 = vst [vmem:[%s177 + $0xf0] sm:$0xff] %v541
      %574 = vst [vmem:[%s177 + $0xf8] sm:$0xff] %v542
      %v575 = vld [vmem:[%s172 + $0x1] sm:$0xff]
      %v576 = vld [vmem:[%s172 + $0x9] sm:$0xff]
      %v577 = vld [vmem:[%s172 + $0x19] sm:$0xff]
      %v578 = vld [vmem:[%s172 + $0x21] sm:$0xff]
      %v579 = vld [vmem:[%s172 + $0x31] sm:$0xff]
      %v580 = vld [vmem:[%s172 + $0x39] sm:$0xff]
      %v581 = vld [vmem:[%s172 + $0x49] sm:$0xff]
      %v582 = vld [vmem:[%s172 + $0x51] sm:$0xff]
      %v583 = vld [vmem:[%s172 + $0x61] sm:$0xff]
      %v584 = vld [vmem:[%s172 + $0x69] sm:$0xff]
      %v585 = vld [vmem:[%s172 + $0x79] sm:$0xff]
      %v586 = vld [vmem:[%s172 + $0x81] sm:$0xff]
      %v587 = vld [vmem:[%s172 + $0x91] sm:$0xff]
      %v588 = vld [vmem:[%s172 + $0x99] sm:$0xff]
      %v589 = vld [vmem:[%s172 + $0xa9] sm:$0xff]
      %v590 = vld [vmem:[%s172 + $0xb1] sm:$0xff]
      %v591 = vld [vmem:[%s172 + $0xc1] sm:$0xff]
      %v592 = vld [vmem:[%s172 + $0xc9] sm:$0xff]
      %v593 = vld [vmem:[%s172 + $0xd9] sm:$0xff]
      %v594 = vld [vmem:[%s172 + $0xe1] sm:$0xff]
      %v595 = vld [vmem:[%s172 + $0xf1] sm:$0xff]
      %v596 = vld [vmem:[%s172 + $0xf9] sm:$0xff]
      %v597 = vld [vmem:[%s172 + $0x109] sm:$0xff]
      %v598 = vld [vmem:[%s172 + $0x111] sm:$0xff]
      %v599 = vld [vmem:[%s172 + $0x121] sm:$0xff]
      %v600 = vld [vmem:[%s172 + $0x129] sm:$0xff]
      %v601 = vld [vmem:[%s172 + $0x139] sm:$0xff]
      %v602 = vld [vmem:[%s172 + $0x141] sm:$0xff]
      %v603 = vld [vmem:[%s172 + $0x151] sm:$0xff]
      %v604 = vld [vmem:[%s172 + $0x159] sm:$0xff]
      %v605 = vld [vmem:[%s172 + $0x169] sm:$0xff]
      %v606 = vld [vmem:[%s172 + $0x171] sm:$0xff]
      %v607 = vpack.c.bf16 %v576, %v575
      %v608 = vpack.c.bf16 %v578, %v577
      %v609 = vpack.c.bf16 %v580, %v579
      %v610 = vpack.c.bf16 %v582, %v581
      %v611 = vpack.c.bf16 %v584, %v583
      %v612 = vpack.c.bf16 %v586, %v585
      %v613 = vpack.c.bf16 %v588, %v587
      %v614 = vpack.c.bf16 %v590, %v589
      %v615 = vpack.c.bf16 %v592, %v591
      %v616 = vpack.c.bf16 %v594, %v593
      %v617 = vpack.c.bf16 %v596, %v595
      %v618 = vpack.c.bf16 %v598, %v597
      %v619 = vpack.c.bf16 %v600, %v599
      %v620 = vpack.c.bf16 %v602, %v601
      %v621 = vpack.c.bf16 %v604, %v603
      %v622 = vpack.c.bf16 %v606, %v605
      %v623 = vld [vmem:[%s177] sm:$0xff]
      %v624 = vld [vmem:[%s177 + $0x8] sm:$0xff]
      %v625 = vld [vmem:[%s177 + $0x10] sm:$0xff]
      %v626 = vld [vmem:[%s177 + $0x18] sm:$0xff]
      %v627 = vld [vmem:[%s177 + $0x20] sm:$0xff]
      %v628 = vld [vmem:[%s177 + $0x28] sm:$0xff]
      %v629 = vld [vmem:[%s177 + $0x30] sm:$0xff]
      %v630 = vld [vmem:[%s177 + $0x38] sm:$0xff]
      %v631 = vld [vmem:[%s177 + $0x40] sm:$0xff]
      %v632 = vld [vmem:[%s177 + $0x48] sm:$0xff]
      %v633 = vld [vmem:[%s177 + $0x50] sm:$0xff]
      %v634 = vld [vmem:[%s177 + $0x58] sm:$0xff]
      %v635 = vld [vmem:[%s177 + $0x60] sm:$0xff]
      %v636 = vld [vmem:[%s177 + $0x68] sm:$0xff]
      %v637 = vld [vmem:[%s177 + $0x70] sm:$0xff]
      %v638 = vld [vmem:[%s177 + $0x78] sm:$0xff]
      %v639 = vld [vmem:[%s177 + $0x80] sm:$0xff]
      %v640 = vld [vmem:[%s177 + $0x88] sm:$0xff]
      %v641 = vld [vmem:[%s177 + $0x90] sm:$0xff]
      %v642 = vld [vmem:[%s177 + $0x98] sm:$0xff]
      %v643 = vld [vmem:[%s177 + $0xa0] sm:$0xff]
      %v644 = vld [vmem:[%s177 + $0xa8] sm:$0xff]
      %v645 = vld [vmem:[%s177 + $0xb0] sm:$0xff]
      %v646 = vld [vmem:[%s177 + $0xb8] sm:$0xff]
      %v647 = vld [vmem:[%s177 + $0xc0] sm:$0xff]
      %v648 = vld [vmem:[%s177 + $0xc8] sm:$0xff]
      %v649 = vld [vmem:[%s177 + $0xd0] sm:$0xff]
      %v650 = vld [vmem:[%s177 + $0xd8] sm:$0xff]
      %v651 = vld [vmem:[%s177 + $0xe0] sm:$0xff]
      %v652 = vld [vmem:[%s177 + $0xe8] sm:$0xff]
      %v653 = vld [vmem:[%s177 + $0xf0] sm:$0xff]
      %v654 = vld [vmem:[%s177 + $0xf8] sm:$0xff]
      %s655 = scalar_lea.vmem %s1, 4
      %v656 = vld [vmem:[%s655] sm:$0xf]
      %v658 = vsel %vm297, %v607, 0
      %v661 = vsel %vm297, %v608, 0
      %v664 = vsel %vm297, %v609, 0
      %v667 = vsel %vm297, %v610, 0
      %v670 = vsel %vm297, %v611, 0
      %v673 = vsel %vm297, %v612, 0
      %v676 = vsel %vm297, %v613, 0
      %v679 = vsel %vm297, %v614, 0
      %v682 = vsel %vm297, %v615, 0
      %v685 = vsel %vm297, %v616, 0
      %v688 = vsel %vm297, %v617, 0
      %v691 = vsel %vm297, %v618, 0
      %v694 = vsel %vm297, %v619, 0
      %v697 = vsel %vm297, %v620, 0
      %v700 = vsel %vm297, %v621, 0
      %v703 = vsel %vm297, %v622, 0
      %v706 = vsel %vm346, %v656, 0
      %708 = vmatprep.subr.bf16.mxu0 0
      %709 = vmatpush1.bf16.msra.mxu0 %v706
      %710 = vmatprep.subr.bf16.mxu0 0
      %711 = vmatpush1.bf16.msra.mxu0 0
      %712 = vmatprep.subr.bf16.mxu0 0
      %713 = vmatpush1.bf16.msra.mxu0 0
      %714 = vmatprep.subr.bf16.mxu0 0
      %715 = vmatpush1.bf16.msra.mxu0 0
      %716 = vmatprep.subr.bf16.mxu0 0
      %717 = vmatpush1.bf16.msra.mxu0 0
      %718 = vmatprep.subr.bf16.mxu0 0
      %719 = vmatpush1.bf16.msra.mxu0 0
      %720 = vmatprep.subr.bf16.mxu0 0
      %721 = vmatpush1.bf16.msra.mxu0 0
      %722 = vmatprep.subr.bf16.mxu0 0
      %723 = vmatpush1.bf16.msra.mxu0 0
      %724 = vmatprep.subr.bf16.mxu0 0
      %725 = vmatpush1.bf16.msra.mxu0 0
      %726 = vmatprep.subr.bf16.mxu0 0
      %727 = vmatpush1.bf16.msra.mxu0 0
      %728 = vmatprep.subr.bf16.mxu0 0
      %729 = vmatpush1.bf16.msra.mxu0 0
      %730 = vmatprep.subr.bf16.mxu0 0
      %731 = vmatpush1.bf16.msra.mxu0 0
      %732 = vmatprep.subr.bf16.mxu0 0
      %733 = vmatpush1.bf16.msra.mxu0 0
      %734 = vmatprep.subr.bf16.mxu0 0
      %735 = vmatpush1.bf16.msra.mxu0 0
      %736 = vmatprep.subr.bf16.mxu0 0
      %737 = vmatpush1.bf16.msra.mxu0 0
      %738 = vmatprep.subr.bf16.mxu0 0
      %739 = vmatpush1.bf16.msra.mxu0 0
      %740 = vmatprep.mubr.bf16.mxu0 0
      %741 = vmatmul.mubr.bf16.gmra.mrb[0].mxu0 %v658
      %v742 = vpop.f32.mrb[0].mxu0
      %v743 = vadd.f32 0.0, %v742
      %v744 = vpop.f32.mrb[0].mxu0
      %v745 = vpop.f32.mrb[0].mxu0
      %v746 = vadd.f32 0.0, %v745
      %v747 = vpop.f32.mrb[0].mxu0
      %748 = vmatprep.mubr.bf16.mxu0 0
      %749 = vmatmul.mubr.bf16.gmra.mrb[0].mxu0 %v661
      %v750 = vpop.f32.mrb[0].mxu0
      %v751 = vadd.f32 0.0, %v750
      %v752 = vpop.f32.mrb[0].mxu0
      %v753 = vpop.f32.mrb[0].mxu0
      %v754 = vadd.f32 0.0, %v753
      %v755 = vpop.f32.mrb[0].mxu0
      %756 = vmatprep.mubr.bf16.mxu0 0
      %757 = vmatmul.mubr.bf16.gmra.mrb[0].mxu0 %v664
      %v758 = vpop.f32.mrb[0].mxu0
      %v759 = vadd.f32 0.0, %v758
      %v760 = vpop.f32.mrb[0].mxu0
      %v761 = vpop.f32.mrb[0].mxu0
      %v762 = vadd.f32 0.0, %v761
      %v763 = vpop.f32.mrb[0].mxu0
      %764 = vmatprep.mubr.bf16.mxu0 0
      %765 = vmatmul.mubr.bf16.gmra.mrb[0].mxu0 %v667
      %v766 = vpop.f32.mrb[0].mxu0
      %v767 = vadd.f32 0.0, %v766
      %v768 = vpop.f32.mrb[0].mxu0
      %v769 = vpop.f32.mrb[0].mxu0
      %v770 = vadd.f32 0.0, %v769
      %v771 = vpop.f32.mrb[0].mxu0
      %772 = vmatprep.mubr.bf16.mxu0 0
      %773 = vmatmul.mubr.bf16.gmra.mrb[0].mxu0 %v670
      %v774 = vpop.f32.mrb[0].mxu0
      %v775 = vadd.f32 0.0, %v774
      %v776 = vpop.f32.mrb[0].mxu0
      %v777 = vpop.f32.mrb[0].mxu0
      %v778 = vadd.f32 0.0, %v777
      %v779 = vpop.f32.mrb[0].mxu0
      %780 = vmatprep.mubr.bf16.mxu0 0
      %781 = vmatmul.mubr.bf16.gmra.mrb[0].mxu0 %v673
      %v782 = vpop.f32.mrb[0].mxu0
      %v783 = vadd.f32 0.0, %v782
      %v784 = vpop.f32.mrb[0].mxu0
      %v785 = vpop.f32.mrb[0].mxu0
      %v786 = vadd.f32 0.0, %v785
      %v787 = vpop.f32.mrb[0].mxu0
      %788 = vmatprep.mubr.bf16.mxu0 0
      %789 = vmatmul.mubr.bf16.gmra.mrb[0].mxu0 %v676
      %v790 = vpop.f32.mrb[0].mxu0
      %v791 = vadd.f32 0.0, %v790
      %v792 = vpop.f32.mrb[0].mxu0
      %v793 = vpop.f32.mrb[0].mxu0
      %v794 = vadd.f32 0.0, %v793
      %v795 = vpop.f32.mrb[0].mxu0
      %796 = vmatprep.mubr.bf16.mxu0 0
      %797 = vmatmul.mubr.bf16.gmra.mrb[0].mxu0 %v679
      %v798 = vpop.f32.mrb[0].mxu0
      %v799 = vadd.f32 0.0, %v798
      %v800 = vpop.f32.mrb[0].mxu0
      %v801 = vpop.f32.mrb[0].mxu0
      %v802 = vadd.f32 0.0, %v801
      %v803 = vpop.f32.mrb[0].mxu0
      %804 = vmatprep.mubr.bf16.mxu0 0
      %805 = vmatmul.mubr.bf16.gmra.mrb[0].mxu0 %v682
      %v806 = vpop.f32.mrb[0].mxu0
      %v807 = vadd.f32 0.0, %v806
      %v808 = vpop.f32.mrb[0].mxu0
      %v809 = vpop.f32.mrb[0].mxu0
      %v810 = vadd.f32 0.0, %v809
      %v811 = vpop.f32.mrb[0].mxu0
      %812 = vmatprep.mubr.bf16.mxu0 0
      %813 = vmatmul.mubr.bf16.gmra.mrb[0].mxu0 %v685
      %v814 = vpop.f32.mrb[0].mxu0
      %v815 = vadd.f32 0.0, %v814
      %v816 = vpop.f32.mrb[0].mxu0
      %v817 = vpop.f32.mrb[0].mxu0
      %v818 = vadd.f32 0.0, %v817
      %v819 = vpop.f32.mrb[0].mxu0
      %820 = vmatprep.mubr.bf16.mxu0 0
      %821 = vmatmul.mubr.bf16.gmra.mrb[0].mxu0 %v688
      %v822 = vpop.f32.mrb[0].mxu0
      %v823 = vadd.f32 0.0, %v822
      %v824 = vpop.f32.mrb[0].mxu0
      %v825 = vpop.f32.mrb[0].mxu0
      %v826 = vadd.f32 0.0, %v825
      %v827 = vpop.f32.mrb[0].mxu0
      %828 = vmatprep.mubr.bf16.mxu0 0
      %829 = vmatmul.mubr.bf16.gmra.mrb[0].mxu0 %v691
      %v830 = vpop.f32.mrb[0].mxu0
      %v831 = vadd.f32 0.0, %v830
      %v832 = vpop.f32.mrb[0].mxu0
      %v833 = vpop.f32.mrb[0].mxu0
      %v834 = vadd.f32 0.0, %v833
      %v835 = vpop.f32.mrb[0].mxu0
      %836 = vmatprep.mubr.bf16.mxu0 0
      %837 = vmatmul.mubr.bf16.gmra.mrb[0].mxu0 %v694
      %v838 = vpop.f32.mrb[0].mxu0
      %v839 = vadd.f32 0.0, %v838
      %v840 = vpop.f32.mrb[0].mxu0
      %v841 = vpop.f32.mrb[0].mxu0
      %v842 = vadd.f32 0.0, %v841
      %v843 = vpop.f32.mrb[0].mxu0
      %844 = vmatprep.mubr.bf16.mxu0 0
      %845 = vmatmul.mubr.bf16.gmra.mrb[0].mxu0 %v697
      %v846 = vpop.f32.mrb[0].mxu0
      %v847 = vadd.f32 0.0, %v846
      %v848 = vpop.f32.mrb[0].mxu0
      %v849 = vpop.f32.mrb[0].mxu0
      %v850 = vadd.f32 0.0, %v849
      %v851 = vpop.f32.mrb[0].mxu0
      %852 = vmatprep.mubr.bf16.mxu0 0
      %853 = vmatmul.mubr.bf16.gmra.mrb[0].mxu0 %v700
      %v854 = vpop.f32.mrb[0].mxu0
      %v855 = vadd.f32 0.0, %v854
      %v856 = vpop.f32.mrb[0].mxu0
      %v857 = vpop.f32.mrb[0].mxu0
      %v858 = vadd.f32 0.0, %v857
      %v859 = vpop.f32.mrb[0].mxu0
      %860 = vmatprep.mubr.bf16.mxu0 0
      %861 = vmatmul.mubr.bf16.gmra.mrb[0].mxu0 %v703
      %v862 = vpop.f32.mrb[0].mxu0
      %v863 = vadd.f32 0.0, %v862
      %v864 = vpop.f32.mrb[0].mxu0
      %v865 = vpop.f32.mrb[0].mxu0
      %v866 = vadd.f32 0.0, %v865
      %v867 = vpop.f32.mrb[0].mxu0
      %868 = vdwg.mxu0
      %v869 = vadd.f32 %v623, %v743
      %v870 = vadd.f32 %v624, %v746
      %v871 = vadd.f32 %v625, %v751
      %v872 = vadd.f32 %v626, %v754
      %v873 = vadd.f32 %v627, %v759
      %v874 = vadd.f32 %v628, %v762
      %v875 = vadd.f32 %v629, %v767
      %v876 = vadd.f32 %v630, %v770
      %v877 = vadd.f32 %v631, %v775
      %v878 = vadd.f32 %v632, %v778
      %v879 = vadd.f32 %v633, %v783
      %v880 = vadd.f32 %v634, %v786
      %v881 = vadd.f32 %v635, %v791
      %v882 = vadd.f32 %v636, %v794
      %v883 = vadd.f32 %v637, %v799
      %v884 = vadd.f32 %v638, %v802
      %v885 = vadd.f32 %v639, %v807
      %v886 = vadd.f32 %v640, %v810
      %v887 = vadd.f32 %v641, %v815
      %v888 = vadd.f32 %v642, %v818
      %v889 = vadd.f32 %v643, %v823
      %v890 = vadd.f32 %v644, %v826
      %v891 = vadd.f32 %v645, %v831
      %v892 = vadd.f32 %v646, %v834
      %v893 = vadd.f32 %v647, %v839
      %v894 = vadd.f32 %v648, %v842
      %v895 = vadd.f32 %v649, %v847
      %v896 = vadd.f32 %v650, %v850
      %v897 = vadd.f32 %v651, %v855
      %v898 = vadd.f32 %v652, %v858
      %v899 = vadd.f32 %v653, %v863
      %v900 = vadd.f32 %v654, %v866
      %901 = vst [vmem:[%s177] sm:$0xff] %v869
      %902 = vst [vmem:[%s177 + $0x8] sm:$0xff] %v870
      %903 = vst [vmem:[%s177 + $0x10] sm:$0xff] %v871
      %904 = vst [vmem:[%s177 + $0x18] sm:$0xff] %v872
      %905 = vst [vmem:[%s177 + $0x20] sm:$0xff] %v873
      %906 = vst [vmem:[%s177 + $0x28] sm:$0xff] %v874
      %907 = vst [vmem:[%s177 + $0x30] sm:$0xff] %v875
      %908 = vst [vmem:[%s177 + $0x38] sm:$0xff] %v876
      %909 = vst [vmem:[%s177 + $0x40] sm:$0xff] %v877
      %910 = vst [vmem:[%s177 + $0x48] sm:$0xff] %v878
      %911 = vst [vmem:[%s177 + $0x50] sm:$0xff] %v879
      %912 = vst [vmem:[%s177 + $0x58] sm:$0xff] %v880
      %913 = vst [vmem:[%s177 + $0x60] sm:$0xff] %v881
      %914 = vst [vmem:[%s177 + $0x68] sm:$0xff] %v882
      %915 = vst [vmem:[%s177 + $0x70] sm:$0xff] %v883
      %916 = vst [vmem:[%s177 + $0x78] sm:$0xff] %v884
      %917 = vst [vmem:[%s177 + $0x80] sm:$0xff] %v885
      %918 = vst [vmem:[%s177 + $0x88] sm:$0xff] %v886
      %919 = vst [vmem:[%s177 + $0x90] sm:$0xff] %v887
      %920 = vst [vmem:[%s177 + $0x98] sm:$0xff] %v888
      %921 = vst [vmem:[%s177 + $0xa0] sm:$0xff] %v889
      %922 = vst [vmem:[%s177 + $0xa8] sm:$0xff] %v890
      %923 = vst [vmem:[%s177 + $0xb0] sm:$0xff] %v891
      %924 = vst [vmem:[%s177 + $0xb8] sm:$0xff] %v892
      %925 = vst [vmem:[%s177 + $0xc0] sm:$0xff] %v893
      %926 = vst [vmem:[%s177 + $0xc8] sm:$0xff] %v894
      %927 = vst [vmem:[%s177 + $0xd0] sm:$0xff] %v895
      %928 = vst [vmem:[%s177 + $0xd8] sm:$0xff] %v896
      %929 = vst [vmem:[%s177 + $0xe0] sm:$0xff] %v897
      %930 = vst [vmem:[%s177 + $0xe8] sm:$0xff] %v898
      %931 = vst [vmem:[%s177 + $0xf0] sm:$0xff] %v899
      %932 = vst [vmem:[%s177 + $0xf8] sm:$0xff] %v900
      %v933 = vld [vmem:[%s172 + $0x2] sm:$0xff]
      %v934 = vld [vmem:[%s172 + $0xa] sm:$0xff]
      %v935 = vld [vmem:[%s172 + $0x1a] sm:$0xff]
      %v936 = vld [vmem:[%s172 + $0x22] sm:$0xff]
      %v937 = vld [vmem:[%s172 + $0x32] sm:$0xff]
      %v938 = vld [vmem:[%s172 + $0x3a] sm:$0xff]
      %v939 = vld [vmem:[%s172 + $0x4a] sm:$0xff]
      %v940 = vld [vmem:[%s172 + $0x52] sm:$0xff]
      %v941 = vld [vmem:[%s172 + $0x62] sm:$0xff]
      %v942 = vld [vmem:[%s172 + $0x6a] sm:$0xff]
      %v943 = vld [vmem:[%s172 + $0x7a] sm:$0xff]
      %v944 = vld [vmem:[%s172 + $0x82] sm:$0xff]
      %v945 = vld [vmem:[%s172 + $0x92] sm:$0xff]
      %v946 = vld [vmem:[%s172 + $0x9a] sm:$0xff]
      %v947 = vld [vmem:[%s172 + $0xaa] sm:$0xff]
      %v948 = vld [vmem:[%s172 + $0xb2] sm:$0xff]
      %v949 = vld [vmem:[%s172 + $0xc2] sm:$0xff]
      %v950 = vld [vmem:[%s172 + $0xca] sm:$0xff]
      %v951 = vld [vmem:[%s172 + $0xda] sm:$0xff]
      %v952 = vld [vmem:[%s172 + $0xe2] sm:$0xff]
      %v953 = vld [vmem:[%s172 + $0xf2] sm:$0xff]
      %v954 = vld [vmem:[%s172 + $0xfa] sm:$0xff]
      %v955 = vld [vmem:[%s172 + $0x10a] sm:$0xff]
      %v956 = vld [vmem:[%s172 + $0x112] sm:$0xff]
      %v957 = vld [vmem:[%s172 + $0x122] sm:$0xff]
      %v958 = vld [vmem:[%s172 + $0x12a] sm:$0xff]
      %v959 = vld [vmem:[%s172 + $0x13a] sm:$0xff]
      %v960 = vld [vmem:[%s172 + $0x142] sm:$0xff]
      %v961 = vld [vmem:[%s172 + $0x152] sm:$0xff]
      %v962 = vld [vmem:[%s172 + $0x15a] sm:$0xff]
      %v963 = vld [vmem:[%s172 + $0x16a] sm:$0xff]
      %v964 = vld [vmem:[%s172 + $0x172] sm:$0xff]
      %v965 = vpack.c.bf16 %v934, %v933
      %v966 = vpack.c.bf16 %v936, %v935
      %v967 = vpack.c.bf16 %v938, %v937
      %v968 = vpack.c.bf16 %v940, %v939
      %v969 = vpack.c.bf16 %v942, %v941
      %v970 = vpack.c.bf16 %v944, %v943
      %v971 = vpack.c.bf16 %v946, %v945
      %v972 = vpack.c.bf16 %v948, %v947
      %v973 = vpack.c.bf16 %v950, %v949
      %v974 = vpack.c.bf16 %v952, %v951
      %v975 = vpack.c.bf16 %v954, %v953
      %v976 = vpack.c.bf16 %v956, %v955
      %v977 = vpack.c.bf16 %v958, %v957
      %v978 = vpack.c.bf16 %v960, %v959
      %v979 = vpack.c.bf16 %v962, %v961
      %v980 = vpack.c.bf16 %v964, %v963
      %v981 = vld [vmem:[%s177] sm:$0xff]
      %v982 = vld [vmem:[%s177 + $0x8] sm:$0xff]
      %v983 = vld [vmem:[%s177 + $0x10] sm:$0xff]
      %v984 = vld [vmem:[%s177 + $0x18] sm:$0xff]
      %v985 = vld [vmem:[%s177 + $0x20] sm:$0xff]
      %v986 = vld [vmem:[%s177 + $0x28] sm:$0xff]
      %v987 = vld [vmem:[%s177 + $0x30] sm:$0xff]
      %v988 = vld [vmem:[%s177 + $0x38] sm:$0xff]
      %v989 = vld [vmem:[%s177 + $0x40] sm:$0xff]
      %v990 = vld [vmem:[%s177 + $0x48] sm:$0xff]
      %v991 = vld [vmem:[%s177 + $0x50] sm:$0xff]
      %v992 = vld [vmem:[%s177 + $0x58] sm:$0xff]
      %v993 = vld [vmem:[%s177 + $0x60] sm:$0xff]
      %v994 = vld [vmem:[%s177 + $0x68] sm:$0xff]
      %v995 = vld [vmem:[%s177 + $0x70] sm:$0xff]
      %v996 = vld [vmem:[%s177 + $0x78] sm:$0xff]
      %v997 = vld [vmem:[%s177 + $0x80] sm:$0xff]
      %v998 = vld [vmem:[%s177 + $0x88] sm:$0xff]
      %v999 = vld [vmem:[%s177 + $0x90] sm:$0xff]
      %v1000 = vld [vmem:[%s177 + $0x98] sm:$0xff]
      %v1001 = vld [vmem:[%s177 + $0xa0] sm:$0xff]
      %v1002 = vld [vmem:[%s177 + $0xa8] sm:$0xff]
      %v1003 = vld [vmem:[%s177 + $0xb0] sm:$0xff]
      %v1004 = vld [vmem:[%s177 + $0xb8] sm:$0xff]
      %v1005 = vld [vmem:[%s177 + $0xc0] sm:$0xff]
      %v1006 = vld [vmem:[%s177 + $0xc8] sm:$0xff]
      %v1007 = vld [vmem:[%s177 + $0xd0] sm:$0xff]
      %v1008 = vld [vmem:[%s177 + $0xd8] sm:$0xff]
      %v1009 = vld [vmem:[%s177 + $0xe0] sm:$0xff]
      %v1010 = vld [vmem:[%s177 + $0xe8] sm:$0xff]
      %v1011 = vld [vmem:[%s177 + $0xf0] sm:$0xff]
      %v1012 = vld [vmem:[%s177 + $0xf8] sm:$0xff]
      %s1013 = scalar_lea.vmem %s1, 8
      %v1014 = vld [vmem:[%s1013] sm:$0xf]
      %v1016 = vsel %vm297, %v965, 0
      %v1019 = vsel %vm297, %v966, 0
      %v1022 = vsel %vm297, %v967, 0
      %v1025 = vsel %vm297, %v968, 0
      %v1028 = vsel %vm297, %v969, 0
      %v1031 = vsel %vm297, %v970, 0
      %v1034 = vsel %vm297, %v971, 0
      %v1037 = vsel %vm297, %v972, 0
      %v1040 = vsel %vm297, %v973, 0
      %v1043 = vsel %vm297, %v974, 0
      %v1046 = vsel %vm297, %v975, 0
      %v1049 = vsel %vm297, %v976, 0
      %v1052 = vsel %vm297, %v977, 0
      %v1055 = vsel %vm297, %v978, 0
      %v1058 = vsel %vm297, %v979, 0
      %v1061 = vsel %vm297, %v980, 0
      %v1064 = vsel %vm346, %v1014, 0
      %1066 = vmatprep.subr.bf16.mxu0 0
      %1067 = vmatpush1.bf16.msra.mxu0 %v1064
      %1068 = vmatprep.subr.bf16.mxu0 0
      %1069 = vmatpush1.bf16.msra.mxu0 0
      %1070 = vmatprep.subr.bf16.mxu0 0
      %1071 = vmatpush1.bf16.msra.mxu0 0
      %1072 = vmatprep.subr.bf16.mxu0 0
      %1073 = vmatpush1.bf16.msra.mxu0 0
      %1074 = vmatprep.subr.bf16.mxu0 0
      %1075 = vmatpush1.bf16.msra.mxu0 0
      %1076 = vmatprep.subr.bf16.mxu0 0
      %1077 = vmatpush1.bf16.msra.mxu0 0
      %1078 = vmatprep.subr.bf16.mxu0 0
      %1079 = vmatpush1.bf16.msra.mxu0 0
      %1080 = vmatprep.subr.bf16.mxu0 0
      %1081 = vmatpush1.bf16.msra.mxu0 0
      %1082 = vmatprep.subr.bf16.mxu0 0
      %1083 = vmatpush1.bf16.msra.mxu0 0
      %1084 = vmatprep.subr.bf16.mxu0 0
      %1085 = vmatpush1.bf16.msra.mxu0 0
      %1086 = vmatprep.subr.bf16.mxu0 0
      %1087 = vmatpush1.bf16.msra.mxu0 0
      %1088 = vmatprep.subr.bf16.mxu0 0
      %1089 = vmatpush1.bf16.msra.mxu0 0
      %1090 = vmatprep.subr.bf16.mxu0 0
      %1091 = vmatpush1.bf16.msra.mxu0 0
      %1092 = vmatprep.subr.bf16.mxu0 0
      %1093 = vmatpush1.bf16.msra.mxu0 0
      %1094 = vmatprep.subr.bf16.mxu0 0
      %1095 = vmatpush1.bf16.msra.mxu0 0
      %1096 = vmatprep.subr.bf16.mxu0 0
      %1097 = vmatpush1.bf16.msra.mxu0 0
      %1098 = vmatprep.mubr.bf16.mxu0 0
      %1099 = vmatmul.mubr.bf16.gmra.mrb[0].mxu0 %v1016
      %v1100 = vpop.f32.mrb[0].mxu0
      %v1101 = vadd.f32 0.0, %v1100
      %v1102 = vpop.f32.mrb[0].mxu0
      %v1103 = vpop.f32.mrb[0].mxu0
      %v1104 = vadd.f32 0.0, %v1103
      %v1105 = vpop.f32.mrb[0].mxu0
      %1106 = vmatprep.mubr.bf16.mxu0 0
      %1107 = vmatmul.mubr.bf16.gmra.mrb[0].mxu0 %v1019
      %v1108 = vpop.f32.mrb[0].mxu0
      %v1109 = vadd.f32 0.0, %v1108
      %v1110 = vpop.f32.mrb[0].mxu0
      %v1111 = vpop.f32.mrb[0].mxu0
      %v1112 = vadd.f32 0.0, %v1111
      %v1113 = vpop.f32.mrb[0].mxu0
      %1114 = vmatprep.mubr.bf16.mxu0 0
      %1115 = vmatmul.mubr.bf16.gmra.mrb[0].mxu0 %v1022
      %v1116 = vpop.f32.mrb[0].mxu0
      %v1117 = vadd.f32 0.0, %v1116
      %v1118 = vpop.f32.mrb[0].mxu0
      %v1119 = vpop.f32.mrb[0].mxu0
      %v1120 = vadd.f32 0.0, %v1119
      %v1121 = vpop.f32.mrb[0].mxu0
      %1122 = vmatprep.mubr.bf16.mxu0 0
      %1123 = vmatmul.mubr.bf16.gmra.mrb[0].mxu0 %v1025
      %v1124 = vpop.f32.mrb[0].mxu0
      %v1125 = vadd.f32 0.0, %v1124
      %v1126 = vpop.f32.mrb[0].mxu0
      %v1127 = vpop.f32.mrb[0].mxu0
      %v1128 = vadd.f32 0.0, %v1127
      %v1129 = vpop.f32.mrb[0].mxu0
      %1130 = vmatprep.mubr.bf16.mxu0 0
      %1131 = vmatmul.mubr.bf16.gmra.mrb[0].mxu0 %v1028
      %v1132 = vpop.f32.mrb[0].mxu0
      %v1133 = vadd.f32 0.0, %v1132
      %v1134 = vpop.f32.mrb[0].mxu0
      %v1135 = vpop.f32.mrb[0].mxu0
      %v1136 = vadd.f32 0.0, %v1135
      %v1137 = vpop.f32.mrb[0].mxu0
      %1138 = vmatprep.mubr.bf16.mxu0 0
      %1139 = vmatmul.mubr.bf16.gmra.mrb[0].mxu0 %v1031
      %v1140 = vpop.f32.mrb[0].mxu0
      %v1141 = vadd.f32 0.0, %v1140
      %v1142 = vpop.f32.mrb[0].mxu0
      %v1143 = vpop.f32.mrb[0].mxu0
      %v1144 = vadd.f32 0.0, %v1143
      %v1145 = vpop.f32.mrb[0].mxu0
      %1146 = vmatprep.mubr.bf16.mxu0 0
      %1147 = vmatmul.mubr.bf16.gmra.mrb[0].mxu0 %v1034
      %v1148 = vpop.f32.mrb[0].mxu0
      %v1149 = vadd.f32 0.0, %v1148
      %v1150 = vpop.f32.mrb[0].mxu0
      %v1151 = vpop.f32.mrb[0].mxu0
      %v1152 = vadd.f32 0.0, %v1151
      %v1153 = vpop.f32.mrb[0].mxu0
      %1154 = vmatprep.mubr.bf16.mxu0 0
      %1155 = vmatmul.mubr.bf16.gmra.mrb[0].mxu0 %v1037
      %v1156 = vpop.f32.mrb[0].mxu0
      %v1157 = vadd.f32 0.0, %v1156
      %v1158 = vpop.f32.mrb[0].mxu0
      %v1159 = vpop.f32.mrb[0].mxu0
      %v1160 = vadd.f32 0.0, %v1159
      %v1161 = vpop.f32.mrb[0].mxu0
      %1162 = vmatprep.mubr.bf16.mxu0 0
      %1163 = vmatmul.mubr.bf16.gmra.mrb[0].mxu0 %v1040
      %v1164 = vpop.f32.mrb[0].mxu0
      %v1165 = vadd.f32 0.0, %v1164
      %v1166 = vpop.f32.mrb[0].mxu0
      %v1167 = vpop.f32.mrb[0].mxu0
      %v1168 = vadd.f32 0.0, %v1167
      %v1169 = vpop.f32.mrb[0].mxu0
      %1170 = vmatprep.mubr.bf16.mxu0 0
      %1171 = vmatmul.mubr.bf16.gmra.mrb[0].mxu0 %v1043
      %v1172 = vpop.f32.mrb[0].mxu0
      %v1173 = vadd.f32 0.0, %v1172
      %v1174 = vpop.f32.mrb[0].mxu0
      %v1175 = vpop.f32.mrb[0].mxu0
      %v1176 = vadd.f32 0.0, %v1175
      %v1177 = vpop.f32.mrb[0].mxu0
      %1178 = vmatprep.mubr.bf16.mxu0 0
      %1179 = vmatmul.mubr.bf16.gmra.mrb[0].mxu0 %v1046
      %v1180 = vpop.f32.mrb[0].mxu0
      %v1181 = vadd.f32 0.0, %v1180
      %v1182 = vpop.f32.mrb[0].mxu0
      %v1183 = vpop.f32.mrb[0].mxu0
      %v1184 = vadd.f32 0.0, %v1183
      %v1185 = vpop.f32.mrb[0].mxu0
      %1186 = vmatprep.mubr.bf16.mxu0 0
      %1187 = vmatmul.mubr.bf16.gmra.mrb[0].mxu0 %v1049
      %v1188 = vpop.f32.mrb[0].mxu0
      %v1189 = vadd.f32 0.0, %v1188
      %v1190 = vpop.f32.mrb[0].mxu0
      %v1191 = vpop.f32.mrb[0].mxu0
      %v1192 = vadd.f32 0.0, %v1191
      %v1193 = vpop.f32.mrb[0].mxu0
      %1194 = vmatprep.mubr.bf16.mxu0 0
      %1195 = vmatmul.mubr.bf16.gmra.mrb[0].mxu0 %v1052
      %v1196 = vpop.f32.mrb[0].mxu0
      %v1197 = vadd.f32 0.0, %v1196
      %v1198 = vpop.f32.mrb[0].mxu0
      %v1199 = vpop.f32.mrb[0].mxu0
      %v1200 = vadd.f32 0.0, %v1199
      %v1201 = vpop.f32.mrb[0].mxu0
      %1202 = vmatprep.mubr.bf16.mxu0 0
      %1203 = vmatmul.mubr.bf16.gmra.mrb[0].mxu0 %v1055
      %v1204 = vpop.f32.mrb[0].mxu0
      %v1205 = vadd.f32 0.0, %v1204
      %v1206 = vpop.f32.mrb[0].mxu0
      %v1207 = vpop.f32.mrb[0].mxu0
      %v1208 = vadd.f32 0.0, %v1207
      %v1209 = vpop.f32.mrb[0].mxu0
      %1210 = vmatprep.mubr.bf16.mxu0 0
      %1211 = vmatmul.mubr.bf16.gmra.mrb[0].mxu0 %v1058
      %v1212 = vpop.f32.mrb[0].mxu0
      %v1213 = vadd.f32 0.0, %v1212
      %v1214 = vpop.f32.mrb[0].mxu0
      %v1215 = vpop.f32.mrb[0].mxu0
      %v1216 = vadd.f32 0.0, %v1215
      %v1217 = vpop.f32.mrb[0].mxu0
      %1218 = vmatprep.mubr.bf16.mxu0 0
      %1219 = vmatmul.mubr.bf16.gmra.mrb[0].mxu0 %v1061
      %v1220 = vpop.f32.mrb[0].mxu0
      %v1221 = vadd.f32 0.0, %v1220
      %v1222 = vpop.f32.mrb[0].mxu0
      %v1223 = vpop.f32.mrb[0].mxu0
      %v1224 = vadd.f32 0.0, %v1223
      %v1225 = vpop.f32.mrb[0].mxu0
      %1226 = vdwg.mxu0
      %v1227 = vadd.f32 %v981, %v1101
      %v1228 = vadd.f32 %v982, %v1104
      %v1229 = vadd.f32 %v983, %v1109
      %v1230 = vadd.f32 %v984, %v1112
      %v1231 = vadd.f32 %v985, %v1117
      %v1232 = vadd.f32 %v986, %v1120
      %v1233 = vadd.f32 %v987, %v1125
      %v1234 = vadd.f32 %v988, %v1128
      %v1235 = vadd.f32 %v989, %v1133
      %v1236 = vadd.f32 %v990, %v1136
      %v1237 = vadd.f32 %v991, %v1141
      %v1238 = vadd.f32 %v992, %v1144
      %v1239 = vadd.f32 %v993, %v1149
      %v1240 = vadd.f32 %v994, %v1152
      %v1241 = vadd.f32 %v995, %v1157
      %v1242 = vadd.f32 %v996, %v1160
      %v1243 = vadd.f32 %v997, %v1165
      %v1244 = vadd.f32 %v998, %v1168
      %v1245 = vadd.f32 %v999, %v1173
      %v1246 = vadd.f32 %v1000, %v1176
      %v1247 = vadd.f32 %v1001, %v1181
      %v1248 = vadd.f32 %v1002, %v1184
      %v1249 = vadd.f32 %v1003, %v1189
      %v1250 = vadd.f32 %v1004, %v1192
      %v1251 = vadd.f32 %v1005, %v1197
      %v1252 = vadd.f32 %v1006, %v1200
      %v1253 = vadd.f32 %v1007, %v1205
      %v1254 = vadd.f32 %v1008, %v1208
      %v1255 = vadd.f32 %v1009, %v1213
      %v1256 = vadd.f32 %v1010, %v1216
      %v1257 = vadd.f32 %v1011, %v1221
      %v1258 = vadd.f32 %v1012, %v1224
      %1259 = vst [vmem:[%s177] sm:$0xff] %v1227
      %1260 = vst [vmem:[%s177 + $0x8] sm:$0xff] %v1228
      %1261 = vst [vmem:[%s177 + $0x10] sm:$0xff] %v1229
      %1262 = vst [vmem:[%s177 + $0x18] sm:$0xff] %v1230
      %1263 = vst [vmem:[%s177 + $0x20] sm:$0xff] %v1231
      %1264 = vst [vmem:[%s177 + $0x28] sm:$0xff] %v1232
      %1265 = vst [vmem:[%s177 + $0x30] sm:$0xff] %v1233
      %1266 = vst [vmem:[%s177 + $0x38] sm:$0xff] %v1234
      %1267 = vst [vmem:[%s177 + $0x40] sm:$0xff] %v1235
      %1268 = vst [vmem:[%s177 + $0x48] sm:$0xff] %v1236
      %1269 = vst [vmem:[%s177 + $0x50] sm:$0xff] %v1237
      %1270 = vst [vmem:[%s177 + $0x58] sm:$0xff] %v1238
      %1271 = vst [vmem:[%s177 + $0x60] sm:$0xff] %v1239
      %1272 = vst [vmem:[%s177 + $0x68] sm:$0xff] %v1240
      %1273 = vst [vmem:[%s177 + $0x70] sm:$0xff] %v1241
      %1274 = vst [vmem:[%s177 + $0x78] sm:$0xff] %v1242
      %1275 = vst [vmem:[%s177 + $0x80] sm:$0xff] %v1243
      %1276 = vst [vmem:[%s177 + $0x88] sm:$0xff] %v1244
      %1277 = vst [vmem:[%s177 + $0x90] sm:$0xff] %v1245
      %1278 = vst [vmem:[%s177 + $0x98] sm:$0xff] %v1246
      %1279 = vst [vmem:[%s177 + $0xa0] sm:$0xff] %v1247
      %1280 = vst [vmem:[%s177 + $0xa8] sm:$0xff] %v1248
      %1281 = vst [vmem:[%s177 + $0xb0] sm:$0xff] %v1249
      %1282 = vst [vmem:[%s177 + $0xb8] sm:$0xff] %v1250
      %1283 = vst [vmem:[%s177 + $0xc0] sm:$0xff] %v1251
      %1284 = vst [vmem:[%s177 + $0xc8] sm:$0xff] %v1252
      %1285 = vst [vmem:[%s177 + $0xd0] sm:$0xff] %v1253
      %1286 = vst [vmem:[%s177 + $0xd8] sm:$0xff] %v1254
      %1287 = vst [vmem:[%s177 + $0xe0] sm:$0xff] %v1255
      %1288 = vst [vmem:[%s177 + $0xe8] sm:$0xff] %v1256
      %1289 = vst [vmem:[%s177 + $0xf0] sm:$0xff] %v1257
      %1290 = vst [vmem:[%s177 + $0xf8] sm:$0xff] %v1258
      %s1291 = scalar_lea.vmem %s172, 24
      %v1292 = vld [vmem:[%s1291] sm:$0xff]
      %v1293 = vld [vmem:[%s1291 + $0x8] sm:$0xff]
      %v1294 = vld [vmem:[%s1291 + $0x18] sm:$0xff]
      %v1295 = vld [vmem:[%s1291 + $0x20] sm:$0xff]
      %v1296 = vld [vmem:[%s1291 + $0x30] sm:$0xff]
      %v1297 = vld [vmem:[%s1291 + $0x38] sm:$0xff]
      %v1298 = vld [vmem:[%s1291 + $0x48] sm:$0xff]
      %v1299 = vld [vmem:[%s1291 + $0x50] sm:$0xff]
      %v1300 = vld [vmem:[%s1291 + $0x60] sm:$0xff]
      %v1301 = vld [vmem:[%s1291 + $0x68] sm:$0xff]
      %v1302 = vld [vmem:[%s1291 + $0x78] sm:$0xff]
      %v1303 = vld [vmem:[%s1291 + $0x80] sm:$0xff]
      %v1304 = vld [vmem:[%s1291 + $0x90] sm:$0xff]
      %v1305 = vld [vmem:[%s1291 + $0x98] sm:$0xff]
      %v1306 = vld [vmem:[%s1291 + $0xa8] sm:$0xff]
      %v1307 = vld [vmem:[%s1291 + $0xb0] sm:$0xff]
      %v1308 = vld [vmem:[%s1291 + $0xc0] sm:$0xff]
      %v1309 = vld [vmem:[%s1291 + $0xc8] sm:$0xff]
      %v1310 = vld [vmem:[%s1291 + $0xd8] sm:$0xff]
      %v1311 = vld [vmem:[%s1291 + $0xe0] sm:$0xff]
      %v1312 = vld [vmem:[%s1291 + $0xf0] sm:$0xff]
      %v1313 = vld [vmem:[%s1291 + $0xf8] sm:$0xff]
      %v1314 = vld [vmem:[%s1291 + $0x108] sm:$0xff]
      %v1315 = vld [vmem:[%s1291 + $0x110] sm:$0xff]
      %v1316 = vld [vmem:[%s1291 + $0x120] sm:$0xff]
      %v1317 = vld [vmem:[%s1291 + $0x128] sm:$0xff]
      %v1318 = vld [vmem:[%s1291 + $0x138] sm:$0xff]
      %v1319 = vld [vmem:[%s1291 + $0x140] sm:$0xff]
      %v1320 = vld [vmem:[%s1291 + $0x150] sm:$0xff]
      %v1321 = vld [vmem:[%s1291 + $0x158] sm:$0xff]
      %v1322 = vld [vmem:[%s1291 + $0x168] sm:$0xff]
      %v1323 = vld [vmem:[%s1291 + $0x170] sm:$0xff]
      %v1324 = vpack.c.bf16 %v1293, %v1292
      %v1325 = vpack.c.bf16 %v1295, %v1294
      %v1326 = vpack.c.bf16 %v1297, %v1296
      %v1327 = vpack.c.bf16 %v1299, %v1298
      %v1328 = vpack.c.bf16 %v1301, %v1300
      %v1329 = vpack.c.bf16 %v1303, %v1302
      %v1330 = vpack.c.bf16 %v1305, %v1304
      %v1331 = vpack.c.bf16 %v1307, %v1306
      %v1332 = vpack.c.bf16 %v1309, %v1308
      %v1333 = vpack.c.bf16 %v1311, %v1310
      %v1334 = vpack.c.bf16 %v1313, %v1312
      %v1335 = vpack.c.bf16 %v1315, %v1314
      %v1336 = vpack.c.bf16 %v1317, %v1316
      %v1337 = vpack.c.bf16 %v1319, %v1318
      %v1338 = vpack.c.bf16 %v1321, %v1320
      %v1339 = vpack.c.bf16 %v1323, %v1322
      %v1340 = vld [vmem:[%s177] sm:$0xff]
      %v1341 = vld [vmem:[%s177 + $0x8] sm:$0xff]
      %v1342 = vld [vmem:[%s177 + $0x10] sm:$0xff]
      %v1343 = vld [vmem:[%s177 + $0x18] sm:$0xff]
      %v1344 = vld [vmem:[%s177 + $0x20] sm:$0xff]
      %v1345 = vld [vmem:[%s177 + $0x28] sm:$0xff]
      %v1346 = vld [vmem:[%s177 + $0x30] sm:$0xff]
      %v1347 = vld [vmem:[%s177 + $0x38] sm:$0xff]
      %v1348 = vld [vmem:[%s177 + $0x40] sm:$0xff]
      %v1349 = vld [vmem:[%s177 + $0x48] sm:$0xff]
      %v1350 = vld [vmem:[%s177 + $0x50] sm:$0xff]
      %v1351 = vld [vmem:[%s177 + $0x58] sm:$0xff]
      %v1352 = vld [vmem:[%s177 + $0x60] sm:$0xff]
      %v1353 = vld [vmem:[%s177 + $0x68] sm:$0xff]
      %v1354 = vld [vmem:[%s177 + $0x70] sm:$0xff]
      %v1355 = vld [vmem:[%s177 + $0x78] sm:$0xff]
      %v1356 = vld [vmem:[%s177 + $0x80] sm:$0xff]
      %v1357 = vld [vmem:[%s177 + $0x88] sm:$0xff]
      %v1358 = vld [vmem:[%s177 + $0x90] sm:$0xff]
      %v1359 = vld [vmem:[%s177 + $0x98] sm:$0xff]
      %v1360 = vld [vmem:[%s177 + $0xa0] sm:$0xff]
      %v1361 = vld [vmem:[%s177 + $0xa8] sm:$0xff]
      %v1362 = vld [vmem:[%s177 + $0xb0] sm:$0xff]
      %v1363 = vld [vmem:[%s177 + $0xb8] sm:$0xff]
      %v1364 = vld [vmem:[%s177 + $0xc0] sm:$0xff]
      %v1365 = vld [vmem:[%s177 + $0xc8] sm:$0xff]
      %v1366 = vld [vmem:[%s177 + $0xd0] sm:$0xff]
      %v1367 = vld [vmem:[%s177 + $0xd8] sm:$0xff]
      %v1368 = vld [vmem:[%s177 + $0xe0] sm:$0xff]
      %v1369 = vld [vmem:[%s177 + $0xe8] sm:$0xff]
      %v1370 = vld [vmem:[%s177 + $0xf0] sm:$0xff]
      %v1371 = vld [vmem:[%s177 + $0xf8] sm:$0xff]
      %s1372 = scalar_lea.vmem %s1, 12
      %v1373 = vld [vmem:[%s1372] sm:$0xf]
      %v1375 = vsel %vm297, %v1324, 0
      %v1378 = vsel %vm297, %v1325, 0
      %v1381 = vsel %vm297, %v1326, 0
      %v1384 = vsel %vm297, %v1327, 0
      %v1387 = vsel %vm297, %v1328, 0
      %v1390 = vsel %vm297, %v1329, 0
      %v1393 = vsel %vm297, %v1330, 0
      %v1396 = vsel %vm297, %v1331, 0
      %v1399 = vsel %vm297, %v1332, 0
      %v1402 = vsel %vm297, %v1333, 0
      %v1405 = vsel %vm297, %v1334, 0
      %v1408 = vsel %vm297, %v1335, 0
      %v1411 = vsel %vm297, %v1336, 0
      %v1414 = vsel %vm297, %v1337, 0
      %v1417 = vsel %vm297, %v1338, 0
      %v1420 = vsel %vm297, %v1339, 0
      %v1423 = vsel %vm346, %v1373, 0
      %1425 = vmatprep.subr.bf16.mxu0 0
      %1426 = vmatpush1.bf16.msra.mxu0 %v1423
      %1427 = vmatprep.subr.bf16.mxu0 0
      %1428 = vmatpush1.bf16.msra.mxu0 0
      %1429 = vmatprep.subr.bf16.mxu0 0
      %1430 = vmatpush1.bf16.msra.mxu0 0
      %1431 = vmatprep.subr.bf16.mxu0 0
      %1432 = vmatpush1.bf16.msra.mxu0 0
      %1433 = vmatprep.subr.bf16.mxu0 0
      %1434 = vmatpush1.bf16.msra.mxu0 0
      %1435 = vmatprep.subr.bf16.mxu0 0
      %1436 = vmatpush1.bf16.msra.mxu0 0
      %1437 = vmatprep.subr.bf16.mxu0 0
      %1438 = vmatpush1.bf16.msra.mxu0 0
      %1439 = vmatprep.subr.bf16.mxu0 0
      %1440 = vmatpush1.bf16.msra.mxu0 0
      %1441 = vmatprep.subr.bf16.mxu0 0
      %1442 = vmatpush1.bf16.msra.mxu0 0
      %1443 = vmatprep.subr.bf16.mxu0 0
      %1444 = vmatpush1.bf16.msra.mxu0 0
      %1445 = vmatprep.subr.bf16.mxu0 0
      %1446 = vmatpush1.bf16.msra.mxu0 0
      %1447 = vmatprep.subr.bf16.mxu0 0
      %1448 = vmatpush1.bf16.msra.mxu0 0
      %1449 = vmatprep.subr.bf16.mxu0 0
      %1450 = vmatpush1.bf16.msra.mxu0 0
      %1451 = vmatprep.subr.bf16.mxu0 0
      %1452 = vmatpush1.bf16.msra.mxu0 0
      %1453 = vmatprep.subr.bf16.mxu0 0
      %1454 = vmatpush1.bf16.msra.mxu0 0
      %1455 = vmatprep.subr.bf16.mxu0 0
      %1456 = vmatpush1.bf16.msra.mxu0 0
      %1457 = vmatprep.mubr.bf16.mxu0 0
      %1458 = vmatmul.mubr.bf16.gmra.mrb[0].mxu0 %v1375
      %v1459 = vpop.f32.mrb[0].mxu0
      %v1460 = vadd.f32 0.0, %v1459
      %v1461 = vpop.f32.mrb[0].mxu0
      %v1462 = vpop.f32.mrb[0].mxu0
      %v1463 = vadd.f32 0.0, %v1462
      %v1464 = vpop.f32.mrb[0].mxu0
      %1465 = vmatprep.mubr.bf16.mxu0 0
      %1466 = vmatmul.mubr.bf16.gmra.mrb[0].mxu0 %v1378
      %v1467 = vpop.f32.mrb[0].mxu0
      %v1468 = vadd.f32 0.0, %v1467
      %v1469 = vpop.f32.mrb[0].mxu0
      %v1470 = vpop.f32.mrb[0].mxu0
      %v1471 = vadd.f32 0.0, %v1470
      %v1472 = vpop.f32.mrb[0].mxu0
      %1473 = vmatprep.mubr.bf16.mxu0 0
      %1474 = vmatmul.mubr.bf16.gmra.mrb[0].mxu0 %v1381
      %v1475 = vpop.f32.mrb[0].mxu0
      %v1476 = vadd.f32 0.0, %v1475
      %v1477 = vpop.f32.mrb[0].mxu0
      %v1478 = vpop.f32.mrb[0].mxu0
      %v1479 = vadd.f32 0.0, %v1478
      %v1480 = vpop.f32.mrb[0].mxu0
      %1481 = vmatprep.mubr.bf16.mxu0 0
      %1482 = vmatmul.mubr.bf16.gmra.mrb[0].mxu0 %v1384
      %v1483 = vpop.f32.mrb[0].mxu0
      %v1484 = vadd.f32 0.0, %v1483
      %v1485 = vpop.f32.mrb[0].mxu0
      %v1486 = vpop.f32.mrb[0].mxu0
      %v1487 = vadd.f32 0.0, %v1486
      %v1488 = vpop.f32.mrb[0].mxu0
      %1489 = vmatprep.mubr.bf16.mxu0 0
      %1490 = vmatmul.mubr.bf16.gmra.mrb[0].mxu0 %v1387
      %v1491 = vpop.f32.mrb[0].mxu0
      %v1492 = vadd.f32 0.0, %v1491
      %v1493 = vpop.f32.mrb[0].mxu0
      %v1494 = vpop.f32.mrb[0].mxu0
      %v1495 = vadd.f32 0.0, %v1494
      %v1496 = vpop.f32.mrb[0].mxu0
      %1497 = vmatprep.mubr.bf16.mxu0 0
      %1498 = vmatmul.mubr.bf16.gmra.mrb[0].mxu0 %v1390
      %v1499 = vpop.f32.mrb[0].mxu0
      %v1500 = vadd.f32 0.0, %v1499
      %v1501 = vpop.f32.mrb[0].mxu0
      %v1502 = vpop.f32.mrb[0].mxu0
      %v1503 = vadd.f32 0.0, %v1502
      %v1504 = vpop.f32.mrb[0].mxu0
      %1505 = vmatprep.mubr.bf16.mxu0 0
      %1506 = vmatmul.mubr.bf16.gmra.mrb[0].mxu0 %v1393
      %v1507 = vpop.f32.mrb[0].mxu0
      %v1508 = vadd.f32 0.0, %v1507
      %v1509 = vpop.f32.mrb[0].mxu0
      %v1510 = vpop.f32.mrb[0].mxu0
      %v1511 = vadd.f32 0.0, %v1510
      %v1512 = vpop.f32.mrb[0].mxu0
      %1513 = vmatprep.mubr.bf16.mxu0 0
      %1514 = vmatmul.mubr.bf16.gmra.mrb[0].mxu0 %v1396
      %v1515 = vpop.f32.mrb[0].mxu0
      %v1516 = vadd.f32 0.0, %v1515
      %v1517 = vpop.f32.mrb[0].mxu0
      %v1518 = vpop.f32.mrb[0].mxu0
      %v1519 = vadd.f32 0.0, %v1518
      %v1520 = vpop.f32.mrb[0].mxu0
      %1521 = vmatprep.mubr.bf16.mxu0 0
      %1522 = vmatmul.mubr.bf16.gmra.mrb[0].mxu0 %v1399
      %v1523 = vpop.f32.mrb[0].mxu0
      %v1524 = vadd.f32 0.0, %v1523
      %v1525 = vpop.f32.mrb[0].mxu0
      %v1526 = vpop.f32.mrb[0].mxu0
      %v1527 = vadd.f32 0.0, %v1526
      %v1528 = vpop.f32.mrb[0].mxu0
      %1529 = vmatprep.mubr.bf16.mxu0 0
      %1530 = vmatmul.mubr.bf16.gmra.mrb[0].mxu0 %v1402
      %v1531 = vpop.f32.mrb[0].mxu0
      %v1532 = vadd.f32 0.0, %v1531
      %v1533 = vpop.f32.mrb[0].mxu0
      %v1534 = vpop.f32.mrb[0].mxu0
      %v1535 = vadd.f32 0.0, %v1534
      %v1536 = vpop.f32.mrb[0].mxu0
      %1537 = vmatprep.mubr.bf16.mxu0 0
      %1538 = vmatmul.mubr.bf16.gmra.mrb[0].mxu0 %v1405
      %v1539 = vpop.f32.mrb[0].mxu0
      %v1540 = vadd.f32 0.0, %v1539
      %v1541 = vpop.f32.mrb[0].mxu0
      %v1542 = vpop.f32.mrb[0].mxu0
      %v1543 = vadd.f32 0.0, %v1542
      %v1544 = vpop.f32.mrb[0].mxu0
      %1545 = vmatprep.mubr.bf16.mxu0 0
      %1546 = vmatmul.mubr.bf16.gmra.mrb[0].mxu0 %v1408
      %v1547 = vpop.f32.mrb[0].mxu0
      %v1548 = vadd.f32 0.0, %v1547
      %v1549 = vpop.f32.mrb[0].mxu0
      %v1550 = vpop.f32.mrb[0].mxu0
      %v1551 = vadd.f32 0.0, %v1550
      %v1552 = vpop.f32.mrb[0].mxu0
      %1553 = vmatprep.mubr.bf16.mxu0 0
      %1554 = vmatmul.mubr.bf16.gmra.mrb[0].mxu0 %v1411
      %v1555 = vpop.f32.mrb[0].mxu0
      %v1556 = vadd.f32 0.0, %v1555
      %v1557 = vpop.f32.mrb[0].mxu0
      %v1558 = vpop.f32.mrb[0].mxu0
      %v1559 = vadd.f32 0.0, %v1558
      %v1560 = vpop.f32.mrb[0].mxu0
      %1561 = vmatprep.mubr.bf16.mxu0 0
      %1562 = vmatmul.mubr.bf16.gmra.mrb[0].mxu0 %v1414
      %v1563 = vpop.f32.mrb[0].mxu0
      %v1564 = vadd.f32 0.0, %v1563
      %v1565 = vpop.f32.mrb[0].mxu0
      %v1566 = vpop.f32.mrb[0].mxu0
      %v1567 = vadd.f32 0.0, %v1566
      %v1568 = vpop.f32.mrb[0].mxu0
      %1569 = vmatprep.mubr.bf16.mxu0 0
      %1570 = vmatmul.mubr.bf16.gmra.mrb[0].mxu0 %v1417
      %v1571 = vpop.f32.mrb[0].mxu0
      %v1572 = vadd.f32 0.0, %v1571
      %v1573 = vpop.f32.mrb[0].mxu0
      %v1574 = vpop.f32.mrb[0].mxu0
      %v1575 = vadd.f32 0.0, %v1574
      %v1576 = vpop.f32.mrb[0].mxu0
      %1577 = vmatprep.mubr.bf16.mxu0 0
      %1578 = vmatmul.mubr.bf16.gmra.mrb[0].mxu0 %v1420
      %v1579 = vpop.f32.mrb[0].mxu0
      %v1580 = vadd.f32 0.0, %v1579
      %v1581 = vpop.f32.mrb[0].mxu0
      %v1582 = vpop.f32.mrb[0].mxu0
      %v1583 = vadd.f32 0.0, %v1582
      %v1584 = vpop.f32.mrb[0].mxu0
      %1585 = vdwg.mxu0
      %v1586 = vadd.f32 %v1340, %v1460
      %v1587 = vadd.f32 %v1341, %v1463
      %v1588 = vadd.f32 %v1342, %v1468
      %v1589 = vadd.f32 %v1343, %v1471
      %v1590 = vadd.f32 %v1344, %v1476
      %v1591 = vadd.f32 %v1345, %v1479
      %v1592 = vadd.f32 %v1346, %v1484
      %v1593 = vadd.f32 %v1347, %v1487
      %v1594 = vadd.f32 %v1348, %v1492
      %v1595 = vadd.f32 %v1349, %v1495
      %v1596 = vadd.f32 %v1350, %v1500
      %v1597 = vadd.f32 %v1351, %v1503
      %v1598 = vadd.f32 %v1352, %v1508
      %v1599 = vadd.f32 %v1353, %v1511
      %v1600 = vadd.f32 %v1354, %v1516
      %v1601 = vadd.f32 %v1355, %v1519
      %v1602 = vadd.f32 %v1356, %v1524
      %v1603 = vadd.f32 %v1357, %v1527
      %v1604 = vadd.f32 %v1358, %v1532
      %v1605 = vadd.f32 %v1359, %v1535
      %v1606 = vadd.f32 %v1360, %v1540
      %v1607 = vadd.f32 %v1361, %v1543
      %v1608 = vadd.f32 %v1362, %v1548
      %v1609 = vadd.f32 %v1363, %v1551
      %v1610 = vadd.f32 %v1364, %v1556
      %v1611 = vadd.f32 %v1365, %v1559
      %v1612 = vadd.f32 %v1366, %v1564
      %v1613 = vadd.f32 %v1367, %v1567
      %v1614 = vadd.f32 %v1368, %v1572
      %v1615 = vadd.f32 %v1369, %v1575
      %v1616 = vadd.f32 %v1370, %v1580
      %v1617 = vadd.f32 %v1371, %v1583
      %1618 = vst [vmem:[%s177] sm:$0xff] %v1586
      %1619 = vst [vmem:[%s177 + $0x8] sm:$0xff] %v1587
      %1620 = vst [vmem:[%s177 + $0x10] sm:$0xff] %v1588
      %1621 = vst [vmem:[%s177 + $0x18] sm:$0xff] %v1589
      %1622 = vst [vmem:[%s177 + $0x20] sm:$0xff] %v1590
      %1623 = vst [vmem:[%s177 + $0x28] sm:$0xff] %v1591
      %1624 = vst [vmem:[%s177 + $0x30] sm:$0xff] %v1592
      %1625 = vst [vmem:[%s177 + $0x38] sm:$0xff] %v1593
      %1626 = vst [vmem:[%s177 + $0x40] sm:$0xff] %v1594
      %1627 = vst [vmem:[%s177 + $0x48] sm:$0xff] %v1595
      %1628 = vst [vmem:[%s177 + $0x50] sm:$0xff] %v1596
      %1629 = vst [vmem:[%s177 + $0x58] sm:$0xff] %v1597
      %1630 = vst [vmem:[%s177 + $0x60] sm:$0xff] %v1598
      %1631 = vst [vmem:[%s177 + $0x68] sm:$0xff] %v1599
      %1632 = vst [vmem:[%s177 + $0x70] sm:$0xff] %v1600
      %1633 = vst [vmem:[%s177 + $0x78] sm:$0xff] %v1601
      %1634 = vst [vmem:[%s177 + $0x80] sm:$0xff] %v1602
      %1635 = vst [vmem:[%s177 + $0x88] sm:$0xff] %v1603
      %1636 = vst [vmem:[%s177 + $0x90] sm:$0xff] %v1604
      %1637 = vst [vmem:[%s177 + $0x98] sm:$0xff] %v1605
      %1638 = vst [vmem:[%s177 + $0xa0] sm:$0xff] %v1606
      %1639 = vst [vmem:[%s177 + $0xa8] sm:$0xff] %v1607
      %1640 = vst [vmem:[%s177 + $0xb0] sm:$0xff] %v1608
      %1641 = vst [vmem:[%s177 + $0xb8] sm:$0xff] %v1609
      %1642 = vst [vmem:[%s177 + $0xc0] sm:$0xff] %v1610
      %1643 = vst [vmem:[%s177 + $0xc8] sm:$0xff] %v1611
      %1644 = vst [vmem:[%s177 + $0xd0] sm:$0xff] %v1612
      %1645 = vst [vmem:[%s177 + $0xd8] sm:$0xff] %v1613
      %1646 = vst [vmem:[%s177 + $0xe0] sm:$0xff] %v1614
      %1647 = vst [vmem:[%s177 + $0xe8] sm:$0xff] %v1615
      %1648 = vst [vmem:[%s177 + $0xf0] sm:$0xff] %v1616
      %1649 = vst [vmem:[%s177 + $0xf8] sm:$0xff] %v1617
      %v1650 = vld [vmem:[%s1291 + $0x1] sm:$0xff]
      %v1651 = vld [vmem:[%s1291 + $0x9] sm:$0xff]
      %v1652 = vld [vmem:[%s1291 + $0x19] sm:$0xff]
      %v1653 = vld [vmem:[%s1291 + $0x21] sm:$0xff]
      %v1654 = vld [vmem:[%s1291 + $0x31] sm:$0xff]
      %v1655 = vld [vmem:[%s1291 + $0x39] sm:$0xff]
      %v1656 = vld [vmem:[%s1291 + $0x49] sm:$0xff]
      %v1657 = vld [vmem:[%s1291 + $0x51] sm:$0xff]
      %v1658 = vld [vmem:[%s1291 + $0x61] sm:$0xff]
      %v1659 = vld [vmem:[%s1291 + $0x69] sm:$0xff]
      %v1660 = vld [vmem:[%s1291 + $0x79] sm:$0xff]
      %v1661 = vld [vmem:[%s1291 + $0x81] sm:$0xff]
      %v1662 = vld [vmem:[%s1291 + $0x91] sm:$0xff]
      %v1663 = vld [vmem:[%s1291 + $0x99] sm:$0xff]
      %v1664 = vld [vmem:[%s1291 + $0xa9] sm:$0xff]
      %v1665 = vld [vmem:[%s1291 + $0xb1] sm:$0xff]
      %v1666 = vld [vmem:[%s1291 + $0xc1] sm:$0xff]
      %v1667 = vld [vmem:[%s1291 + $0xc9] sm:$0xff]
      %v1668 = vld [vmem:[%s1291 + $0xd9] sm:$0xff]
      %v1669 = vld [vmem:[%s1291 + $0xe1] sm:$0xff]
      %v1670 = vld [vmem:[%s1291 + $0xf1] sm:$0xff]
      %v1671 = vld [vmem:[%s1291 + $0xf9] sm:$0xff]
      %v1672 = vld [vmem:[%s1291 + $0x109] sm:$0xff]
      %v1673 = vld [vmem:[%s1291 + $0x111] sm:$0xff]
      %v1674 = vld [vmem:[%s1291 + $0x121] sm:$0xff]
      %v1675 = vld [vmem:[%s1291 + $0x129] sm:$0xff]
      %v1676 = vld [vmem:[%s1291 + $0x139] sm:$0xff]
      %v1677 = vld [vmem:[%s1291 + $0x141] sm:$0xff]
      %v1678 = vld [vmem:[%s1291 + $0x151] sm:$0xff]
      %v1679 = vld [vmem:[%s1291 + $0x159] sm:$0xff]
      %v1680 = vld [vmem:[%s1291 + $0x169] sm:$0xff]
      %v1681 = vld [vmem:[%s1291 + $0x171] sm:$0xff]
      %v1682 = vpack.c.bf16 %v1651, %v1650
      %v1683 = vpack.c.bf16 %v1653, %v1652
      %v1684 = vpack.c.bf16 %v1655, %v1654
      %v1685 = vpack.c.bf16 %v1657, %v1656
      %v1686 = vpack.c.bf16 %v1659, %v1658
      %v1687 = vpack.c.bf16 %v1661, %v1660
      %v1688 = vpack.c.bf16 %v1663, %v1662
      %v1689 = vpack.c.bf16 %v1665, %v1664
      %v1690 = vpack.c.bf16 %v1667, %v1666
      %v1691 = vpack.c.bf16 %v1669, %v1668
      %v1692 = vpack.c.bf16 %v1671, %v1670
      %v1693 = vpack.c.bf16 %v1673, %v1672
      %v1694 = vpack.c.bf16 %v1675, %v1674
      %v1695 = vpack.c.bf16 %v1677, %v1676
      %v1696 = vpack.c.bf16 %v1679, %v1678
      %v1697 = vpack.c.bf16 %v1681, %v1680
      %v1698 = vld [vmem:[%s177] sm:$0xff]
      %v1699 = vld [vmem:[%s177 + $0x8] sm:$0xff]
      %v1700 = vld [vmem:[%s177 + $0x10] sm:$0xff]
      %v1701 = vld [vmem:[%s177 + $0x18] sm:$0xff]
      %v1702 = vld [vmem:[%s177 + $0x20] sm:$0xff]
      %v1703 = vld [vmem:[%s177 + $0x28] sm:$0xff]
      %v1704 = vld [vmem:[%s177 + $0x30] sm:$0xff]
      %v1705 = vld [vmem:[%s177 + $0x38] sm:$0xff]
      %v1706 = vld [vmem:[%s177 + $0x40] sm:$0xff]
      %v1707 = vld [vmem:[%s177 + $0x48] sm:$0xff]
      %v1708 = vld [vmem:[%s177 + $0x50] sm:$0xff]
      %v1709 = vld [vmem:[%s177 + $0x58] sm:$0xff]
      %v1710 = vld [vmem:[%s177 + $0x60] sm:$0xff]
      %v1711 = vld [vmem:[%s177 + $0x68] sm:$0xff]
      %v1712 = vld [vmem:[%s177 + $0x70] sm:$0xff]
      %v1713 = vld [vmem:[%s177 + $0x78] sm:$0xff]
      %v1714 = vld [vmem:[%s177 + $0x80] sm:$0xff]
      %v1715 = vld [vmem:[%s177 + $0x88] sm:$0xff]
      %v1716 = vld [vmem:[%s177 + $0x90] sm:$0xff]
      %v1717 = vld [vmem:[%s177 + $0x98] sm:$0xff]
      %v1718 = vld [vmem:[%s177 + $0xa0] sm:$0xff]
      %v1719 = vld [vmem:[%s177 + $0xa8] sm:$0xff]
      %v1720 = vld [vmem:[%s177 + $0xb0] sm:$0xff]
      %v1721 = vld [vmem:[%s177 + $0xb8] sm:$0xff]
      %v1722 = vld [vmem:[%s177 + $0xc0] sm:$0xff]
      %v1723 = vld [vmem:[%s177 + $0xc8] sm:$0xff]
      %v1724 = vld [vmem:[%s177 + $0xd0] sm:$0xff]
      %v1725 = vld [vmem:[%s177 + $0xd8] sm:$0xff]
      %v1726 = vld [vmem:[%s177 + $0xe0] sm:$0xff]
      %v1727 = vld [vmem:[%s177 + $0xe8] sm:$0xff]
      %v1728 = vld [vmem:[%s177 + $0xf0] sm:$0xff]
      %v1729 = vld [vmem:[%s177 + $0xf8] sm:$0xff]
      %s1730 = scalar_lea.vmem %s1, 16
      %v1731 = vld [vmem:[%s1730] sm:$0xf]
      %v1733 = vsel %vm297, %v1682, 0
      %v1736 = vsel %vm297, %v1683, 0
      %v1739 = vsel %vm297, %v1684, 0
      %v1742 = vsel %vm297, %v1685, 0
      %v1745 = vsel %vm297, %v1686, 0
      %v1748 = vsel %vm297, %v1687, 0
      %v1751 = vsel %vm297, %v1688, 0
      %v1754 = vsel %vm297, %v1689, 0
      %v1757 = vsel %vm297, %v1690, 0
      %v1760 = vsel %vm297, %v1691, 0
      %v1763 = vsel %vm297, %v1692, 0
      %v1766 = vsel %vm297, %v1693, 0
      %v1769 = vsel %vm297, %v1694, 0
      %v1772 = vsel %vm297, %v1695, 0
      %v1775 = vsel %vm297, %v1696, 0
      %v1778 = vsel %vm297, %v1697, 0
      %v1781 = vsel %vm346, %v1731, 0
      %1783 = vmatprep.subr.bf16.mxu0 0
      %1784 = vmatpush1.bf16.msra.mxu0 %v1781
      %1785 = vmatprep.subr.bf16.mxu0 0
      %1786 = vmatpush1.bf16.msra.mxu0 0
      %1787 = vmatprep.subr.bf16.mxu0 0
      %1788 = vmatpush1.bf16.msra.mxu0 0
      %1789 = vmatprep.subr.bf16.mxu0 0
      %1790 = vmatpush1.bf16.msra.mxu0 0
      %1791 = vmatprep.subr.bf16.mxu0 0
      %1792 = vmatpush1.bf16.msra.mxu0 0
      %1793 = vmatprep.subr.bf16.mxu0 0
      %1794 = vmatpush1.bf16.msra.mxu0 0
      %1795 = vmatprep.subr.bf16.mxu0 0
      %1796 = vmatpush1.bf16.msra.mxu0 0
      %1797 = vmatprep.subr.bf16.mxu0 0
      %1798 = vmatpush1.bf16.msra.mxu0 0
      %1799 = vmatprep.subr.bf16.mxu0 0
      %1800 = vmatpush1.bf16.msra.mxu0 0
      %1801 = vmatprep.subr.bf16.mxu0 0
      %1802 = vmatpush1.bf16.msra.mxu0 0
      %1803 = vmatprep.subr.bf16.mxu0 0
      %1804 = vmatpush1.bf16.msra.mxu0 0
      %1805 = vmatprep.subr.bf16.mxu0 0
      %1806 = vmatpush1.bf16.msra.mxu0 0
      %1807 = vmatprep.subr.bf16.mxu0 0
      %1808 = vmatpush1.bf16.msra.mxu0 0
      %1809 = vmatprep.subr.bf16.mxu0 0
      %1810 = vmatpush1.bf16.msra.mxu0 0
      %1811 = vmatprep.subr.bf16.mxu0 0
      %1812 = vmatpush1.bf16.msra.mxu0 0
      %1813 = vmatprep.subr.bf16.mxu0 0
      %1814 = vmatpush1.bf16.msra.mxu0 0
      %1815 = vmatprep.mubr.bf16.mxu0 0
      %1816 = vmatmul.mubr.bf16.gmra.mrb[0].mxu0 %v1733
      %v1817 = vpop.f32.mrb[0].mxu0
      %v1818 = vadd.f32 0.0, %v1817
      %v1819 = vpop.f32.mrb[0].mxu0
      %v1820 = vpop.f32.mrb[0].mxu0
      %v1821 = vadd.f32 0.0, %v1820
      %v1822 = vpop.f32.mrb[0].mxu0
      %1823 = vmatprep.mubr.bf16.mxu0 0
      %1824 = vmatmul.mubr.bf16.gmra.mrb[0].mxu0 %v1736
      %v1825 = vpop.f32.mrb[0].mxu0
      %v1826 = vadd.f32 0.0, %v1825
      %v1827 = vpop.f32.mrb[0].mxu0
      %v1828 = vpop.f32.mrb[0].mxu0
      %v1829 = vadd.f32 0.0, %v1828
      %v1830 = vpop.f32.mrb[0].mxu0
      %1831 = vmatprep.mubr.bf16.mxu0 0
      %1832 = vmatmul.mubr.bf16.gmra.mrb[0].mxu0 %v1739
      %v1833 = vpop.f32.mrb[0].mxu0
      %v1834 = vadd.f32 0.0, %v1833
      %v1835 = vpop.f32.mrb[0].mxu0
      %v1836 = vpop.f32.mrb[0].mxu0
      %v1837 = vadd.f32 0.0, %v1836
      %v1838 = vpop.f32.mrb[0].mxu0
      %1839 = vmatprep.mubr.bf16.mxu0 0
      %1840 = vmatmul.mubr.bf16.gmra.mrb[0].mxu0 %v1742
      %v1841 = vpop.f32.mrb[0].mxu0
      %v1842 = vadd.f32 0.0, %v1841
      %v1843 = vpop.f32.mrb[0].mxu0
      %v1844 = vpop.f32.mrb[0].mxu0
      %v1845 = vadd.f32 0.0, %v1844
      %v1846 = vpop.f32.mrb[0].mxu0
      %1847 = vmatprep.mubr.bf16.mxu0 0
      %1848 = vmatmul.mubr.bf16.gmra.mrb[0].mxu0 %v1745
      %v1849 = vpop.f32.mrb[0].mxu0
      %v1850 = vadd.f32 0.0, %v1849
      %v1851 = vpop.f32.mrb[0].mxu0
      %v1852 = vpop.f32.mrb[0].mxu0
      %v1853 = vadd.f32 0.0, %v1852
      %v1854 = vpop.f32.mrb[0].mxu0
      %1855 = vmatprep.mubr.bf16.mxu0 0
      %1856 = vmatmul.mubr.bf16.gmra.mrb[0].mxu0 %v1748
      %v1857 = vpop.f32.mrb[0].mxu0
      %v1858 = vadd.f32 0.0, %v1857
      %v1859 = vpop.f32.mrb[0].mxu0
      %v1860 = vpop.f32.mrb[0].mxu0
      %v1861 = vadd.f32 0.0, %v1860
      %v1862 = vpop.f32.mrb[0].mxu0
      %1863 = vmatprep.mubr.bf16.mxu0 0
      %1864 = vmatmul.mubr.bf16.gmra.mrb[0].mxu0 %v1751
      %v1865 = vpop.f32.mrb[0].mxu0
      %v1866 = vadd.f32 0.0, %v1865
      %v1867 = vpop.f32.mrb[0].mxu0
      %v1868 = vpop.f32.mrb[0].mxu0
      %v1869 = vadd.f32 0.0, %v1868
      %v1870 = vpop.f32.mrb[0].mxu0
      %1871 = vmatprep.mubr.bf16.mxu0 0
      %1872 = vmatmul.mubr.bf16.gmra.mrb[0].mxu0 %v1754
      %v1873 = vpop.f32.mrb[0].mxu0
      %v1874 = vadd.f32 0.0, %v1873
      %v1875 = vpop.f32.mrb[0].mxu0
      %v1876 = vpop.f32.mrb[0].mxu0
      %v1877 = vadd.f32 0.0, %v1876
      %v1878 = vpop.f32.mrb[0].mxu0
      %1879 = vmatprep.mubr.bf16.mxu0 0
      %1880 = vmatmul.mubr.bf16.gmra.mrb[0].mxu0 %v1757
      %v1881 = vpop.f32.mrb[0].mxu0
      %v1882 = vadd.f32 0.0, %v1881
      %v1883 = vpop.f32.mrb[0].mxu0
      %v1884 = vpop.f32.mrb[0].mxu0
      %v1885 = vadd.f32 0.0, %v1884
      %v1886 = vpop.f32.mrb[0].mxu0
      %1887 = vmatprep.mubr.bf16.mxu0 0
      %1888 = vmatmul.mubr.bf16.gmra.mrb[0].mxu0 %v1760
      %v1889 = vpop.f32.mrb[0].mxu0
      %v1890 = vadd.f32 0.0, %v1889
      %v1891 = vpop.f32.mrb[0].mxu0
      %v1892 = vpop.f32.mrb[0].mxu0
      %v1893 = vadd.f32 0.0, %v1892
      %v1894 = vpop.f32.mrb[0].mxu0
      %1895 = vmatprep.mubr.bf16.mxu0 0
      %1896 = vmatmul.mubr.bf16.gmra.mrb[0].mxu0 %v1763
      %v1897 = vpop.f32.mrb[0].mxu0
      %v1898 = vadd.f32 0.0, %v1897
      %v1899 = vpop.f32.mrb[0].mxu0
      %v1900 = vpop.f32.mrb[0].mxu0
      %v1901 = vadd.f32 0.0, %v1900
      %v1902 = vpop.f32.mrb[0].mxu0
      %1903 = vmatprep.mubr.bf16.mxu0 0
      %1904 = vmatmul.mubr.bf16.gmra.mrb[0].mxu0 %v1766
      %v1905 = vpop.f32.mrb[0].mxu0
      %v1906 = vadd.f32 0.0, %v1905
      %v1907 = vpop.f32.mrb[0].mxu0
      %v1908 = vpop.f32.mrb[0].mxu0
      %v1909 = vadd.f32 0.0, %v1908
      %v1910 = vpop.f32.mrb[0].mxu0
      %1911 = vmatprep.mubr.bf16.mxu0 0
      %1912 = vmatmul.mubr.bf16.gmra.mrb[0].mxu0 %v1769
      %v1913 = vpop.f32.mrb[0].mxu0
      %v1914 = vadd.f32 0.0, %v1913
      %v1915 = vpop.f32.mrb[0].mxu0
      %v1916 = vpop.f32.mrb[0].mxu0
      %v1917 = vadd.f32 0.0, %v1916
      %v1918 = vpop.f32.mrb[0].mxu0
      %1919 = vmatprep.mubr.bf16.mxu0 0
      %1920 = vmatmul.mubr.bf16.gmra.mrb[0].mxu0 %v1772
      %v1921 = vpop.f32.mrb[0].mxu0
      %v1922 = vadd.f32 0.0, %v1921
      %v1923 = vpop.f32.mrb[0].mxu0
      %v1924 = vpop.f32.mrb[0].mxu0
      %v1925 = vadd.f32 0.0, %v1924
      %v1926 = vpop.f32.mrb[0].mxu0
      %1927 = vmatprep.mubr.bf16.mxu0 0
      %1928 = vmatmul.mubr.bf16.gmra.mrb[0].mxu0 %v1775
      %v1929 = vpop.f32.mrb[0].mxu0
      %v1930 = vadd.f32 0.0, %v1929
      %v1931 = vpop.f32.mrb[0].mxu0
      %v1932 = vpop.f32.mrb[0].mxu0
      %v1933 = vadd.f32 0.0, %v1932
      %v1934 = vpop.f32.mrb[0].mxu0
      %1935 = vmatprep.mubr.bf16.mxu0 0
      %1936 = vmatmul.mubr.bf16.gmra.mrb[0].mxu0 %v1778
      %v1937 = vpop.f32.mrb[0].mxu0
      %v1938 = vadd.f32 0.0, %v1937
      %v1939 = vpop.f32.mrb[0].mxu0
      %v1940 = vpop.f32.mrb[0].mxu0
      %v1941 = vadd.f32 0.0, %v1940
      %v1942 = vpop.f32.mrb[0].mxu0
      %1943 = vdwg.mxu0
      %v1944 = vadd.f32 %v1698, %v1818
      %v1945 = vadd.f32 %v1699, %v1821
      %v1946 = vadd.f32 %v1700, %v1826
      %v1947 = vadd.f32 %v1701, %v1829
      %v1948 = vadd.f32 %v1702, %v1834
      %v1949 = vadd.f32 %v1703, %v1837
      %v1950 = vadd.f32 %v1704, %v1842
      %v1951 = vadd.f32 %v1705, %v1845
      %v1952 = vadd.f32 %v1706, %v1850
      %v1953 = vadd.f32 %v1707, %v1853
      %v1954 = vadd.f32 %v1708, %v1858
      %v1955 = vadd.f32 %v1709, %v1861
      %v1956 = vadd.f32 %v1710, %v1866
      %v1957 = vadd.f32 %v1711, %v1869
      %v1958 = vadd.f32 %v1712, %v1874
      %v1959 = vadd.f32 %v1713, %v1877
      %v1960 = vadd.f32 %v1714, %v1882
      %v1961 = vadd.f32 %v1715, %v1885
      %v1962 = vadd.f32 %v1716, %v1890
      %v1963 = vadd.f32 %v1717, %v1893
      %v1964 = vadd.f32 %v1718, %v1898
      %v1965 = vadd.f32 %v1719, %v1901
      %v1966 = vadd.f32 %v1720, %v1906
      %v1967 = vadd.f32 %v1721, %v1909
      %v1968 = vadd.f32 %v1722, %v1914
      %v1969 = vadd.f32 %v1723, %v1917
      %v1970 = vadd.f32 %v1724, %v1922
      %v1971 = vadd.f32 %v1725, %v1925
      %v1972 = vadd.f32 %v1726, %v1930
      %v1973 = vadd.f32 %v1727, %v1933
      %v1974 = vadd.f32 %v1728, %v1938
      %v1975 = vadd.f32 %v1729, %v1941
      %1976 = vst [vmem:[%s177] sm:$0xff] %v1944
      %1977 = vst [vmem:[%s177 + $0x8] sm:$0xff] %v1945
      %1978 = vst [vmem:[%s177 + $0x10] sm:$0xff] %v1946
      %1979 = vst [vmem:[%s177 + $0x18] sm:$0xff] %v1947
      %1980 = vst [vmem:[%s177 + $0x20] sm:$0xff] %v1948
      %1981 = vst [vmem:[%s177 + $0x28] sm:$0xff] %v1949
      %1982 = vst [vmem:[%s177 + $0x30] sm:$0xff] %v1950
      %1983 = vst [vmem:[%s177 + $0x38] sm:$0xff] %v1951
      %1984 = vst [vmem:[%s177 + $0x40] sm:$0xff] %v1952
      %1985 = vst [vmem:[%s177 + $0x48] sm:$0xff] %v1953
      %1986 = vst [vmem:[%s177 + $0x50] sm:$0xff] %v1954
      %1987 = vst [vmem:[%s177 + $0x58] sm:$0xff] %v1955
      %1988 = vst [vmem:[%s177 + $0x60] sm:$0xff] %v1956
      %1989 = vst [vmem:[%s177 + $0x68] sm:$0xff] %v1957
      %1990 = vst [vmem:[%s177 + $0x70] sm:$0xff] %v1958
      %1991 = vst [vmem:[%s177 + $0x78] sm:$0xff] %v1959
      %1992 = vst [vmem:[%s177 + $0x80] sm:$0xff] %v1960
      %1993 = vst [vmem:[%s177 + $0x88] sm:$0xff] %v1961
      %1994 = vst [vmem:[%s177 + $0x90] sm:$0xff] %v1962
      %1995 = vst [vmem:[%s177 + $0x98] sm:$0xff] %v1963
      %1996 = vst [vmem:[%s177 + $0xa0] sm:$0xff] %v1964
      %1997 = vst [vmem:[%s177 + $0xa8] sm:$0xff] %v1965
      %1998 = vst [vmem:[%s177 + $0xb0] sm:$0xff] %v1966
      %1999 = vst [vmem:[%s177 + $0xb8] sm:$0xff] %v1967
      %2000 = vst [vmem:[%s177 + $0xc0] sm:$0xff] %v1968
      %2001 = vst [vmem:[%s177 + $0xc8] sm:$0xff] %v1969
      %2002 = vst [vmem:[%s177 + $0xd0] sm:$0xff] %v1970
      %2003 = vst [vmem:[%s177 + $0xd8] sm:$0xff] %v1971
      %2004 = vst [vmem:[%s177 + $0xe0] sm:$0xff] %v1972
      %2005 = vst [vmem:[%s177 + $0xe8] sm:$0xff] %v1973
      %2006 = vst [vmem:[%s177 + $0xf0] sm:$0xff] %v1974
      %2007 = vst [vmem:[%s177 + $0xf8] sm:$0xff] %v1975
      %v2008 = vld [vmem:[%s1291 + $0x2] sm:$0xff]
      %v2009 = vld [vmem:[%s1291 + $0xa] sm:$0xff]
      %v2010 = vld [vmem:[%s1291 + $0x1a] sm:$0xff]
      %v2011 = vld [vmem:[%s1291 + $0x22] sm:$0xff]
      %v2012 = vld [vmem:[%s1291 + $0x32] sm:$0xff]
      %v2013 = vld [vmem:[%s1291 + $0x3a] sm:$0xff]
      %v2014 = vld [vmem:[%s1291 + $0x4a] sm:$0xff]
      %v2015 = vld [vmem:[%s1291 + $0x52] sm:$0xff]
      %v2016 = vld [vmem:[%s1291 + $0x62] sm:$0xff]
      %v2017 = vld [vmem:[%s1291 + $0x6a] sm:$0xff]
      %v2018 = vld [vmem:[%s1291 + $0x7a] sm:$0xff]
      %v2019 = vld [vmem:[%s1291 + $0x82] sm:$0xff]
      %v2020 = vld [vmem:[%s1291 + $0x92] sm:$0xff]
      %v2021 = vld [vmem:[%s1291 + $0x9a] sm:$0xff]
      %v2022 = vld [vmem:[%s1291 + $0xaa] sm:$0xff]
      %v2023 = vld [vmem:[%s1291 + $0xb2] sm:$0xff]
      %v2024 = vld [vmem:[%s1291 + $0xc2] sm:$0xff]
      %v2025 = vld [vmem:[%s1291 + $0xca] sm:$0xff]
      %v2026 = vld [vmem:[%s1291 + $0xda] sm:$0xff]
      %v2027 = vld [vmem:[%s1291 + $0xe2] sm:$0xff]
      %v2028 = vld [vmem:[%s1291 + $0xf2] sm:$0xff]
      %v2029 = vld [vmem:[%s1291 + $0xfa] sm:$0xff]
      %v2030 = vld [vmem:[%s1291 + $0x10a] sm:$0xff]
      %v2031 = vld [vmem:[%s1291 + $0x112] sm:$0xff]
      %v2032 = vld [vmem:[%s1291 + $0x122] sm:$0xff]
      %v2033 = vld [vmem:[%s1291 + $0x12a] sm:$0xff]
      %v2034 = vld [vmem:[%s1291 + $0x13a] sm:$0xff]
      %v2035 = vld [vmem:[%s1291 + $0x142] sm:$0xff]
      %v2036 = vld [vmem:[%s1291 + $0x152] sm:$0xff]
      %v2037 = vld [vmem:[%s1291 + $0x15a] sm:$0xff]
      %v2038 = vld [vmem:[%s1291 + $0x16a] sm:$0xff]
      %v2039 = vld [vmem:[%s1291 + $0x172] sm:$0xff]
      %v2040 = vpack.c.bf16 %v2009, %v2008
      %v2041 = vpack.c.bf16 %v2011, %v2010
      %v2042 = vpack.c.bf16 %v2013, %v2012
      %v2043 = vpack.c.bf16 %v2015, %v2014
      %v2044 = vpack.c.bf16 %v2017, %v2016
      %v2045 = vpack.c.bf16 %v2019, %v2018
      %v2046 = vpack.c.bf16 %v2021, %v2020
      %v2047 = vpack.c.bf16 %v2023, %v2022
      %v2048 = vpack.c.bf16 %v2025, %v2024
      %v2049 = vpack.c.bf16 %v2027, %v2026
      %v2050 = vpack.c.bf16 %v2029, %v2028
      %v2051 = vpack.c.bf16 %v2031, %v2030
      %v2052 = vpack.c.bf16 %v2033, %v2032
      %v2053 = vpack.c.bf16 %v2035, %v2034
      %v2054 = vpack.c.bf16 %v2037, %v2036
      %v2055 = vpack.c.bf16 %v2039, %v2038
      %v2056 = vld [vmem:[%s177] sm:$0xff]
      %v2057 = vld [vmem:[%s177 + $0x8] sm:$0xff]
      %v2058 = vld [vmem:[%s177 + $0x10] sm:$0xff]
      %v2059 = vld [vmem:[%s177 + $0x18] sm:$0xff]
      %v2060 = vld [vmem:[%s177 + $0x20] sm:$0xff]
      %v2061 = vld [vmem:[%s177 + $0x28] sm:$0xff]
      %v2062 = vld [vmem:[%s177 + $0x30] sm:$0xff]
      %v2063 = vld [vmem:[%s177 + $0x38] sm:$0xff]
      %v2064 = vld [vmem:[%s177 + $0x40] sm:$0xff]
      %v2065 = vld [vmem:[%s177 + $0x48] sm:$0xff]
      %v2066 = vld [vmem:[%s177 + $0x50] sm:$0xff]
      %v2067 = vld [vmem:[%s177 + $0x58] sm:$0xff]
      %v2068 = vld [vmem:[%s177 + $0x60] sm:$0xff]
      %v2069 = vld [vmem:[%s177 + $0x68] sm:$0xff]
      %v2070 = vld [vmem:[%s177 + $0x70] sm:$0xff]
      %v2071 = vld [vmem:[%s177 + $0x78] sm:$0xff]
      %v2072 = vld [vmem:[%s177 + $0x80] sm:$0xff]
      %v2073 = vld [vmem:[%s177 + $0x88] sm:$0xff]
      %v2074 = vld [vmem:[%s177 + $0x90] sm:$0xff]
      %v2075 = vld [vmem:[%s177 + $0x98] sm:$0xff]
      %v2076 = vld [vmem:[%s177 + $0xa0] sm:$0xff]
      %v2077 = vld [vmem:[%s177 + $0xa8] sm:$0xff]
      %v2078 = vld [vmem:[%s177 + $0xb0] sm:$0xff]
      %v2079 = vld [vmem:[%s177 + $0xb8] sm:$0xff]
      %v2080 = vld [vmem:[%s177 + $0xc0] sm:$0xff]
      %v2081 = vld [vmem:[%s177 + $0xc8] sm:$0xff]
      %v2082 = vld [vmem:[%s177 + $0xd0] sm:$0xff]
      %v2083 = vld [vmem:[%s177 + $0xd8] sm:$0xff]
      %v2084 = vld [vmem:[%s177 + $0xe0] sm:$0xff]
      %v2085 = vld [vmem:[%s177 + $0xe8] sm:$0xff]
      %v2086 = vld [vmem:[%s177 + $0xf0] sm:$0xff]
      %v2087 = vld [vmem:[%s177 + $0xf8] sm:$0xff]
      %s2088 = scalar_lea.vmem %s1, 20
      %v2089 = vld [vmem:[%s2088] sm:$0xf]
      %v2091 = vsel %vm297, %v2040, 0
      %v2094 = vsel %vm297, %v2041, 0
      %v2097 = vsel %vm297, %v2042, 0
      %v2100 = vsel %vm297, %v2043, 0
      %v2103 = vsel %vm297, %v2044, 0
      %v2106 = vsel %vm297, %v2045, 0
      %v2109 = vsel %vm297, %v2046, 0
      %v2112 = vsel %vm297, %v2047, 0
      %v2115 = vsel %vm297, %v2048, 0
      %v2118 = vsel %vm297, %v2049, 0
      %v2121 = vsel %vm297, %v2050, 0
      %v2124 = vsel %vm297, %v2051, 0
      %v2127 = vsel %vm297, %v2052, 0
      %v2130 = vsel %vm297, %v2053, 0
      %v2133 = vsel %vm297, %v2054, 0
      %v2136 = vsel %vm297, %v2055, 0
      %v2139 = vsel %vm346, %v2089, 0
      %2141 = vmatprep.subr.bf16.mxu0 0
      %2142 = vmatpush1.bf16.msra.mxu0 %v2139
      %2143 = vmatprep.subr.bf16.mxu0 0
      %2144 = vmatpush1.bf16.msra.mxu0 0
      %2145 = vmatprep.subr.bf16.mxu0 0
      %2146 = vmatpush1.bf16.msra.mxu0 0
      %2147 = vmatprep.subr.bf16.mxu0 0
      %2148 = vmatpush1.bf16.msra.mxu0 0
      %2149 = vmatprep.subr.bf16.mxu0 0
      %2150 = vmatpush1.bf16.msra.mxu0 0
      %2151 = vmatprep.subr.bf16.mxu0 0
      %2152 = vmatpush1.bf16.msra.mxu0 0
      %2153 = vmatprep.subr.bf16.mxu0 0
      %2154 = vmatpush1.bf16.msra.mxu0 0
      %2155 = vmatprep.subr.bf16.mxu0 0
      %2156 = vmatpush1.bf16.msra.mxu0 0
      %2157 = vmatprep.subr.bf16.mxu0 0
      %2158 = vmatpush1.bf16.msra.mxu0 0
      %2159 = vmatprep.subr.bf16.mxu0 0
      %2160 = vmatpush1.bf16.msra.mxu0 0
      %2161 = vmatprep.subr.bf16.mxu0 0
      %2162 = vmatpush1.bf16.msra.mxu0 0
      %2163 = vmatprep.subr.bf16.mxu0 0
      %2164 = vmatpush1.bf16.msra.mxu0 0
      %2165 = vmatprep.subr.bf16.mxu0 0
      %2166 = vmatpush1.bf16.msra.mxu0 0
      %2167 = vmatprep.subr.bf16.mxu0 0
      %2168 = vmatpush1.bf16.msra.mxu0 0
      %2169 = vmatprep.subr.bf16.mxu0 0
      %2170 = vmatpush1.bf16.msra.mxu0 0
      %2171 = vmatprep.subr.bf16.mxu0 0
      %2172 = vmatpush1.bf16.msra.mxu0 0
      %2173 = vmatprep.mubr.bf16.mxu0 0
      %2174 = vmatmul.mubr.bf16.gmra.mrb[0].mxu0 %v2091
      %v2175 = vpop.f32.mrb[0].mxu0
      %v2176 = vadd.f32 0.0, %v2175
      %v2177 = vpop.f32.mrb[0].mxu0
      %v2178 = vpop.f32.mrb[0].mxu0
      %v2179 = vadd.f32 0.0, %v2178
      %v2180 = vpop.f32.mrb[0].mxu0
      %2181 = vmatprep.mubr.bf16.mxu0 0
      %2182 = vmatmul.mubr.bf16.gmra.mrb[0].mxu0 %v2094
      %v2183 = vpop.f32.mrb[0].mxu0
      %v2184 = vadd.f32 0.0, %v2183
      %v2185 = vpop.f32.mrb[0].mxu0
      %v2186 = vpop.f32.mrb[0].mxu0
      %v2187 = vadd.f32 0.0, %v2186
      %v2188 = vpop.f32.mrb[0].mxu0
      %2189 = vmatprep.mubr.bf16.mxu0 0
      %2190 = vmatmul.mubr.bf16.gmra.mrb[0].mxu0 %v2097
      %v2191 = vpop.f32.mrb[0].mxu0
      %v2192 = vadd.f32 0.0, %v2191
      %v2193 = vpop.f32.mrb[0].mxu0
      %v2194 = vpop.f32.mrb[0].mxu0
      %v2195 = vadd.f32 0.0, %v2194
      %v2196 = vpop.f32.mrb[0].mxu0
      %2197 = vmatprep.mubr.bf16.mxu0 0
      %2198 = vmatmul.mubr.bf16.gmra.mrb[0].mxu0 %v2100
      %v2199 = vpop.f32.mrb[0].mxu0
      %v2200 = vadd.f32 0.0, %v2199
      %v2201 = vpop.f32.mrb[0].mxu0
      %v2202 = vpop.f32.mrb[0].mxu0
      %v2203 = vadd.f32 0.0, %v2202
      %v2204 = vpop.f32.mrb[0].mxu0
      %2205 = vmatprep.mubr.bf16.mxu0 0
      %2206 = vmatmul.mubr.bf16.gmra.mrb[0].mxu0 %v2103
      %v2207 = vpop.f32.mrb[0].mxu0
      %v2208 = vadd.f32 0.0, %v2207
      %v2209 = vpop.f32.mrb[0].mxu0
      %v2210 = vpop.f32.mrb[0].mxu0
      %v2211 = vadd.f32 0.0, %v2210
      %v2212 = vpop.f32.mrb[0].mxu0
      %2213 = vmatprep.mubr.bf16.mxu0 0
      %2214 = vmatmul.mubr.bf16.gmra.mrb[0].mxu0 %v2106
      %v2215 = vpop.f32.mrb[0].mxu0
      %v2216 = vadd.f32 0.0, %v2215
      %v2217 = vpop.f32.mrb[0].mxu0
      %v2218 = vpop.f32.mrb[0].mxu0
      %v2219 = vadd.f32 0.0, %v2218
      %v2220 = vpop.f32.mrb[0].mxu0
      %2221 = vmatprep.mubr.bf16.mxu0 0
      %2222 = vmatmul.mubr.bf16.gmra.mrb[0].mxu0 %v2109
      %v2223 = vpop.f32.mrb[0].mxu0
      %v2224 = vadd.f32 0.0, %v2223
      %v2225 = vpop.f32.mrb[0].mxu0
      %v2226 = vpop.f32.mrb[0].mxu0
      %v2227 = vadd.f32 0.0, %v2226
      %v2228 = vpop.f32.mrb[0].mxu0
      %2229 = vmatprep.mubr.bf16.mxu0 0
      %2230 = vmatmul.mubr.bf16.gmra.mrb[0].mxu0 %v2112
      %v2231 = vpop.f32.mrb[0].mxu0
      %v2232 = vadd.f32 0.0, %v2231
      %v2233 = vpop.f32.mrb[0].mxu0
      %v2234 = vpop.f32.mrb[0].mxu0
      %v2235 = vadd.f32 0.0, %v2234
      %v2236 = vpop.f32.mrb[0].mxu0
      %2237 = vmatprep.mubr.bf16.mxu0 0
      %2238 = vmatmul.mubr.bf16.gmra.mrb[0].mxu0 %v2115
      %v2239 = vpop.f32.mrb[0].mxu0
      %v2240 = vadd.f32 0.0, %v2239
      %v2241 = vpop.f32.mrb[0].mxu0
      %v2242 = vpop.f32.mrb[0].mxu0
      %v2243 = vadd.f32 0.0, %v2242
      %v2244 = vpop.f32.mrb[0].mxu0
      %2245 = vmatprep.mubr.bf16.mxu0 0
      %2246 = vmatmul.mubr.bf16.gmra.mrb[0].mxu0 %v2118
      %v2247 = vpop.f32.mrb[0].mxu0
      %v2248 = vadd.f32 0.0, %v2247
      %v2249 = vpop.f32.mrb[0].mxu0
      %v2250 = vpop.f32.mrb[0].mxu0
      %v2251 = vadd.f32 0.0, %v2250
      %v2252 = vpop.f32.mrb[0].mxu0
      %2253 = vmatprep.mubr.bf16.mxu0 0
      %2254 = vmatmul.mubr.bf16.gmra.mrb[0].mxu0 %v2121
      %v2255 = vpop.f32.mrb[0].mxu0
      %v2256 = vadd.f32 0.0, %v2255
      %v2257 = vpop.f32.mrb[0].mxu0
      %v2258 = vpop.f32.mrb[0].mxu0
      %v2259 = vadd.f32 0.0, %v2258
      %v2260 = vpop.f32.mrb[0].mxu0
      %2261 = vmatprep.mubr.bf16.mxu0 0
      %2262 = vmatmul.mubr.bf16.gmra.mrb[0].mxu0 %v2124
      %v2263 = vpop.f32.mrb[0].mxu0
      %v2264 = vadd.f32 0.0, %v2263
      %v2265 = vpop.f32.mrb[0].mxu0
      %v2266 = vpop.f32.mrb[0].mxu0
      %v2267 = vadd.f32 0.0, %v2266
      %v2268 = vpop.f32.mrb[0].mxu0
      %2269 = vmatprep.mubr.bf16.mxu0 0
      %2270 = vmatmul.mubr.bf16.gmra.mrb[0].mxu0 %v2127
      %v2271 = vpop.f32.mrb[0].mxu0
      %v2272 = vadd.f32 0.0, %v2271
      %v2273 = vpop.f32.mrb[0].mxu0
      %v2274 = vpop.f32.mrb[0].mxu0
      %v2275 = vadd.f32 0.0, %v2274
      %v2276 = vpop.f32.mrb[0].mxu0
      %2277 = vmatprep.mubr.bf16.mxu0 0
      %2278 = vmatmul.mubr.bf16.gmra.mrb[0].mxu0 %v2130
      %v2279 = vpop.f32.mrb[0].mxu0
      %v2280 = vadd.f32 0.0, %v2279
      %v2281 = vpop.f32.mrb[0].mxu0
      %v2282 = vpop.f32.mrb[0].mxu0
      %v2283 = vadd.f32 0.0, %v2282
      %v2284 = vpop.f32.mrb[0].mxu0
      %2285 = vmatprep.mubr.bf16.mxu0 0
      %2286 = vmatmul.mubr.bf16.gmra.mrb[0].mxu0 %v2133
      %v2287 = vpop.f32.mrb[0].mxu0
      %v2288 = vadd.f32 0.0, %v2287
      %v2289 = vpop.f32.mrb[0].mxu0
      %v2290 = vpop.f32.mrb[0].mxu0
      %v2291 = vadd.f32 0.0, %v2290
      %v2292 = vpop.f32.mrb[0].mxu0
      %2293 = vmatprep.mubr.bf16.mxu0 0
      %2294 = vmatmul.mubr.bf16.gmra.mrb[0].mxu0 %v2136
      %v2295 = vpop.f32.mrb[0].mxu0
      %v2296 = vadd.f32 0.0, %v2295
      %v2297 = vpop.f32.mrb[0].mxu0
      %v2298 = vpop.f32.mrb[0].mxu0
      %v2299 = vadd.f32 0.0, %v2298
      %v2300 = vpop.f32.mrb[0].mxu0
      %2301 = vdwg.mxu0
      %v2302 = vadd.f32 %v2056, %v2176
      %v2303 = vadd.f32 %v2057, %v2179
      %v2304 = vadd.f32 %v2058, %v2184
      %v2305 = vadd.f32 %v2059, %v2187
      %v2306 = vadd.f32 %v2060, %v2192
      %v2307 = vadd.f32 %v2061, %v2195
      %v2308 = vadd.f32 %v2062, %v2200
      %v2309 = vadd.f32 %v2063, %v2203
      %v2310 = vadd.f32 %v2064, %v2208
      %v2311 = vadd.f32 %v2065, %v2211
      %v2312 = vadd.f32 %v2066, %v2216
      %v2313 = vadd.f32 %v2067, %v2219
      %v2314 = vadd.f32 %v2068, %v2224
      %v2315 = vadd.f32 %v2069, %v2227
      %v2316 = vadd.f32 %v2070, %v2232
      %v2317 = vadd.f32 %v2071, %v2235
      %v2318 = vadd.f32 %v2072, %v2240
      %v2319 = vadd.f32 %v2073, %v2243
      %v2320 = vadd.f32 %v2074, %v2248
      %v2321 = vadd.f32 %v2075, %v2251
      %v2322 = vadd.f32 %v2076, %v2256
      %v2323 = vadd.f32 %v2077, %v2259
      %v2324 = vadd.f32 %v2078, %v2264
      %v2325 = vadd.f32 %v2079, %v2267
      %v2326 = vadd.f32 %v2080, %v2272
      %v2327 = vadd.f32 %v2081, %v2275
      %v2328 = vadd.f32 %v2082, %v2280
      %v2329 = vadd.f32 %v2083, %v2283
      %v2330 = vadd.f32 %v2084, %v2288
      %v2331 = vadd.f32 %v2085, %v2291
      %v2332 = vadd.f32 %v2086, %v2296
      %v2333 = vadd.f32 %v2087, %v2299
      %2334 = vst [vmem:[%s177] sm:$0xff] %v2302
      %2335 = vst [vmem:[%s177 + $0x8] sm:$0xff] %v2303
      %2336 = vst [vmem:[%s177 + $0x10] sm:$0xff] %v2304
      %2337 = vst [vmem:[%s177 + $0x18] sm:$0xff] %v2305
      %2338 = vst [vmem:[%s177 + $0x20] sm:$0xff] %v2306
      %2339 = vst [vmem:[%s177 + $0x28] sm:$0xff] %v2307
      %2340 = vst [vmem:[%s177 + $0x30] sm:$0xff] %v2308
      %2341 = vst [vmem:[%s177 + $0x38] sm:$0xff] %v2309
      %2342 = vst [vmem:[%s177 + $0x40] sm:$0xff] %v2310
      %2343 = vst [vmem:[%s177 + $0x48] sm:$0xff] %v2311
      %2344 = vst [vmem:[%s177 + $0x50] sm:$0xff] %v2312
      %2345 = vst [vmem:[%s177 + $0x58] sm:$0xff] %v2313
      %2346 = vst [vmem:[%s177 + $0x60] sm:$0xff] %v2314
      %2347 = vst [vmem:[%s177 + $0x68] sm:$0xff] %v2315
      %2348 = vst [vmem:[%s177 + $0x70] sm:$0xff] %v2316
      %2349 = vst [vmem:[%s177 + $0x78] sm:$0xff] %v2317
      %2350 = vst [vmem:[%s177 + $0x80] sm:$0xff] %v2318
      %2351 = vst [vmem:[%s177 + $0x88] sm:$0xff] %v2319
      %2352 = vst [vmem:[%s177 + $0x90] sm:$0xff] %v2320
      %2353 = vst [vmem:[%s177 + $0x98] sm:$0xff] %v2321
      %2354 = vst [vmem:[%s177 + $0xa0] sm:$0xff] %v2322
      %2355 = vst [vmem:[%s177 + $0xa8] sm:$0xff] %v2323
      %2356 = vst [vmem:[%s177 + $0xb0] sm:$0xff] %v2324
      %2357 = vst [vmem:[%s177 + $0xb8] sm:$0xff] %v2325
      %2358 = vst [vmem:[%s177 + $0xc0] sm:$0xff] %v2326
      %2359 = vst [vmem:[%s177 + $0xc8] sm:$0xff] %v2327
      %2360 = vst [vmem:[%s177 + $0xd0] sm:$0xff] %v2328
      %2361 = vst [vmem:[%s177 + $0xd8] sm:$0xff] %v2329
      %2362 = vst [vmem:[%s177 + $0xe0] sm:$0xff] %v2330
      %2363 = vst [vmem:[%s177 + $0xe8] sm:$0xff] %v2331
      %2364 = vst [vmem:[%s177 + $0xf0] sm:$0xff] %v2332
      %2365 = vst [vmem:[%s177 + $0xf8] sm:$0xff] %v2333
      %s2366 = scalar_lea.vmem %s172, 48
      %v2367 = vld [vmem:[%s2366] sm:$0xff]
      %v2368 = vld [vmem:[%s2366 + $0x8] sm:$0xff]
      %v2369 = vld [vmem:[%s2366 + $0x18] sm:$0xff]
      %v2370 = vld [vmem:[%s2366 + $0x20] sm:$0xff]
      %v2371 = vld [vmem:[%s2366 + $0x30] sm:$0xff]
      %v2372 = vld [vmem:[%s2366 + $0x38] sm:$0xff]
      %v2373 = vld [vmem:[%s2366 + $0x48] sm:$0xff]
      %v2374 = vld [vmem:[%s2366 + $0x50] sm:$0xff]
      %v2375 = vld [vmem:[%s2366 + $0x60] sm:$0xff]
      %v2376 = vld [vmem:[%s2366 + $0x68] sm:$0xff]
      %v2377 = vld [vmem:[%s2366 + $0x78] sm:$0xff]
      %v2378 = vld [vmem:[%s2366 + $0x80] sm:$0xff]
      %v2379 = vld [vmem:[%s2366 + $0x90] sm:$0xff]
      %v2380 = vld [vmem:[%s2366 + $0x98] sm:$0xff]
      %v2381 = vld [vmem:[%s2366 + $0xa8] sm:$0xff]
      %v2382 = vld [vmem:[%s2366 + $0xb0] sm:$0xff]
      %v2383 = vld [vmem:[%s2366 + $0xc0] sm:$0xff]
      %v2384 = vld [vmem:[%s2366 + $0xc8] sm:$0xff]
      %v2385 = vld [vmem:[%s2366 + $0xd8] sm:$0xff]
      %v2386 = vld [vmem:[%s2366 + $0xe0] sm:$0xff]
      %v2387 = vld [vmem:[%s2366 + $0xf0] sm:$0xff]
      %v2388 = vld [vmem:[%s2366 + $0xf8] sm:$0xff]
      %v2389 = vld [vmem:[%s2366 + $0x108] sm:$0xff]
      %v2390 = vld [vmem:[%s2366 + $0x110] sm:$0xff]
      %v2391 = vld [vmem:[%s2366 + $0x120] sm:$0xff]
      %v2392 = vld [vmem:[%s2366 + $0x128] sm:$0xff]
      %v2393 = vld [vmem:[%s2366 + $0x138] sm:$0xff]
      %v2394 = vld [vmem:[%s2366 + $0x140] sm:$0xff]
      %v2395 = vld [vmem:[%s2366 + $0x150] sm:$0xff]
      %v2396 = vld [vmem:[%s2366 + $0x158] sm:$0xff]
      %v2397 = vld [vmem:[%s2366 + $0x168] sm:$0xff]
      %v2398 = vld [vmem:[%s2366 + $0x170] sm:$0xff]
      %v2399 = vpack.c.bf16 %v2368, %v2367
      %v2400 = vpack.c.bf16 %v2370, %v2369
      %v2401 = vpack.c.bf16 %v2372, %v2371
      %v2402 = vpack.c.bf16 %v2374, %v2373
      %v2403 = vpack.c.bf16 %v2376, %v2375
      %v2404 = vpack.c.bf16 %v2378, %v2377
      %v2405 = vpack.c.bf16 %v2380, %v2379
      %v2406 = vpack.c.bf16 %v2382, %v2381
      %v2407 = vpack.c.bf16 %v2384, %v2383
      %v2408 = vpack.c.bf16 %v2386, %v2385
      %v2409 = vpack.c.bf16 %v2388, %v2387
      %v2410 = vpack.c.bf16 %v2390, %v2389
      %v2411 = vpack.c.bf16 %v2392, %v2391
      %v2412 = vpack.c.bf16 %v2394, %v2393
      %v2413 = vpack.c.bf16 %v2396, %v2395
      %v2414 = vpack.c.bf16 %v2398, %v2397
      %v2415 = vld [vmem:[%s177] sm:$0xff]
      %v2416 = vld [vmem:[%s177 + $0x8] sm:$0xff]
      %v2417 = vld [vmem:[%s177 + $0x10] sm:$0xff]
      %v2418 = vld [vmem:[%s177 + $0x18] sm:$0xff]
      %v2419 = vld [vmem:[%s177 + $0x20] sm:$0xff]
      %v2420 = vld [vmem:[%s177 + $0x28] sm:$0xff]
      %v2421 = vld [vmem:[%s177 + $0x30] sm:$0xff]
      %v2422 = vld [vmem:[%s177 + $0x38] sm:$0xff]
      %v2423 = vld [vmem:[%s177 + $0x40] sm:$0xff]
      %v2424 = vld [vmem:[%s177 + $0x48] sm:$0xff]
      %v2425 = vld [vmem:[%s177 + $0x50] sm:$0xff]
      %v2426 = vld [vmem:[%s177 + $0x58] sm:$0xff]
      %v2427 = vld [vmem:[%s177 + $0x60] sm:$0xff]
      %v2428 = vld [vmem:[%s177 + $0x68] sm:$0xff]
      %v2429 = vld [vmem:[%s177 + $0x70] sm:$0xff]
      %v2430 = vld [vmem:[%s177 + $0x78] sm:$0xff]
      %v2431 = vld [vmem:[%s177 + $0x80] sm:$0xff]
      %v2432 = vld [vmem:[%s177 + $0x88] sm:$0xff]
      %v2433 = vld [vmem:[%s177 + $0x90] sm:$0xff]
      %v2434 = vld [vmem:[%s177 + $0x98] sm:$0xff]
      %v2435 = vld [vmem:[%s177 + $0xa0] sm:$0xff]
      %v2436 = vld [vmem:[%s177 + $0xa8] sm:$0xff]
      %v2437 = vld [vmem:[%s177 + $0xb0] sm:$0xff]
      %v2438 = vld [vmem:[%s177 + $0xb8] sm:$0xff]
      %v2439 = vld [vmem:[%s177 + $0xc0] sm:$0xff]
      %v2440 = vld [vmem:[%s177 + $0xc8] sm:$0xff]
      %v2441 = vld [vmem:[%s177 + $0xd0] sm:$0xff]
      %v2442 = vld [vmem:[%s177 + $0xd8] sm:$0xff]
      %v2443 = vld [vmem:[%s177 + $0xe0] sm:$0xff]
      %v2444 = vld [vmem:[%s177 + $0xe8] sm:$0xff]
      %v2445 = vld [vmem:[%s177 + $0xf0] sm:$0xff]
      %v2446 = vld [vmem:[%s177 + $0xf8] sm:$0xff]
      %s2447 = scalar_lea.vmem %s1, 24
      %v2448 = vld [vmem:[%s2447] sm:$0xf]
      %v2450 = vsel %vm297, %v2399, 0
      %v2453 = vsel %vm297, %v2400, 0
      %v2456 = vsel %vm297, %v2401, 0
      %v2459 = vsel %vm297, %v2402, 0
      %v2462 = vsel %vm297, %v2403, 0
      %v2465 = vsel %vm297, %v2404, 0
      %v2468 = vsel %vm297, %v2405, 0
      %v2471 = vsel %vm297, %v2406, 0
      %v2474 = vsel %vm297, %v2407, 0
      %v2477 = vsel %vm297, %v2408, 0
      %v2480 = vsel %vm297, %v2409, 0
      %v2483 = vsel %vm297, %v2410, 0
      %v2486 = vsel %vm297, %v2411, 0
      %v2489 = vsel %vm297, %v2412, 0
      %v2492 = vsel %vm297, %v2413, 0
      %v2495 = vsel %vm297, %v2414, 0
      %v2498 = vsel %vm346, %v2448, 0
      %2500 = vmatprep.subr.bf16.mxu0 0
      %2501 = vmatpush1.bf16.msra.mxu0 %v2498
      %2502 = vmatprep.subr.bf16.mxu0 0
      %2503 = vmatpush1.bf16.msra.mxu0 0
      %2504 = vmatprep.subr.bf16.mxu0 0
      %2505 = vmatpush1.bf16.msra.mxu0 0
      %2506 = vmatprep.subr.bf16.mxu0 0
      %2507 = vmatpush1.bf16.msra.mxu0 0
      %2508 = vmatprep.subr.bf16.mxu0 0
      %2509 = vmatpush1.bf16.msra.mxu0 0
      %2510 = vmatprep.subr.bf16.mxu0 0
      %2511 = vmatpush1.bf16.msra.mxu0 0
      %2512 = vmatprep.subr.bf16.mxu0 0
      %2513 = vmatpush1.bf16.msra.mxu0 0
      %2514 = vmatprep.subr.bf16.mxu0 0
      %2515 = vmatpush1.bf16.msra.mxu0 0
      %2516 = vmatprep.subr.bf16.mxu0 0
      %2517 = vmatpush1.bf16.msra.mxu0 0
      %2518 = vmatprep.subr.bf16.mxu0 0
      %2519 = vmatpush1.bf16.msra.mxu0 0
      %2520 = vmatprep.subr.bf16.mxu0 0
      %2521 = vmatpush1.bf16.msra.mxu0 0
      %2522 = vmatprep.subr.bf16.mxu0 0
      %2523 = vmatpush1.bf16.msra.mxu0 0
      %2524 = vmatprep.subr.bf16.mxu0 0
      %2525 = vmatpush1.bf16.msra.mxu0 0
      %2526 = vmatprep.subr.bf16.mxu0 0
      %2527 = vmatpush1.bf16.msra.mxu0 0
      %2528 = vmatprep.subr.bf16.mxu0 0
      %2529 = vmatpush1.bf16.msra.mxu0 0
      %2530 = vmatprep.subr.bf16.mxu0 0
      %2531 = vmatpush1.bf16.msra.mxu0 0
      %2532 = vmatprep.mubr.bf16.mxu0 0
      %2533 = vmatmul.mubr.bf16.gmra.mrb[0].mxu0 %v2450
      %v2534 = vpop.f32.mrb[0].mxu0
      %v2535 = vadd.f32 0.0, %v2534
      %v2536 = vpop.f32.mrb[0].mxu0
      %v2537 = vpop.f32.mrb[0].mxu0
      %v2538 = vadd.f32 0.0, %v2537
      %v2539 = vpop.f32.mrb[0].mxu0
      %2540 = vmatprep.mubr.bf16.mxu0 0
      %2541 = vmatmul.mubr.bf16.gmra.mrb[0].mxu0 %v2453
      %v2542 = vpop.f32.mrb[0].mxu0
      %v2543 = vadd.f32 0.0, %v2542
      %v2544 = vpop.f32.mrb[0].mxu0
      %v2545 = vpop.f32.mrb[0].mxu0
      %v2546 = vadd.f32 0.0, %v2545
      %v2547 = vpop.f32.mrb[0].mxu0
      %2548 = vmatprep.mubr.bf16.mxu0 0
      %2549 = vmatmul.mubr.bf16.gmra.mrb[0].mxu0 %v2456
      %v2550 = vpop.f32.mrb[0].mxu0
      %v2551 = vadd.f32 0.0, %v2550
      %v2552 = vpop.f32.mrb[0].mxu0
      %v2553 = vpop.f32.mrb[0].mxu0
      %v2554 = vadd.f32 0.0, %v2553
      %v2555 = vpop.f32.mrb[0].mxu0
      %2556 = vmatprep.mubr.bf16.mxu0 0
      %2557 = vmatmul.mubr.bf16.gmra.mrb[0].mxu0 %v2459
      %v2558 = vpop.f32.mrb[0].mxu0
      %v2559 = vadd.f32 0.0, %v2558
      %v2560 = vpop.f32.mrb[0].mxu0
      %v2561 = vpop.f32.mrb[0].mxu0
      %v2562 = vadd.f32 0.0, %v2561
      %v2563 = vpop.f32.mrb[0].mxu0
      %2564 = vmatprep.mubr.bf16.mxu0 0
      %2565 = vmatmul.mubr.bf16.gmra.mrb[0].mxu0 %v2462
      %v2566 = vpop.f32.mrb[0].mxu0
      %v2567 = vadd.f32 0.0, %v2566
      %v2568 = vpop.f32.mrb[0].mxu0
      %v2569 = vpop.f32.mrb[0].mxu0
      %v2570 = vadd.f32 0.0, %v2569
      %v2571 = vpop.f32.mrb[0].mxu0
      %2572 = vmatprep.mubr.bf16.mxu0 0
      %2573 = vmatmul.mubr.bf16.gmra.mrb[0].mxu0 %v2465
      %v2574 = vpop.f32.mrb[0].mxu0
      %v2575 = vadd.f32 0.0, %v2574
      %v2576 = vpop.f32.mrb[0].mxu0
      %v2577 = vpop.f32.mrb[0].mxu0
      %v2578 = vadd.f32 0.0, %v2577
      %v2579 = vpop.f32.mrb[0].mxu0
      %2580 = vmatprep.mubr.bf16.mxu0 0
      %2581 = vmatmul.mubr.bf16.gmra.mrb[0].mxu0 %v2468
      %v2582 = vpop.f32.mrb[0].mxu0
      %v2583 = vadd.f32 0.0, %v2582
      %v2584 = vpop.f32.mrb[0].mxu0
      %v2585 = vpop.f32.mrb[0].mxu0
      %v2586 = vadd.f32 0.0, %v2585
      %v2587 = vpop.f32.mrb[0].mxu0
      %2588 = vmatprep.mubr.bf16.mxu0 0
      %2589 = vmatmul.mubr.bf16.gmra.mrb[0].mxu0 %v2471
      %v2590 = vpop.f32.mrb[0].mxu0
      %v2591 = vadd.f32 0.0, %v2590
      %v2592 = vpop.f32.mrb[0].mxu0
      %v2593 = vpop.f32.mrb[0].mxu0
      %v2594 = vadd.f32 0.0, %v2593
      %v2595 = vpop.f32.mrb[0].mxu0
      %2596 = vmatprep.mubr.bf16.mxu0 0
      %2597 = vmatmul.mubr.bf16.gmra.mrb[0].mxu0 %v2474
      %v2598 = vpop.f32.mrb[0].mxu0
      %v2599 = vadd.f32 0.0, %v2598
      %v2600 = vpop.f32.mrb[0].mxu0
      %v2601 = vpop.f32.mrb[0].mxu0
      %v2602 = vadd.f32 0.0, %v2601
      %v2603 = vpop.f32.mrb[0].mxu0
      %2604 = vmatprep.mubr.bf16.mxu0 0
      %2605 = vmatmul.mubr.bf16.gmra.mrb[0].mxu0 %v2477
      %v2606 = vpop.f32.mrb[0].mxu0
      %v2607 = vadd.f32 0.0, %v2606
      %v2608 = vpop.f32.mrb[0].mxu0
      %v2609 = vpop.f32.mrb[0].mxu0
      %v2610 = vadd.f32 0.0, %v2609
      %v2611 = vpop.f32.mrb[0].mxu0
      %2612 = vmatprep.mubr.bf16.mxu0 0
      %2613 = vmatmul.mubr.bf16.gmra.mrb[0].mxu0 %v2480
      %v2614 = vpop.f32.mrb[0].mxu0
      %v2615 = vadd.f32 0.0, %v2614
      %v2616 = vpop.f32.mrb[0].mxu0
      %v2617 = vpop.f32.mrb[0].mxu0
      %v2618 = vadd.f32 0.0, %v2617
      %v2619 = vpop.f32.mrb[0].mxu0
      %2620 = vmatprep.mubr.bf16.mxu0 0
      %2621 = vmatmul.mubr.bf16.gmra.mrb[0].mxu0 %v2483
      %v2622 = vpop.f32.mrb[0].mxu0
      %v2623 = vadd.f32 0.0, %v2622
      %v2624 = vpop.f32.mrb[0].mxu0
      %v2625 = vpop.f32.mrb[0].mxu0
      %v2626 = vadd.f32 0.0, %v2625
      %v2627 = vpop.f32.mrb[0].mxu0
      %2628 = vmatprep.mubr.bf16.mxu0 0
      %2629 = vmatmul.mubr.bf16.gmra.mrb[0].mxu0 %v2486
      %v2630 = vpop.f32.mrb[0].mxu0
      %v2631 = vadd.f32 0.0, %v2630
      %v2632 = vpop.f32.mrb[0].mxu0
      %v2633 = vpop.f32.mrb[0].mxu0
      %v2634 = vadd.f32 0.0, %v2633
      %v2635 = vpop.f32.mrb[0].mxu0
      %2636 = vmatprep.mubr.bf16.mxu0 0
      %2637 = vmatmul.mubr.bf16.gmra.mrb[0].mxu0 %v2489
      %v2638 = vpop.f32.mrb[0].mxu0
      %v2639 = vadd.f32 0.0, %v2638
      %v2640 = vpop.f32.mrb[0].mxu0
      %v2641 = vpop.f32.mrb[0].mxu0
      %v2642 = vadd.f32 0.0, %v2641
      %v2643 = vpop.f32.mrb[0].mxu0
      %2644 = vmatprep.mubr.bf16.mxu0 0
      %2645 = vmatmul.mubr.bf16.gmra.mrb[0].mxu0 %v2492
      %v2646 = vpop.f32.mrb[0].mxu0
      %v2647 = vadd.f32 0.0, %v2646
      %v2648 = vpop.f32.mrb[0].mxu0
      %v2649 = vpop.f32.mrb[0].mxu0
      %v2650 = vadd.f32 0.0, %v2649
      %v2651 = vpop.f32.mrb[0].mxu0
      %2652 = vmatprep.mubr.bf16.mxu0 0
      %2653 = vmatmul.mubr.bf16.gmra.mrb[0].mxu0 %v2495
      %v2654 = vpop.f32.mrb[0].mxu0
      %v2655 = vadd.f32 0.0, %v2654
      %v2656 = vpop.f32.mrb[0].mxu0
      %v2657 = vpop.f32.mrb[0].mxu0
      %v2658 = vadd.f32 0.0, %v2657
      %v2659 = vpop.f32.mrb[0].mxu0
      %2660 = vdwg.mxu0
      %v2661 = vadd.f32 %v2415, %v2535
      %v2662 = vadd.f32 %v2416, %v2538
      %v2663 = vadd.f32 %v2417, %v2543
      %v2664 = vadd.f32 %v2418, %v2546
      %v2665 = vadd.f32 %v2419, %v2551
      %v2666 = vadd.f32 %v2420, %v2554
      %v2667 = vadd.f32 %v2421, %v2559
      %v2668 = vadd.f32 %v2422, %v2562
      %v2669 = vadd.f32 %v2423, %v2567
      %v2670 = vadd.f32 %v2424, %v2570
      %v2671 = vadd.f32 %v2425, %v2575
      %v2672 = vadd.f32 %v2426, %v2578
      %v2673 = vadd.f32 %v2427, %v2583
      %v2674 = vadd.f32 %v2428, %v2586
      %v2675 = vadd.f32 %v2429, %v2591
      %v2676 = vadd.f32 %v2430, %v2594
      %v2677 = vadd.f32 %v2431, %v2599
      %v2678 = vadd.f32 %v2432, %v2602
      %v2679 = vadd.f32 %v2433, %v2607
      %v2680 = vadd.f32 %v2434, %v2610
      %v2681 = vadd.f32 %v2435, %v2615
      %v2682 = vadd.f32 %v2436, %v2618
      %v2683 = vadd.f32 %v2437, %v2623
      %v2684 = vadd.f32 %v2438, %v2626
      %v2685 = vadd.f32 %v2439, %v2631
      %v2686 = vadd.f32 %v2440, %v2634
      %v2687 = vadd.f32 %v2441, %v2639
      %v2688 = vadd.f32 %v2442, %v2642
      %v2689 = vadd.f32 %v2443, %v2647
      %v2690 = vadd.f32 %v2444, %v2650
      %v2691 = vadd.f32 %v2445, %v2655
      %v2692 = vadd.f32 %v2446, %v2658
      %2693 = vst [vmem:[%s177] sm:$0xff] %v2661
      %2694 = vst [vmem:[%s177 + $0x8] sm:$0xff] %v2662
      %2695 = vst [vmem:[%s177 + $0x10] sm:$0xff] %v2663
      %2696 = vst [vmem:[%s177 + $0x18] sm:$0xff] %v2664
      %2697 = vst [vmem:[%s177 + $0x20] sm:$0xff] %v2665
      %2698 = vst [vmem:[%s177 + $0x28] sm:$0xff] %v2666
      %2699 = vst [vmem:[%s177 + $0x30] sm:$0xff] %v2667
      %2700 = vst [vmem:[%s177 + $0x38] sm:$0xff] %v2668
      %2701 = vst [vmem:[%s177 + $0x40] sm:$0xff] %v2669
      %2702 = vst [vmem:[%s177 + $0x48] sm:$0xff] %v2670
      %2703 = vst [vmem:[%s177 + $0x50] sm:$0xff] %v2671
      %2704 = vst [vmem:[%s177 + $0x58] sm:$0xff] %v2672
      %2705 = vst [vmem:[%s177 + $0x60] sm:$0xff] %v2673
      %2706 = vst [vmem:[%s177 + $0x68] sm:$0xff] %v2674
      %2707 = vst [vmem:[%s177 + $0x70] sm:$0xff] %v2675
      %2708 = vst [vmem:[%s177 + $0x78] sm:$0xff] %v2676
      %2709 = vst [vmem:[%s177 + $0x80] sm:$0xff] %v2677
      %2710 = vst [vmem:[%s177 + $0x88] sm:$0xff] %v2678
      %2711 = vst [vmem:[%s177 + $0x90] sm:$0xff] %v2679
      %2712 = vst [vmem:[%s177 + $0x98] sm:$0xff] %v2680
      %2713 = vst [vmem:[%s177 + $0xa0] sm:$0xff] %v2681
      %2714 = vst [vmem:[%s177 + $0xa8] sm:$0xff] %v2682
      %2715 = vst [vmem:[%s177 + $0xb0] sm:$0xff] %v2683
      %2716 = vst [vmem:[%s177 + $0xb8] sm:$0xff] %v2684
      %2717 = vst [vmem:[%s177 + $0xc0] sm:$0xff] %v2685
      %2718 = vst [vmem:[%s177 + $0xc8] sm:$0xff] %v2686
      %2719 = vst [vmem:[%s177 + $0xd0] sm:$0xff] %v2687
      %2720 = vst [vmem:[%s177 + $0xd8] sm:$0xff] %v2688
      %2721 = vst [vmem:[%s177 + $0xe0] sm:$0xff] %v2689
      %2722 = vst [vmem:[%s177 + $0xe8] sm:$0xff] %v2690
      %2723 = vst [vmem:[%s177 + $0xf0] sm:$0xff] %v2691
      %2724 = vst [vmem:[%s177 + $0xf8] sm:$0xff] %v2692
      %v2725 = vld [vmem:[%s2366 + $0x1] sm:$0xff]
      %v2726 = vld [vmem:[%s2366 + $0x9] sm:$0xff]
      %v2727 = vld [vmem:[%s2366 + $0x19] sm:$0xff]
      %v2728 = vld [vmem:[%s2366 + $0x21] sm:$0xff]
      %v2729 = vld [vmem:[%s2366 + $0x31] sm:$0xff]
      %v2730 = vld [vmem:[%s2366 + $0x39] sm:$0xff]
      %v2731 = vld [vmem:[%s2366 + $0x49] sm:$0xff]
      %v2732 = vld [vmem:[%s2366 + $0x51] sm:$0xff]
      %v2733 = vld [vmem:[%s2366 + $0x61] sm:$0xff]
      %v2734 = vld [vmem:[%s2366 + $0x69] sm:$0xff]
      %v2735 = vld [vmem:[%s2366 + $0x79] sm:$0xff]
      %v2736 = vld [vmem:[%s2366 + $0x81] sm:$0xff]
      %v2737 = vld [vmem:[%s2366 + $0x91] sm:$0xff]
      %v2738 = vld [vmem:[%s2366 + $0x99] sm:$0xff]
      %v2739 = vld [vmem:[%s2366 + $0xa9] sm:$0xff]
      %v2740 = vld [vmem:[%s2366 + $0xb1] sm:$0xff]
      %v2741 = vld [vmem:[%s2366 + $0xc1] sm:$0xff]
      %v2742 = vld [vmem:[%s2366 + $0xc9] sm:$0xff]
      %v2743 = vld [vmem:[%s2366 + $0xd9] sm:$0xff]
      %v2744 = vld [vmem:[%s2366 + $0xe1] sm:$0xff]
      %v2745 = vld [vmem:[%s2366 + $0xf1] sm:$0xff]
      %v2746 = vld [vmem:[%s2366 + $0xf9] sm:$0xff]
      %v2747 = vld [vmem:[%s2366 + $0x109] sm:$0xff]
      %v2748 = vld [vmem:[%s2366 + $0x111] sm:$0xff]
      %v2749 = vld [vmem:[%s2366 + $0x121] sm:$0xff]
      %v2750 = vld [vmem:[%s2366 + $0x129] sm:$0xff]
      %v2751 = vld [vmem:[%s2366 + $0x139] sm:$0xff]
      %v2752 = vld [vmem:[%s2366 + $0x141] sm:$0xff]
      %v2753 = vld [vmem:[%s2366 + $0x151] sm:$0xff]
      %v2754 = vld [vmem:[%s2366 + $0x159] sm:$0xff]
      %v2755 = vld [vmem:[%s2366 + $0x169] sm:$0xff]
      %v2756 = vld [vmem:[%s2366 + $0x171] sm:$0xff]
      %v2757 = vpack.c.bf16 %v2726, %v2725
      %v2758 = vpack.c.bf16 %v2728, %v2727
      %v2759 = vpack.c.bf16 %v2730, %v2729
      %v2760 = vpack.c.bf16 %v2732, %v2731
      %v2761 = vpack.c.bf16 %v2734, %v2733
      %v2762 = vpack.c.bf16 %v2736, %v2735
      %v2763 = vpack.c.bf16 %v2738, %v2737
      %v2764 = vpack.c.bf16 %v2740, %v2739
      %v2765 = vpack.c.bf16 %v2742, %v2741
      %v2766 = vpack.c.bf16 %v2744, %v2743
      %v2767 = vpack.c.bf16 %v2746, %v2745
      %v2768 = vpack.c.bf16 %v2748, %v2747
      %v2769 = vpack.c.bf16 %v2750, %v2749
      %v2770 = vpack.c.bf16 %v2752, %v2751
      %v2771 = vpack.c.bf16 %v2754, %v2753
      %v2772 = vpack.c.bf16 %v2756, %v2755
      %v2773 = vld [vmem:[%s177] sm:$0xff]
      %v2774 = vld [vmem:[%s177 + $0x8] sm:$0xff]
      %v2775 = vld [vmem:[%s177 + $0x10] sm:$0xff]
      %v2776 = vld [vmem:[%s177 + $0x18] sm:$0xff]
      %v2777 = vld [vmem:[%s177 + $0x20] sm:$0xff]
      %v2778 = vld [vmem:[%s177 + $0x28] sm:$0xff]
      %v2779 = vld [vmem:[%s177 + $0x30] sm:$0xff]
      %v2780 = vld [vmem:[%s177 + $0x38] sm:$0xff]
      %v2781 = vld [vmem:[%s177 + $0x40] sm:$0xff]
      %v2782 = vld [vmem:[%s177 + $0x48] sm:$0xff]
      %v2783 = vld [vmem:[%s177 + $0x50] sm:$0xff]
      %v2784 = vld [vmem:[%s177 + $0x58] sm:$0xff]
      %v2785 = vld [vmem:[%s177 + $0x60] sm:$0xff]
      %v2786 = vld [vmem:[%s177 + $0x68] sm:$0xff]
      %v2787 = vld [vmem:[%s177 + $0x70] sm:$0xff]
      %v2788 = vld [vmem:[%s177 + $0x78] sm:$0xff]
      %v2789 = vld [vmem:[%s177 + $0x80] sm:$0xff]
      %v2790 = vld [vmem:[%s177 + $0x88] sm:$0xff]
      %v2791 = vld [vmem:[%s177 + $0x90] sm:$0xff]
      %v2792 = vld [vmem:[%s177 + $0x98] sm:$0xff]
      %v2793 = vld [vmem:[%s177 + $0xa0] sm:$0xff]
      %v2794 = vld [vmem:[%s177 + $0xa8] sm:$0xff]
      %v2795 = vld [vmem:[%s177 + $0xb0] sm:$0xff]
      %v2796 = vld [vmem:[%s177 + $0xb8] sm:$0xff]
      %v2797 = vld [vmem:[%s177 + $0xc0] sm:$0xff]
      %v2798 = vld [vmem:[%s177 + $0xc8] sm:$0xff]
      %v2799 = vld [vmem:[%s177 + $0xd0] sm:$0xff]
      %v2800 = vld [vmem:[%s177 + $0xd8] sm:$0xff]
      %v2801 = vld [vmem:[%s177 + $0xe0] sm:$0xff]
      %v2802 = vld [vmem:[%s177 + $0xe8] sm:$0xff]
      %v2803 = vld [vmem:[%s177 + $0xf0] sm:$0xff]
      %v2804 = vld [vmem:[%s177 + $0xf8] sm:$0xff]
      %s2805 = scalar_lea.vmem %s1, 28
      %v2806 = vld [vmem:[%s2805] sm:$0xf]
      %v2808 = vsel %vm297, %v2757, 0
      %v2811 = vsel %vm297, %v2758, 0
      %v2814 = vsel %vm297, %v2759, 0
      %v2817 = vsel %vm297, %v2760, 0
      %v2820 = vsel %vm297, %v2761, 0
      %v2823 = vsel %vm297, %v2762, 0
      %v2826 = vsel %vm297, %v2763, 0
      %v2829 = vsel %vm297, %v2764, 0
      %v2832 = vsel %vm297, %v2765, 0
      %v2835 = vsel %vm297, %v2766, 0
      %v2838 = vsel %vm297, %v2767, 0
      %v2841 = vsel %vm297, %v2768, 0
      %v2844 = vsel %vm297, %v2769, 0
      %v2847 = vsel %vm297, %v2770, 0
      %v2850 = vsel %vm297, %v2771, 0
      %v2853 = vsel %vm297, %v2772, 0
      %v2856 = vsel %vm346, %v2806, 0
      %2858 = vmatprep.subr.bf16.mxu0 0
      %2859 = vmatpush1.bf16.msra.mxu0 %v2856
      %2860 = vmatprep.subr.bf16.mxu0 0
      %2861 = vmatpush1.bf16.msra.mxu0 0
      %2862 = vmatprep.subr.bf16.mxu0 0
      %2863 = vmatpush1.bf16.msra.mxu0 0
      %2864 = vmatprep.subr.bf16.mxu0 0
      %2865 = vmatpush1.bf16.msra.mxu0 0
      %2866 = vmatprep.subr.bf16.mxu0 0
      %2867 = vmatpush1.bf16.msra.mxu0 0
      %2868 = vmatprep.subr.bf16.mxu0 0
      %2869 = vmatpush1.bf16.msra.mxu0 0
      %2870 = vmatprep.subr.bf16.mxu0 0
      %2871 = vmatpush1.bf16.msra.mxu0 0
      %2872 = vmatprep.subr.bf16.mxu0 0
      %2873 = vmatpush1.bf16.msra.mxu0 0
      %2874 = vmatprep.subr.bf16.mxu0 0
      %2875 = vmatpush1.bf16.msra.mxu0 0
      %2876 = vmatprep.subr.bf16.mxu0 0
      %2877 = vmatpush1.bf16.msra.mxu0 0
      %2878 = vmatprep.subr.bf16.mxu0 0
      %2879 = vmatpush1.bf16.msra.mxu0 0
      %2880 = vmatprep.subr.bf16.mxu0 0
      %2881 = vmatpush1.bf16.msra.mxu0 0
      %2882 = vmatprep.subr.bf16.mxu0 0
      %2883 = vmatpush1.bf16.msra.mxu0 0
      %2884 = vmatprep.subr.bf16.mxu0 0
      %2885 = vmatpush1.bf16.msra.mxu0 0
      %2886 = vmatprep.subr.bf16.mxu0 0
      %2887 = vmatpush1.bf16.msra.mxu0 0
      %2888 = vmatprep.subr.bf16.mxu0 0
      %2889 = vmatpush1.bf16.msra.mxu0 0
      %2890 = vmatprep.mubr.bf16.mxu0 0
      %2891 = vmatmul.mubr.bf16.gmra.mrb[0].mxu0 %v2808
      %v2892 = vpop.f32.mrb[0].mxu0
      %v2893 = vadd.f32 0.0, %v2892
      %v2894 = vpop.f32.mrb[0].mxu0
      %v2895 = vpop.f32.mrb[0].mxu0
      %v2896 = vadd.f32 0.0, %v2895
      %v2897 = vpop.f32.mrb[0].mxu0
      %2898 = vmatprep.mubr.bf16.mxu0 0
      %2899 = vmatmul.mubr.bf16.gmra.mrb[0].mxu0 %v2811
      %v2900 = vpop.f32.mrb[0].mxu0
      %v2901 = vadd.f32 0.0, %v2900
      %v2902 = vpop.f32.mrb[0].mxu0
      %v2903 = vpop.f32.mrb[0].mxu0
      %v2904 = vadd.f32 0.0, %v2903
      %v2905 = vpop.f32.mrb[0].mxu0
      %2906 = vmatprep.mubr.bf16.mxu0 0
      %2907 = vmatmul.mubr.bf16.gmra.mrb[0].mxu0 %v2814
      %v2908 = vpop.f32.mrb[0].mxu0
      %v2909 = vadd.f32 0.0, %v2908
      %v2910 = vpop.f32.mrb[0].mxu0
      %v2911 = vpop.f32.mrb[0].mxu0
      %v2912 = vadd.f32 0.0, %v2911
      %v2913 = vpop.f32.mrb[0].mxu0
      %2914 = vmatprep.mubr.bf16.mxu0 0
      %2915 = vmatmul.mubr.bf16.gmra.mrb[0].mxu0 %v2817
      %v2916 = vpop.f32.mrb[0].mxu0
      %v2917 = vadd.f32 0.0, %v2916
      %v2918 = vpop.f32.mrb[0].mxu0
      %v2919 = vpop.f32.mrb[0].mxu0
      %v2920 = vadd.f32 0.0, %v2919
      %v2921 = vpop.f32.mrb[0].mxu0
      %2922 = vmatprep.mubr.bf16.mxu0 0
      %2923 = vmatmul.mubr.bf16.gmra.mrb[0].mxu0 %v2820
      %v2924 = vpop.f32.mrb[0].mxu0
      %v2925 = vadd.f32 0.0, %v2924
      %v2926 = vpop.f32.mrb[0].mxu0
      %v2927 = vpop.f32.mrb[0].mxu0
      %v2928 = vadd.f32 0.0, %v2927
      %v2929 = vpop.f32.mrb[0].mxu0
      %2930 = vmatprep.mubr.bf16.mxu0 0
      %2931 = vmatmul.mubr.bf16.gmra.mrb[0].mxu0 %v2823
      %v2932 = vpop.f32.mrb[0].mxu0
      %v2933 = vadd.f32 0.0, %v2932
      %v2934 = vpop.f32.mrb[0].mxu0
      %v2935 = vpop.f32.mrb[0].mxu0
      %v2936 = vadd.f32 0.0, %v2935
      %v2937 = vpop.f32.mrb[0].mxu0
      %2938 = vmatprep.mubr.bf16.mxu0 0
      %2939 = vmatmul.mubr.bf16.gmra.mrb[0].mxu0 %v2826
      %v2940 = vpop.f32.mrb[0].mxu0
      %v2941 = vadd.f32 0.0, %v2940
      %v2942 = vpop.f32.mrb[0].mxu0
      %v2943 = vpop.f32.mrb[0].mxu0
      %v2944 = vadd.f32 0.0, %v2943
      %v2945 = vpop.f32.mrb[0].mxu0
      %2946 = vmatprep.mubr.bf16.mxu0 0
      %2947 = vmatmul.mubr.bf16.gmra.mrb[0].mxu0 %v2829
      %v2948 = vpop.f32.mrb[0].mxu0
      %v2949 = vadd.f32 0.0, %v2948
      %v2950 = vpop.f32.mrb[0].mxu0
      %v2951 = vpop.f32.mrb[0].mxu0
      %v2952 = vadd.f32 0.0, %v2951
      %v2953 = vpop.f32.mrb[0].mxu0
      %2954 = vmatprep.mubr.bf16.mxu0 0
      %2955 = vmatmul.mubr.bf16.gmra.mrb[0].mxu0 %v2832
      %v2956 = vpop.f32.mrb[0].mxu0
      %v2957 = vadd.f32 0.0, %v2956
      %v2958 = vpop.f32.mrb[0].mxu0
      %v2959 = vpop.f32.mrb[0].mxu0
      %v2960 = vadd.f32 0.0, %v2959
      %v2961 = vpop.f32.mrb[0].mxu0
      %2962 = vmatprep.mubr.bf16.mxu0 0
      %2963 = vmatmul.mubr.bf16.gmra.mrb[0].mxu0 %v2835
      %v2964 = vpop.f32.mrb[0].mxu0
      %v2965 = vadd.f32 0.0, %v2964
      %v2966 = vpop.f32.mrb[0].mxu0
      %v2967 = vpop.f32.mrb[0].mxu0
      %v2968 = vadd.f32 0.0, %v2967
      %v2969 = vpop.f32.mrb[0].mxu0
      %2970 = vmatprep.mubr.bf16.mxu0 0
      %2971 = vmatmul.mubr.bf16.gmra.mrb[0].mxu0 %v2838
      %v2972 = vpop.f32.mrb[0].mxu0
      %v2973 = vadd.f32 0.0, %v2972
      %v2974 = vpop.f32.mrb[0].mxu0
      %v2975 = vpop.f32.mrb[0].mxu0
      %v2976 = vadd.f32 0.0, %v2975
      %v2977 = vpop.f32.mrb[0].mxu0
      %2978 = vmatprep.mubr.bf16.mxu0 0
      %2979 = vmatmul.mubr.bf16.gmra.mrb[0].mxu0 %v2841
      %v2980 = vpop.f32.mrb[0].mxu0
      %v2981 = vadd.f32 0.0, %v2980
      %v2982 = vpop.f32.mrb[0].mxu0
      %v2983 = vpop.f32.mrb[0].mxu0
      %v2984 = vadd.f32 0.0, %v2983
      %v2985 = vpop.f32.mrb[0].mxu0
      %2986 = vmatprep.mubr.bf16.mxu0 0
      %2987 = vmatmul.mubr.bf16.gmra.mrb[0].mxu0 %v2844
      %v2988 = vpop.f32.mrb[0].mxu0
      %v2989 = vadd.f32 0.0, %v2988
      %v2990 = vpop.f32.mrb[0].mxu0
      %v2991 = vpop.f32.mrb[0].mxu0
      %v2992 = vadd.f32 0.0, %v2991
      %v2993 = vpop.f32.mrb[0].mxu0
      %2994 = vmatprep.mubr.bf16.mxu0 0
      %2995 = vmatmul.mubr.bf16.gmra.mrb[0].mxu0 %v2847
      %v2996 = vpop.f32.mrb[0].mxu0
      %v2997 = vadd.f32 0.0, %v2996
      %v2998 = vpop.f32.mrb[0].mxu0
      %v2999 = vpop.f32.mrb[0].mxu0
      %v3000 = vadd.f32 0.0, %v2999
      %v3001 = vpop.f32.mrb[0].mxu0
      %3002 = vmatprep.mubr.bf16.mxu0 0
      %3003 = vmatmul.mubr.bf16.gmra.mrb[0].mxu0 %v2850
      %v3004 = vpop.f32.mrb[0].mxu0
      %v3005 = vadd.f32 0.0, %v3004
      %v3006 = vpop.f32.mrb[0].mxu0
      %v3007 = vpop.f32.mrb[0].mxu0
      %v3008 = vadd.f32 0.0, %v3007
      %v3009 = vpop.f32.mrb[0].mxu0
      %3010 = vmatprep.mubr.bf16.mxu0 0
      %3011 = vmatmul.mubr.bf16.gmra.mrb[0].mxu0 %v2853
      %v3012 = vpop.f32.mrb[0].mxu0
      %v3013 = vadd.f32 0.0, %v3012
      %v3014 = vpop.f32.mrb[0].mxu0
      %v3015 = vpop.f32.mrb[0].mxu0
      %v3016 = vadd.f32 0.0, %v3015
      %v3017 = vpop.f32.mrb[0].mxu0
      %3018 = vdwg.mxu0
      %v3019 = vadd.f32 %v2773, %v2893
      %v3020 = vadd.f32 %v2774, %v2896
      %v3021 = vadd.f32 %v2775, %v2901
      %v3022 = vadd.f32 %v2776, %v2904
      %v3023 = vadd.f32 %v2777, %v2909
      %v3024 = vadd.f32 %v2778, %v2912
      %v3025 = vadd.f32 %v2779, %v2917
      %v3026 = vadd.f32 %v2780, %v2920
      %v3027 = vadd.f32 %v2781, %v2925
      %v3028 = vadd.f32 %v2782, %v2928
      %v3029 = vadd.f32 %v2783, %v2933
      %v3030 = vadd.f32 %v2784, %v2936
      %v3031 = vadd.f32 %v2785, %v2941
      %v3032 = vadd.f32 %v2786, %v2944
      %v3033 = vadd.f32 %v2787, %v2949
      %v3034 = vadd.f32 %v2788, %v2952
      %v3035 = vadd.f32 %v2789, %v2957
      %v3036 = vadd.f32 %v2790, %v2960
      %v3037 = vadd.f32 %v2791, %v2965
      %v3038 = vadd.f32 %v2792, %v2968
      %v3039 = vadd.f32 %v2793, %v2973
      %v3040 = vadd.f32 %v2794, %v2976
      %v3041 = vadd.f32 %v2795, %v2981
      %v3042 = vadd.f32 %v2796, %v2984
      %v3043 = vadd.f32 %v2797, %v2989
      %v3044 = vadd.f32 %v2798, %v2992
      %v3045 = vadd.f32 %v2799, %v2997
      %v3046 = vadd.f32 %v2800, %v3000
      %v3047 = vadd.f32 %v2801, %v3005
      %v3048 = vadd.f32 %v2802, %v3008
      %v3049 = vadd.f32 %v2803, %v3013
      %v3050 = vadd.f32 %v2804, %v3016
      %3051 = vst [vmem:[%s177] sm:$0xff] %v3019
      %3052 = vst [vmem:[%s177 + $0x8] sm:$0xff] %v3020
      %3053 = vst [vmem:[%s177 + $0x10] sm:$0xff] %v3021
      %3054 = vst [vmem:[%s177 + $0x18] sm:$0xff] %v3022
      %3055 = vst [vmem:[%s177 + $0x20] sm:$0xff] %v3023
      %3056 = vst [vmem:[%s177 + $0x28] sm:$0xff] %v3024
      %3057 = vst [vmem:[%s177 + $0x30] sm:$0xff] %v3025
      %3058 = vst [vmem:[%s177 + $0x38] sm:$0xff] %v3026
      %3059 = vst [vmem:[%s177 + $0x40] sm:$0xff] %v3027
      %3060 = vst [vmem:[%s177 + $0x48] sm:$0xff] %v3028
      %3061 = vst [vmem:[%s177 + $0x50] sm:$0xff] %v3029
      %3062 = vst [vmem:[%s177 + $0x58] sm:$0xff] %v3030
      %3063 = vst [vmem:[%s177 + $0x60] sm:$0xff] %v3031
      %3064 = vst [vmem:[%s177 + $0x68] sm:$0xff] %v3032
      %3065 = vst [vmem:[%s177 + $0x70] sm:$0xff] %v3033
      %3066 = vst [vmem:[%s177 + $0x78] sm:$0xff] %v3034
      %3067 = vst [vmem:[%s177 + $0x80] sm:$0xff] %v3035
      %3068 = vst [vmem:[%s177 + $0x88] sm:$0xff] %v3036
      %3069 = vst [vmem:[%s177 + $0x90] sm:$0xff] %v3037
      %3070 = vst [vmem:[%s177 + $0x98] sm:$0xff] %v3038
      %3071 = vst [vmem:[%s177 + $0xa0] sm:$0xff] %v3039
      %3072 = vst [vmem:[%s177 + $0xa8] sm:$0xff] %v3040
      %3073 = vst [vmem:[%s177 + $0xb0] sm:$0xff] %v3041
      %3074 = vst [vmem:[%s177 + $0xb8] sm:$0xff] %v3042
      %3075 = vst [vmem:[%s177 + $0xc0] sm:$0xff] %v3043
      %3076 = vst [vmem:[%s177 + $0xc8] sm:$0xff] %v3044
      %3077 = vst [vmem:[%s177 + $0xd0] sm:$0xff] %v3045
      %3078 = vst [vmem:[%s177 + $0xd8] sm:$0xff] %v3046
      %3079 = vst [vmem:[%s177 + $0xe0] sm:$0xff] %v3047
      %3080 = vst [vmem:[%s177 + $0xe8] sm:$0xff] %v3048
      %3081 = vst [vmem:[%s177 + $0xf0] sm:$0xff] %v3049
      %3082 = vst [vmem:[%s177 + $0xf8] sm:$0xff] %v3050
      %v3083 = vld [vmem:[%s2366 + $0x2] sm:$0xff]
      %v3084 = vld [vmem:[%s2366 + $0xa] sm:$0xff]
      %v3085 = vld [vmem:[%s2366 + $0x1a] sm:$0xff]
      %v3086 = vld [vmem:[%s2366 + $0x22] sm:$0xff]
      %v3087 = vld [vmem:[%s2366 + $0x32] sm:$0xff]
      %v3088 = vld [vmem:[%s2366 + $0x3a] sm:$0xff]
      %v3089 = vld [vmem:[%s2366 + $0x4a] sm:$0xff]
      %v3090 = vld [vmem:[%s2366 + $0x52] sm:$0xff]
      %v3091 = vld [vmem:[%s2366 + $0x62] sm:$0xff]
      %v3092 = vld [vmem:[%s2366 + $0x6a] sm:$0xff]
      %v3093 = vld [vmem:[%s2366 + $0x7a] sm:$0xff]
      %v3094 = vld [vmem:[%s2366 + $0x82] sm:$0xff]
      %v3095 = vld [vmem:[%s2366 + $0x92] sm:$0xff]
      %v3096 = vld [vmem:[%s2366 + $0x9a] sm:$0xff]
      %v3097 = vld [vmem:[%s2366 + $0xaa] sm:$0xff]
      %v3098 = vld [vmem:[%s2366 + $0xb2] sm:$0xff]
      %v3099 = vld [vmem:[%s2366 + $0xc2] sm:$0xff]
      %v3100 = vld [vmem:[%s2366 + $0xca] sm:$0xff]
      %v3101 = vld [vmem:[%s2366 + $0xda] sm:$0xff]
      %v3102 = vld [vmem:[%s2366 + $0xe2] sm:$0xff]
      %v3103 = vld [vmem:[%s2366 + $0xf2] sm:$0xff]
      %v3104 = vld [vmem:[%s2366 + $0xfa] sm:$0xff]
      %v3105 = vld [vmem:[%s2366 + $0x10a] sm:$0xff]
      %v3106 = vld [vmem:[%s2366 + $0x112] sm:$0xff]
      %v3107 = vld [vmem:[%s2366 + $0x122] sm:$0xff]
      %v3108 = vld [vmem:[%s2366 + $0x12a] sm:$0xff]
      %v3109 = vld [vmem:[%s2366 + $0x13a] sm:$0xff]
      %v3110 = vld [vmem:[%s2366 + $0x142] sm:$0xff]
      %v3111 = vld [vmem:[%s2366 + $0x152] sm:$0xff]
      %v3112 = vld [vmem:[%s2366 + $0x15a] sm:$0xff]
      %v3113 = vld [vmem:[%s2366 + $0x16a] sm:$0xff]
      %v3114 = vld [vmem:[%s2366 + $0x172] sm:$0xff]
      %v3115 = vpack.c.bf16 %v3084, %v3083
      %v3116 = vpack.c.bf16 %v3086, %v3085
      %v3117 = vpack.c.bf16 %v3088, %v3087
      %v3118 = vpack.c.bf16 %v3090, %v3089
      %v3119 = vpack.c.bf16 %v3092, %v3091
      %v3120 = vpack.c.bf16 %v3094, %v3093
      %v3121 = vpack.c.bf16 %v3096, %v3095
      %v3122 = vpack.c.bf16 %v3098, %v3097
      %v3123 = vpack.c.bf16 %v3100, %v3099
      %v3124 = vpack.c.bf16 %v3102, %v3101
      %v3125 = vpack.c.bf16 %v3104, %v3103
      %v3126 = vpack.c.bf16 %v3106, %v3105
      %v3127 = vpack.c.bf16 %v3108, %v3107
      %v3128 = vpack.c.bf16 %v3110, %v3109
      %v3129 = vpack.c.bf16 %v3112, %v3111
      %v3130 = vpack.c.bf16 %v3114, %v3113
      %v3131 = vld [vmem:[%s177] sm:$0xff]
      %v3132 = vld [vmem:[%s177 + $0x8] sm:$0xff]
      %v3133 = vld [vmem:[%s177 + $0x10] sm:$0xff]
      %v3134 = vld [vmem:[%s177 + $0x18] sm:$0xff]
      %v3135 = vld [vmem:[%s177 + $0x20] sm:$0xff]
      %v3136 = vld [vmem:[%s177 + $0x28] sm:$0xff]
      %v3137 = vld [vmem:[%s177 + $0x30] sm:$0xff]
      %v3138 = vld [vmem:[%s177 + $0x38] sm:$0xff]
      %v3139 = vld [vmem:[%s177 + $0x40] sm:$0xff]
      %v3140 = vld [vmem:[%s177 + $0x48] sm:$0xff]
      %v3141 = vld [vmem:[%s177 + $0x50] sm:$0xff]
      %v3142 = vld [vmem:[%s177 + $0x58] sm:$0xff]
      %v3143 = vld [vmem:[%s177 + $0x60] sm:$0xff]
      %v3144 = vld [vmem:[%s177 + $0x68] sm:$0xff]
      %v3145 = vld [vmem:[%s177 + $0x70] sm:$0xff]
      %v3146 = vld [vmem:[%s177 + $0x78] sm:$0xff]
      %v3147 = vld [vmem:[%s177 + $0x80] sm:$0xff]
      %v3148 = vld [vmem:[%s177 + $0x88] sm:$0xff]
      %v3149 = vld [vmem:[%s177 + $0x90] sm:$0xff]
      %v3150 = vld [vmem:[%s177 + $0x98] sm:$0xff]
      %v3151 = vld [vmem:[%s177 + $0xa0] sm:$0xff]
      %v3152 = vld [vmem:[%s177 + $0xa8] sm:$0xff]
      %v3153 = vld [vmem:[%s177 + $0xb0] sm:$0xff]
      %v3154 = vld [vmem:[%s177 + $0xb8] sm:$0xff]
      %v3155 = vld [vmem:[%s177 + $0xc0] sm:$0xff]
      %v3156 = vld [vmem:[%s177 + $0xc8] sm:$0xff]
      %v3157 = vld [vmem:[%s177 + $0xd0] sm:$0xff]
      %v3158 = vld [vmem:[%s177 + $0xd8] sm:$0xff]
      %v3159 = vld [vmem:[%s177 + $0xe0] sm:$0xff]
      %v3160 = vld [vmem:[%s177 + $0xe8] sm:$0xff]
      %v3161 = vld [vmem:[%s177 + $0xf0] sm:$0xff]
      %v3162 = vld [vmem:[%s177 + $0xf8] sm:$0xff]
      %s3163 = scalar_lea.vmem %s1, 32
      %v3164 = vld [vmem:[%s3163] sm:$0xf]
      %v3166 = vsel %vm297, %v3115, 0
      %v3169 = vsel %vm297, %v3116, 0
      %v3172 = vsel %vm297, %v3117, 0
      %v3175 = vsel %vm297, %v3118, 0
      %v3178 = vsel %vm297, %v3119, 0
      %v3181 = vsel %vm297, %v3120, 0
      %v3184 = vsel %vm297, %v3121, 0
      %v3187 = vsel %vm297, %v3122, 0
      %v3190 = vsel %vm297, %v3123, 0
      %v3193 = vsel %vm297, %v3124, 0
      %v3196 = vsel %vm297, %v3125, 0
      %v3199 = vsel %vm297, %v3126, 0
      %v3202 = vsel %vm297, %v3127, 0
      %v3205 = vsel %vm297, %v3128, 0
      %v3208 = vsel %vm297, %v3129, 0
      %v3211 = vsel %vm297, %v3130, 0
      %v3214 = vsel %vm346, %v3164, 0
      %3216 = vmatprep.subr.bf16.mxu0 0
      %3217 = vmatpush1.bf16.msra.mxu0 %v3214
      %3218 = vmatprep.subr.bf16.mxu0 0
      %3219 = vmatpush1.bf16.msra.mxu0 0
      %3220 = vmatprep.subr.bf16.mxu0 0
      %3221 = vmatpush1.bf16.msra.mxu0 0
      %3222 = vmatprep.subr.bf16.mxu0 0
      %3223 = vmatpush1.bf16.msra.mxu0 0
      %3224 = vmatprep.subr.bf16.mxu0 0
      %3225 = vmatpush1.bf16.msra.mxu0 0
      %3226 = vmatprep.subr.bf16.mxu0 0
      %3227 = vmatpush1.bf16.msra.mxu0 0
      %3228 = vmatprep.subr.bf16.mxu0 0
      %3229 = vmatpush1.bf16.msra.mxu0 0
      %3230 = vmatprep.subr.bf16.mxu0 0
      %3231 = vmatpush1.bf16.msra.mxu0 0
      %3232 = vmatprep.subr.bf16.mxu0 0
      %3233 = vmatpush1.bf16.msra.mxu0 0
      %3234 = vmatprep.subr.bf16.mxu0 0
      %3235 = vmatpush1.bf16.msra.mxu0 0
      %3236 = vmatprep.subr.bf16.mxu0 0
      %3237 = vmatpush1.bf16.msra.mxu0 0
      %3238 = vmatprep.subr.bf16.mxu0 0
      %3239 = vmatpush1.bf16.msra.mxu0 0
      %3240 = vmatprep.subr.bf16.mxu0 0
      %3241 = vmatpush1.bf16.msra.mxu0 0
      %3242 = vmatprep.subr.bf16.mxu0 0
      %3243 = vmatpush1.bf16.msra.mxu0 0
      %3244 = vmatprep.subr.bf16.mxu0 0
      %3245 = vmatpush1.bf16.msra.mxu0 0
      %3246 = vmatprep.subr.bf16.mxu0 0
      %3247 = vmatpush1.bf16.msra.mxu0 0
      %3248 = vmatprep.mubr.bf16.mxu0 0
      %3249 = vmatmul.mubr.bf16.gmra.mrb[0].mxu0 %v3166
      %v3250 = vpop.f32.mrb[0].mxu0
      %v3251 = vadd.f32 0.0, %v3250
      %v3252 = vpop.f32.mrb[0].mxu0
      %v3253 = vpop.f32.mrb[0].mxu0
      %v3254 = vadd.f32 0.0, %v3253
      %v3255 = vpop.f32.mrb[0].mxu0
      %3256 = vmatprep.mubr.bf16.mxu0 0
      %3257 = vmatmul.mubr.bf16.gmra.mrb[0].mxu0 %v3169
      %v3258 = vpop.f32.mrb[0].mxu0
      %v3259 = vadd.f32 0.0, %v3258
      %v3260 = vpop.f32.mrb[0].mxu0
      %v3261 = vpop.f32.mrb[0].mxu0
      %v3262 = vadd.f32 0.0, %v3261
      %v3263 = vpop.f32.mrb[0].mxu0
      %3264 = vmatprep.mubr.bf16.mxu0 0
      %3265 = vmatmul.mubr.bf16.gmra.mrb[0].mxu0 %v3172
      %v3266 = vpop.f32.mrb[0].mxu0
      %v3267 = vadd.f32 0.0, %v3266
      %v3268 = vpop.f32.mrb[0].mxu0
      %v3269 = vpop.f32.mrb[0].mxu0
      %v3270 = vadd.f32 0.0, %v3269
      %v3271 = vpop.f32.mrb[0].mxu0
      %3272 = vmatprep.mubr.bf16.mxu0 0
      %3273 = vmatmul.mubr.bf16.gmra.mrb[0].mxu0 %v3175
      %v3274 = vpop.f32.mrb[0].mxu0
      %v3275 = vadd.f32 0.0, %v3274
      %v3276 = vpop.f32.mrb[0].mxu0
      %v3277 = vpop.f32.mrb[0].mxu0
      %v3278 = vadd.f32 0.0, %v3277
      %v3279 = vpop.f32.mrb[0].mxu0
      %3280 = vmatprep.mubr.bf16.mxu0 0
      %3281 = vmatmul.mubr.bf16.gmra.mrb[0].mxu0 %v3178
      %v3282 = vpop.f32.mrb[0].mxu0
      %v3283 = vadd.f32 0.0, %v3282
      %v3284 = vpop.f32.mrb[0].mxu0
      %v3285 = vpop.f32.mrb[0].mxu0
      %v3286 = vadd.f32 0.0, %v3285
      %v3287 = vpop.f32.mrb[0].mxu0
      %3288 = vmatprep.mubr.bf16.mxu0 0
      %3289 = vmatmul.mubr.bf16.gmra.mrb[0].mxu0 %v3181
      %v3290 = vpop.f32.mrb[0].mxu0
      %v3291 = vadd.f32 0.0, %v3290
      %v3292 = vpop.f32.mrb[0].mxu0
      %v3293 = vpop.f32.mrb[0].mxu0
      %v3294 = vadd.f32 0.0, %v3293
      %v3295 = vpop.f32.mrb[0].mxu0
      %3296 = vmatprep.mubr.bf16.mxu0 0
      %3297 = vmatmul.mubr.bf16.gmra.mrb[0].mxu0 %v3184
      %v3298 = vpop.f32.mrb[0].mxu0
      %v3299 = vadd.f32 0.0, %v3298
      %v3300 = vpop.f32.mrb[0].mxu0
      %v3301 = vpop.f32.mrb[0].mxu0
      %v3302 = vadd.f32 0.0, %v3301
      %v3303 = vpop.f32.mrb[0].mxu0
      %3304 = vmatprep.mubr.bf16.mxu0 0
      %3305 = vmatmul.mubr.bf16.gmra.mrb[0].mxu0 %v3187
      %v3306 = vpop.f32.mrb[0].mxu0
      %v3307 = vadd.f32 0.0, %v3306
      %v3308 = vpop.f32.mrb[0].mxu0
      %v3309 = vpop.f32.mrb[0].mxu0
      %v3310 = vadd.f32 0.0, %v3309
      %v3311 = vpop.f32.mrb[0].mxu0
      %3312 = vmatprep.mubr.bf16.mxu0 0
      %3313 = vmatmul.mubr.bf16.gmra.mrb[0].mxu0 %v3190
      %v3314 = vpop.f32.mrb[0].mxu0
      %v3315 = vadd.f32 0.0, %v3314
      %v3316 = vpop.f32.mrb[0].mxu0
      %v3317 = vpop.f32.mrb[0].mxu0
      %v3318 = vadd.f32 0.0, %v3317
      %v3319 = vpop.f32.mrb[0].mxu0
      %3320 = vmatprep.mubr.bf16.mxu0 0
      %3321 = vmatmul.mubr.bf16.gmra.mrb[0].mxu0 %v3193
      %v3322 = vpop.f32.mrb[0].mxu0
      %v3323 = vadd.f32 0.0, %v3322
      %v3324 = vpop.f32.mrb[0].mxu0
      %v3325 = vpop.f32.mrb[0].mxu0
      %v3326 = vadd.f32 0.0, %v3325
      %v3327 = vpop.f32.mrb[0].mxu0
      %3328 = vmatprep.mubr.bf16.mxu0 0
      %3329 = vmatmul.mubr.bf16.gmra.mrb[0].mxu0 %v3196
      %v3330 = vpop.f32.mrb[0].mxu0
      %v3331 = vadd.f32 0.0, %v3330
      %v3332 = vpop.f32.mrb[0].mxu0
      %v3333 = vpop.f32.mrb[0].mxu0
      %v3334 = vadd.f32 0.0, %v3333
      %v3335 = vpop.f32.mrb[0].mxu0
      %3336 = vmatprep.mubr.bf16.mxu0 0
      %3337 = vmatmul.mubr.bf16.gmra.mrb[0].mxu0 %v3199
      %v3338 = vpop.f32.mrb[0].mxu0
      %v3339 = vadd.f32 0.0, %v3338
      %v3340 = vpop.f32.mrb[0].mxu0
      %v3341 = vpop.f32.mrb[0].mxu0
      %v3342 = vadd.f32 0.0, %v3341
      %v3343 = vpop.f32.mrb[0].mxu0
      %3344 = vmatprep.mubr.bf16.mxu0 0
      %3345 = vmatmul.mubr.bf16.gmra.mrb[0].mxu0 %v3202
      %v3346 = vpop.f32.mrb[0].mxu0
      %v3347 = vadd.f32 0.0, %v3346
      %v3348 = vpop.f32.mrb[0].mxu0
      %v3349 = vpop.f32.mrb[0].mxu0
      %v3350 = vadd.f32 0.0, %v3349
      %v3351 = vpop.f32.mrb[0].mxu0
      %3352 = vmatprep.mubr.bf16.mxu0 0
      %3353 = vmatmul.mubr.bf16.gmra.mrb[0].mxu0 %v3205
      %v3354 = vpop.f32.mrb[0].mxu0
      %v3355 = vadd.f32 0.0, %v3354
      %v3356 = vpop.f32.mrb[0].mxu0
      %v3357 = vpop.f32.mrb[0].mxu0
      %v3358 = vadd.f32 0.0, %v3357
      %v3359 = vpop.f32.mrb[0].mxu0
      %3360 = vmatprep.mubr.bf16.mxu0 0
      %3361 = vmatmul.mubr.bf16.gmra.mrb[0].mxu0 %v3208
      %v3362 = vpop.f32.mrb[0].mxu0
      %v3363 = vadd.f32 0.0, %v3362
      %v3364 = vpop.f32.mrb[0].mxu0
      %v3365 = vpop.f32.mrb[0].mxu0
      %v3366 = vadd.f32 0.0, %v3365
      %v3367 = vpop.f32.mrb[0].mxu0
      %3368 = vmatprep.mubr.bf16.mxu0 0
      %3369 = vmatmul.mubr.bf16.gmra.mrb[0].mxu0 %v3211
      %v3370 = vpop.f32.mrb[0].mxu0
      %v3371 = vadd.f32 0.0, %v3370
      %v3372 = vpop.f32.mrb[0].mxu0
      %v3373 = vpop.f32.mrb[0].mxu0
      %v3374 = vadd.f32 0.0, %v3373
      %v3375 = vpop.f32.mrb[0].mxu0
      %3376 = vdwg.mxu0
      %v3377 = vadd.f32 %v3131, %v3251
      %v3378 = vadd.f32 %v3132, %v3254
      %v3379 = vadd.f32 %v3133, %v3259
      %v3380 = vadd.f32 %v3134, %v3262
      %v3381 = vadd.f32 %v3135, %v3267
      %v3382 = vadd.f32 %v3136, %v3270
      %v3383 = vadd.f32 %v3137, %v3275
      %v3384 = vadd.f32 %v3138, %v3278
      %v3385 = vadd.f32 %v3139, %v3283
      %v3386 = vadd.f32 %v3140, %v3286
      %v3387 = vadd.f32 %v3141, %v3291
      %v3388 = vadd.f32 %v3142, %v3294
      %v3389 = vadd.f32 %v3143, %v3299
      %v3390 = vadd.f32 %v3144, %v3302
      %v3391 = vadd.f32 %v3145, %v3307
      %v3392 = vadd.f32 %v3146, %v3310
      %v3393 = vadd.f32 %v3147, %v3315
      %v3394 = vadd.f32 %v3148, %v3318
      %v3395 = vadd.f32 %v3149, %v3323
      %v3396 = vadd.f32 %v3150, %v3326
      %v3397 = vadd.f32 %v3151, %v3331
      %v3398 = vadd.f32 %v3152, %v3334
      %v3399 = vadd.f32 %v3153, %v3339
      %v3400 = vadd.f32 %v3154, %v3342
      %v3401 = vadd.f32 %v3155, %v3347
      %v3402 = vadd.f32 %v3156, %v3350
      %v3403 = vadd.f32 %v3157, %v3355
      %v3404 = vadd.f32 %v3158, %v3358
      %v3405 = vadd.f32 %v3159, %v3363
      %v3406 = vadd.f32 %v3160, %v3366
      %v3407 = vadd.f32 %v3161, %v3371
      %v3408 = vadd.f32 %v3162, %v3374
      %3409 = vst [vmem:[%s177] sm:$0xff] %v3377
      %3410 = vst [vmem:[%s177 + $0x8] sm:$0xff] %v3378
      %3411 = vst [vmem:[%s177 + $0x10] sm:$0xff] %v3379
      %3412 = vst [vmem:[%s177 + $0x18] sm:$0xff] %v3380
      %3413 = vst [vmem:[%s177 + $0x20] sm:$0xff] %v3381
      %3414 = vst [vmem:[%s177 + $0x28] sm:$0xff] %v3382
      %3415 = vst [vmem:[%s177 + $0x30] sm:$0xff] %v3383
      %3416 = vst [vmem:[%s177 + $0x38] sm:$0xff] %v3384
      %3417 = vst [vmem:[%s177 + $0x40] sm:$0xff] %v3385
      %3418 = vst [vmem:[%s177 + $0x48] sm:$0xff] %v3386
      %3419 = vst [vmem:[%s177 + $0x50] sm:$0xff] %v3387
      %3420 = vst [vmem:[%s177 + $0x58] sm:$0xff] %v3388
      %3421 = vst [vmem:[%s177 + $0x60] sm:$0xff] %v3389
      %3422 = vst [vmem:[%s177 + $0x68] sm:$0xff] %v3390
      %3423 = vst [vmem:[%s177 + $0x70] sm:$0xff] %v3391
      %3424 = vst [vmem:[%s177 + $0x78] sm:$0xff] %v3392
      %3425 = vst [vmem:[%s177 + $0x80] sm:$0xff] %v3393
      %3426 = vst [vmem:[%s177 + $0x88] sm:$0xff] %v3394
      %3427 = vst [vmem:[%s177 + $0x90] sm:$0xff] %v3395
      %3428 = vst [vmem:[%s177 + $0x98] sm:$0xff] %v3396
      %3429 = vst [vmem:[%s177 + $0xa0] sm:$0xff] %v3397
      %3430 = vst [vmem:[%s177 + $0xa8] sm:$0xff] %v3398
      %3431 = vst [vmem:[%s177 + $0xb0] sm:$0xff] %v3399
      %3432 = vst [vmem:[%s177 + $0xb8] sm:$0xff] %v3400
      %3433 = vst [vmem:[%s177 + $0xc0] sm:$0xff] %v3401
      %3434 = vst [vmem:[%s177 + $0xc8] sm:$0xff] %v3402
      %3435 = vst [vmem:[%s177 + $0xd0] sm:$0xff] %v3403
      %3436 = vst [vmem:[%s177 + $0xd8] sm:$0xff] %v3404
      %3437 = vst [vmem:[%s177 + $0xe0] sm:$0xff] %v3405
      %3438 = vst [vmem:[%s177 + $0xe8] sm:$0xff] %v3406
      %3439 = vst [vmem:[%s177 + $0xf0] sm:$0xff] %v3407
      %3440 = vst [vmem:[%s177 + $0xf8] sm:$0xff] %v3408
      %v3441 = vld [vmem:[%s177] sm:$0xff]
      %v3442 = vld [vmem:[%s177 + $0x8] sm:$0xff]
      %v3443 = vld [vmem:[%s177 + $0x10] sm:$0xff]
      %v3444 = vld [vmem:[%s177 + $0x18] sm:$0xff]
      %v3445 = vld [vmem:[%s177 + $0x20] sm:$0xff]
      %v3446 = vld [vmem:[%s177 + $0x28] sm:$0xff]
      %v3447 = vld [vmem:[%s177 + $0x30] sm:$0xff]
      %v3448 = vld [vmem:[%s177 + $0x38] sm:$0xff]
      %v3449 = vld [vmem:[%s177 + $0x40] sm:$0xff]
      %v3450 = vld [vmem:[%s177 + $0x48] sm:$0xff]
      %v3451 = vld [vmem:[%s177 + $0x50] sm:$0xff]
      %v3452 = vld [vmem:[%s177 + $0x58] sm:$0xff]
      %v3453 = vld [vmem:[%s177 + $0x60] sm:$0xff]
      %v3454 = vld [vmem:[%s177 + $0x68] sm:$0xff]
      %v3455 = vld [vmem:[%s177 + $0x70] sm:$0xff]
      %v3456 = vld [vmem:[%s177 + $0x78] sm:$0xff]
      %v3457 = vld [vmem:[%s177 + $0x80] sm:$0xff]
      %v3458 = vld [vmem:[%s177 + $0x88] sm:$0xff]
      %v3459 = vld [vmem:[%s177 + $0x90] sm:$0xff]
      %v3460 = vld [vmem:[%s177 + $0x98] sm:$0xff]
      %v3461 = vld [vmem:[%s177 + $0xa0] sm:$0xff]
      %v3462 = vld [vmem:[%s177 + $0xa8] sm:$0xff]
      %v3463 = vld [vmem:[%s177 + $0xb0] sm:$0xff]
      %v3464 = vld [vmem:[%s177 + $0xb8] sm:$0xff]
      %v3465 = vld [vmem:[%s177 + $0xc0] sm:$0xff]
      %v3466 = vld [vmem:[%s177 + $0xc8] sm:$0xff]
      %v3467 = vld [vmem:[%s177 + $0xd0] sm:$0xff]
      %v3468 = vld [vmem:[%s177 + $0xd8] sm:$0xff]
      %v3469 = vld [vmem:[%s177 + $0xe0] sm:$0xff]
      %v3470 = vld [vmem:[%s177 + $0xe8] sm:$0xff]
      %v3471 = vld [vmem:[%s177 + $0xf0] sm:$0xff]
      %v3472 = vld [vmem:[%s177 + $0xf8] sm:$0xff]
      %v3473 = vadd.f32 %v3441, %v3442
      %v3474 = vadd.f32 %v3473, %v3443
      %v3475 = vadd.f32 %v3474, %v3444
      %v3476 = vadd.f32 %v3475, %v3445
      %v3477 = vadd.f32 %v3476, %v3446
      %v3478 = vadd.f32 %v3477, %v3447
      %v3479 = vadd.f32 %v3478, %v3448
      %v3480 = vadd.f32 %v3479, %v3449
      %v3481 = vadd.f32 %v3480, %v3450
      %v3482 = vadd.f32 %v3481, %v3451
      %v3483 = vadd.f32 %v3482, %v3452
      %v3484 = vadd.f32 %v3483, %v3453
      %v3485 = vadd.f32 %v3484, %v3454
      %v3486 = vadd.f32 %v3485, %v3455
      %v3487 = vadd.f32 %v3486, %v3456
      %v3488 = vadd.f32 %v3487, %v3457
      %v3489 = vadd.f32 %v3488, %v3458
      %v3490 = vadd.f32 %v3489, %v3459
      %v3491 = vadd.f32 %v3490, %v3460
      %v3492 = vadd.f32 %v3491, %v3461
      %v3493 = vadd.f32 %v3492, %v3462
      %v3494 = vadd.f32 %v3493, %v3463
      %v3495 = vadd.f32 %v3494, %v3464
      %v3496 = vadd.f32 %v3495, %v3465
      %v3497 = vadd.f32 %v3496, %v3466
      %v3498 = vadd.f32 %v3497, %v3467
      %v3499 = vadd.f32 %v3498, %v3468
      %v3500 = vadd.f32 %v3499, %v3469
      %v3501 = vadd.f32 %v3500, %v3470
      %v3502 = vadd.f32 %v3501, %v3471
      %v3503 = vadd.f32 %v3502, %v3472
      %v3504 = vrot.slane %v3503, 4
      %v3505 = vadd.f32 %v3503, %v3504
      %v3506 = vrot.slane %v3505, 2
      %v3507 = vadd.f32 %v3505, %v3506
      %v3508 = vrot.slane %v3507, 1
      %v3509 = vadd.f32 %v3507, %v3508
      %v3510 = vmul.f32 %v3441, %v3441
      %v3511 = vmul.f32 %v3442, %v3442
      %v3512 = vmul.f32 %v3443, %v3443
      %v3513 = vmul.f32 %v3444, %v3444
      %v3514 = vmul.f32 %v3445, %v3445
      %v3515 = vmul.f32 %v3446, %v3446
      %v3516 = vmul.f32 %v3447, %v3447
      %v3517 = vmul.f32 %v3448, %v3448
      %v3518 = vmul.f32 %v3449, %v3449
      %v3519 = vmul.f32 %v3450, %v3450
      %v3520 = vmul.f32 %v3451, %v3451
      %v3521 = vmul.f32 %v3452, %v3452
      %v3522 = vmul.f32 %v3453, %v3453
      %v3523 = vmul.f32 %v3454, %v3454
      %v3524 = vmul.f32 %v3455, %v3455
      %v3525 = vmul.f32 %v3456, %v3456
      %v3526 = vmul.f32 %v3457, %v3457
      %v3527 = vmul.f32 %v3458, %v3458
      %v3528 = vmul.f32 %v3459, %v3459
      %v3529 = vmul.f32 %v3460, %v3460
      %v3530 = vmul.f32 %v3461, %v3461
      %v3531 = vmul.f32 %v3462, %v3462
      %v3532 = vmul.f32 %v3463, %v3463
      %v3533 = vmul.f32 %v3464, %v3464
      %v3534 = vmul.f32 %v3465, %v3465
      %v3535 = vmul.f32 %v3466, %v3466
      %v3536 = vmul.f32 %v3467, %v3467
      %v3537 = vmul.f32 %v3468, %v3468
      %v3538 = vmul.f32 %v3469, %v3469
      %v3539 = vmul.f32 %v3470, %v3470
      %v3540 = vmul.f32 %v3471, %v3471
      %v3541 = vmul.f32 %v3472, %v3472
      %v3542 = vadd.f32 %v3510, %v3511
      %v3543 = vadd.f32 %v3542, %v3512
      %v3544 = vadd.f32 %v3543, %v3513
      %v3545 = vadd.f32 %v3544, %v3514
      %v3546 = vadd.f32 %v3545, %v3515
      %v3547 = vadd.f32 %v3546, %v3516
      %v3548 = vadd.f32 %v3547, %v3517
      %v3549 = vadd.f32 %v3548, %v3518
      %v3550 = vadd.f32 %v3549, %v3519
      %v3551 = vadd.f32 %v3550, %v3520
      %v3552 = vadd.f32 %v3551, %v3521
      %v3553 = vadd.f32 %v3552, %v3522
      %v3554 = vadd.f32 %v3553, %v3523
      %v3555 = vadd.f32 %v3554, %v3524
      %v3556 = vadd.f32 %v3555, %v3525
      %v3557 = vadd.f32 %v3556, %v3526
      %v3558 = vadd.f32 %v3557, %v3527
      %v3559 = vadd.f32 %v3558, %v3528
      %v3560 = vadd.f32 %v3559, %v3529
      %v3561 = vadd.f32 %v3560, %v3530
      %v3562 = vadd.f32 %v3561, %v3531
      %v3563 = vadd.f32 %v3562, %v3532
      %v3564 = vadd.f32 %v3563, %v3533
      %v3565 = vadd.f32 %v3564, %v3534
      %v3566 = vadd.f32 %v3565, %v3535
      %v3567 = vadd.f32 %v3566, %v3536
      %v3568 = vadd.f32 %v3567, %v3537
      %v3569 = vadd.f32 %v3568, %v3538
      %v3570 = vadd.f32 %v3569, %v3539
      %v3571 = vadd.f32 %v3570, %v3540
      %v3572 = vadd.f32 %v3571, %v3541
      %v3573 = vrot.slane %v3572, 4
      %v3574 = vadd.f32 %v3572, %v3573
      %v3575 = vrot.slane %v3574, 2
      %v3576 = vadd.f32 %v3574, %v3575
      %v3577 = vrot.slane %v3576, 1
      %v3578 = vadd.f32 %v3576, %v3577
      %vm3579 = vcmask 1040384
      %v3580 = vsel %vm3579, %v3509, %v3578
      %vm3581 = vcmask 1041408
      %v3582 = vsel %vm3581, %v3580, 0.0
      %3583 = vst [vmem:[%s182] sm:$0xff] %v3582
      %s3584 = smul.u32 32, %s15
      %p3585 = scmp.lt.s32.totalorder %s3584, 63
      %s3586 = scalar_select %p3585, %s3584, 63
      %s3587 = smul.addr %s3586, 8
      %s3588 = scalar_lea.vmem %s2, %s3587
      %p3589 = scmp.lt.s32.totalorder %s15, 1
      %s3590 = scalar_select %p3589, %s15, 1
      %s3591 = smul.addr %s3590, 8
      %s3592 = scalar_lea.vmem %s3, %s3591
      // Predicated region
      $region29: #{decoder_block_forward.6} parent=27 // pred_check
        %p3593 = pneg %p80
      $region30: #{decoder_block_forward.6} parent=27 // pred_check_branch
        %3595 = sbr.rel (%p3593) target = $region32
      $region31: #{decoder_block_forward.6} parent=27 // pred_region
        %s3596 = smul.u32 32, %s15
      $region32: #{decoder_block_forward.6} parent=27 // pred_fallthru
        _
      // Predicated region
      $region33: #{decoder_block_forward.6} parent=27 // pred_check
        %p3597 = pneg %p106
      $region34: #{decoder_block_forward.6} parent=27 // pred_check_branch
        %3599 = sbr.rel (%p3597) target = $region36
      $region35: #{decoder_block_forward.6} parent=27 // pred_region
        _
      $region36: #{decoder_block_forward.6} parent=27 // pred_fallthru
        _
    $region28: #{decoder_block_forward.6} parent=5 // pred_fallthru
      _
    %p3600 = scmp.le.s32.totalorder 2, %s10
    // Predicated region
    $region37: #{decoder_block_forward.6} parent=5 // pred_check
      %p3601 = pneg %p3600
    $region38: #{decoder_block_forward.6} parent=5 // pred_check_branch
      %3603 = sbr.rel (%p3601) target = $region40
    $region39: #{decoder_block_forward.6} parent=5 // pred_region
      %s3604 = ssub.s32 %s10, 2
      // Predicated region
      $region41: #{decoder_block_forward.6} parent=39 // pred_check
        %p3605 = pneg %p86
      $region42: #{decoder_block_forward.6} parent=39 // pred_check_branch
        %3607 = sbr.rel (%p3605) target = $region44
      $region43: #{decoder_block_forward.6} parent=39 // pred_region
        %s3608 = smul.u32 32, %s16
        %p3609 = scmp.lt.s32.totalorder %s3608, 63
        %s3610 = scalar_select %p3609, %s3608, 63
        %s3611 = smul.addr %s3610, 8
        %s3612 = scalar_lea.vmem %s2, %s3611
      $region44: #{decoder_block_forward.6} parent=39 // pred_fallthru
        _
      // Predicated region
      $region45: #{decoder_block_forward.6} parent=39 // pred_check
        %p3613 = pneg %p112
      $region46: #{decoder_block_forward.6} parent=39 // pred_check_branch
        %3615 = sbr.rel (%p3613) target = $region48
      $region47: #{decoder_block_forward.6} parent=39 // pred_region
        %p3616 = scmp.lt.s32.totalorder %s16, 1
        %s3617 = scalar_select %p3616, %s16, 1
        %s3618 = smul.addr %s3617, 8
        %s3619 = scalar_lea.vmem %s3, %s3618
      $region48: #{decoder_block_forward.6} parent=39 // pred_fallthru
        _
    $region40: #{decoder_block_forward.6} parent=5 // pred_fallthru
      _
  $region6: #{decoder_block_forward.6} parent=0 // loop_footer
    %s14 = sadd.s32 1, %s10
  $region7: #{decoder_block_forward.6} parent=0 // loop_footer_branch
    %9 = sbr.rel target = $region3
  $region8: #{decoder_block_forward.6} parent=0 // loop_exit
    _

// kernel: decoder_block_forward.8
$region0: #{decoder_block_forward.8}
  #allocation0 [shape = 'u32[]', space=smem, size = 0x4, offset = 0x4, fixed_abs, tag = 'smem constant byte address 0x4 - core index']
  #allocation1 [shape = 'u32[144,128]{1,0:T(1,128)}', space=vmem, size = 0x12000, scoped, tag = 'internal scratch']
  %s0 = inlined_call_operand.vmem [shape: f32[2,18,18,4], index: 0, kind: input, shape index: {}]
  %s1 = inlined_call_operand.vmem [shape: bf16[9,4,128], index: 1, kind: input, shape index: {}]
  %s2 = inlined_call_operand.vmem [shape: f32[512,128], index: 2, kind: output, shape index: {0}]
  %s3 = inlined_call_operand.vmem [shape: f32[16,128], index: 3, kind: output, shape index: {1}]
  %4 = xla_tuple %s2, %s3
  %s5 = sld [smem:[#allocation0]]
  $region49: #{decoder_block_forward.8} parent=0
    _
  %s7 = ssub.s32 1, %s5
  %s8 = scalar_select 0, %s7, %s5
  loop: start=0, step=1, limit=4
  $region2: #{decoder_block_forward.8} parent=0 // loop_pre_header
    _
  $region3: #{decoder_block_forward.8} parent=0 // loop_header
    %s10 = sphi 0, %s14
    %p11 = scmp.ge.s32.totalorder %s10, 4
    %s20 = sphi 0, %s22
    %s23 = sphi 0, %s20
    %s24 = sphi 0, %s23
    %s40 = sphi 0, %s24
    %s44 = sphi 0, %s44
    %s46 = sphi 0, %s44
    %s47 = sphi 0, %s46
    %s61 = sphi 0, %s47
    %s67 = sphi 0, %s69
    %s70 = sphi 0, %s67
    %s71 = sphi 0, %s70
    %s87 = sphi 0, %s71
    %s93 = sphi 0, %s95
    %s96 = sphi 0, %s93
    %s97 = sphi 0, %s96
    %s113 = sphi 0, %s97
  $region4: #{decoder_block_forward.8} parent=0 // loop_header_branch
    %13 = sbr.rel (%p11) target = $region8
  $region5: #{decoder_block_forward.8} parent=0 // loop_body
    %s15 = ssub.s32 %s10, 1
    %s16 = ssub.s32 %s10, 2
    %s17 = sadd.s32 %s10, 1
    %s18 = ssub.s32 %s10, %s17
    %p19 = scmp.eq.s32.totalorder %s18, 0
    %s21 = sadd.s32 %s20, 1
    %s22 = scalar_select %p19, %s20, %s21
    %p25 = pneg %p19
    %p26 = scmp.eq.s32.totalorder %s10, 1
    %p27 = por %p25, %p26
    %p28 = scmp.ne.s32.totalorder %s20, %s23
    %p29 = scmp.eq.s32.totalorder %s10, 0
    %p30 = por %p28, %p29
    %p31 = scmp.ne.s32.totalorder %s20, %s23
    %p32 = scmp.eq.s32.totalorder %s15, 1
    %p33 = por %p31, %p32
    %p34 = scmp.ne.s32.totalorder %s23, %s24
    %p35 = scmp.eq.s32.totalorder %s15, 0
    %p36 = por %p34, %p35
    %p37 = scmp.ne.s32.totalorder %s23, %s24
    %p38 = scmp.eq.s32.totalorder %s16, 1
    %p39 = por %p37, %p38
    %p41 = scmp.ne.s32.totalorder %s24, %s40
    %p42 = scmp.eq.s32.totalorder %s16, 0
    %p43 = por %p41, %p42
    %s45 = sadd.s32 %s44, 1
    %p48 = scmp.eq.s32.totalorder %s10, 1
    %p49 = scmp.ne.s32.totalorder %s44, %s46
    %p50 = scmp.eq.s32.totalorder %s10, 0
    %p51 = por %p49, %p50
    %p52 = scmp.ne.s32.totalorder %s44, %s46
    %p53 = scmp.eq.s32.totalorder %s15, 1
    %p54 = por %p52, %p53
    %p55 = scmp.ne.s32.totalorder %s46, %s47
    %p56 = scmp.eq.s32.totalorder %s15, 0
    %p57 = por %p55, %p56
    %p58 = scmp.ne.s32.totalorder %s46, %s47
    %p59 = scmp.eq.s32.totalorder %s16, 1
    %p60 = por %p58, %p59
    %p62 = scmp.ne.s32.totalorder %s47, %s61
    %p63 = scmp.eq.s32.totalorder %s16, 0
    %p64 = por %p62, %p63
    %s65 = ssub.s32 %s10, %s17
    %p66 = scmp.eq.s32.totalorder %s65, 0
    %s68 = sadd.s32 %s67, 1
    %s69 = scalar_select %p66, %s67, %s68
    %p72 = pneg %p66
    %p73 = scmp.eq.s32.totalorder %s10, 1
    %p74 = por %p72, %p73
    %p75 = scmp.ne.s32.totalorder %s67, %s70
    %p76 = scmp.eq.s32.totalorder %s10, 0
    %p77 = por %p75, %p76
    %p78 = scmp.ne.s32.totalorder %s67, %s70
    %p79 = scmp.eq.s32.totalorder %s15, 1
    %p80 = por %p78, %p79
    %p81 = scmp.ne.s32.totalorder %s70, %s71
    %p82 = scmp.eq.s32.totalorder %s15, 0
    %p83 = por %p81, %p82
    %p84 = scmp.ne.s32.totalorder %s70, %s71
    %p85 = scmp.eq.s32.totalorder %s16, 1
    %p86 = por %p84, %p85
    %p88 = scmp.ne.s32.totalorder %s71, %s87
    %p89 = scmp.eq.s32.totalorder %s16, 0
    %p90 = por %p88, %p89
    %s91 = ssub.s32 %s10, %s17
    %p92 = scmp.eq.s32.totalorder %s91, 0
    %s94 = sadd.s32 %s93, 1
    %s95 = scalar_select %p92, %s93, %s94
    %p98 = pneg %p92
    %p99 = scmp.eq.s32.totalorder %s10, 1
    %p100 = por %p98, %p99
    %p101 = scmp.ne.s32.totalorder %s93, %s96
    %p102 = scmp.eq.s32.totalorder %s10, 0
    %p103 = por %p101, %p102
    %p104 = scmp.ne.s32.totalorder %s93, %s96
    %p105 = scmp.eq.s32.totalorder %s15, 1
    %p106 = por %p104, %p105
    %p107 = scmp.ne.s32.totalorder %s96, %s97
    %p108 = scmp.eq.s32.totalorder %s15, 0
    %p109 = por %p107, %p108
    %p110 = scmp.ne.s32.totalorder %s96, %s97
    %p111 = scmp.eq.s32.totalorder %s16, 1
    %p112 = por %p110, %p111
    %p114 = scmp.ne.s32.totalorder %s97, %s113
    %p115 = scmp.eq.s32.totalorder %s16, 0
    %p116 = por %p114, %p115
    %p117 = scmp.le.s32.totalorder 1, %s10
    %p118 = scmp.lt.s32.totalorder %s10, 3
    %p119 = pnand %p117, %p118
    %p120 = pneg %p119
    // Predicated region
    $region9: #{decoder_block_forward.8} parent=5 // pred_check
      _
    $region10: #{decoder_block_forward.8} parent=5 // pred_check_branch
      %122 = sbr.rel (%p119) target = $region12
    $region11: #{decoder_block_forward.8} parent=5 // pred_region
      %s123 = ssub.s32 %s10, 1
      // Predicated region
      $region13: #{decoder_block_forward.8} parent=11 // pred_check
        %p124 = pneg %p57
      $region14: #{decoder_block_forward.8} parent=11 // pred_check_branch
        %126 = sbr.rel (%p124) target = $region16
      $region15: #{decoder_block_forward.8} parent=11 // pred_region
        _
      $region16: #{decoder_block_forward.8} parent=11 // pred_fallthru
        _
    $region12: #{decoder_block_forward.8} parent=5 // pred_fallthru
      _
    %p127 = scmp.lt.s32.totalorder %s10, 2
    // Predicated region
    $region17: #{decoder_block_forward.8} parent=5 // pred_check
      %p128 = pneg %p127
    $region18: #{decoder_block_forward.8} parent=5 // pred_check_branch
      %130 = sbr.rel (%p128) target = $region20
    $region19: #{decoder_block_forward.8} parent=5 // pred_region
      // Predicated region
      $region21: #{decoder_block_forward.8} parent=19 // pred_check
        %p131 = pneg %p30
      $region22: #{decoder_block_forward.8} parent=19 // pred_check_branch
        %133 = sbr.rel (%p131) target = $region24
      $region23: #{decoder_block_forward.8} parent=19 // pred_region
        %p134 = scmp.lt.s32.totalorder %s10, 1
        %s135 = scalar_select %p134, %s10, 1
        %s136 = smul.addr %s135, 54
        %s137 = smul.addr %s136, 8
        %s138 = scalar_lea.vmem %s0, %s137
      $region24: #{decoder_block_forward.8} parent=19 // pred_fallthru
        _
    $region20: #{decoder_block_forward.8} parent=5 // pred_fallthru
      _
    %p139 = scmp.le.s32.totalorder 1, %s10
    %p140 = scmp.lt.s32.totalorder %s10, 3
    %p141 = pnand %p139, %p140
    %p142 = pneg %p141
    // Predicated region
    $region25: #{decoder_block_forward.8} parent=5 // pred_check
      _
    $region26: #{decoder_block_forward.8} parent=5 // pred_check_branch
      %144 = sbr.rel (%p141) target = $region28
    $region27: #{decoder_block_forward.8} parent=5 // pred_region
      %s145 = ssub.s32 %s10, 1
      %p146 = scmp.lt.s32.totalorder %s15, 1
      %s147 = scalar_select %p146, %s15, 1
      %s148 = smul.addr %s147, 54
      %s149 = smul.addr %s148, 8
      %s150 = scalar_lea.vmem %s0, %s149
      %p151 = pneg %p36
      %p152 = pneg %p33
      %p153 = pneg %p57
      %p154 = pneg %p54
      %p155 = pneg %p83
      %p156 = pneg %p80
      %s157 = smul.u32 32, %s15
      %p158 = scmp.lt.s32.totalorder %s157, 63
      %s159 = scalar_select %p158, %s157, 63
      %s160 = smul.addr %s159, 8
      %s161 = scalar_lea.vmem %s2, %s160
      %p162 = pneg %p109
      %p163 = pneg %p106
      %p164 = scmp.lt.s32.totalorder %s15, 1
      %s165 = scalar_select %p164, %s15, 1
      %s166 = smul.addr %s165, 8
      %s167 = scalar_lea.vmem %s3, %s166
      %p168 = scmp.lt.s32.totalorder %s15, 1
      %s169 = scalar_select %p168, %s15, 1
      %s170 = smul.addr %s169, 54
      %s171 = smul.addr %s170, 8
      %s172 = scalar_lea.vmem %s0, %s171
      %s173 = smul.u32 32, %s15
      %p174 = scmp.lt.s32.totalorder %s173, 63
      %s175 = scalar_select %p174, %s173, 63
      %s176 = smul.addr %s175, 8
      %s177 = scalar_lea.vmem %s2, %s176
      %s178 = smul.u32 32, %s15
      %p179 = scmp.lt.s32.totalorder %s15, 1
      %s180 = scalar_select %p179, %s15, 1
      %s181 = smul.addr %s180, 8
      %s182 = scalar_lea.vmem %s3, %s181
      %184 = vst [vmem:[%s177] sm:$0xff] 0.0
      %185 = vst [vmem:[%s177 + $0x8] sm:$0xff] 0.0
      %186 = vst [vmem:[%s177 + $0x10] sm:$0xff] 0.0
      %187 = vst [vmem:[%s177 + $0x18] sm:$0xff] 0.0
      %188 = vst [vmem:[%s177 + $0x20] sm:$0xff] 0.0
      %189 = vst [vmem:[%s177 + $0x28] sm:$0xff] 0.0
      %190 = vst [vmem:[%s177 + $0x30] sm:$0xff] 0.0
      %191 = vst [vmem:[%s177 + $0x38] sm:$0xff] 0.0
      %192 = vst [vmem:[%s177 + $0x40] sm:$0xff] 0.0
      %193 = vst [vmem:[%s177 + $0x48] sm:$0xff] 0.0
      %194 = vst [vmem:[%s177 + $0x50] sm:$0xff] 0.0
      %195 = vst [vmem:[%s177 + $0x58] sm:$0xff] 0.0
      %196 = vst [vmem:[%s177 + $0x60] sm:$0xff] 0.0
      %197 = vst [vmem:[%s177 + $0x68] sm:$0xff] 0.0
      %198 = vst [vmem:[%s177 + $0x70] sm:$0xff] 0.0
      %199 = vst [vmem:[%s177 + $0x78] sm:$0xff] 0.0
      %200 = vst [vmem:[%s177 + $0x80] sm:$0xff] 0.0
      %201 = vst [vmem:[%s177 + $0x88] sm:$0xff] 0.0
      %202 = vst [vmem:[%s177 + $0x90] sm:$0xff] 0.0
      %203 = vst [vmem:[%s177 + $0x98] sm:$0xff] 0.0
      %204 = vst [vmem:[%s177 + $0xa0] sm:$0xff] 0.0
      %205 = vst [vmem:[%s177 + $0xa8] sm:$0xff] 0.0
      %206 = vst [vmem:[%s177 + $0xb0] sm:$0xff] 0.0
      %207 = vst [vmem:[%s177 + $0xb8] sm:$0xff] 0.0
      %208 = vst [vmem:[%s177 + $0xc0] sm:$0xff] 0.0
      %209 = vst [vmem:[%s177 + $0xc8] sm:$0xff] 0.0
      %210 = vst [vmem:[%s177 + $0xd0] sm:$0xff] 0.0
      %211 = vst [vmem:[%s177 + $0xd8] sm:$0xff] 0.0
      %212 = vst [vmem:[%s177 + $0xe0] sm:$0xff] 0.0
      %213 = vst [vmem:[%s177 + $0xe8] sm:$0xff] 0.0
      %214 = vst [vmem:[%s177 + $0xf0] sm:$0xff] 0.0
      %215 = vst [vmem:[%s177 + $0xf8] sm:$0xff] 0.0
      %v216 = vld [vmem:[%s172] sm:$0xff]
      %v217 = vld [vmem:[%s172 + $0x8] sm:$0xff]
      %v218 = vld [vmem:[%s172 + $0x18] sm:$0xff]
      %v219 = vld [vmem:[%s172 + $0x20] sm:$0xff]
      %v220 = vld [vmem:[%s172 + $0x30] sm:$0xff]
      %v221 = vld [vmem:[%s172 + $0x38] sm:$0xff]
      %v222 = vld [vmem:[%s172 + $0x48] sm:$0xff]
      %v223 = vld [vmem:[%s172 + $0x50] sm:$0xff]
      %v224 = vld [vmem:[%s172 + $0x60] sm:$0xff]
      %v225 = vld [vmem:[%s172 + $0x68] sm:$0xff]
      %v226 = vld [vmem:[%s172 + $0x78] sm:$0xff]
      %v227 = vld [vmem:[%s172 + $0x80] sm:$0xff]
      %v228 = vld [vmem:[%s172 + $0x90] sm:$0xff]
      %v229 = vld [vmem:[%s172 + $0x98] sm:$0xff]
      %v230 = vld [vmem:[%s172 + $0xa8] sm:$0xff]
      %v231 = vld [vmem:[%s172 + $0xb0] sm:$0xff]
      %v232 = vld [vmem:[%s172 + $0xc0] sm:$0xff]
      %v233 = vld [vmem:[%s172 + $0xc8] sm:$0xff]
      %v234 = vld [vmem:[%s172 + $0xd8] sm:$0xff]
      %v235 = vld [vmem:[%s172 + $0xe0] sm:$0xff]
      %v236 = vld [vmem:[%s172 + $0xf0] sm:$0xff]
      %v237 = vld [vmem:[%s172 + $0xf8] sm:$0xff]
      %v238 = vld [vmem:[%s172 + $0x108] sm:$0xff]
      %v239 = vld [vmem:[%s172 + $0x110] sm:$0xff]
      %v240 = vld [vmem:[%s172 + $0x120] sm:$0xff]
      %v241 = vld [vmem:[%s172 + $0x128] sm:$0xff]
      %v242 = vld [vmem:[%s172 + $0x138] sm:$0xff]
      %v243 = vld [vmem:[%s172 + $0x140] sm:$0xff]
      %v244 = vld [vmem:[%s172 + $0x150] sm:$0xff]
      %v245 = vld [vmem:[%s172 + $0x158] sm:$0xff]
      %v246 = vld [vmem:[%s172 + $0x168] sm:$0xff]
      %v247 = vld [vmem:[%s172 + $0x170] sm:$0xff]
      %v248 = vpack.c.bf16 %v217, %v216
      %v249 = vpack.c.bf16 %v219, %v218
      %v250 = vpack.c.bf16 %v221, %v220
      %v251 = vpack.c.bf16 %v223, %v222
      %v252 = vpack.c.bf16 %v225, %v224
      %v253 = vpack.c.bf16 %v227, %v226
      %v254 = vpack.c.bf16 %v229, %v228
      %v255 = vpack.c.bf16 %v231, %v230
      %v256 = vpack.c.bf16 %v233, %v232
      %v257 = vpack.c.bf16 %v235, %v234
      %v258 = vpack.c.bf16 %v237, %v236
      %v259 = vpack.c.bf16 %v239, %v238
      %v260 = vpack.c.bf16 %v241, %v240
      %v261 = vpack.c.bf16 %v243, %v242
      %v262 = vpack.c.bf16 %v245, %v244
      %v263 = vpack.c.bf16 %v247, %v246
      %v264 = vld [vmem:[%s177] sm:$0xff]
      %v265 = vld [vmem:[%s177 + $0x8] sm:$0xff]
      %v266 = vld [vmem:[%s177 + $0x10] sm:$0xff]
      %v267 = vld [vmem:[%s177 + $0x18] sm:$0xff]
      %v268 = vld [vmem:[%s177 + $0x20] sm:$0xff]
      %v269 = vld [vmem:[%s177 + $0x28] sm:$0xff]
      %v270 = vld [vmem:[%s177 + $0x30] sm:$0xff]
      %v271 = vld [vmem:[%s177 + $0x38] sm:$0xff]
      %v272 = vld [vmem:[%s177 + $0x40] sm:$0xff]
      %v273 = vld [vmem:[%s177 + $0x48] sm:$0xff]
      %v274 = vld [vmem:[%s177 + $0x50] sm:$0xff]
      %v275 = vld [vmem:[%s177 + $0x58] sm:$0xff]
      %v276 = vld [vmem:[%s177 + $0x60] sm:$0xff]
      %v277 = vld [vmem:[%s177 + $0x68] sm:$0xff]
      %v278 = vld [vmem:[%s177 + $0x70] sm:$0xff]
      %v279 = vld [vmem:[%s177 + $0x78] sm:$0xff]
      %v280 = vld [vmem:[%s177 + $0x80] sm:$0xff]
      %v281 = vld [vmem:[%s177 + $0x88] sm:$0xff]
      %v282 = vld [vmem:[%s177 + $0x90] sm:$0xff]
      %v283 = vld [vmem:[%s177 + $0x98] sm:$0xff]
      %v284 = vld [vmem:[%s177 + $0xa0] sm:$0xff]
      %v285 = vld [vmem:[%s177 + $0xa8] sm:$0xff]
      %v286 = vld [vmem:[%s177 + $0xb0] sm:$0xff]
      %v287 = vld [vmem:[%s177 + $0xb8] sm:$0xff]
      %v288 = vld [vmem:[%s177 + $0xc0] sm:$0xff]
      %v289 = vld [vmem:[%s177 + $0xc8] sm:$0xff]
      %v290 = vld [vmem:[%s177 + $0xd0] sm:$0xff]
      %v291 = vld [vmem:[%s177 + $0xd8] sm:$0xff]
      %v292 = vld [vmem:[%s177 + $0xe0] sm:$0xff]
      %v293 = vld [vmem:[%s177 + $0xe8] sm:$0xff]
      %v294 = vld [vmem:[%s177 + $0xf0] sm:$0xff]
      %v295 = vld [vmem:[%s177 + $0xf8] sm:$0xff]
      %v296 = vld [vmem:[%s1] sm:$0x3]
      %vm297 = vcmask 31744
      %v299 = vsel %vm297, %v248, 0
      %v302 = vsel %vm297, %v249, 0
      %v305 = vsel %vm297, %v250, 0
      %v308 = vsel %vm297, %v251, 0
      %v311 = vsel %vm297, %v252, 0
      %v314 = vsel %vm297, %v253, 0
      %v317 = vsel %vm297, %v254, 0
      %v320 = vsel %vm297, %v255, 0
      %v323 = vsel %vm297, %v256, 0
      %v326 = vsel %vm297, %v257, 0
      %v329 = vsel %vm297, %v258, 0
      %v332 = vsel %vm297, %v259, 0
      %v335 = vsel %vm297, %v260, 0
      %v338 = vsel %vm297, %v261, 0
      %v341 = vsel %vm297, %v262, 0
      %v344 = vsel %vm297, %v263, 0
      %vm346 = vcmask 1041408
      %v348 = vsel %vm346, %v296, 0
      %350 = vmatprep.subr.bf16.mxu0 0
      %351 = vmatpush1.bf16.msra.mxu0 %v348
      %352 = vmatprep.subr.bf16.mxu0 0
      %353 = vmatpush1.bf16.msra.mxu0 0
      %354 = vmatprep.subr.bf16.mxu0 0
      %355 = vmatpush1.bf16.msra.mxu0 0
      %356 = vmatprep.subr.bf16.mxu0 0
      %357 = vmatpush1.bf16.msra.mxu0 0
      %358 = vmatprep.subr.bf16.mxu0 0
      %359 = vmatpush1.bf16.msra.mxu0 0
      %360 = vmatprep.subr.bf16.mxu0 0
      %361 = vmatpush1.bf16.msra.mxu0 0
      %362 = vmatprep.subr.bf16.mxu0 0
      %363 = vmatpush1.bf16.msra.mxu0 0
      %364 = vmatprep.subr.bf16.mxu0 0
      %365 = vmatpush1.bf16.msra.mxu0 0
      %366 = vmatprep.subr.bf16.mxu0 0
      %367 = vmatpush1.bf16.msra.mxu0 0
      %368 = vmatprep.subr.bf16.mxu0 0
      %369 = vmatpush1.bf16.msra.mxu0 0
      %370 = vmatprep.subr.bf16.mxu0 0
      %371 = vmatpush1.bf16.msra.mxu0 0
      %372 = vmatprep.subr.bf16.mxu0 0
      %373 = vmatpush1.bf16.msra.mxu0 0
      %374 = vmatprep.subr.bf16.mxu0 0
      %375 = vmatpush1.bf16.msra.mxu0 0
      %376 = vmatprep.subr.bf16.mxu0 0
      %377 = vmatpush1.bf16.msra.mxu0 0
      %378 = vmatprep.subr.bf16.mxu0 0
      %379 = vmatpush1.bf16.msra.mxu0 0
      %380 = vmatprep.subr.bf16.mxu0 0
      %381 = vmatpush1.bf16.msra.mxu0 0
      %382 = vmatprep.mubr.bf16.mxu0 0
      %383 = vmatmul.mubr.bf16.gmra.mrb[0].mxu0 %v299
      %v384 = vpop.f32.mrb[0].mxu0
      %v385 = vadd.f32 0.0, %v384
      %v386 = vpop.f32.mrb[0].mxu0
      %v387 = vpop.f32.mrb[0].mxu0
      %v388 = vadd.f32 0.0, %v387
      %v389 = vpop.f32.mrb[0].mxu0
      %390 = vmatprep.mubr.bf16.mxu0 0
      %391 = vmatmul.mubr.bf16.gmra.mrb[0].mxu0 %v302
      %v392 = vpop.f32.mrb[0].mxu0
      %v393 = vadd.f32 0.0, %v392
      %v394 = vpop.f32.mrb[0].mxu0
      %v395 = vpop.f32.mrb[0].mxu0
      %v396 = vadd.f32 0.0, %v395
      %v397 = vpop.f32.mrb[0].mxu0
      %398 = vmatprep.mubr.bf16.mxu0 0
      %399 = vmatmul.mubr.bf16.gmra.mrb[0].mxu0 %v305
      %v400 = vpop.f32.mrb[0].mxu0
      %v401 = vadd.f32 0.0, %v400
      %v402 = vpop.f32.mrb[0].mxu0
      %v403 = vpop.f32.mrb[0].mxu0
      %v404 = vadd.f32 0.0, %v403
      %v405 = vpop.f32.mrb[0].mxu0
      %406 = vmatprep.mubr.bf16.mxu0 0
      %407 = vmatmul.mubr.bf16.gmra.mrb[0].mxu0 %v308
      %v408 = vpop.f32.mrb[0].mxu0
      %v409 = vadd.f32 0.0, %v408
      %v410 = vpop.f32.mrb[0].mxu0
      %v411 = vpop.f32.mrb[0].mxu0
      %v412 = vadd.f32 0.0, %v411
      %v413 = vpop.f32.mrb[0].mxu0
      %414 = vmatprep.mubr.bf16.mxu0 0
      %415 = vmatmul.mubr.bf16.gmra.mrb[0].mxu0 %v311
      %v416 = vpop.f32.mrb[0].mxu0
      %v417 = vadd.f32 0.0, %v416
      %v418 = vpop.f32.mrb[0].mxu0
      %v419 = vpop.f32.mrb[0].mxu0
      %v420 = vadd.f32 0.0, %v419
      %v421 = vpop.f32.mrb[0].mxu0
      %422 = vmatprep.mubr.bf16.mxu0 0
      %423 = vmatmul.mubr.bf16.gmra.mrb[0].mxu0 %v314
      %v424 = vpop.f32.mrb[0].mxu0
      %v425 = vadd.f32 0.0, %v424
      %v426 = vpop.f32.mrb[0].mxu0
      %v427 = vpop.f32.mrb[0].mxu0
      %v428 = vadd.f32 0.0, %v427
      %v429 = vpop.f32.mrb[0].mxu0
      %430 = vmatprep.mubr.bf16.mxu0 0
      %431 = vmatmul.mubr.bf16.gmra.mrb[0].mxu0 %v317
      %v432 = vpop.f32.mrb[0].mxu0
      %v433 = vadd.f32 0.0, %v432
      %v434 = vpop.f32.mrb[0].mxu0
      %v435 = vpop.f32.mrb[0].mxu0
      %v436 = vadd.f32 0.0, %v435
      %v437 = vpop.f32.mrb[0].mxu0
      %438 = vmatprep.mubr.bf16.mxu0 0
      %439 = vmatmul.mubr.bf16.gmra.mrb[0].mxu0 %v320
      %v440 = vpop.f32.mrb[0].mxu0
      %v441 = vadd.f32 0.0, %v440
      %v442 = vpop.f32.mrb[0].mxu0
      %v443 = vpop.f32.mrb[0].mxu0
      %v444 = vadd.f32 0.0, %v443
      %v445 = vpop.f32.mrb[0].mxu0
      %446 = vmatprep.mubr.bf16.mxu0 0
      %447 = vmatmul.mubr.bf16.gmra.mrb[0].mxu0 %v323
      %v448 = vpop.f32.mrb[0].mxu0
      %v449 = vadd.f32 0.0, %v448
      %v450 = vpop.f32.mrb[0].mxu0
      %v451 = vpop.f32.mrb[0].mxu0
      %v452 = vadd.f32 0.0, %v451
      %v453 = vpop.f32.mrb[0].mxu0
      %454 = vmatprep.mubr.bf16.mxu0 0
      %455 = vmatmul.mubr.bf16.gmra.mrb[0].mxu0 %v326
      %v456 = vpop.f32.mrb[0].mxu0
      %v457 = vadd.f32 0.0, %v456
      %v458 = vpop.f32.mrb[0].mxu0
      %v459 = vpop.f32.mrb[0].mxu0
      %v460 = vadd.f32 0.0, %v459
      %v461 = vpop.f32.mrb[0].mxu0
      %462 = vmatprep.mubr.bf16.mxu0 0
      %463 = vmatmul.mubr.bf16.gmra.mrb[0].mxu0 %v329
      %v464 = vpop.f32.mrb[0].mxu0
      %v465 = vadd.f32 0.0, %v464
      %v466 = vpop.f32.mrb[0].mxu0
      %v467 = vpop.f32.mrb[0].mxu0
      %v468 = vadd.f32 0.0, %v467
      %v469 = vpop.f32.mrb[0].mxu0
      %470 = vmatprep.mubr.bf16.mxu0 0
      %471 = vmatmul.mubr.bf16.gmra.mrb[0].mxu0 %v332
      %v472 = vpop.f32.mrb[0].mxu0
      %v473 = vadd.f32 0.0, %v472
      %v474 = vpop.f32.mrb[0].mxu0
      %v475 = vpop.f32.mrb[0].mxu0
      %v476 = vadd.f32 0.0, %v475
      %v477 = vpop.f32.mrb[0].mxu0
      %478 = vmatprep.mubr.bf16.mxu0 0
      %479 = vmatmul.mubr.bf16.gmra.mrb[0].mxu0 %v335
      %v480 = vpop.f32.mrb[0].mxu0
      %v481 = vadd.f32 0.0, %v480
      %v482 = vpop.f32.mrb[0].mxu0
      %v483 = vpop.f32.mrb[0].mxu0
      %v484 = vadd.f32 0.0, %v483
      %v485 = vpop.f32.mrb[0].mxu0
      %486 = vmatprep.mubr.bf16.mxu0 0
      %487 = vmatmul.mubr.bf16.gmra.mrb[0].mxu0 %v338
      %v488 = vpop.f32.mrb[0].mxu0
      %v489 = vadd.f32 0.0, %v488
      %v490 = vpop.f32.mrb[0].mxu0
      %v491 = vpop.f32.mrb[0].mxu0
      %v492 = vadd.f32 0.0, %v491
      %v493 = vpop.f32.mrb[0].mxu0
      %494 = vmatprep.mubr.bf16.mxu0 0
      %495 = vmatmul.mubr.bf16.gmra.mrb[0].mxu0 %v341
      %v496 = vpop.f32.mrb[0].mxu0
      %v497 = vadd.f32 0.0, %v496
      %v498 = vpop.f32.mrb[0].mxu0
      %v499 = vpop.f32.mrb[0].mxu0
      %v500 = vadd.f32 0.0, %v499
      %v501 = vpop.f32.mrb[0].mxu0
      %502 = vmatprep.mubr.bf16.mxu0 0
      %503 = vmatmul.mubr.bf16.gmra.mrb[0].mxu0 %v344
      %v504 = vpop.f32.mrb[0].mxu0
      %v505 = vadd.f32 0.0, %v504
      %v506 = vpop.f32.mrb[0].mxu0
      %v507 = vpop.f32.mrb[0].mxu0
      %v508 = vadd.f32 0.0, %v507
      %v509 = vpop.f32.mrb[0].mxu0
      %510 = vdwg.mxu0
      %v511 = vadd.f32 %v264, %v385
      %v512 = vadd.f32 %v265, %v388
      %v513 = vadd.f32 %v266, %v393
      %v514 = vadd.f32 %v267, %v396
      %v515 = vadd.f32 %v268, %v401
      %v516 = vadd.f32 %v269, %v404
      %v517 = vadd.f32 %v270, %v409
      %v518 = vadd.f32 %v271, %v412
      %v519 = vadd.f32 %v272, %v417
      %v520 = vadd.f32 %v273, %v420
      %v521 = vadd.f32 %v274, %v425
      %v522 = vadd.f32 %v275, %v428
      %v523 = vadd.f32 %v276, %v433
      %v524 = vadd.f32 %v277, %v436
      %v525 = vadd.f32 %v278, %v441
      %v526 = vadd.f32 %v279, %v444
      %v527 = vadd.f32 %v280, %v449
      %v528 = vadd.f32 %v281, %v452
      %v529 = vadd.f32 %v282, %v457
      %v530 = vadd.f32 %v283, %v460
      %v531 = vadd.f32 %v284, %v465
      %v532 = vadd.f32 %v285, %v468
      %v533 = vadd.f32 %v286, %v473
      %v534 = vadd.f32 %v287, %v476
      %v535 = vadd.f32 %v288, %v481
      %v536 = vadd.f32 %v289, %v484
      %v537 = vadd.f32 %v290, %v489
      %v538 = vadd.f32 %v291, %v492
      %v539 = vadd.f32 %v292, %v497
      %v540 = vadd.f32 %v293, %v500
      %v541 = vadd.f32 %v294, %v505
      %v542 = vadd.f32 %v295, %v508
      %543 = vst [vmem:[%s177] sm:$0xff] %v511
      %544 = vst [vmem:[%s177 + $0x8] sm:$0xff] %v512
      %545 = vst [vmem:[%s177 + $0x10] sm:$0xff] %v513
      %546 = vst [vmem:[%s177 + $0x18] sm:$0xff] %v514
      %547 = vst [vmem:[%s177 + $0x20] sm:$0xff] %v515
      %548 = vst [vmem:[%s177 + $0x28] sm:$0xff] %v516
      %549 = vst [vmem:[%s177 + $0x30] sm:$0xff] %v517
      %550 = vst [vmem:[%s177 + $0x38] sm:$0xff] %v518
      %551 = vst [vmem:[%s177 + $0x40] sm:$0xff] %v519
      %552 = vst [vmem:[%s177 + $0x48] sm:$0xff] %v520
      %553 = vst [vmem:[%s177 + $0x50] sm:$0xff] %v521
      %554 = vst [vmem:[%s177 + $0x58] sm:$0xff] %v522
      %555 = vst [vmem:[%s177 + $0x60] sm:$0xff] %v523
      %556 = vst [vmem:[%s177 + $0x68] sm:$0xff] %v524
      %557 = vst [vmem:[%s177 + $0x70] sm:$0xff] %v525
      %558 = vst [vmem:[%s177 + $0x78] sm:$0xff] %v526
      %559 = vst [vmem:[%s177 + $0x80] sm:$0xff] %v527
      %560 = vst [vmem:[%s177 + $0x88] sm:$0xff] %v528
      %561 = vst [vmem:[%s177 + $0x90] sm:$0xff] %v529
      %562 = vst [vmem:[%s177 + $0x98] sm:$0xff] %v530
      %563 = vst [vmem:[%s177 + $0xa0] sm:$0xff] %v531
      %564 = vst [vmem:[%s177 + $0xa8] sm:$0xff] %v532
      %565 = vst [vmem:[%s177 + $0xb0] sm:$0xff] %v533
      %566 = vst [vmem:[%s177 + $0xb8] sm:$0xff] %v534
      %567 = vst [vmem:[%s177 + $0xc0] sm:$0xff] %v535
      %568 = vst [vmem:[%s177 + $0xc8] sm:$0xff] %v536
      %569 = vst [vmem:[%s177 + $0xd0] sm:$0xff] %v537
      %570 = vst [vmem:[%s177 + $0xd8] sm:$0xff] %v538
      %571 = vst [vmem:[%s177 + $0xe0] sm:$0xff] %v539
      %572 = vst [vmem:[%s177 + $0xe8] sm:$0xff] %v540
      %573 = vst [vmem:[%s177 + $0xf0] sm:$0xff] %v541
      %574 = vst [vmem:[%s177 + $0xf8] sm:$0xff] %v542
      %v575 = vld [vmem:[%s172 + $0x1] sm:$0xff]
      %v576 = vld [vmem:[%s172 + $0x9] sm:$0xff]
      %v577 = vld [vmem:[%s172 + $0x19] sm:$0xff]
      %v578 = vld [vmem:[%s172 + $0x21] sm:$0xff]
      %v579 = vld [vmem:[%s172 + $0x31] sm:$0xff]
      %v580 = vld [vmem:[%s172 + $0x39] sm:$0xff]
      %v581 = vld [vmem:[%s172 + $0x49] sm:$0xff]
      %v582 = vld [vmem:[%s172 + $0x51] sm:$0xff]
      %v583 = vld [vmem:[%s172 + $0x61] sm:$0xff]
      %v584 = vld [vmem:[%s172 + $0x69] sm:$0xff]
      %v585 = vld [vmem:[%s172 + $0x79] sm:$0xff]
      %v586 = vld [vmem:[%s172 + $0x81] sm:$0xff]
      %v587 = vld [vmem:[%s172 + $0x91] sm:$0xff]
      %v588 = vld [vmem:[%s172 + $0x99] sm:$0xff]
      %v589 = vld [vmem:[%s172 + $0xa9] sm:$0xff]
      %v590 = vld [vmem:[%s172 + $0xb1] sm:$0xff]
      %v591 = vld [vmem:[%s172 + $0xc1] sm:$0xff]
      %v592 = vld [vmem:[%s172 + $0xc9] sm:$0xff]
      %v593 = vld [vmem:[%s172 + $0xd9] sm:$0xff]
      %v594 = vld [vmem:[%s172 + $0xe1] sm:$0xff]
      %v595 = vld [vmem:[%s172 + $0xf1] sm:$0xff]
      %v596 = vld [vmem:[%s172 + $0xf9] sm:$0xff]
      %v597 = vld [vmem:[%s172 + $0x109] sm:$0xff]
      %v598 = vld [vmem:[%s172 + $0x111] sm:$0xff]
      %v599 = vld [vmem:[%s172 + $0x121] sm:$0xff]
      %v600 = vld [vmem:[%s172 + $0x129] sm:$0xff]
      %v601 = vld [vmem:[%s172 + $0x139] sm:$0xff]
      %v602 = vld [vmem:[%s172 + $0x141] sm:$0xff]
      %v603 = vld [vmem:[%s172 + $0x151] sm:$0xff]
      %v604 = vld [vmem:[%s172 + $0x159] sm:$0xff]
      %v605 = vld [vmem:[%s172 + $0x169] sm:$0xff]
      %v606 = vld [vmem:[%s172 + $0x171] sm:$0xff]
      %v607 = vpack.c.bf16 %v576, %v575
      %v608 = vpack.c.bf16 %v578, %v577
      %v609 = vpack.c.bf16 %v580, %v579
      %v610 = vpack.c.bf16 %v582, %v581
      %v611 = vpack.c.bf16 %v584, %v583
      %v612 = vpack.c.bf16 %v586, %v585
      %v613 = vpack.c.bf16 %v588, %v587
      %v614 = vpack.c.bf16 %v590, %v589
      %v615 = vpack.c.bf16 %v592, %v591
      %v616 = vpack.c.bf16 %v594, %v593
      %v617 = vpack.c.bf16 %v596, %v595
      %v618 = vpack.c.bf16 %v598, %v597
      %v619 = vpack.c.bf16 %v600, %v599
      %v620 = vpack.c.bf16 %v602, %v601
      %v621 = vpack.c.bf16 %v604, %v603
      %v622 = vpack.c.bf16 %v606, %v605
      %v623 = vld [vmem:[%s177] sm:$0xff]
      %v624 = vld [vmem:[%s177 + $0x8] sm:$0xff]
      %v625 = vld [vmem:[%s177 + $0x10] sm:$0xff]
      %v626 = vld [vmem:[%s177 + $0x18] sm:$0xff]
      %v627 = vld [vmem:[%s177 + $0x20] sm:$0xff]
      %v628 = vld [vmem:[%s177 + $0x28] sm:$0xff]
      %v629 = vld [vmem:[%s177 + $0x30] sm:$0xff]
      %v630 = vld [vmem:[%s177 + $0x38] sm:$0xff]
      %v631 = vld [vmem:[%s177 + $0x40] sm:$0xff]
      %v632 = vld [vmem:[%s177 + $0x48] sm:$0xff]
      %v633 = vld [vmem:[%s177 + $0x50] sm:$0xff]
      %v634 = vld [vmem:[%s177 + $0x58] sm:$0xff]
      %v635 = vld [vmem:[%s177 + $0x60] sm:$0xff]
      %v636 = vld [vmem:[%s177 + $0x68] sm:$0xff]
      %v637 = vld [vmem:[%s177 + $0x70] sm:$0xff]
      %v638 = vld [vmem:[%s177 + $0x78] sm:$0xff]
      %v639 = vld [vmem:[%s177 + $0x80] sm:$0xff]
      %v640 = vld [vmem:[%s177 + $0x88] sm:$0xff]
      %v641 = vld [vmem:[%s177 + $0x90] sm:$0xff]
      %v642 = vld [vmem:[%s177 + $0x98] sm:$0xff]
      %v643 = vld [vmem:[%s177 + $0xa0] sm:$0xff]
      %v644 = vld [vmem:[%s177 + $0xa8] sm:$0xff]
      %v645 = vld [vmem:[%s177 + $0xb0] sm:$0xff]
      %v646 = vld [vmem:[%s177 + $0xb8] sm:$0xff]
      %v647 = vld [vmem:[%s177 + $0xc0] sm:$0xff]
      %v648 = vld [vmem:[%s177 + $0xc8] sm:$0xff]
      %v649 = vld [vmem:[%s177 + $0xd0] sm:$0xff]
      %v650 = vld [vmem:[%s177 + $0xd8] sm:$0xff]
      %v651 = vld [vmem:[%s177 + $0xe0] sm:$0xff]
      %v652 = vld [vmem:[%s177 + $0xe8] sm:$0xff]
      %v653 = vld [vmem:[%s177 + $0xf0] sm:$0xff]
      %v654 = vld [vmem:[%s177 + $0xf8] sm:$0xff]
      %s655 = scalar_lea.vmem %s1, 2
      %v656 = vld [vmem:[%s655] sm:$0x3]
      %v658 = vsel %vm297, %v607, 0
      %v661 = vsel %vm297, %v608, 0
      %v664 = vsel %vm297, %v609, 0
      %v667 = vsel %vm297, %v610, 0
      %v670 = vsel %vm297, %v611, 0
      %v673 = vsel %vm297, %v612, 0
      %v676 = vsel %vm297, %v613, 0
      %v679 = vsel %vm297, %v614, 0
      %v682 = vsel %vm297, %v615, 0
      %v685 = vsel %vm297, %v616, 0
      %v688 = vsel %vm297, %v617, 0
      %v691 = vsel %vm297, %v618, 0
      %v694 = vsel %vm297, %v619, 0
      %v697 = vsel %vm297, %v620, 0
      %v700 = vsel %vm297, %v621, 0
      %v703 = vsel %vm297, %v622, 0
      %v706 = vsel %vm346, %v656, 0
      %708 = vmatprep.subr.bf16.mxu0 0
      %709 = vmatpush1.bf16.msra.mxu0 %v706
      %710 = vmatprep.subr.bf16.mxu0 0
      %711 = vmatpush1.bf16.msra.mxu0 0
      %712 = vmatprep.subr.bf16.mxu0 0
      %713 = vmatpush1.bf16.msra.mxu0 0
      %714 = vmatprep.subr.bf16.mxu0 0
      %715 = vmatpush1.bf16.msra.mxu0 0
      %716 = vmatprep.subr.bf16.mxu0 0
      %717 = vmatpush1.bf16.msra.mxu0 0
      %718 = vmatprep.subr.bf16.mxu0 0
      %719 = vmatpush1.bf16.msra.mxu0 0
      %720 = vmatprep.subr.bf16.mxu0 0
      %721 = vmatpush1.bf16.msra.mxu0 0
      %722 = vmatprep.subr.bf16.mxu0 0
      %723 = vmatpush1.bf16.msra.mxu0 0
      %724 = vmatprep.subr.bf16.mxu0 0
      %725 = vmatpush1.bf16.msra.mxu0 0
      %726 = vmatprep.subr.bf16.mxu0 0
      %727 = vmatpush1.bf16.msra.mxu0 0
      %728 = vmatprep.subr.bf16.mxu0 0
      %729 = vmatpush1.bf16.msra.mxu0 0
      %730 = vmatprep.subr.bf16.mxu0 0
      %731 = vmatpush1.bf16.msra.mxu0 0
      %732 = vmatprep.subr.bf16.mxu0 0
      %733 = vmatpush1.bf16.msra.mxu0 0
      %734 = vmatprep.subr.bf16.mxu0 0
      %735 = vmatpush1.bf16.msra.mxu0 0
      %736 = vmatprep.subr.bf16.mxu0 0
      %737 = vmatpush1.bf16.msra.mxu0 0
      %738 = vmatprep.subr.bf16.mxu0 0
      %739 = vmatpush1.bf16.msra.mxu0 0
      %740 = vmatprep.mubr.bf16.mxu0 0
      %741 = vmatmul.mubr.bf16.gmra.mrb[0].mxu0 %v658
      %v742 = vpop.f32.mrb[0].mxu0
      %v743 = vadd.f32 0.0, %v742
      %v744 = vpop.f32.mrb[0].mxu0
      %v745 = vpop.f32.mrb[0].mxu0
      %v746 = vadd.f32 0.0, %v745
      %v747 = vpop.f32.mrb[0].mxu0
      %748 = vmatprep.mubr.bf16.mxu0 0
      %749 = vmatmul.mubr.bf16.gmra.mrb[0].mxu0 %v661
      %v750 = vpop.f32.mrb[0].mxu0
      %v751 = vadd.f32 0.0, %v750
      %v752 = vpop.f32.mrb[0].mxu0
      %v753 = vpop.f32.mrb[0].mxu0
      %v754 = vadd.f32 0.0, %v753
      %v755 = vpop.f32.mrb[0].mxu0
      %756 = vmatprep.mubr.bf16.mxu0 0
      %757 = vmatmul.mubr.bf16.gmra.mrb[0].mxu0 %v664
      %v758 = vpop.f32.mrb[0].mxu0
      %v759 = vadd.f32 0.0, %v758
      %v760 = vpop.f32.mrb[0].mxu0
      %v761 = vpop.f32.mrb[0].mxu0
      %v762 = vadd.f32 0.0, %v761
      %v763 = vpop.f32.mrb[0].mxu0
      %764 = vmatprep.mubr.bf16.mxu0 0
      %765 = vmatmul.mubr.bf16.gmra.mrb[0].mxu0 %v667
      %v766 = vpop.f32.mrb[0].mxu0
      %v767 = vadd.f32 0.0, %v766
      %v768 = vpop.f32.mrb[0].mxu0
      %v769 = vpop.f32.mrb[0].mxu0
      %v770 = vadd.f32 0.0, %v769
      %v771 = vpop.f32.mrb[0].mxu0
      %772 = vmatprep.mubr.bf16.mxu0 0
      %773 = vmatmul.mubr.bf16.gmra.mrb[0].mxu0 %v670
      %v774 = vpop.f32.mrb[0].mxu0
      %v775 = vadd.f32 0.0, %v774
      %v776 = vpop.f32.mrb[0].mxu0
      %v777 = vpop.f32.mrb[0].mxu0
      %v778 = vadd.f32 0.0, %v777
      %v779 = vpop.f32.mrb[0].mxu0
      %780 = vmatprep.mubr.bf16.mxu0 0
      %781 = vmatmul.mubr.bf16.gmra.mrb[0].mxu0 %v673
      %v782 = vpop.f32.mrb[0].mxu0
      %v783 = vadd.f32 0.0, %v782
      %v784 = vpop.f32.mrb[0].mxu0
      %v785 = vpop.f32.mrb[0].mxu0
      %v786 = vadd.f32 0.0, %v785
      %v787 = vpop.f32.mrb[0].mxu0
      %788 = vmatprep.mubr.bf16.mxu0 0
      %789 = vmatmul.mubr.bf16.gmra.mrb[0].mxu0 %v676
      %v790 = vpop.f32.mrb[0].mxu0
      %v791 = vadd.f32 0.0, %v790
      %v792 = vpop.f32.mrb[0].mxu0
      %v793 = vpop.f32.mrb[0].mxu0
      %v794 = vadd.f32 0.0, %v793
      %v795 = vpop.f32.mrb[0].mxu0
      %796 = vmatprep.mubr.bf16.mxu0 0
      %797 = vmatmul.mubr.bf16.gmra.mrb[0].mxu0 %v679
      %v798 = vpop.f32.mrb[0].mxu0
      %v799 = vadd.f32 0.0, %v798
      %v800 = vpop.f32.mrb[0].mxu0
      %v801 = vpop.f32.mrb[0].mxu0
      %v802 = vadd.f32 0.0, %v801
      %v803 = vpop.f32.mrb[0].mxu0
      %804 = vmatprep.mubr.bf16.mxu0 0
      %805 = vmatmul.mubr.bf16.gmra.mrb[0].mxu0 %v682
      %v806 = vpop.f32.mrb[0].mxu0
      %v807 = vadd.f32 0.0, %v806
      %v808 = vpop.f32.mrb[0].mxu0
      %v809 = vpop.f32.mrb[0].mxu0
      %v810 = vadd.f32 0.0, %v809
      %v811 = vpop.f32.mrb[0].mxu0
      %812 = vmatprep.mubr.bf16.mxu0 0
      %813 = vmatmul.mubr.bf16.gmra.mrb[0].mxu0 %v685
      %v814 = vpop.f32.mrb[0].mxu0
      %v815 = vadd.f32 0.0, %v814
      %v816 = vpop.f32.mrb[0].mxu0
      %v817 = vpop.f32.mrb[0].mxu0
      %v818 = vadd.f32 0.0, %v817
      %v819 = vpop.f32.mrb[0].mxu0
      %820 = vmatprep.mubr.bf16.mxu0 0
      %821 = vmatmul.mubr.bf16.gmra.mrb[0].mxu0 %v688
      %v822 = vpop.f32.mrb[0].mxu0
      %v823 = vadd.f32 0.0, %v822
      %v824 = vpop.f32.mrb[0].mxu0
      %v825 = vpop.f32.mrb[0].mxu0
      %v826 = vadd.f32 0.0, %v825
      %v827 = vpop.f32.mrb[0].mxu0
      %828 = vmatprep.mubr.bf16.mxu0 0
      %829 = vmatmul.mubr.bf16.gmra.mrb[0].mxu0 %v691
      %v830 = vpop.f32.mrb[0].mxu0
      %v831 = vadd.f32 0.0, %v830
      %v832 = vpop.f32.mrb[0].mxu0
      %v833 = vpop.f32.mrb[0].mxu0
      %v834 = vadd.f32 0.0, %v833
      %v835 = vpop.f32.mrb[0].mxu0
      %836 = vmatprep.mubr.bf16.mxu0 0
      %837 = vmatmul.mubr.bf16.gmra.mrb[0].mxu0 %v694
      %v838 = vpop.f32.mrb[0].mxu0
      %v839 = vadd.f32 0.0, %v838
      %v840 = vpop.f32.mrb[0].mxu0
      %v841 = vpop.f32.mrb[0].mxu0
      %v842 = vadd.f32 0.0, %v841
      %v843 = vpop.f32.mrb[0].mxu0
      %844 = vmatprep.mubr.bf16.mxu0 0
      %845 = vmatmul.mubr.bf16.gmra.mrb[0].mxu0 %v697
      %v846 = vpop.f32.mrb[0].mxu0
      %v847 = vadd.f32 0.0, %v846
      %v848 = vpop.f32.mrb[0].mxu0
      %v849 = vpop.f32.mrb[0].mxu0
      %v850 = vadd.f32 0.0, %v849
      %v851 = vpop.f32.mrb[0].mxu0
      %852 = vmatprep.mubr.bf16.mxu0 0
      %853 = vmatmul.mubr.bf16.gmra.mrb[0].mxu0 %v700
      %v854 = vpop.f32.mrb[0].mxu0
      %v855 = vadd.f32 0.0, %v854
      %v856 = vpop.f32.mrb[0].mxu0
      %v857 = vpop.f32.mrb[0].mxu0
      %v858 = vadd.f32 0.0, %v857
      %v859 = vpop.f32.mrb[0].mxu0
      %860 = vmatprep.mubr.bf16.mxu0 0
      %861 = vmatmul.mubr.bf16.gmra.mrb[0].mxu0 %v703
      %v862 = vpop.f32.mrb[0].mxu0
      %v863 = vadd.f32 0.0, %v862
      %v864 = vpop.f32.mrb[0].mxu0
      %v865 = vpop.f32.mrb[0].mxu0
      %v866 = vadd.f32 0.0, %v865
      %v867 = vpop.f32.mrb[0].mxu0
      %868 = vdwg.mxu0
      %v869 = vadd.f32 %v623, %v743
      %v870 = vadd.f32 %v624, %v746
      %v871 = vadd.f32 %v625, %v751
      %v872 = vadd.f32 %v626, %v754
      %v873 = vadd.f32 %v627, %v759
      %v874 = vadd.f32 %v628, %v762
      %v875 = vadd.f32 %v629, %v767
      %v876 = vadd.f32 %v630, %v770
      %v877 = vadd.f32 %v631, %v775
      %v878 = vadd.f32 %v632, %v778
      %v879 = vadd.f32 %v633, %v783
      %v880 = vadd.f32 %v634, %v786
      %v881 = vadd.f32 %v635, %v791
      %v882 = vadd.f32 %v636, %v794
      %v883 = vadd.f32 %v637, %v799
      %v884 = vadd.f32 %v638, %v802
      %v885 = vadd.f32 %v639, %v807
      %v886 = vadd.f32 %v640, %v810
      %v887 = vadd.f32 %v641, %v815
      %v888 = vadd.f32 %v642, %v818
      %v889 = vadd.f32 %v643, %v823
      %v890 = vadd.f32 %v644, %v826
      %v891 = vadd.f32 %v645, %v831
      %v892 = vadd.f32 %v646, %v834
      %v893 = vadd.f32 %v647, %v839
      %v894 = vadd.f32 %v648, %v842
      %v895 = vadd.f32 %v649, %v847
      %v896 = vadd.f32 %v650, %v850
      %v897 = vadd.f32 %v651, %v855
      %v898 = vadd.f32 %v652, %v858
      %v899 = vadd.f32 %v653, %v863
      %v900 = vadd.f32 %v654, %v866
      %901 = vst [vmem:[%s177] sm:$0xff] %v869
      %902 = vst [vmem:[%s177 + $0x8] sm:$0xff] %v870
      %903 = vst [vmem:[%s177 + $0x10] sm:$0xff] %v871
      %904 = vst [vmem:[%s177 + $0x18] sm:$0xff] %v872
      %905 = vst [vmem:[%s177 + $0x20] sm:$0xff] %v873
      %906 = vst [vmem:[%s177 + $0x28] sm:$0xff] %v874
      %907 = vst [vmem:[%s177 + $0x30] sm:$0xff] %v875
      %908 = vst [vmem:[%s177 + $0x38] sm:$0xff] %v876
      %909 = vst [vmem:[%s177 + $0x40] sm:$0xff] %v877
      %910 = vst [vmem:[%s177 + $0x48] sm:$0xff] %v878
      %911 = vst [vmem:[%s177 + $0x50] sm:$0xff] %v879
      %912 = vst [vmem:[%s177 + $0x58] sm:$0xff] %v880
      %913 = vst [vmem:[%s177 + $0x60] sm:$0xff] %v881
      %914 = vst [vmem:[%s177 + $0x68] sm:$0xff] %v882
      %915 = vst [vmem:[%s177 + $0x70] sm:$0xff] %v883
      %916 = vst [vmem:[%s177 + $0x78] sm:$0xff] %v884
      %917 = vst [vmem:[%s177 + $0x80] sm:$0xff] %v885
      %918 = vst [vmem:[%s177 + $0x88] sm:$0xff] %v886
      %919 = vst [vmem:[%s177 + $0x90] sm:$0xff] %v887
      %920 = vst [vmem:[%s177 + $0x98] sm:$0xff] %v888
      %921 = vst [vmem:[%s177 + $0xa0] sm:$0xff] %v889
      %922 = vst [vmem:[%s177 + $0xa8] sm:$0xff] %v890
      %923 = vst [vmem:[%s177 + $0xb0] sm:$0xff] %v891
      %924 = vst [vmem:[%s177 + $0xb8] sm:$0xff] %v892
      %925 = vst [vmem:[%s177 + $0xc0] sm:$0xff] %v893
      %926 = vst [vmem:[%s177 + $0xc8] sm:$0xff] %v894
      %927 = vst [vmem:[%s177 + $0xd0] sm:$0xff] %v895
      %928 = vst [vmem:[%s177 + $0xd8] sm:$0xff] %v896
      %929 = vst [vmem:[%s177 + $0xe0] sm:$0xff] %v897
      %930 = vst [vmem:[%s177 + $0xe8] sm:$0xff] %v898
      %931 = vst [vmem:[%s177 + $0xf0] sm:$0xff] %v899
      %932 = vst [vmem:[%s177 + $0xf8] sm:$0xff] %v900
      %v933 = vld [vmem:[%s172 + $0x2] sm:$0xff]
      %v934 = vld [vmem:[%s172 + $0xa] sm:$0xff]
      %v935 = vld [vmem:[%s172 + $0x1a] sm:$0xff]
      %v936 = vld [vmem:[%s172 + $0x22] sm:$0xff]
      %v937 = vld [vmem:[%s172 + $0x32] sm:$0xff]
      %v938 = vld [vmem:[%s172 + $0x3a] sm:$0xff]
      %v939 = vld [vmem:[%s172 + $0x4a] sm:$0xff]
      %v940 = vld [vmem:[%s172 + $0x52] sm:$0xff]
      %v941 = vld [vmem:[%s172 + $0x62] sm:$0xff]
      %v942 = vld [vmem:[%s172 + $0x6a] sm:$0xff]
      %v943 = vld [vmem:[%s172 + $0x7a] sm:$0xff]
      %v944 = vld [vmem:[%s172 + $0x82] sm:$0xff]
      %v945 = vld [vmem:[%s172 + $0x92] sm:$0xff]
      %v946 = vld [vmem:[%s172 + $0x9a] sm:$0xff]
      %v947 = vld [vmem:[%s172 + $0xaa] sm:$0xff]
      %v948 = vld [vmem:[%s172 + $0xb2] sm:$0xff]
      %v949 = vld [vmem:[%s172 + $0xc2] sm:$0xff]
      %v950 = vld [vmem:[%s172 + $0xca] sm:$0xff]
      %v951 = vld [vmem:[%s172 + $0xda] sm:$0xff]
      %v952 = vld [vmem:[%s172 + $0xe2] sm:$0xff]
      %v953 = vld [vmem:[%s172 + $0xf2] sm:$0xff]
      %v954 = vld [vmem:[%s172 + $0xfa] sm:$0xff]
      %v955 = vld [vmem:[%s172 + $0x10a] sm:$0xff]
      %v956 = vld [vmem:[%s172 + $0x112] sm:$0xff]
      %v957 = vld [vmem:[%s172 + $0x122] sm:$0xff]
      %v958 = vld [vmem:[%s172 + $0x12a] sm:$0xff]
      %v959 = vld [vmem:[%s172 + $0x13a] sm:$0xff]
      %v960 = vld [vmem:[%s172 + $0x142] sm:$0xff]
      %v961 = vld [vmem:[%s172 + $0x152] sm:$0xff]
      %v962 = vld [vmem:[%s172 + $0x15a] sm:$0xff]
      %v963 = vld [vmem:[%s172 + $0x16a] sm:$0xff]
      %v964 = vld [vmem:[%s172 + $0x172] sm:$0xff]
      %v965 = vpack.c.bf16 %v934, %v933
      %v966 = vpack.c.bf16 %v936, %v935
      %v967 = vpack.c.bf16 %v938, %v937
      %v968 = vpack.c.bf16 %v940, %v939
      %v969 = vpack.c.bf16 %v942, %v941
      %v970 = vpack.c.bf16 %v944, %v943
      %v971 = vpack.c.bf16 %v946, %v945
      %v972 = vpack.c.bf16 %v948, %v947
      %v973 = vpack.c.bf16 %v950, %v949
      %v974 = vpack.c.bf16 %v952, %v951
      %v975 = vpack.c.bf16 %v954, %v953
      %v976 = vpack.c.bf16 %v956, %v955
      %v977 = vpack.c.bf16 %v958, %v957
      %v978 = vpack.c.bf16 %v960, %v959
      %v979 = vpack.c.bf16 %v962, %v961
      %v980 = vpack.c.bf16 %v964, %v963
      %v981 = vld [vmem:[%s177] sm:$0xff]
      %v982 = vld [vmem:[%s177 + $0x8] sm:$0xff]
      %v983 = vld [vmem:[%s177 + $0x10] sm:$0xff]
      %v984 = vld [vmem:[%s177 + $0x18] sm:$0xff]
      %v985 = vld [vmem:[%s177 + $0x20] sm:$0xff]
      %v986 = vld [vmem:[%s177 + $0x28] sm:$0xff]
      %v987 = vld [vmem:[%s177 + $0x30] sm:$0xff]
      %v988 = vld [vmem:[%s177 + $0x38] sm:$0xff]
      %v989 = vld [vmem:[%s177 + $0x40] sm:$0xff]
      %v990 = vld [vmem:[%s177 + $0x48] sm:$0xff]
      %v991 = vld [vmem:[%s177 + $0x50] sm:$0xff]
      %v992 = vld [vmem:[%s177 + $0x58] sm:$0xff]
      %v993 = vld [vmem:[%s177 + $0x60] sm:$0xff]
      %v994 = vld [vmem:[%s177 + $0x68] sm:$0xff]
      %v995 = vld [vmem:[%s177 + $0x70] sm:$0xff]
      %v996 = vld [vmem:[%s177 + $0x78] sm:$0xff]
      %v997 = vld [vmem:[%s177 + $0x80] sm:$0xff]
      %v998 = vld [vmem:[%s177 + $0x88] sm:$0xff]
      %v999 = vld [vmem:[%s177 + $0x90] sm:$0xff]
      %v1000 = vld [vmem:[%s177 + $0x98] sm:$0xff]
      %v1001 = vld [vmem:[%s177 + $0xa0] sm:$0xff]
      %v1002 = vld [vmem:[%s177 + $0xa8] sm:$0xff]
      %v1003 = vld [vmem:[%s177 + $0xb0] sm:$0xff]
      %v1004 = vld [vmem:[%s177 + $0xb8] sm:$0xff]
      %v1005 = vld [vmem:[%s177 + $0xc0] sm:$0xff]
      %v1006 = vld [vmem:[%s177 + $0xc8] sm:$0xff]
      %v1007 = vld [vmem:[%s177 + $0xd0] sm:$0xff]
      %v1008 = vld [vmem:[%s177 + $0xd8] sm:$0xff]
      %v1009 = vld [vmem:[%s177 + $0xe0] sm:$0xff]
      %v1010 = vld [vmem:[%s177 + $0xe8] sm:$0xff]
      %v1011 = vld [vmem:[%s177 + $0xf0] sm:$0xff]
      %v1012 = vld [vmem:[%s177 + $0xf8] sm:$0xff]
      %s1013 = scalar_lea.vmem %s1, 4
      %v1014 = vld [vmem:[%s1013] sm:$0x3]
      %v1016 = vsel %vm297, %v965, 0
      %v1019 = vsel %vm297, %v966, 0
      %v1022 = vsel %vm297, %v967, 0
      %v1025 = vsel %vm297, %v968, 0
      %v1028 = vsel %vm297, %v969, 0
      %v1031 = vsel %vm297, %v970, 0
      %v1034 = vsel %vm297, %v971, 0
      %v1037 = vsel %vm297, %v972, 0
      %v1040 = vsel %vm297, %v973, 0
      %v1043 = vsel %vm297, %v974, 0
      %v1046 = vsel %vm297, %v975, 0
      %v1049 = vsel %vm297, %v976, 0
      %v1052 = vsel %vm297, %v977, 0
      %v1055 = vsel %vm297, %v978, 0
      %v1058 = vsel %vm297, %v979, 0
      %v1061 = vsel %vm297, %v980, 0
      %v1064 = vsel %vm346, %v1014, 0
      %1066 = vmatprep.subr.bf16.mxu0 0
      %1067 = vmatpush1.bf16.msra.mxu0 %v1064
      %1068 = vmatprep.subr.bf16.mxu0 0
      %1069 = vmatpush1.bf16.msra.mxu0 0
      %1070 = vmatprep.subr.bf16.mxu0 0
      %1071 = vmatpush1.bf16.msra.mxu0 0
      %1072 = vmatprep.subr.bf16.mxu0 0
      %1073 = vmatpush1.bf16.msra.mxu0 0
      %1074 = vmatprep.subr.bf16.mxu0 0
      %1075 = vmatpush1.bf16.msra.mxu0 0
      %1076 = vmatprep.subr.bf16.mxu0 0
      %1077 = vmatpush1.bf16.msra.mxu0 0
      %1078 = vmatprep.subr.bf16.mxu0 0
      %1079 = vmatpush1.bf16.msra.mxu0 0
      %1080 = vmatprep.subr.bf16.mxu0 0
      %1081 = vmatpush1.bf16.msra.mxu0 0
      %1082 = vmatprep.subr.bf16.mxu0 0
      %1083 = vmatpush1.bf16.msra.mxu0 0
      %1084 = vmatprep.subr.bf16.mxu0 0
      %1085 = vmatpush1.bf16.msra.mxu0 0
      %1086 = vmatprep.subr.bf16.mxu0 0
      %1087 = vmatpush1.bf16.msra.mxu0 0
      %1088 = vmatprep.subr.bf16.mxu0 0
      %1089 = vmatpush1.bf16.msra.mxu0 0
      %1090 = vmatprep.subr.bf16.mxu0 0
      %1091 = vmatpush1.bf16.msra.mxu0 0
      %1092 = vmatprep.subr.bf16.mxu0 0
      %1093 = vmatpush1.bf16.msra.mxu0 0
      %1094 = vmatprep.subr.bf16.mxu0 0
      %1095 = vmatpush1.bf16.msra.mxu0 0
      %1096 = vmatprep.subr.bf16.mxu0 0
      %1097 = vmatpush1.bf16.msra.mxu0 0
      %1098 = vmatprep.mubr.bf16.mxu0 0
      %1099 = vmatmul.mubr.bf16.gmra.mrb[0].mxu0 %v1016
      %v1100 = vpop.f32.mrb[0].mxu0
      %v1101 = vadd.f32 0.0, %v1100
      %v1102 = vpop.f32.mrb[0].mxu0
      %v1103 = vpop.f32.mrb[0].mxu0
      %v1104 = vadd.f32 0.0, %v1103
      %v1105 = vpop.f32.mrb[0].mxu0
      %1106 = vmatprep.mubr.bf16.mxu0 0
      %1107 = vmatmul.mubr.bf16.gmra.mrb[0].mxu0 %v1019
      %v1108 = vpop.f32.mrb[0].mxu0
      %v1109 = vadd.f32 0.0, %v1108
      %v1110 = vpop.f32.mrb[0].mxu0
      %v1111 = vpop.f32.mrb[0].mxu0
      %v1112 = vadd.f32 0.0, %v1111
      %v1113 = vpop.f32.mrb[0].mxu0
      %1114 = vmatprep.mubr.bf16.mxu0 0
      %1115 = vmatmul.mubr.bf16.gmra.mrb[0].mxu0 %v1022
      %v1116 = vpop.f32.mrb[0].mxu0
      %v1117 = vadd.f32 0.0, %v1116
      %v1118 = vpop.f32.mrb[0].mxu0
      %v1119 = vpop.f32.mrb[0].mxu0
      %v1120 = vadd.f32 0.0, %v1119
      %v1121 = vpop.f32.mrb[0].mxu0
      %1122 = vmatprep.mubr.bf16.mxu0 0
      %1123 = vmatmul.mubr.bf16.gmra.mrb[0].mxu0 %v1025
      %v1124 = vpop.f32.mrb[0].mxu0
      %v1125 = vadd.f32 0.0, %v1124
      %v1126 = vpop.f32.mrb[0].mxu0
      %v1127 = vpop.f32.mrb[0].mxu0
      %v1128 = vadd.f32 0.0, %v1127
      %v1129 = vpop.f32.mrb[0].mxu0
      %1130 = vmatprep.mubr.bf16.mxu0 0
      %1131 = vmatmul.mubr.bf16.gmra.mrb[0].mxu0 %v1028
      %v1132 = vpop.f32.mrb[0].mxu0
      %v1133 = vadd.f32 0.0, %v1132
      %v1134 = vpop.f32.mrb[0].mxu0
      %v1135 = vpop.f32.mrb[0].mxu0
      %v1136 = vadd.f32 0.0, %v1135
      %v1137 = vpop.f32.mrb[0].mxu0
      %1138 = vmatprep.mubr.bf16.mxu0 0
      %1139 = vmatmul.mubr.bf16.gmra.mrb[0].mxu0 %v1031
      %v1140 = vpop.f32.mrb[0].mxu0
      %v1141 = vadd.f32 0.0, %v1140
      %v1142 = vpop.f32.mrb[0].mxu0
      %v1143 = vpop.f32.mrb[0].mxu0
      %v1144 = vadd.f32 0.0, %v1143
      %v1145 = vpop.f32.mrb[0].mxu0
      %1146 = vmatprep.mubr.bf16.mxu0 0
      %1147 = vmatmul.mubr.bf16.gmra.mrb[0].mxu0 %v1034
      %v1148 = vpop.f32.mrb[0].mxu0
      %v1149 = vadd.f32 0.0, %v1148
      %v1150 = vpop.f32.mrb[0].mxu0
      %v1151 = vpop.f32.mrb[0].mxu0
      %v1152 = vadd.f32 0.0, %v1151
      %v1153 = vpop.f32.mrb[0].mxu0
      %1154 = vmatprep.mubr.bf16.mxu0 0
      %1155 = vmatmul.mubr.bf16.gmra.mrb[0].mxu0 %v1037
      %v1156 = vpop.f32.mrb[0].mxu0
      %v1157 = vadd.f32 0.0, %v1156
      %v1158 = vpop.f32.mrb[0].mxu0
      %v1159 = vpop.f32.mrb[0].mxu0
      %v1160 = vadd.f32 0.0, %v1159
      %v1161 = vpop.f32.mrb[0].mxu0
      %1162 = vmatprep.mubr.bf16.mxu0 0
      %1163 = vmatmul.mubr.bf16.gmra.mrb[0].mxu0 %v1040
      %v1164 = vpop.f32.mrb[0].mxu0
      %v1165 = vadd.f32 0.0, %v1164
      %v1166 = vpop.f32.mrb[0].mxu0
      %v1167 = vpop.f32.mrb[0].mxu0
      %v1168 = vadd.f32 0.0, %v1167
      %v1169 = vpop.f32.mrb[0].mxu0
      %1170 = vmatprep.mubr.bf16.mxu0 0
      %1171 = vmatmul.mubr.bf16.gmra.mrb[0].mxu0 %v1043
      %v1172 = vpop.f32.mrb[0].mxu0
      %v1173 = vadd.f32 0.0, %v1172
      %v1174 = vpop.f32.mrb[0].mxu0
      %v1175 = vpop.f32.mrb[0].mxu0
      %v1176 = vadd.f32 0.0, %v1175
      %v1177 = vpop.f32.mrb[0].mxu0
      %1178 = vmatprep.mubr.bf16.mxu0 0
      %1179 = vmatmul.mubr.bf16.gmra.mrb[0].mxu0 %v1046
      %v1180 = vpop.f32.mrb[0].mxu0
      %v1181 = vadd.f32 0.0, %v1180
      %v1182 = vpop.f32.mrb[0].mxu0
      %v1183 = vpop.f32.mrb[0].mxu0
      %v1184 = vadd.f32 0.0, %v1183
      %v1185 = vpop.f32.mrb[0].mxu0
      %1186 = vmatprep.mubr.bf16.mxu0 0
      %1187 = vmatmul.mubr.bf16.gmra.mrb[0].mxu0 %v1049
      %v1188 = vpop.f32.mrb[0].mxu0
      %v1189 = vadd.f32 0.0, %v1188
      %v1190 = vpop.f32.mrb[0].mxu0
      %v1191 = vpop.f32.mrb[0].mxu0
      %v1192 = vadd.f32 0.0, %v1191
      %v1193 = vpop.f32.mrb[0].mxu0
      %1194 = vmatprep.mubr.bf16.mxu0 0
      %1195 = vmatmul.mubr.bf16.gmra.mrb[0].mxu0 %v1052
      %v1196 = vpop.f32.mrb[0].mxu0
      %v1197 = vadd.f32 0.0, %v1196
      %v1198 = vpop.f32.mrb[0].mxu0
      %v1199 = vpop.f32.mrb[0].mxu0
      %v1200 = vadd.f32 0.0, %v1199
      %v1201 = vpop.f32.mrb[0].mxu0
      %1202 = vmatprep.mubr.bf16.mxu0 0
      %1203 = vmatmul.mubr.bf16.gmra.mrb[0].mxu0 %v1055
      %v1204 = vpop.f32.mrb[0].mxu0
      %v1205 = vadd.f32 0.0, %v1204
      %v1206 = vpop.f32.mrb[0].mxu0
      %v1207 = vpop.f32.mrb[0].mxu0
      %v1208 = vadd.f32 0.0, %v1207
      %v1209 = vpop.f32.mrb[0].mxu0
      %1210 = vmatprep.mubr.bf16.mxu0 0
      %1211 = vmatmul.mubr.bf16.gmra.mrb[0].mxu0 %v1058
      %v1212 = vpop.f32.mrb[0].mxu0
      %v1213 = vadd.f32 0.0, %v1212
      %v1214 = vpop.f32.mrb[0].mxu0
      %v1215 = vpop.f32.mrb[0].mxu0
      %v1216 = vadd.f32 0.0, %v1215
      %v1217 = vpop.f32.mrb[0].mxu0
      %1218 = vmatprep.mubr.bf16.mxu0 0
      %1219 = vmatmul.mubr.bf16.gmra.mrb[0].mxu0 %v1061
      %v1220 = vpop.f32.mrb[0].mxu0
      %v1221 = vadd.f32 0.0, %v1220
      %v1222 = vpop.f32.mrb[0].mxu0
      %v1223 = vpop.f32.mrb[0].mxu0
      %v1224 = vadd.f32 0.0, %v1223
      %v1225 = vpop.f32.mrb[0].mxu0
      %1226 = vdwg.mxu0
      %v1227 = vadd.f32 %v981, %v1101
      %v1228 = vadd.f32 %v982, %v1104
      %v1229 = vadd.f32 %v983, %v1109
      %v1230 = vadd.f32 %v984, %v1112
      %v1231 = vadd.f32 %v985, %v1117
      %v1232 = vadd.f32 %v986, %v1120
      %v1233 = vadd.f32 %v987, %v1125
      %v1234 = vadd.f32 %v988, %v1128
      %v1235 = vadd.f32 %v989, %v1133
      %v1236 = vadd.f32 %v990, %v1136
      %v1237 = vadd.f32 %v991, %v1141
      %v1238 = vadd.f32 %v992, %v1144
      %v1239 = vadd.f32 %v993, %v1149
      %v1240 = vadd.f32 %v994, %v1152
      %v1241 = vadd.f32 %v995, %v1157
      %v1242 = vadd.f32 %v996, %v1160
      %v1243 = vadd.f32 %v997, %v1165
      %v1244 = vadd.f32 %v998, %v1168
      %v1245 = vadd.f32 %v999, %v1173
      %v1246 = vadd.f32 %v1000, %v1176
      %v1247 = vadd.f32 %v1001, %v1181
      %v1248 = vadd.f32 %v1002, %v1184
      %v1249 = vadd.f32 %v1003, %v1189
      %v1250 = vadd.f32 %v1004, %v1192
      %v1251 = vadd.f32 %v1005, %v1197
      %v1252 = vadd.f32 %v1006, %v1200
      %v1253 = vadd.f32 %v1007, %v1205
      %v1254 = vadd.f32 %v1008, %v1208
      %v1255 = vadd.f32 %v1009, %v1213
      %v1256 = vadd.f32 %v1010, %v1216
      %v1257 = vadd.f32 %v1011, %v1221
      %v1258 = vadd.f32 %v1012, %v1224
      %1259 = vst [vmem:[%s177] sm:$0xff] %v1227
      %1260 = vst [vmem:[%s177 + $0x8] sm:$0xff] %v1228
      %1261 = vst [vmem:[%s177 + $0x10] sm:$0xff] %v1229
      %1262 = vst [vmem:[%s177 + $0x18] sm:$0xff] %v1230
      %1263 = vst [vmem:[%s177 + $0x20] sm:$0xff] %v1231
      %1264 = vst [vmem:[%s177 + $0x28] sm:$0xff] %v1232
      %1265 = vst [vmem:[%s177 + $0x30] sm:$0xff] %v1233
      %1266 = vst [vmem:[%s177 + $0x38] sm:$0xff] %v1234
      %1267 = vst [vmem:[%s177 + $0x40] sm:$0xff] %v1235
      %1268 = vst [vmem:[%s177 + $0x48] sm:$0xff] %v1236
      %1269 = vst [vmem:[%s177 + $0x50] sm:$0xff] %v1237
      %1270 = vst [vmem:[%s177 + $0x58] sm:$0xff] %v1238
      %1271 = vst [vmem:[%s177 + $0x60] sm:$0xff] %v1239
      %1272 = vst [vmem:[%s177 + $0x68] sm:$0xff] %v1240
      %1273 = vst [vmem:[%s177 + $0x70] sm:$0xff] %v1241
      %1274 = vst [vmem:[%s177 + $0x78] sm:$0xff] %v1242
      %1275 = vst [vmem:[%s177 + $0x80] sm:$0xff] %v1243
      %1276 = vst [vmem:[%s177 + $0x88] sm:$0xff] %v1244
      %1277 = vst [vmem:[%s177 + $0x90] sm:$0xff] %v1245
      %1278 = vst [vmem:[%s177 + $0x98] sm:$0xff] %v1246
      %1279 = vst [vmem:[%s177 + $0xa0] sm:$0xff] %v1247
      %1280 = vst [vmem:[%s177 + $0xa8] sm:$0xff] %v1248
      %1281 = vst [vmem:[%s177 + $0xb0] sm:$0xff] %v1249
      %1282 = vst [vmem:[%s177 + $0xb8] sm:$0xff] %v1250
      %1283 = vst [vmem:[%s177 + $0xc0] sm:$0xff] %v1251
      %1284 = vst [vmem:[%s177 + $0xc8] sm:$0xff] %v1252
      %1285 = vst [vmem:[%s177 + $0xd0] sm:$0xff] %v1253
      %1286 = vst [vmem:[%s177 + $0xd8] sm:$0xff] %v1254
      %1287 = vst [vmem:[%s177 + $0xe0] sm:$0xff] %v1255
      %1288 = vst [vmem:[%s177 + $0xe8] sm:$0xff] %v1256
      %1289 = vst [vmem:[%s177 + $0xf0] sm:$0xff] %v1257
      %1290 = vst [vmem:[%s177 + $0xf8] sm:$0xff] %v1258
      %s1291 = scalar_lea.vmem %s172, 24
      %v1292 = vld [vmem:[%s1291] sm:$0xff]
      %v1293 = vld [vmem:[%s1291 + $0x8] sm:$0xff]
      %v1294 = vld [vmem:[%s1291 + $0x18] sm:$0xff]
      %v1295 = vld [vmem:[%s1291 + $0x20] sm:$0xff]
      %v1296 = vld [vmem:[%s1291 + $0x30] sm:$0xff]
      %v1297 = vld [vmem:[%s1291 + $0x38] sm:$0xff]
      %v1298 = vld [vmem:[%s1291 + $0x48] sm:$0xff]
      %v1299 = vld [vmem:[%s1291 + $0x50] sm:$0xff]
      %v1300 = vld [vmem:[%s1291 + $0x60] sm:$0xff]
      %v1301 = vld [vmem:[%s1291 + $0x68] sm:$0xff]
      %v1302 = vld [vmem:[%s1291 + $0x78] sm:$0xff]
      %v1303 = vld [vmem:[%s1291 + $0x80] sm:$0xff]
      %v1304 = vld [vmem:[%s1291 + $0x90] sm:$0xff]
      %v1305 = vld [vmem:[%s1291 + $0x98] sm:$0xff]
      %v1306 = vld [vmem:[%s1291 + $0xa8] sm:$0xff]
      %v1307 = vld [vmem:[%s1291 + $0xb0] sm:$0xff]
      %v1308 = vld [vmem:[%s1291 + $0xc0] sm:$0xff]
      %v1309 = vld [vmem:[%s1291 + $0xc8] sm:$0xff]
      %v1310 = vld [vmem:[%s1291 + $0xd8] sm:$0xff]
      %v1311 = vld [vmem:[%s1291 + $0xe0] sm:$0xff]
      %v1312 = vld [vmem:[%s1291 + $0xf0] sm:$0xff]
      %v1313 = vld [vmem:[%s1291 + $0xf8] sm:$0xff]
      %v1314 = vld [vmem:[%s1291 + $0x108] sm:$0xff]
      %v1315 = vld [vmem:[%s1291 + $0x110] sm:$0xff]
      %v1316 = vld [vmem:[%s1291 + $0x120] sm:$0xff]
      %v1317 = vld [vmem:[%s1291 + $0x128] sm:$0xff]
      %v1318 = vld [vmem:[%s1291 + $0x138] sm:$0xff]
      %v1319 = vld [vmem:[%s1291 + $0x140] sm:$0xff]
      %v1320 = vld [vmem:[%s1291 + $0x150] sm:$0xff]
      %v1321 = vld [vmem:[%s1291 + $0x158] sm:$0xff]
      %v1322 = vld [vmem:[%s1291 + $0x168] sm:$0xff]
      %v1323 = vld [vmem:[%s1291 + $0x170] sm:$0xff]
      %v1324 = vpack.c.bf16 %v1293, %v1292
      %v1325 = vpack.c.bf16 %v1295, %v1294
      %v1326 = vpack.c.bf16 %v1297, %v1296
      %v1327 = vpack.c.bf16 %v1299, %v1298
      %v1328 = vpack.c.bf16 %v1301, %v1300
      %v1329 = vpack.c.bf16 %v1303, %v1302
      %v1330 = vpack.c.bf16 %v1305, %v1304
      %v1331 = vpack.c.bf16 %v1307, %v1306
      %v1332 = vpack.c.bf16 %v1309, %v1308
      %v1333 = vpack.c.bf16 %v1311, %v1310
      %v1334 = vpack.c.bf16 %v1313, %v1312
      %v1335 = vpack.c.bf16 %v1315, %v1314
      %v1336 = vpack.c.bf16 %v1317, %v1316
      %v1337 = vpack.c.bf16 %v1319, %v1318
      %v1338 = vpack.c.bf16 %v1321, %v1320
      %v1339 = vpack.c.bf16 %v1323, %v1322
      %v1340 = vld [vmem:[%s177] sm:$0xff]
      %v1341 = vld [vmem:[%s177 + $0x8] sm:$0xff]
      %v1342 = vld [vmem:[%s177 + $0x10] sm:$0xff]
      %v1343 = vld [vmem:[%s177 + $0x18] sm:$0xff]
      %v1344 = vld [vmem:[%s177 + $0x20] sm:$0xff]
      %v1345 = vld [vmem:[%s177 + $0x28] sm:$0xff]
      %v1346 = vld [vmem:[%s177 + $0x30] sm:$0xff]
      %v1347 = vld [vmem:[%s177 + $0x38] sm:$0xff]
      %v1348 = vld [vmem:[%s177 + $0x40] sm:$0xff]
      %v1349 = vld [vmem:[%s177 + $0x48] sm:$0xff]
      %v1350 = vld [vmem:[%s177 + $0x50] sm:$0xff]
      %v1351 = vld [vmem:[%s177 + $0x58] sm:$0xff]
      %v1352 = vld [vmem:[%s177 + $0x60] sm:$0xff]
      %v1353 = vld [vmem:[%s177 + $0x68] sm:$0xff]
      %v1354 = vld [vmem:[%s177 + $0x70] sm:$0xff]
      %v1355 = vld [vmem:[%s177 + $0x78] sm:$0xff]
      %v1356 = vld [vmem:[%s177 + $0x80] sm:$0xff]
      %v1357 = vld [vmem:[%s177 + $0x88] sm:$0xff]
      %v1358 = vld [vmem:[%s177 + $0x90] sm:$0xff]
      %v1359 = vld [vmem:[%s177 + $0x98] sm:$0xff]
      %v1360 = vld [vmem:[%s177 + $0xa0] sm:$0xff]
      %v1361 = vld [vmem:[%s177 + $0xa8] sm:$0xff]
      %v1362 = vld [vmem:[%s177 + $0xb0] sm:$0xff]
      %v1363 = vld [vmem:[%s177 + $0xb8] sm:$0xff]
      %v1364 = vld [vmem:[%s177 + $0xc0] sm:$0xff]
      %v1365 = vld [vmem:[%s177 + $0xc8] sm:$0xff]
      %v1366 = vld [vmem:[%s177 + $0xd0] sm:$0xff]
      %v1367 = vld [vmem:[%s177 + $0xd8] sm:$0xff]
      %v1368 = vld [vmem:[%s177 + $0xe0] sm:$0xff]
      %v1369 = vld [vmem:[%s177 + $0xe8] sm:$0xff]
      %v1370 = vld [vmem:[%s177 + $0xf0] sm:$0xff]
      %v1371 = vld [vmem:[%s177 + $0xf8] sm:$0xff]
      %s1372 = scalar_lea.vmem %s1, 6
      %v1373 = vld [vmem:[%s1372] sm:$0x3]
      %v1375 = vsel %vm297, %v1324, 0
      %v1378 = vsel %vm297, %v1325, 0
      %v1381 = vsel %vm297, %v1326, 0
      %v1384 = vsel %vm297, %v1327, 0
      %v1387 = vsel %vm297, %v1328, 0
      %v1390 = vsel %vm297, %v1329, 0
      %v1393 = vsel %vm297, %v1330, 0
      %v1396 = vsel %vm297, %v1331, 0
      %v1399 = vsel %vm297, %v1332, 0
      %v1402 = vsel %vm297, %v1333, 0
      %v1405 = vsel %vm297, %v1334, 0
      %v1408 = vsel %vm297, %v1335, 0
      %v1411 = vsel %vm297, %v1336, 0
      %v1414 = vsel %vm297, %v1337, 0
      %v1417 = vsel %vm297, %v1338, 0
      %v1420 = vsel %vm297, %v1339, 0
      %v1423 = vsel %vm346, %v1373, 0
      %1425 = vmatprep.subr.bf16.mxu0 0
      %1426 = vmatpush1.bf16.msra.mxu0 %v1423
      %1427 = vmatprep.subr.bf16.mxu0 0
      %1428 = vmatpush1.bf16.msra.mxu0 0
      %1429 = vmatprep.subr.bf16.mxu0 0
      %1430 = vmatpush1.bf16.msra.mxu0 0
      %1431 = vmatprep.subr.bf16.mxu0 0
      %1432 = vmatpush1.bf16.msra.mxu0 0
      %1433 = vmatprep.subr.bf16.mxu0 0
      %1434 = vmatpush1.bf16.msra.mxu0 0
      %1435 = vmatprep.subr.bf16.mxu0 0
      %1436 = vmatpush1.bf16.msra.mxu0 0
      %1437 = vmatprep.subr.bf16.mxu0 0
      %1438 = vmatpush1.bf16.msra.mxu0 0
      %1439 = vmatprep.subr.bf16.mxu0 0
      %1440 = vmatpush1.bf16.msra.mxu0 0
      %1441 = vmatprep.subr.bf16.mxu0 0
      %1442 = vmatpush1.bf16.msra.mxu0 0
      %1443 = vmatprep.subr.bf16.mxu0 0
      %1444 = vmatpush1.bf16.msra.mxu0 0
      %1445 = vmatprep.subr.bf16.mxu0 0
      %1446 = vmatpush1.bf16.msra.mxu0 0
      %1447 = vmatprep.subr.bf16.mxu0 0
      %1448 = vmatpush1.bf16.msra.mxu0 0
      %1449 = vmatprep.subr.bf16.mxu0 0
      %1450 = vmatpush1.bf16.msra.mxu0 0
      %1451 = vmatprep.subr.bf16.mxu0 0
      %1452 = vmatpush1.bf16.msra.mxu0 0
      %1453 = vmatprep.subr.bf16.mxu0 0
      %1454 = vmatpush1.bf16.msra.mxu0 0
      %1455 = vmatprep.subr.bf16.mxu0 0
      %1456 = vmatpush1.bf16.msra.mxu0 0
      %1457 = vmatprep.mubr.bf16.mxu0 0
      %1458 = vmatmul.mubr.bf16.gmra.mrb[0].mxu0 %v1375
      %v1459 = vpop.f32.mrb[0].mxu0
      %v1460 = vadd.f32 0.0, %v1459
      %v1461 = vpop.f32.mrb[0].mxu0
      %v1462 = vpop.f32.mrb[0].mxu0
      %v1463 = vadd.f32 0.0, %v1462
      %v1464 = vpop.f32.mrb[0].mxu0
      %1465 = vmatprep.mubr.bf16.mxu0 0
      %1466 = vmatmul.mubr.bf16.gmra.mrb[0].mxu0 %v1378
      %v1467 = vpop.f32.mrb[0].mxu0
      %v1468 = vadd.f32 0.0, %v1467
      %v1469 = vpop.f32.mrb[0].mxu0
      %v1470 = vpop.f32.mrb[0].mxu0
      %v1471 = vadd.f32 0.0, %v1470
      %v1472 = vpop.f32.mrb[0].mxu0
      %1473 = vmatprep.mubr.bf16.mxu0 0
      %1474 = vmatmul.mubr.bf16.gmra.mrb[0].mxu0 %v1381
      %v1475 = vpop.f32.mrb[0].mxu0
      %v1476 = vadd.f32 0.0, %v1475
      %v1477 = vpop.f32.mrb[0].mxu0
      %v1478 = vpop.f32.mrb[0].mxu0
      %v1479 = vadd.f32 0.0, %v1478
      %v1480 = vpop.f32.mrb[0].mxu0
      %1481 = vmatprep.mubr.bf16.mxu0 0
      %1482 = vmatmul.mubr.bf16.gmra.mrb[0].mxu0 %v1384
      %v1483 = vpop.f32.mrb[0].mxu0
      %v1484 = vadd.f32 0.0, %v1483
      %v1485 = vpop.f32.mrb[0].mxu0
      %v1486 = vpop.f32.mrb[0].mxu0
      %v1487 = vadd.f32 0.0, %v1486
      %v1488 = vpop.f32.mrb[0].mxu0
      %1489 = vmatprep.mubr.bf16.mxu0 0
      %1490 = vmatmul.mubr.bf16.gmra.mrb[0].mxu0 %v1387
      %v1491 = vpop.f32.mrb[0].mxu0
      %v1492 = vadd.f32 0.0, %v1491
      %v1493 = vpop.f32.mrb[0].mxu0
      %v1494 = vpop.f32.mrb[0].mxu0
      %v1495 = vadd.f32 0.0, %v1494
      %v1496 = vpop.f32.mrb[0].mxu0
      %1497 = vmatprep.mubr.bf16.mxu0 0
      %1498 = vmatmul.mubr.bf16.gmra.mrb[0].mxu0 %v1390
      %v1499 = vpop.f32.mrb[0].mxu0
      %v1500 = vadd.f32 0.0, %v1499
      %v1501 = vpop.f32.mrb[0].mxu0
      %v1502 = vpop.f32.mrb[0].mxu0
      %v1503 = vadd.f32 0.0, %v1502
      %v1504 = vpop.f32.mrb[0].mxu0
      %1505 = vmatprep.mubr.bf16.mxu0 0
      %1506 = vmatmul.mubr.bf16.gmra.mrb[0].mxu0 %v1393
      %v1507 = vpop.f32.mrb[0].mxu0
      %v1508 = vadd.f32 0.0, %v1507
      %v1509 = vpop.f32.mrb[0].mxu0
      %v1510 = vpop.f32.mrb[0].mxu0
      %v1511 = vadd.f32 0.0, %v1510
      %v1512 = vpop.f32.mrb[0].mxu0
      %1513 = vmatprep.mubr.bf16.mxu0 0
      %1514 = vmatmul.mubr.bf16.gmra.mrb[0].mxu0 %v1396
      %v1515 = vpop.f32.mrb[0].mxu0
      %v1516 = vadd.f32 0.0, %v1515
      %v1517 = vpop.f32.mrb[0].mxu0
      %v1518 = vpop.f32.mrb[0].mxu0
      %v1519 = vadd.f32 0.0, %v1518
      %v1520 = vpop.f32.mrb[0].mxu0
      %1521 = vmatprep.mubr.bf16.mxu0 0
      %1522 = vmatmul.mubr.bf16.gmra.mrb[0].mxu0 %v1399
      %v1523 = vpop.f32.mrb[0].mxu0
      %v1524 = vadd.f32 0.0, %v1523
      %v1525 = vpop.f32.mrb[0].mxu0
      %v1526 = vpop.f32.mrb[0].mxu0
      %v1527 = vadd.f32 0.0, %v1526
      %v1528 = vpop.f32.mrb[0].mxu0
      %1529 = vmatprep.mubr.bf16.mxu0 0
      %1530 = vmatmul.mubr.bf16.gmra.mrb[0].mxu0 %v1402
      %v1531 = vpop.f32.mrb[0].mxu0
      %v1532 = vadd.f32 0.0, %v1531
      %v1533 = vpop.f32.mrb[0].mxu0
      %v1534 = vpop.f32.mrb[0].mxu0
      %v1535 = vadd.f32 0.0, %v1534
      %v1536 = vpop.f32.mrb[0].mxu0
      %1537 = vmatprep.mubr.bf16.mxu0 0
      %1538 = vmatmul.mubr.bf16.gmra.mrb[0].mxu0 %v1405
      %v1539 = vpop.f32.mrb[0].mxu0
      %v1540 = vadd.f32 0.0, %v1539
      %v1541 = vpop.f32.mrb[0].mxu0
      %v1542 = vpop.f32.mrb[0].mxu0
      %v1543 = vadd.f32 0.0, %v1542
      %v1544 = vpop.f32.mrb[0].mxu0
      %1545 = vmatprep.mubr.bf16.mxu0 0
      %1546 = vmatmul.mubr.bf16.gmra.mrb[0].mxu0 %v1408
      %v1547 = vpop.f32.mrb[0].mxu0
      %v1548 = vadd.f32 0.0, %v1547
      %v1549 = vpop.f32.mrb[0].mxu0
      %v1550 = vpop.f32.mrb[0].mxu0
      %v1551 = vadd.f32 0.0, %v1550
      %v1552 = vpop.f32.mrb[0].mxu0
      %1553 = vmatprep.mubr.bf16.mxu0 0
      %1554 = vmatmul.mubr.bf16.gmra.mrb[0].mxu0 %v1411
      %v1555 = vpop.f32.mrb[0].mxu0
      %v1556 = vadd.f32 0.0, %v1555
      %v1557 = vpop.f32.mrb[0].mxu0
      %v1558 = vpop.f32.mrb[0].mxu0
      %v1559 = vadd.f32 0.0, %v1558
      %v1560 = vpop.f32.mrb[0].mxu0
      %1561 = vmatprep.mubr.bf16.mxu0 0
      %1562 = vmatmul.mubr.bf16.gmra.mrb[0].mxu0 %v1414
      %v1563 = vpop.f32.mrb[0].mxu0
      %v1564 = vadd.f32 0.0, %v1563
      %v1565 = vpop.f32.mrb[0].mxu0
      %v1566 = vpop.f32.mrb[0].mxu0
      %v1567 = vadd.f32 0.0, %v1566
      %v1568 = vpop.f32.mrb[0].mxu0
      %1569 = vmatprep.mubr.bf16.mxu0 0
      %1570 = vmatmul.mubr.bf16.gmra.mrb[0].mxu0 %v1417
      %v1571 = vpop.f32.mrb[0].mxu0
      %v1572 = vadd.f32 0.0, %v1571
      %v1573 = vpop.f32.mrb[0].mxu0
      %v1574 = vpop.f32.mrb[0].mxu0
      %v1575 = vadd.f32 0.0, %v1574
      %v1576 = vpop.f32.mrb[0].mxu0
      %1577 = vmatprep.mubr.bf16.mxu0 0
      %1578 = vmatmul.mubr.bf16.gmra.mrb[0].mxu0 %v1420
      %v1579 = vpop.f32.mrb[0].mxu0
      %v1580 = vadd.f32 0.0, %v1579
      %v1581 = vpop.f32.mrb[0].mxu0
      %v1582 = vpop.f32.mrb[0].mxu0
      %v1583 = vadd.f32 0.0, %v1582
      %v1584 = vpop.f32.mrb[0].mxu0
      %1585 = vdwg.mxu0
      %v1586 = vadd.f32 %v1340, %v1460
      %v1587 = vadd.f32 %v1341, %v1463
      %v1588 = vadd.f32 %v1342, %v1468
      %v1589 = vadd.f32 %v1343, %v1471
      %v1590 = vadd.f32 %v1344, %v1476
      %v1591 = vadd.f32 %v1345, %v1479
      %v1592 = vadd.f32 %v1346, %v1484
      %v1593 = vadd.f32 %v1347, %v1487
      %v1594 = vadd.f32 %v1348, %v1492
      %v1595 = vadd.f32 %v1349, %v1495
      %v1596 = vadd.f32 %v1350, %v1500
      %v1597 = vadd.f32 %v1351, %v1503
      %v1598 = vadd.f32 %v1352, %v1508
      %v1599 = vadd.f32 %v1353, %v1511
      %v1600 = vadd.f32 %v1354, %v1516
      %v1601 = vadd.f32 %v1355, %v1519
      %v1602 = vadd.f32 %v1356, %v1524
      %v1603 = vadd.f32 %v1357, %v1527
      %v1604 = vadd.f32 %v1358, %v1532
      %v1605 = vadd.f32 %v1359, %v1535
      %v1606 = vadd.f32 %v1360, %v1540
      %v1607 = vadd.f32 %v1361, %v1543
      %v1608 = vadd.f32 %v1362, %v1548
      %v1609 = vadd.f32 %v1363, %v1551
      %v1610 = vadd.f32 %v1364, %v1556
      %v1611 = vadd.f32 %v1365, %v1559
      %v1612 = vadd.f32 %v1366, %v1564
      %v1613 = vadd.f32 %v1367, %v1567
      %v1614 = vadd.f32 %v1368, %v1572
      %v1615 = vadd.f32 %v1369, %v1575
      %v1616 = vadd.f32 %v1370, %v1580
      %v1617 = vadd.f32 %v1371, %v1583
      %1618 = vst [vmem:[%s177] sm:$0xff] %v1586
      %1619 = vst [vmem:[%s177 + $0x8] sm:$0xff] %v1587
      %1620 = vst [vmem:[%s177 + $0x10] sm:$0xff] %v1588
      %1621 = vst [vmem:[%s177 + $0x18] sm:$0xff] %v1589
      %1622 = vst [vmem:[%s177 + $0x20] sm:$0xff] %v1590
      %1623 = vst [vmem:[%s177 + $0x28] sm:$0xff] %v1591
      %1624 = vst [vmem:[%s177 + $0x30] sm:$0xff] %v1592
      %1625 = vst [vmem:[%s177 + $0x38] sm:$0xff] %v1593
      %1626 = vst [vmem:[%s177 + $0x40] sm:$0xff] %v1594
      %1627 = vst [vmem:[%s177 + $0x48] sm:$0xff] %v1595
      %1628 = vst [vmem:[%s177 + $0x50] sm:$0xff] %v1596
      %1629 = vst [vmem:[%s177 + $0x58] sm:$0xff] %v1597
      %1630 = vst [vmem:[%s177 + $0x60] sm:$0xff] %v1598
      %1631 = vst [vmem:[%s177 + $0x68] sm:$0xff] %v1599
      %1632 = vst [vmem:[%s177 + $0x70] sm:$0xff] %v1600
      %1633 = vst [vmem:[%s177 + $0x78] sm:$0xff] %v1601
      %1634 = vst [vmem:[%s177 + $0x80] sm:$0xff] %v1602
      %1635 = vst [vmem:[%s177 + $0x88] sm:$0xff] %v1603
      %1636 = vst [vmem:[%s177 + $0x90] sm:$0xff] %v1604
      %1637 = vst [vmem:[%s177 + $0x98] sm:$0xff] %v1605
      %1638 = vst [vmem:[%s177 + $0xa0] sm:$0xff] %v1606
      %1639 = vst [vmem:[%s177 + $0xa8] sm:$0xff] %v1607
      %1640 = vst [vmem:[%s177 + $0xb0] sm:$0xff] %v1608
      %1641 = vst [vmem:[%s177 + $0xb8] sm:$0xff] %v1609
      %1642 = vst [vmem:[%s177 + $0xc0] sm:$0xff] %v1610
      %1643 = vst [vmem:[%s177 + $0xc8] sm:$0xff] %v1611
      %1644 = vst [vmem:[%s177 + $0xd0] sm:$0xff] %v1612
      %1645 = vst [vmem:[%s177 + $0xd8] sm:$0xff] %v1613
      %1646 = vst [vmem:[%s177 + $0xe0] sm:$0xff] %v1614
      %1647 = vst [vmem:[%s177 + $0xe8] sm:$0xff] %v1615
      %1648 = vst [vmem:[%s177 + $0xf0] sm:$0xff] %v1616
      %1649 = vst [vmem:[%s177 + $0xf8] sm:$0xff] %v1617
      %v1650 = vld [vmem:[%s1291 + $0x1] sm:$0xff]
      %v1651 = vld [vmem:[%s1291 + $0x9] sm:$0xff]
      %v1652 = vld [vmem:[%s1291 + $0x19] sm:$0xff]
      %v1653 = vld [vmem:[%s1291 + $0x21] sm:$0xff]
      %v1654 = vld [vmem:[%s1291 + $0x31] sm:$0xff]
      %v1655 = vld [vmem:[%s1291 + $0x39] sm:$0xff]
      %v1656 = vld [vmem:[%s1291 + $0x49] sm:$0xff]
      %v1657 = vld [vmem:[%s1291 + $0x51] sm:$0xff]
      %v1658 = vld [vmem:[%s1291 + $0x61] sm:$0xff]
      %v1659 = vld [vmem:[%s1291 + $0x69] sm:$0xff]
      %v1660 = vld [vmem:[%s1291 + $0x79] sm:$0xff]
      %v1661 = vld [vmem:[%s1291 + $0x81] sm:$0xff]
      %v1662 = vld [vmem:[%s1291 + $0x91] sm:$0xff]
      %v1663 = vld [vmem:[%s1291 + $0x99] sm:$0xff]
      %v1664 = vld [vmem:[%s1291 + $0xa9] sm:$0xff]
      %v1665 = vld [vmem:[%s1291 + $0xb1] sm:$0xff]
      %v1666 = vld [vmem:[%s1291 + $0xc1] sm:$0xff]
      %v1667 = vld [vmem:[%s1291 + $0xc9] sm:$0xff]
      %v1668 = vld [vmem:[%s1291 + $0xd9] sm:$0xff]
      %v1669 = vld [vmem:[%s1291 + $0xe1] sm:$0xff]
      %v1670 = vld [vmem:[%s1291 + $0xf1] sm:$0xff]
      %v1671 = vld [vmem:[%s1291 + $0xf9] sm:$0xff]
      %v1672 = vld [vmem:[%s1291 + $0x109] sm:$0xff]
      %v1673 = vld [vmem:[%s1291 + $0x111] sm:$0xff]
      %v1674 = vld [vmem:[%s1291 + $0x121] sm:$0xff]
      %v1675 = vld [vmem:[%s1291 + $0x129] sm:$0xff]
      %v1676 = vld [vmem:[%s1291 + $0x139] sm:$0xff]
      %v1677 = vld [vmem:[%s1291 + $0x141] sm:$0xff]
      %v1678 = vld [vmem:[%s1291 + $0x151] sm:$0xff]
      %v1679 = vld [vmem:[%s1291 + $0x159] sm:$0xff]
      %v1680 = vld [vmem:[%s1291 + $0x169] sm:$0xff]
      %v1681 = vld [vmem:[%s1291 + $0x171] sm:$0xff]
      %v1682 = vpack.c.bf16 %v1651, %v1650
      %v1683 = vpack.c.bf16 %v1653, %v1652
      %v1684 = vpack.c.bf16 %v1655, %v1654
      %v1685 = vpack.c.bf16 %v1657, %v1656
      %v1686 = vpack.c.bf16 %v1659, %v1658
      %v1687 = vpack.c.bf16 %v1661, %v1660
      %v1688 = vpack.c.bf16 %v1663, %v1662
      %v1689 = vpack.c.bf16 %v1665, %v1664
      %v1690 = vpack.c.bf16 %v1667, %v1666
      %v1691 = vpack.c.bf16 %v1669, %v1668
      %v1692 = vpack.c.bf16 %v1671, %v1670
      %v1693 = vpack.c.bf16 %v1673, %v1672
      %v1694 = vpack.c.bf16 %v1675, %v1674
      %v1695 = vpack.c.bf16 %v1677, %v1676
      %v1696 = vpack.c.bf16 %v1679, %v1678
      %v1697 = vpack.c.bf16 %v1681, %v1680
      %v1698 = vld [vmem:[%s177] sm:$0xff]
      %v1699 = vld [vmem:[%s177 + $0x8] sm:$0xff]
      %v1700 = vld [vmem:[%s177 + $0x10] sm:$0xff]
      %v1701 = vld [vmem:[%s177 + $0x18] sm:$0xff]
      %v1702 = vld [vmem:[%s177 + $0x20] sm:$0xff]
      %v1703 = vld [vmem:[%s177 + $0x28] sm:$0xff]
      %v1704 = vld [vmem:[%s177 + $0x30] sm:$0xff]
      %v1705 = vld [vmem:[%s177 + $0x38] sm:$0xff]
      %v1706 = vld [vmem:[%s177 + $0x40] sm:$0xff]
      %v1707 = vld [vmem:[%s177 + $0x48] sm:$0xff]
      %v1708 = vld [vmem:[%s177 + $0x50] sm:$0xff]
      %v1709 = vld [vmem:[%s177 + $0x58] sm:$0xff]
      %v1710 = vld [vmem:[%s177 + $0x60] sm:$0xff]
      %v1711 = vld [vmem:[%s177 + $0x68] sm:$0xff]
      %v1712 = vld [vmem:[%s177 + $0x70] sm:$0xff]
      %v1713 = vld [vmem:[%s177 + $0x78] sm:$0xff]
      %v1714 = vld [vmem:[%s177 + $0x80] sm:$0xff]
      %v1715 = vld [vmem:[%s177 + $0x88] sm:$0xff]
      %v1716 = vld [vmem:[%s177 + $0x90] sm:$0xff]
      %v1717 = vld [vmem:[%s177 + $0x98] sm:$0xff]
      %v1718 = vld [vmem:[%s177 + $0xa0] sm:$0xff]
      %v1719 = vld [vmem:[%s177 + $0xa8] sm:$0xff]
      %v1720 = vld [vmem:[%s177 + $0xb0] sm:$0xff]
      %v1721 = vld [vmem:[%s177 + $0xb8] sm:$0xff]
      %v1722 = vld [vmem:[%s177 + $0xc0] sm:$0xff]
      %v1723 = vld [vmem:[%s177 + $0xc8] sm:$0xff]
      %v1724 = vld [vmem:[%s177 + $0xd0] sm:$0xff]
      %v1725 = vld [vmem:[%s177 + $0xd8] sm:$0xff]
      %v1726 = vld [vmem:[%s177 + $0xe0] sm:$0xff]
      %v1727 = vld [vmem:[%s177 + $0xe8] sm:$0xff]
      %v1728 = vld [vmem:[%s177 + $0xf0] sm:$0xff]
      %v1729 = vld [vmem:[%s177 + $0xf8] sm:$0xff]
      %s1730 = scalar_lea.vmem %s1, 8
      %v1731 = vld [vmem:[%s1730] sm:$0x3]
      %v1733 = vsel %vm297, %v1682, 0
      %v1736 = vsel %vm297, %v1683, 0
      %v1739 = vsel %vm297, %v1684, 0
      %v1742 = vsel %vm297, %v1685, 0
      %v1745 = vsel %vm297, %v1686, 0
      %v1748 = vsel %vm297, %v1687, 0
      %v1751 = vsel %vm297, %v1688, 0
      %v1754 = vsel %vm297, %v1689, 0
      %v1757 = vsel %vm297, %v1690, 0
      %v1760 = vsel %vm297, %v1691, 0
      %v1763 = vsel %vm297, %v1692, 0
      %v1766 = vsel %vm297, %v1693, 0
      %v1769 = vsel %vm297, %v1694, 0
      %v1772 = vsel %vm297, %v1695, 0
      %v1775 = vsel %vm297, %v1696, 0
      %v1778 = vsel %vm297, %v1697, 0
      %v1781 = vsel %vm346, %v1731, 0
      %1783 = vmatprep.subr.bf16.mxu0 0
      %1784 = vmatpush1.bf16.msra.mxu0 %v1781
      %1785 = vmatprep.subr.bf16.mxu0 0
      %1786 = vmatpush1.bf16.msra.mxu0 0
      %1787 = vmatprep.subr.bf16.mxu0 0
      %1788 = vmatpush1.bf16.msra.mxu0 0
      %1789 = vmatprep.subr.bf16.mxu0 0
      %1790 = vmatpush1.bf16.msra.mxu0 0
      %1791 = vmatprep.subr.bf16.mxu0 0
      %1792 = vmatpush1.bf16.msra.mxu0 0
      %1793 = vmatprep.subr.bf16.mxu0 0
      %1794 = vmatpush1.bf16.msra.mxu0 0
      %1795 = vmatprep.subr.bf16.mxu0 0
      %1796 = vmatpush1.bf16.msra.mxu0 0
      %1797 = vmatprep.subr.bf16.mxu0 0
      %1798 = vmatpush1.bf16.msra.mxu0 0
      %1799 = vmatprep.subr.bf16.mxu0 0
      %1800 = vmatpush1.bf16.msra.mxu0 0
      %1801 = vmatprep.subr.bf16.mxu0 0
      %1802 = vmatpush1.bf16.msra.mxu0 0
      %1803 = vmatprep.subr.bf16.mxu0 0
      %1804 = vmatpush1.bf16.msra.mxu0 0
      %1805 = vmatprep.subr.bf16.mxu0 0
      %1806 = vmatpush1.bf16.msra.mxu0 0
      %1807 = vmatprep.subr.bf16.mxu0 0
      %1808 = vmatpush1.bf16.msra.mxu0 0
      %1809 = vmatprep.subr.bf16.mxu0 0
      %1810 = vmatpush1.bf16.msra.mxu0 0
      %1811 = vmatprep.subr.bf16.mxu0 0
      %1812 = vmatpush1.bf16.msra.mxu0 0
      %1813 = vmatprep.subr.bf16.mxu0 0
      %1814 = vmatpush1.bf16.msra.mxu0 0
      %1815 = vmatprep.mubr.bf16.mxu0 0
      %1816 = vmatmul.mubr.bf16.gmra.mrb[0].mxu0 %v1733
      %v1817 = vpop.f32.mrb[0].mxu0
      %v1818 = vadd.f32 0.0, %v1817
      %v1819 = vpop.f32.mrb[0].mxu0
      %v1820 = vpop.f32.mrb[0].mxu0
      %v1821 = vadd.f32 0.0, %v1820
      %v1822 = vpop.f32.mrb[0].mxu0
      %1823 = vmatprep.mubr.bf16.mxu0 0
      %1824 = vmatmul.mubr.bf16.gmra.mrb[0].mxu0 %v1736
      %v1825 = vpop.f32.mrb[0].mxu0
      %v1826 = vadd.f32 0.0, %v1825
      %v1827 = vpop.f32.mrb[0].mxu0
      %v1828 = vpop.f32.mrb[0].mxu0
      %v1829 = vadd.f32 0.0, %v1828
      %v1830 = vpop.f32.mrb[0].mxu0
      %1831 = vmatprep.mubr.bf16.mxu0 0
      %1832 = vmatmul.mubr.bf16.gmra.mrb[0].mxu0 %v1739
      %v1833 = vpop.f32.mrb[0].mxu0
      %v1834 = vadd.f32 0.0, %v1833
      %v1835 = vpop.f32.mrb[0].mxu0
      %v1836 = vpop.f32.mrb[0].mxu0
      %v1837 = vadd.f32 0.0, %v1836
      %v1838 = vpop.f32.mrb[0].mxu0
      %1839 = vmatprep.mubr.bf16.mxu0 0
      %1840 = vmatmul.mubr.bf16.gmra.mrb[0].mxu0 %v1742
      %v1841 = vpop.f32.mrb[0].mxu0
      %v1842 = vadd.f32 0.0, %v1841
      %v1843 = vpop.f32.mrb[0].mxu0
      %v1844 = vpop.f32.mrb[0].mxu0
      %v1845 = vadd.f32 0.0, %v1844
      %v1846 = vpop.f32.mrb[0].mxu0
      %1847 = vmatprep.mubr.bf16.mxu0 0
      %1848 = vmatmul.mubr.bf16.gmra.mrb[0].mxu0 %v1745
      %v1849 = vpop.f32.mrb[0].mxu0
      %v1850 = vadd.f32 0.0, %v1849
      %v1851 = vpop.f32.mrb[0].mxu0
      %v1852 = vpop.f32.mrb[0].mxu0
      %v1853 = vadd.f32 0.0, %v1852
      %v1854 = vpop.f32.mrb[0].mxu0
      %1855 = vmatprep.mubr.bf16.mxu0 0
      %1856 = vmatmul.mubr.bf16.gmra.mrb[0].mxu0 %v1748
      %v1857 = vpop.f32.mrb[0].mxu0
      %v1858 = vadd.f32 0.0, %v1857
      %v1859 = vpop.f32.mrb[0].mxu0
      %v1860 = vpop.f32.mrb[0].mxu0
      %v1861 = vadd.f32 0.0, %v1860
      %v1862 = vpop.f32.mrb[0].mxu0
      %1863 = vmatprep.mubr.bf16.mxu0 0
      %1864 = vmatmul.mubr.bf16.gmra.mrb[0].mxu0 %v1751
      %v1865 = vpop.f32.mrb[0].mxu0
      %v1866 = vadd.f32 0.0, %v1865
      %v1867 = vpop.f32.mrb[0].mxu0
      %v1868 = vpop.f32.mrb[0].mxu0
      %v1869 = vadd.f32 0.0, %v1868
      %v1870 = vpop.f32.mrb[0].mxu0
      %1871 = vmatprep.mubr.bf16.mxu0 0
      %1872 = vmatmul.mubr.bf16.gmra.mrb[0].mxu0 %v1754
      %v1873 = vpop.f32.mrb[0].mxu0
      %v1874 = vadd.f32 0.0, %v1873
      %v1875 = vpop.f32.mrb[0].mxu0
      %v1876 = vpop.f32.mrb[0].mxu0
      %v1877 = vadd.f32 0.0, %v1876
      %v1878 = vpop.f32.mrb[0].mxu0
      %1879 = vmatprep.mubr.bf16.mxu0 0
      %1880 = vmatmul.mubr.bf16.gmra.mrb[0].mxu0 %v1757
      %v1881 = vpop.f32.mrb[0].mxu0
      %v1882 = vadd.f32 0.0, %v1881
      %v1883 = vpop.f32.mrb[0].mxu0
      %v1884 = vpop.f32.mrb[0].mxu0
      %v1885 = vadd.f32 0.0, %v1884
      %v1886 = vpop.f32.mrb[0].mxu0
      %1887 = vmatprep.mubr.bf16.mxu0 0
      %1888 = vmatmul.mubr.bf16.gmra.mrb[0].mxu0 %v1760
      %v1889 = vpop.f32.mrb[0].mxu0
      %v1890 = vadd.f32 0.0, %v1889
      %v1891 = vpop.f32.mrb[0].mxu0
      %v1892 = vpop.f32.mrb[0].mxu0
      %v1893 = vadd.f32 0.0, %v1892
      %v1894 = vpop.f32.mrb[0].mxu0
      %1895 = vmatprep.mubr.bf16.mxu0 0
      %1896 = vmatmul.mubr.bf16.gmra.mrb[0].mxu0 %v1763
      %v1897 = vpop.f32.mrb[0].mxu0
      %v1898 = vadd.f32 0.0, %v1897
      %v1899 = vpop.f32.mrb[0].mxu0
      %v1900 = vpop.f32.mrb[0].mxu0
      %v1901 = vadd.f32 0.0, %v1900
      %v1902 = vpop.f32.mrb[0].mxu0
      %1903 = vmatprep.mubr.bf16.mxu0 0
      %1904 = vmatmul.mubr.bf16.gmra.mrb[0].mxu0 %v1766
      %v1905 = vpop.f32.mrb[0].mxu0
      %v1906 = vadd.f32 0.0, %v1905
      %v1907 = vpop.f32.mrb[0].mxu0
      %v1908 = vpop.f32.mrb[0].mxu0
      %v1909 = vadd.f32 0.0, %v1908
      %v1910 = vpop.f32.mrb[0].mxu0
      %1911 = vmatprep.mubr.bf16.mxu0 0
      %1912 = vmatmul.mubr.bf16.gmra.mrb[0].mxu0 %v1769
      %v1913 = vpop.f32.mrb[0].mxu0
      %v1914 = vadd.f32 0.0, %v1913
      %v1915 = vpop.f32.mrb[0].mxu0
      %v1916 = vpop.f32.mrb[0].mxu0
      %v1917 = vadd.f32 0.0, %v1916
      %v1918 = vpop.f32.mrb[0].mxu0
      %1919 = vmatprep.mubr.bf16.mxu0 0
      %1920 = vmatmul.mubr.bf16.gmra.mrb[0].mxu0 %v1772
      %v1921 = vpop.f32.mrb[0].mxu0
      %v1922 = vadd.f32 0.0, %v1921
      %v1923 = vpop.f32.mrb[0].mxu0
      %v1924 = vpop.f32.mrb[0].mxu0
      %v1925 = vadd.f32 0.0, %v1924
      %v1926 = vpop.f32.mrb[0].mxu0
      %1927 = vmatprep.mubr.bf16.mxu0 0
      %1928 = vmatmul.mubr.bf16.gmra.mrb[0].mxu0 %v1775
      %v1929 = vpop.f32.mrb[0].mxu0
      %v1930 = vadd.f32 0.0, %v1929
      %v1931 = vpop.f32.mrb[0].mxu0
      %v1932 = vpop.f32.mrb[0].mxu0
      %v1933 = vadd.f32 0.0, %v1932
      %v1934 = vpop.f32.mrb[0].mxu0
      %1935 = vmatprep.mubr.bf16.mxu0 0
      %1936 = vmatmul.mubr.bf16.gmra.mrb[0].mxu0 %v1778
      %v1937 = vpop.f32.mrb[0].mxu0
      %v1938 = vadd.f32 0.0, %v1937
      %v1939 = vpop.f32.mrb[0].mxu0
      %v1940 = vpop.f32.mrb[0].mxu0
      %v1941 = vadd.f32 0.0, %v1940
      %v1942 = vpop.f32.mrb[0].mxu0
      %1943 = vdwg.mxu0
      %v1944 = vadd.f32 %v1698, %v1818
      %v1945 = vadd.f32 %v1699, %v1821
      %v1946 = vadd.f32 %v1700, %v1826
      %v1947 = vadd.f32 %v1701, %v1829
      %v1948 = vadd.f32 %v1702, %v1834
      %v1949 = vadd.f32 %v1703, %v1837
      %v1950 = vadd.f32 %v1704, %v1842
      %v1951 = vadd.f32 %v1705, %v1845
      %v1952 = vadd.f32 %v1706, %v1850
      %v1953 = vadd.f32 %v1707, %v1853
      %v1954 = vadd.f32 %v1708, %v1858
      %v1955 = vadd.f32 %v1709, %v1861
      %v1956 = vadd.f32 %v1710, %v1866
      %v1957 = vadd.f32 %v1711, %v1869
      %v1958 = vadd.f32 %v1712, %v1874
      %v1959 = vadd.f32 %v1713, %v1877
      %v1960 = vadd.f32 %v1714, %v1882
      %v1961 = vadd.f32 %v1715, %v1885
      %v1962 = vadd.f32 %v1716, %v1890
      %v1963 = vadd.f32 %v1717, %v1893
      %v1964 = vadd.f32 %v1718, %v1898
      %v1965 = vadd.f32 %v1719, %v1901
      %v1966 = vadd.f32 %v1720, %v1906
      %v1967 = vadd.f32 %v1721, %v1909
      %v1968 = vadd.f32 %v1722, %v1914
      %v1969 = vadd.f32 %v1723, %v1917
      %v1970 = vadd.f32 %v1724, %v1922
      %v1971 = vadd.f32 %v1725, %v1925
      %v1972 = vadd.f32 %v1726, %v1930
      %v1973 = vadd.f32 %v1727, %v1933
      %v1974 = vadd.f32 %v1728, %v1938
      %v1975 = vadd.f32 %v1729, %v1941
      %1976 = vst [vmem:[%s177] sm:$0xff] %v1944
      %1977 = vst [vmem:[%s177 + $0x8] sm:$0xff] %v1945
      %1978 = vst [vmem:[%s177 + $0x10] sm:$0xff] %v1946
      %1979 = vst [vmem:[%s177 + $0x18] sm:$0xff] %v1947
      %1980 = vst [vmem:[%s177 + $0x20] sm:$0xff] %v1948
      %1981 = vst [vmem:[%s177 + $0x28] sm:$0xff] %v1949
      %1982 = vst [vmem:[%s177 + $0x30] sm:$0xff] %v1950
      %1983 = vst [vmem:[%s177 + $0x38] sm:$0xff] %v1951
      %1984 = vst [vmem:[%s177 + $0x40] sm:$0xff] %v1952
      %1985 = vst [vmem:[%s177 + $0x48] sm:$0xff] %v1953
      %1986 = vst [vmem:[%s177 + $0x50] sm:$0xff] %v1954
      %1987 = vst [vmem:[%s177 + $0x58] sm:$0xff] %v1955
      %1988 = vst [vmem:[%s177 + $0x60] sm:$0xff] %v1956
      %1989 = vst [vmem:[%s177 + $0x68] sm:$0xff] %v1957
      %1990 = vst [vmem:[%s177 + $0x70] sm:$0xff] %v1958
      %1991 = vst [vmem:[%s177 + $0x78] sm:$0xff] %v1959
      %1992 = vst [vmem:[%s177 + $0x80] sm:$0xff] %v1960
      %1993 = vst [vmem:[%s177 + $0x88] sm:$0xff] %v1961
      %1994 = vst [vmem:[%s177 + $0x90] sm:$0xff] %v1962
      %1995 = vst [vmem:[%s177 + $0x98] sm:$0xff] %v1963
      %1996 = vst [vmem:[%s177 + $0xa0] sm:$0xff] %v1964
      %1997 = vst [vmem:[%s177 + $0xa8] sm:$0xff] %v1965
      %1998 = vst [vmem:[%s177 + $0xb0] sm:$0xff] %v1966
      %1999 = vst [vmem:[%s177 + $0xb8] sm:$0xff] %v1967
      %2000 = vst [vmem:[%s177 + $0xc0] sm:$0xff] %v1968
      %2001 = vst [vmem:[%s177 + $0xc8] sm:$0xff] %v1969
      %2002 = vst [vmem:[%s177 + $0xd0] sm:$0xff] %v1970
      %2003 = vst [vmem:[%s177 + $0xd8] sm:$0xff] %v1971
      %2004 = vst [vmem:[%s177 + $0xe0] sm:$0xff] %v1972
      %2005 = vst [vmem:[%s177 + $0xe8] sm:$0xff] %v1973
      %2006 = vst [vmem:[%s177 + $0xf0] sm:$0xff] %v1974
      %2007 = vst [vmem:[%s177 + $0xf8] sm:$0xff] %v1975
      %v2008 = vld [vmem:[%s1291 + $0x2] sm:$0xff]
      %v2009 = vld [vmem:[%s1291 + $0xa] sm:$0xff]
      %v2010 = vld [vmem:[%s1291 + $0x1a] sm:$0xff]
      %v2011 = vld [vmem:[%s1291 + $0x22] sm:$0xff]
      %v2012 = vld [vmem:[%s1291 + $0x32] sm:$0xff]
      %v2013 = vld [vmem:[%s1291 + $0x3a] sm:$0xff]
      %v2014 = vld [vmem:[%s1291 + $0x4a] sm:$0xff]
      %v2015 = vld [vmem:[%s1291 + $0x52] sm:$0xff]
      %v2016 = vld [vmem:[%s1291 + $0x62] sm:$0xff]
      %v2017 = vld [vmem:[%s1291 + $0x6a] sm:$0xff]
      %v2018 = vld [vmem:[%s1291 + $0x7a] sm:$0xff]
      %v2019 = vld [vmem:[%s1291 + $0x82] sm:$0xff]
      %v2020 = vld [vmem:[%s1291 + $0x92] sm:$0xff]
      %v2021 = vld [vmem:[%s1291 + $0x9a] sm:$0xff]
      %v2022 = vld [vmem:[%s1291 + $0xaa] sm:$0xff]
      %v2023 = vld [vmem:[%s1291 + $0xb2] sm:$0xff]
      %v2024 = vld [vmem:[%s1291 + $0xc2] sm:$0xff]
      %v2025 = vld [vmem:[%s1291 + $0xca] sm:$0xff]
      %v2026 = vld [vmem:[%s1291 + $0xda] sm:$0xff]
      %v2027 = vld [vmem:[%s1291 + $0xe2] sm:$0xff]
      %v2028 = vld [vmem:[%s1291 + $0xf2] sm:$0xff]
      %v2029 = vld [vmem:[%s1291 + $0xfa] sm:$0xff]
      %v2030 = vld [vmem:[%s1291 + $0x10a] sm:$0xff]
      %v2031 = vld [vmem:[%s1291 + $0x112] sm:$0xff]
      %v2032 = vld [vmem:[%s1291 + $0x122] sm:$0xff]
      %v2033 = vld [vmem:[%s1291 + $0x12a] sm:$0xff]
      %v2034 = vld [vmem:[%s1291 + $0x13a] sm:$0xff]
      %v2035 = vld [vmem:[%s1291 + $0x142] sm:$0xff]
      %v2036 = vld [vmem:[%s1291 + $0x152] sm:$0xff]
      %v2037 = vld [vmem:[%s1291 + $0x15a] sm:$0xff]
      %v2038 = vld [vmem:[%s1291 + $0x16a] sm:$0xff]
      %v2039 = vld [vmem:[%s1291 + $0x172] sm:$0xff]
      %v2040 = vpack.c.bf16 %v2009, %v2008
      %v2041 = vpack.c.bf16 %v2011, %v2010
      %v2042 = vpack.c.bf16 %v2013, %v2012
      %v2043 = vpack.c.bf16 %v2015, %v2014
      %v2044 = vpack.c.bf16 %v2017, %v2016
      %v2045 = vpack.c.bf16 %v2019, %v2018
      %v2046 = vpack.c.bf16 %v2021, %v2020
      %v2047 = vpack.c.bf16 %v2023, %v2022
      %v2048 = vpack.c.bf16 %v2025, %v2024
      %v2049 = vpack.c.bf16 %v2027, %v2026
      %v2050 = vpack.c.bf16 %v2029, %v2028
      %v2051 = vpack.c.bf16 %v2031, %v2030
      %v2052 = vpack.c.bf16 %v2033, %v2032
      %v2053 = vpack.c.bf16 %v2035, %v2034
      %v2054 = vpack.c.bf16 %v2037, %v2036
      %v2055 = vpack.c.bf16 %v2039, %v2038
      %v2056 = vld [vmem:[%s177] sm:$0xff]
      %v2057 = vld [vmem:[%s177 + $0x8] sm:$0xff]
      %v2058 = vld [vmem:[%s177 + $0x10] sm:$0xff]
      %v2059 = vld [vmem:[%s177 + $0x18] sm:$0xff]
      %v2060 = vld [vmem:[%s177 + $0x20] sm:$0xff]
      %v2061 = vld [vmem:[%s177 + $0x28] sm:$0xff]
      %v2062 = vld [vmem:[%s177 + $0x30] sm:$0xff]
      %v2063 = vld [vmem:[%s177 + $0x38] sm:$0xff]
      %v2064 = vld [vmem:[%s177 + $0x40] sm:$0xff]
      %v2065 = vld [vmem:[%s177 + $0x48] sm:$0xff]
      %v2066 = vld [vmem:[%s177 + $0x50] sm:$0xff]
      %v2067 = vld [vmem:[%s177 + $0x58] sm:$0xff]
      %v2068 = vld [vmem:[%s177 + $0x60] sm:$0xff]
      %v2069 = vld [vmem:[%s177 + $0x68] sm:$0xff]
      %v2070 = vld [vmem:[%s177 + $0x70] sm:$0xff]
      %v2071 = vld [vmem:[%s177 + $0x78] sm:$0xff]
      %v2072 = vld [vmem:[%s177 + $0x80] sm:$0xff]
      %v2073 = vld [vmem:[%s177 + $0x88] sm:$0xff]
      %v2074 = vld [vmem:[%s177 + $0x90] sm:$0xff]
      %v2075 = vld [vmem:[%s177 + $0x98] sm:$0xff]
      %v2076 = vld [vmem:[%s177 + $0xa0] sm:$0xff]
      %v2077 = vld [vmem:[%s177 + $0xa8] sm:$0xff]
      %v2078 = vld [vmem:[%s177 + $0xb0] sm:$0xff]
      %v2079 = vld [vmem:[%s177 + $0xb8] sm:$0xff]
      %v2080 = vld [vmem:[%s177 + $0xc0] sm:$0xff]
      %v2081 = vld [vmem:[%s177 + $0xc8] sm:$0xff]
      %v2082 = vld [vmem:[%s177 + $0xd0] sm:$0xff]
      %v2083 = vld [vmem:[%s177 + $0xd8] sm:$0xff]
      %v2084 = vld [vmem:[%s177 + $0xe0] sm:$0xff]
      %v2085 = vld [vmem:[%s177 + $0xe8] sm:$0xff]
      %v2086 = vld [vmem:[%s177 + $0xf0] sm:$0xff]
      %v2087 = vld [vmem:[%s177 + $0xf8] sm:$0xff]
      %s2088 = scalar_lea.vmem %s1, 10
      %v2089 = vld [vmem:[%s2088] sm:$0x3]
      %v2091 = vsel %vm297, %v2040, 0
      %v2094 = vsel %vm297, %v2041, 0
      %v2097 = vsel %vm297, %v2042, 0
      %v2100 = vsel %vm297, %v2043, 0
      %v2103 = vsel %vm297, %v2044, 0
      %v2106 = vsel %vm297, %v2045, 0
      %v2109 = vsel %vm297, %v2046, 0
      %v2112 = vsel %vm297, %v2047, 0
      %v2115 = vsel %vm297, %v2048, 0
      %v2118 = vsel %vm297, %v2049, 0
      %v2121 = vsel %vm297, %v2050, 0
      %v2124 = vsel %vm297, %v2051, 0
      %v2127 = vsel %vm297, %v2052, 0
      %v2130 = vsel %vm297, %v2053, 0
      %v2133 = vsel %vm297, %v2054, 0
      %v2136 = vsel %vm297, %v2055, 0
      %v2139 = vsel %vm346, %v2089, 0
      %2141 = vmatprep.subr.bf16.mxu0 0
      %2142 = vmatpush1.bf16.msra.mxu0 %v2139
      %2143 = vmatprep.subr.bf16.mxu0 0
      %2144 = vmatpush1.bf16.msra.mxu0 0
      %2145 = vmatprep.subr.bf16.mxu0 0
      %2146 = vmatpush1.bf16.msra.mxu0 0
      %2147 = vmatprep.subr.bf16.mxu0 0
      %2148 = vmatpush1.bf16.msra.mxu0 0
      %2149 = vmatprep.subr.bf16.mxu0 0
      %2150 = vmatpush1.bf16.msra.mxu0 0
      %2151 = vmatprep.subr.bf16.mxu0 0
      %2152 = vmatpush1.bf16.msra.mxu0 0
      %2153 = vmatprep.subr.bf16.mxu0 0
      %2154 = vmatpush1.bf16.msra.mxu0 0
      %2155 = vmatprep.subr.bf16.mxu0 0
      %2156 = vmatpush1.bf16.msra.mxu0 0
      %2157 = vmatprep.subr.bf16.mxu0 0
      %2158 = vmatpush1.bf16.msra.mxu0 0
      %2159 = vmatprep.subr.bf16.mxu0 0
      %2160 = vmatpush1.bf16.msra.mxu0 0
      %2161 = vmatprep.subr.bf16.mxu0 0
      %2162 = vmatpush1.bf16.msra.mxu0 0
      %2163 = vmatprep.subr.bf16.mxu0 0
      %2164 = vmatpush1.bf16.msra.mxu0 0
      %2165 = vmatprep.subr.bf16.mxu0 0
      %2166 = vmatpush1.bf16.msra.mxu0 0
      %2167 = vmatprep.subr.bf16.mxu0 0
      %2168 = vmatpush1.bf16.msra.mxu0 0
      %2169 = vmatprep.subr.bf16.mxu0 0
      %2170 = vmatpush1.bf16.msra.mxu0 0
      %2171 = vmatprep.subr.bf16.mxu0 0
      %2172 = vmatpush1.bf16.msra.mxu0 0
      %2173 = vmatprep.mubr.bf16.mxu0 0
      %2174 = vmatmul.mubr.bf16.gmra.mrb[0].mxu0 %v2091
      %v2175 = vpop.f32.mrb[0].mxu0
      %v2176 = vadd.f32 0.0, %v2175
      %v2177 = vpop.f32.mrb[0].mxu0
      %v2178 = vpop.f32.mrb[0].mxu0
      %v2179 = vadd.f32 0.0, %v2178
      %v2180 = vpop.f32.mrb[0].mxu0
      %2181 = vmatprep.mubr.bf16.mxu0 0
      %2182 = vmatmul.mubr.bf16.gmra.mrb[0].mxu0 %v2094
      %v2183 = vpop.f32.mrb[0].mxu0
      %v2184 = vadd.f32 0.0, %v2183
      %v2185 = vpop.f32.mrb[0].mxu0
      %v2186 = vpop.f32.mrb[0].mxu0
      %v2187 = vadd.f32 0.0, %v2186
      %v2188 = vpop.f32.mrb[0].mxu0
      %2189 = vmatprep.mubr.bf16.mxu0 0
      %2190 = vmatmul.mubr.bf16.gmra.mrb[0].mxu0 %v2097
      %v2191 = vpop.f32.mrb[0].mxu0
      %v2192 = vadd.f32 0.0, %v2191
      %v2193 = vpop.f32.mrb[0].mxu0
      %v2194 = vpop.f32.mrb[0].mxu0
      %v2195 = vadd.f32 0.0, %v2194
      %v2196 = vpop.f32.mrb[0].mxu0
      %2197 = vmatprep.mubr.bf16.mxu0 0
      %2198 = vmatmul.mubr.bf16.gmra.mrb[0].mxu0 %v2100
      %v2199 = vpop.f32.mrb[0].mxu0
      %v2200 = vadd.f32 0.0, %v2199
      %v2201 = vpop.f32.mrb[0].mxu0
      %v2202 = vpop.f32.mrb[0].mxu0
      %v2203 = vadd.f32 0.0, %v2202
      %v2204 = vpop.f32.mrb[0].mxu0
      %2205 = vmatprep.mubr.bf16.mxu0 0
      %2206 = vmatmul.mubr.bf16.gmra.mrb[0].mxu0 %v2103
      %v2207 = vpop.f32.mrb[0].mxu0
      %v2208 = vadd.f32 0.0, %v2207
      %v2209 = vpop.f32.mrb[0].mxu0
      %v2210 = vpop.f32.mrb[0].mxu0
      %v2211 = vadd.f32 0.0, %v2210
      %v2212 = vpop.f32.mrb[0].mxu0
      %2213 = vmatprep.mubr.bf16.mxu0 0
      %2214 = vmatmul.mubr.bf16.gmra.mrb[0].mxu0 %v2106
      %v2215 = vpop.f32.mrb[0].mxu0
      %v2216 = vadd.f32 0.0, %v2215
      %v2217 = vpop.f32.mrb[0].mxu0
      %v2218 = vpop.f32.mrb[0].mxu0
      %v2219 = vadd.f32 0.0, %v2218
      %v2220 = vpop.f32.mrb[0].mxu0
      %2221 = vmatprep.mubr.bf16.mxu0 0
      %2222 = vmatmul.mubr.bf16.gmra.mrb[0].mxu0 %v2109
      %v2223 = vpop.f32.mrb[0].mxu0
      %v2224 = vadd.f32 0.0, %v2223
      %v2225 = vpop.f32.mrb[0].mxu0
      %v2226 = vpop.f32.mrb[0].mxu0
      %v2227 = vadd.f32 0.0, %v2226
      %v2228 = vpop.f32.mrb[0].mxu0
      %2229 = vmatprep.mubr.bf16.mxu0 0
      %2230 = vmatmul.mubr.bf16.gmra.mrb[0].mxu0 %v2112
      %v2231 = vpop.f32.mrb[0].mxu0
      %v2232 = vadd.f32 0.0, %v2231
      %v2233 = vpop.f32.mrb[0].mxu0
      %v2234 = vpop.f32.mrb[0].mxu0
      %v2235 = vadd.f32 0.0, %v2234
      %v2236 = vpop.f32.mrb[0].mxu0
      %2237 = vmatprep.mubr.bf16.mxu0 0
      %2238 = vmatmul.mubr.bf16.gmra.mrb[0].mxu0 %v2115
      %v2239 = vpop.f32.mrb[0].mxu0
      %v2240 = vadd.f32 0.0, %v2239
      %v2241 = vpop.f32.mrb[0].mxu0
      %v2242 = vpop.f32.mrb[0].mxu0
      %v2243 = vadd.f32 0.0, %v2242
      %v2244 = vpop.f32.mrb[0].mxu0
      %2245 = vmatprep.mubr.bf16.mxu0 0
      %2246 = vmatmul.mubr.bf16.gmra.mrb[0].mxu0 %v2118
      %v2247 = vpop.f32.mrb[0].mxu0
      %v2248 = vadd.f32 0.0, %v2247
      %v2249 = vpop.f32.mrb[0].mxu0
      %v2250 = vpop.f32.mrb[0].mxu0
      %v2251 = vadd.f32 0.0, %v2250
      %v2252 = vpop.f32.mrb[0].mxu0
      %2253 = vmatprep.mubr.bf16.mxu0 0
      %2254 = vmatmul.mubr.bf16.gmra.mrb[0].mxu0 %v2121
      %v2255 = vpop.f32.mrb[0].mxu0
      %v2256 = vadd.f32 0.0, %v2255
      %v2257 = vpop.f32.mrb[0].mxu0
      %v2258 = vpop.f32.mrb[0].mxu0
      %v2259 = vadd.f32 0.0, %v2258
      %v2260 = vpop.f32.mrb[0].mxu0
      %2261 = vmatprep.mubr.bf16.mxu0 0
      %2262 = vmatmul.mubr.bf16.gmra.mrb[0].mxu0 %v2124
      %v2263 = vpop.f32.mrb[0].mxu0
      %v2264 = vadd.f32 0.0, %v2263
      %v2265 = vpop.f32.mrb[0].mxu0
      %v2266 = vpop.f32.mrb[0].mxu0
      %v2267 = vadd.f32 0.0, %v2266
      %v2268 = vpop.f32.mrb[0].mxu0
      %2269 = vmatprep.mubr.bf16.mxu0 0
      %2270 = vmatmul.mubr.bf16.gmra.mrb[0].mxu0 %v2127
      %v2271 = vpop.f32.mrb[0].mxu0
      %v2272 = vadd.f32 0.0, %v2271
      %v2273 = vpop.f32.mrb[0].mxu0
      %v2274 = vpop.f32.mrb[0].mxu0
      %v2275 = vadd.f32 0.0, %v2274
      %v2276 = vpop.f32.mrb[0].mxu0
      %2277 = vmatprep.mubr.bf16.mxu0 0
      %2278 = vmatmul.mubr.bf16.gmra.mrb[0].mxu0 %v2130
      %v2279 = vpop.f32.mrb[0].mxu0
      %v2280 = vadd.f32 0.0, %v2279
      %v2281 = vpop.f32.mrb[0].mxu0
      %v2282 = vpop.f32.mrb[0].mxu0
      %v2283 = vadd.f32 0.0, %v2282
      %v2284 = vpop.f32.mrb[0].mxu0
      %2285 = vmatprep.mubr.bf16.mxu0 0
      %2286 = vmatmul.mubr.bf16.gmra.mrb[0].mxu0 %v2133
      %v2287 = vpop.f32.mrb[0].mxu0
      %v2288 = vadd.f32 0.0, %v2287
      %v2289 = vpop.f32.mrb[0].mxu0
      %v2290 = vpop.f32.mrb[0].mxu0
      %v2291 = vadd.f32 0.0, %v2290
      %v2292 = vpop.f32.mrb[0].mxu0
      %2293 = vmatprep.mubr.bf16.mxu0 0
      %2294 = vmatmul.mubr.bf16.gmra.mrb[0].mxu0 %v2136
      %v2295 = vpop.f32.mrb[0].mxu0
      %v2296 = vadd.f32 0.0, %v2295
      %v2297 = vpop.f32.mrb[0].mxu0
      %v2298 = vpop.f32.mrb[0].mxu0
      %v2299 = vadd.f32 0.0, %v2298
      %v2300 = vpop.f32.mrb[0].mxu0
      %2301 = vdwg.mxu0
      %v2302 = vadd.f32 %v2056, %v2176
      %v2303 = vadd.f32 %v2057, %v2179
      %v2304 = vadd.f32 %v2058, %v2184
      %v2305 = vadd.f32 %v2059, %v2187
      %v2306 = vadd.f32 %v2060, %v2192
      %v2307 = vadd.f32 %v2061, %v2195
      %v2308 = vadd.f32 %v2062, %v2200
      %v2309 = vadd.f32 %v2063, %v2203
      %v2310 = vadd.f32 %v2064, %v2208
      %v2311 = vadd.f32 %v2065, %v2211
      %v2312 = vadd.f32 %v2066, %v2216
      %v2313 = vadd.f32 %v2067, %v2219
      %v2314 = vadd.f32 %v2068, %v2224
      %v2315 = vadd.f32 %v2069, %v2227
      %v2316 = vadd.f32 %v2070, %v2232
      %v2317 = vadd.f32 %v2071, %v2235
      %v2318 = vadd.f32 %v2072, %v2240
      %v2319 = vadd.f32 %v2073, %v2243
      %v2320 = vadd.f32 %v2074, %v2248
      %v2321 = vadd.f32 %v2075, %v2251
      %v2322 = vadd.f32 %v2076, %v2256
      %v2323 = vadd.f32 %v2077, %v2259
      %v2324 = vadd.f32 %v2078, %v2264
      %v2325 = vadd.f32 %v2079, %v2267
      %v2326 = vadd.f32 %v2080, %v2272
      %v2327 = vadd.f32 %v2081, %v2275
      %v2328 = vadd.f32 %v2082, %v2280
      %v2329 = vadd.f32 %v2083, %v2283
      %v2330 = vadd.f32 %v2084, %v2288
      %v2331 = vadd.f32 %v2085, %v2291
      %v2332 = vadd.f32 %v2086, %v2296
      %v2333 = vadd.f32 %v2087, %v2299
      %2334 = vst [vmem:[%s177] sm:$0xff] %v2302
      %2335 = vst [vmem:[%s177 + $0x8] sm:$0xff] %v2303
      %2336 = vst [vmem:[%s177 + $0x10] sm:$0xff] %v2304
      %2337 = vst [vmem:[%s177 + $0x18] sm:$0xff] %v2305
      %2338 = vst [vmem:[%s177 + $0x20] sm:$0xff] %v2306
      %2339 = vst [vmem:[%s177 + $0x28] sm:$0xff] %v2307
      %2340 = vst [vmem:[%s177 + $0x30] sm:$0xff] %v2308
      %2341 = vst [vmem:[%s177 + $0x38] sm:$0xff] %v2309
      %2342 = vst [vmem:[%s177 + $0x40] sm:$0xff] %v2310
      %2343 = vst [vmem:[%s177 + $0x48] sm:$0xff] %v2311
      %2344 = vst [vmem:[%s177 + $0x50] sm:$0xff] %v2312
      %2345 = vst [vmem:[%s177 + $0x58] sm:$0xff] %v2313
      %2346 = vst [vmem:[%s177 + $0x60] sm:$0xff] %v2314
      %2347 = vst [vmem:[%s177 + $0x68] sm:$0xff] %v2315
      %2348 = vst [vmem:[%s177 + $0x70] sm:$0xff] %v2316
      %2349 = vst [vmem:[%s177 + $0x78] sm:$0xff] %v2317
      %2350 = vst [vmem:[%s177 + $0x80] sm:$0xff] %v2318
      %2351 = vst [vmem:[%s177 + $0x88] sm:$0xff] %v2319
      %2352 = vst [vmem:[%s177 + $0x90] sm:$0xff] %v2320
      %2353 = vst [vmem:[%s177 + $0x98] sm:$0xff] %v2321
      %2354 = vst [vmem:[%s177 + $0xa0] sm:$0xff] %v2322
      %2355 = vst [vmem:[%s177 + $0xa8] sm:$0xff] %v2323
      %2356 = vst [vmem:[%s177 + $0xb0] sm:$0xff] %v2324
      %2357 = vst [vmem:[%s177 + $0xb8] sm:$0xff] %v2325
      %2358 = vst [vmem:[%s177 + $0xc0] sm:$0xff] %v2326
      %2359 = vst [vmem:[%s177 + $0xc8] sm:$0xff] %v2327
      %2360 = vst [vmem:[%s177 + $0xd0] sm:$0xff] %v2328
      %2361 = vst [vmem:[%s177 + $0xd8] sm:$0xff] %v2329
      %2362 = vst [vmem:[%s177 + $0xe0] sm:$0xff] %v2330
      %2363 = vst [vmem:[%s177 + $0xe8] sm:$0xff] %v2331
      %2364 = vst [vmem:[%s177 + $0xf0] sm:$0xff] %v2332
      %2365 = vst [vmem:[%s177 + $0xf8] sm:$0xff] %v2333
      %s2366 = scalar_lea.vmem %s172, 48
      %v2367 = vld [vmem:[%s2366] sm:$0xff]
      %v2368 = vld [vmem:[%s2366 + $0x8] sm:$0xff]
      %v2369 = vld [vmem:[%s2366 + $0x18] sm:$0xff]
      %v2370 = vld [vmem:[%s2366 + $0x20] sm:$0xff]
      %v2371 = vld [vmem:[%s2366 + $0x30] sm:$0xff]
      %v2372 = vld [vmem:[%s2366 + $0x38] sm:$0xff]
      %v2373 = vld [vmem:[%s2366 + $0x48] sm:$0xff]
      %v2374 = vld [vmem:[%s2366 + $0x50] sm:$0xff]
      %v2375 = vld [vmem:[%s2366 + $0x60] sm:$0xff]
      %v2376 = vld [vmem:[%s2366 + $0x68] sm:$0xff]
      %v2377 = vld [vmem:[%s2366 + $0x78] sm:$0xff]
      %v2378 = vld [vmem:[%s2366 + $0x80] sm:$0xff]
      %v2379 = vld [vmem:[%s2366 + $0x90] sm:$0xff]
      %v2380 = vld [vmem:[%s2366 + $0x98] sm:$0xff]
      %v2381 = vld [vmem:[%s2366 + $0xa8] sm:$0xff]
      %v2382 = vld [vmem:[%s2366 + $0xb0] sm:$0xff]
      %v2383 = vld [vmem:[%s2366 + $0xc0] sm:$0xff]
      %v2384 = vld [vmem:[%s2366 + $0xc8] sm:$0xff]
      %v2385 = vld [vmem:[%s2366 + $0xd8] sm:$0xff]
      %v2386 = vld [vmem:[%s2366 + $0xe0] sm:$0xff]
      %v2387 = vld [vmem:[%s2366 + $0xf0] sm:$0xff]
      %v2388 = vld [vmem:[%s2366 + $0xf8] sm:$0xff]
      %v2389 = vld [vmem:[%s2366 + $0x108] sm:$0xff]
      %v2390 = vld [vmem:[%s2366 + $0x110] sm:$0xff]
      %v2391 = vld [vmem:[%s2366 + $0x120] sm:$0xff]
      %v2392 = vld [vmem:[%s2366 + $0x128] sm:$0xff]
      %v2393 = vld [vmem:[%s2366 + $0x138] sm:$0xff]
      %v2394 = vld [vmem:[%s2366 + $0x140] sm:$0xff]
      %v2395 = vld [vmem:[%s2366 + $0x150] sm:$0xff]
      %v2396 = vld [vmem:[%s2366 + $0x158] sm:$0xff]
      %v2397 = vld [vmem:[%s2366 + $0x168] sm:$0xff]
      %v2398 = vld [vmem:[%s2366 + $0x170] sm:$0xff]
      %v2399 = vpack.c.bf16 %v2368, %v2367
      %v2400 = vpack.c.bf16 %v2370, %v2369
      %v2401 = vpack.c.bf16 %v2372, %v2371
      %v2402 = vpack.c.bf16 %v2374, %v2373
      %v2403 = vpack.c.bf16 %v2376, %v2375
      %v2404 = vpack.c.bf16 %v2378, %v2377
      %v2405 = vpack.c.bf16 %v2380, %v2379
      %v2406 = vpack.c.bf16 %v2382, %v2381
      %v2407 = vpack.c.bf16 %v2384, %v2383
      %v2408 = vpack.c.bf16 %v2386, %v2385
      %v2409 = vpack.c.bf16 %v2388, %v2387
      %v2410 = vpack.c.bf16 %v2390, %v2389
      %v2411 = vpack.c.bf16 %v2392, %v2391
      %v2412 = vpack.c.bf16 %v2394, %v2393
      %v2413 = vpack.c.bf16 %v2396, %v2395
      %v2414 = vpack.c.bf16 %v2398, %v2397
      %v2415 = vld [vmem:[%s177] sm:$0xff]
      %v2416 = vld [vmem:[%s177 + $0x8] sm:$0xff]
      %v2417 = vld [vmem:[%s177 + $0x10] sm:$0xff]
      %v2418 = vld [vmem:[%s177 + $0x18] sm:$0xff]
      %v2419 = vld [vmem:[%s177 + $0x20] sm:$0xff]
      %v2420 = vld [vmem:[%s177 + $0x28] sm:$0xff]
      %v2421 = vld [vmem:[%s177 + $0x30] sm:$0xff]
      %v2422 = vld [vmem:[%s177 + $0x38] sm:$0xff]
      %v2423 = vld [vmem:[%s177 + $0x40] sm:$0xff]
      %v2424 = vld [vmem:[%s177 + $0x48] sm:$0xff]
      %v2425 = vld [vmem:[%s177 + $0x50] sm:$0xff]
      %v2426 = vld [vmem:[%s177 + $0x58] sm:$0xff]
      %v2427 = vld [vmem:[%s177 + $0x60] sm:$0xff]
      %v2428 = vld [vmem:[%s177 + $0x68] sm:$0xff]
      %v2429 = vld [vmem:[%s177 + $0x70] sm:$0xff]
      %v2430 = vld [vmem:[%s177 + $0x78] sm:$0xff]
      %v2431 = vld [vmem:[%s177 + $0x80] sm:$0xff]
      %v2432 = vld [vmem:[%s177 + $0x88] sm:$0xff]
      %v2433 = vld [vmem:[%s177 + $0x90] sm:$0xff]
      %v2434 = vld [vmem:[%s177 + $0x98] sm:$0xff]
      %v2435 = vld [vmem:[%s177 + $0xa0] sm:$0xff]
      %v2436 = vld [vmem:[%s177 + $0xa8] sm:$0xff]
      %v2437 = vld [vmem:[%s177 + $0xb0] sm:$0xff]
      %v2438 = vld [vmem:[%s177 + $0xb8] sm:$0xff]
      %v2439 = vld [vmem:[%s177 + $0xc0] sm:$0xff]
      %v2440 = vld [vmem:[%s177 + $0xc8] sm:$0xff]
      %v2441 = vld [vmem:[%s177 + $0xd0] sm:$0xff]
      %v2442 = vld [vmem:[%s177 + $0xd8] sm:$0xff]
      %v2443 = vld [vmem:[%s177 + $0xe0] sm:$0xff]
      %v2444 = vld [vmem:[%s177 + $0xe8] sm:$0xff]
      %v2445 = vld [vmem:[%s177 + $0xf0] sm:$0xff]
      %v2446 = vld [vmem:[%s177 + $0xf8] sm:$0xff]
      %s2447 = scalar_lea.vmem %s1, 12
      %v2448 = vld [vmem:[%s2447] sm:$0x3]
      %v2450 = vsel %vm297, %v2399, 0
      %v2453 = vsel %vm297, %v2400, 0
      %v2456 = vsel %vm297, %v2401, 0
      %v2459 = vsel %vm297, %v2402, 0
      %v2462 = vsel %vm297, %v2403, 0
      %v2465 = vsel %vm297, %v2404, 0
      %v2468 = vsel %vm297, %v2405, 0
      %v2471 = vsel %vm297, %v2406, 0
      %v2474 = vsel %vm297, %v2407, 0
      %v2477 = vsel %vm297, %v2408, 0
      %v2480 = vsel %vm297, %v2409, 0
      %v2483 = vsel %vm297, %v2410, 0
      %v2486 = vsel %vm297, %v2411, 0
      %v2489 = vsel %vm297, %v2412, 0
      %v2492 = vsel %vm297, %v2413, 0
      %v2495 = vsel %vm297, %v2414, 0
      %v2498 = vsel %vm346, %v2448, 0
      %2500 = vmatprep.subr.bf16.mxu0 0
      %2501 = vmatpush1.bf16.msra.mxu0 %v2498
      %2502 = vmatprep.subr.bf16.mxu0 0
      %2503 = vmatpush1.bf16.msra.mxu0 0
      %2504 = vmatprep.subr.bf16.mxu0 0
      %2505 = vmatpush1.bf16.msra.mxu0 0
      %2506 = vmatprep.subr.bf16.mxu0 0
      %2507 = vmatpush1.bf16.msra.mxu0 0
      %2508 = vmatprep.subr.bf16.mxu0 0
      %2509 = vmatpush1.bf16.msra.mxu0 0
      %2510 = vmatprep.subr.bf16.mxu0 0
      %2511 = vmatpush1.bf16.msra.mxu0 0
      %2512 = vmatprep.subr.bf16.mxu0 0
      %2513 = vmatpush1.bf16.msra.mxu0 0
      %2514 = vmatprep.subr.bf16.mxu0 0
      %2515 = vmatpush1.bf16.msra.mxu0 0
      %2516 = vmatprep.subr.bf16.mxu0 0
      %2517 = vmatpush1.bf16.msra.mxu0 0
      %2518 = vmatprep.subr.bf16.mxu0 0
      %2519 = vmatpush1.bf16.msra.mxu0 0
      %2520 = vmatprep.subr.bf16.mxu0 0
      %2521 = vmatpush1.bf16.msra.mxu0 0
      %2522 = vmatprep.subr.bf16.mxu0 0
      %2523 = vmatpush1.bf16.msra.mxu0 0
      %2524 = vmatprep.subr.bf16.mxu0 0
      %2525 = vmatpush1.bf16.msra.mxu0 0
      %2526 = vmatprep.subr.bf16.mxu0 0
      %2527 = vmatpush1.bf16.msra.mxu0 0
      %2528 = vmatprep.subr.bf16.mxu0 0
      %2529 = vmatpush1.bf16.msra.mxu0 0
      %2530 = vmatprep.subr.bf16.mxu0 0
      %2531 = vmatpush1.bf16.msra.mxu0 0
      %2532 = vmatprep.mubr.bf16.mxu0 0
      %2533 = vmatmul.mubr.bf16.gmra.mrb[0].mxu0 %v2450
      %v2534 = vpop.f32.mrb[0].mxu0
      %v2535 = vadd.f32 0.0, %v2534
      %v2536 = vpop.f32.mrb[0].mxu0
      %v2537 = vpop.f32.mrb[0].mxu0
      %v2538 = vadd.f32 0.0, %v2537
      %v2539 = vpop.f32.mrb[0].mxu0
      %2540 = vmatprep.mubr.bf16.mxu0 0
      %2541 = vmatmul.mubr.bf16.gmra.mrb[0].mxu0 %v2453
      %v2542 = vpop.f32.mrb[0].mxu0
      %v2543 = vadd.f32 0.0, %v2542
      %v2544 = vpop.f32.mrb[0].mxu0
      %v2545 = vpop.f32.mrb[0].mxu0
      %v2546 = vadd.f32 0.0, %v2545
      %v2547 = vpop.f32.mrb[0].mxu0
      %2548 = vmatprep.mubr.bf16.mxu0 0
      %2549 = vmatmul.mubr.bf16.gmra.mrb[0].mxu0 %v2456
      %v2550 = vpop.f32.mrb[0].mxu0
      %v2551 = vadd.f32 0.0, %v2550
      %v2552 = vpop.f32.mrb[0].mxu0
      %v2553 = vpop.f32.mrb[0].mxu0
      %v2554 = vadd.f32 0.0, %v2553
      %v2555 = vpop.f32.mrb[0].mxu0
      %2556 = vmatprep.mubr.bf16.mxu0 0
      %2557 = vmatmul.mubr.bf16.gmra.mrb[0].mxu0 %v2459
      %v2558 = vpop.f32.mrb[0].mxu0
      %v2559 = vadd.f32 0.0, %v2558
      %v2560 = vpop.f32.mrb[0].mxu0
      %v2561 = vpop.f32.mrb[0].mxu0
      %v2562 = vadd.f32 0.0, %v2561
      %v2563 = vpop.f32.mrb[0].mxu0
      %2564 = vmatprep.mubr.bf16.mxu0 0
      %2565 = vmatmul.mubr.bf16.gmra.mrb[0].mxu0 %v2462
      %v2566 = vpop.f32.mrb[0].mxu0
      %v2567 = vadd.f32 0.0, %v2566
      %v2568 = vpop.f32.mrb[0].mxu0
      %v2569 = vpop.f32.mrb[0].mxu0
      %v2570 = vadd.f32 0.0, %v2569
      %v2571 = vpop.f32.mrb[0].mxu0
      %2572 = vmatprep.mubr.bf16.mxu0 0
      %2573 = vmatmul.mubr.bf16.gmra.mrb[0].mxu0 %v2465
      %v2574 = vpop.f32.mrb[0].mxu0
      %v2575 = vadd.f32 0.0, %v2574
      %v2576 = vpop.f32.mrb[0].mxu0
      %v2577 = vpop.f32.mrb[0].mxu0
      %v2578 = vadd.f32 0.0, %v2577
      %v2579 = vpop.f32.mrb[0].mxu0
      %2580 = vmatprep.mubr.bf16.mxu0 0
      %2581 = vmatmul.mubr.bf16.gmra.mrb[0].mxu0 %v2468
      %v2582 = vpop.f32.mrb[0].mxu0
      %v2583 = vadd.f32 0.0, %v2582
      %v2584 = vpop.f32.mrb[0].mxu0
      %v2585 = vpop.f32.mrb[0].mxu0
      %v2586 = vadd.f32 0.0, %v2585
      %v2587 = vpop.f32.mrb[0].mxu0
      %2588 = vmatprep.mubr.bf16.mxu0 0
      %2589 = vmatmul.mubr.bf16.gmra.mrb[0].mxu0 %v2471
      %v2590 = vpop.f32.mrb[0].mxu0
      %v2591 = vadd.f32 0.0, %v2590
      %v2592 = vpop.f32.mrb[0].mxu0
      %v2593 = vpop.f32.mrb[0].mxu0
      %v2594 = vadd.f32 0.0, %v2593
      %v2595 = vpop.f32.mrb[0].mxu0
      %2596 = vmatprep.mubr.bf16.mxu0 0
      %2597 = vmatmul.mubr.bf16.gmra.mrb[0].mxu0 %v2474
      %v2598 = vpop.f32.mrb[0].mxu0
      %v2599 = vadd.f32 0.0, %v2598
      %v2600 = vpop.f32.mrb[0].mxu0
      %v2601 = vpop.f32.mrb[0].mxu0
      %v2602 = vadd.f32 0.0, %v2601
      %v2603 = vpop.f32.mrb[0].mxu0
      %2604 = vmatprep.mubr.bf16.mxu0 0
      %2605 = vmatmul.mubr.bf16.gmra.mrb[0].mxu0 %v2477
      %v2606 = vpop.f32.mrb[0].mxu0
      %v2607 = vadd.f32 0.0, %v2606
      %v2608 = vpop.f32.mrb[0].mxu0
      %v2609 = vpop.f32.mrb[0].mxu0
      %v2610 = vadd.f32 0.0, %v2609
      %v2611 = vpop.f32.mrb[0].mxu0
      %2612 = vmatprep.mubr.bf16.mxu0 0
      %2613 = vmatmul.mubr.bf16.gmra.mrb[0].mxu0 %v2480
      %v2614 = vpop.f32.mrb[0].mxu0
      %v2615 = vadd.f32 0.0, %v2614
      %v2616 = vpop.f32.mrb[0].mxu0
      %v2617 = vpop.f32.mrb[0].mxu0
      %v2618 = vadd.f32 0.0, %v2617
      %v2619 = vpop.f32.mrb[0].mxu0
      %2620 = vmatprep.mubr.bf16.mxu0 0
      %2621 = vmatmul.mubr.bf16.gmra.mrb[0].mxu0 %v2483
      %v2622 = vpop.f32.mrb[0].mxu0
      %v2623 = vadd.f32 0.0, %v2622
      %v2624 = vpop.f32.mrb[0].mxu0
      %v2625 = vpop.f32.mrb[0].mxu0
      %v2626 = vadd.f32 0.0, %v2625
      %v2627 = vpop.f32.mrb[0].mxu0
      %2628 = vmatprep.mubr.bf16.mxu0 0
      %2629 = vmatmul.mubr.bf16.gmra.mrb[0].mxu0 %v2486
      %v2630 = vpop.f32.mrb[0].mxu0
      %v2631 = vadd.f32 0.0, %v2630
      %v2632 = vpop.f32.mrb[0].mxu0
      %v2633 = vpop.f32.mrb[0].mxu0
      %v2634 = vadd.f32 0.0, %v2633
      %v2635 = vpop.f32.mrb[0].mxu0
      %2636 = vmatprep.mubr.bf16.mxu0 0
      %2637 = vmatmul.mubr.bf16.gmra.mrb[0].mxu0 %v2489
      %v2638 = vpop.f32.mrb[0].mxu0
      %v2639 = vadd.f32 0.0, %v2638
      %v2640 = vpop.f32.mrb[0].mxu0
      %v2641 = vpop.f32.mrb[0].mxu0
      %v2642 = vadd.f32 0.0, %v2641
      %v2643 = vpop.f32.mrb[0].mxu0
      %2644 = vmatprep.mubr.bf16.mxu0 0
      %2645 = vmatmul.mubr.bf16.gmra.mrb[0].mxu0 %v2492
      %v2646 = vpop.f32.mrb[0].mxu0
      %v2647 = vadd.f32 0.0, %v2646
      %v2648 = vpop.f32.mrb[0].mxu0
      %v2649 = vpop.f32.mrb[0].mxu0
      %v2650 = vadd.f32 0.0, %v2649
      %v2651 = vpop.f32.mrb[0].mxu0
      %2652 = vmatprep.mubr.bf16.mxu0 0
      %2653 = vmatmul.mubr.bf16.gmra.mrb[0].mxu0 %v2495
      %v2654 = vpop.f32.mrb[0].mxu0
      %v2655 = vadd.f32 0.0, %v2654
      %v2656 = vpop.f32.mrb[0].mxu0
      %v2657 = vpop.f32.mrb[0].mxu0
      %v2658 = vadd.f32 0.0, %v2657
      %v2659 = vpop.f32.mrb[0].mxu0
      %2660 = vdwg.mxu0
      %v2661 = vadd.f32 %v2415, %v2535
      %v2662 = vadd.f32 %v2416, %v2538
      %v2663 = vadd.f32 %v2417, %v2543
      %v2664 = vadd.f32 %v2418, %v2546
      %v2665 = vadd.f32 %v2419, %v2551
      %v2666 = vadd.f32 %v2420, %v2554
      %v2667 = vadd.f32 %v2421, %v2559
      %v2668 = vadd.f32 %v2422, %v2562
      %v2669 = vadd.f32 %v2423, %v2567
      %v2670 = vadd.f32 %v2424, %v2570
      %v2671 = vadd.f32 %v2425, %v2575
      %v2672 = vadd.f32 %v2426, %v2578
      %v2673 = vadd.f32 %v2427, %v2583
      %v2674 = vadd.f32 %v2428, %v2586
      %v2675 = vadd.f32 %v2429, %v2591
      %v2676 = vadd.f32 %v2430, %v2594
      %v2677 = vadd.f32 %v2431, %v2599
      %v2678 = vadd.f32 %v2432, %v2602
      %v2679 = vadd.f32 %v2433, %v2607
      %v2680 = vadd.f32 %v2434, %v2610
      %v2681 = vadd.f32 %v2435, %v2615
      %v2682 = vadd.f32 %v2436, %v2618
      %v2683 = vadd.f32 %v2437, %v2623
      %v2684 = vadd.f32 %v2438, %v2626
      %v2685 = vadd.f32 %v2439, %v2631
      %v2686 = vadd.f32 %v2440, %v2634
      %v2687 = vadd.f32 %v2441, %v2639
      %v2688 = vadd.f32 %v2442, %v2642
      %v2689 = vadd.f32 %v2443, %v2647
      %v2690 = vadd.f32 %v2444, %v2650
      %v2691 = vadd.f32 %v2445, %v2655
      %v2692 = vadd.f32 %v2446, %v2658
      %2693 = vst [vmem:[%s177] sm:$0xff] %v2661
      %2694 = vst [vmem:[%s177 + $0x8] sm:$0xff] %v2662
      %2695 = vst [vmem:[%s177 + $0x10] sm:$0xff] %v2663
      %2696 = vst [vmem:[%s177 + $0x18] sm:$0xff] %v2664
      %2697 = vst [vmem:[%s177 + $0x20] sm:$0xff] %v2665
      %2698 = vst [vmem:[%s177 + $0x28] sm:$0xff] %v2666
      %2699 = vst [vmem:[%s177 + $0x30] sm:$0xff] %v2667
      %2700 = vst [vmem:[%s177 + $0x38] sm:$0xff] %v2668
      %2701 = vst [vmem:[%s177 + $0x40] sm:$0xff] %v2669
      %2702 = vst [vmem:[%s177 + $0x48] sm:$0xff] %v2670
      %2703 = vst [vmem:[%s177 + $0x50] sm:$0xff] %v2671
      %2704 = vst [vmem:[%s177 + $0x58] sm:$0xff] %v2672
      %2705 = vst [vmem:[%s177 + $0x60] sm:$0xff] %v2673
      %2706 = vst [vmem:[%s177 + $0x68] sm:$0xff] %v2674
      %2707 = vst [vmem:[%s177 + $0x70] sm:$0xff] %v2675
      %2708 = vst [vmem:[%s177 + $0x78] sm:$0xff] %v2676
      %2709 = vst [vmem:[%s177 + $0x80] sm:$0xff] %v2677
      %2710 = vst [vmem:[%s177 + $0x88] sm:$0xff] %v2678
      %2711 = vst [vmem:[%s177 + $0x90] sm:$0xff] %v2679
      %2712 = vst [vmem:[%s177 + $0x98] sm:$0xff] %v2680
      %2713 = vst [vmem:[%s177 + $0xa0] sm:$0xff] %v2681
      %2714 = vst [vmem:[%s177 + $0xa8] sm:$0xff] %v2682
      %2715 = vst [vmem:[%s177 + $0xb0] sm:$0xff] %v2683
      %2716 = vst [vmem:[%s177 + $0xb8] sm:$0xff] %v2684
      %2717 = vst [vmem:[%s177 + $0xc0] sm:$0xff] %v2685
      %2718 = vst [vmem:[%s177 + $0xc8] sm:$0xff] %v2686
      %2719 = vst [vmem:[%s177 + $0xd0] sm:$0xff] %v2687
      %2720 = vst [vmem:[%s177 + $0xd8] sm:$0xff] %v2688
      %2721 = vst [vmem:[%s177 + $0xe0] sm:$0xff] %v2689
      %2722 = vst [vmem:[%s177 + $0xe8] sm:$0xff] %v2690
      %2723 = vst [vmem:[%s177 + $0xf0] sm:$0xff] %v2691
      %2724 = vst [vmem:[%s177 + $0xf8] sm:$0xff] %v2692
      %v2725 = vld [vmem:[%s2366 + $0x1] sm:$0xff]
      %v2726 = vld [vmem:[%s2366 + $0x9] sm:$0xff]
      %v2727 = vld [vmem:[%s2366 + $0x19] sm:$0xff]
      %v2728 = vld [vmem:[%s2366 + $0x21] sm:$0xff]
      %v2729 = vld [vmem:[%s2366 + $0x31] sm:$0xff]
      %v2730 = vld [vmem:[%s2366 + $0x39] sm:$0xff]
      %v2731 = vld [vmem:[%s2366 + $0x49] sm:$0xff]
      %v2732 = vld [vmem:[%s2366 + $0x51] sm:$0xff]
      %v2733 = vld [vmem:[%s2366 + $0x61] sm:$0xff]
      %v2734 = vld [vmem:[%s2366 + $0x69] sm:$0xff]
      %v2735 = vld [vmem:[%s2366 + $0x79] sm:$0xff]
      %v2736 = vld [vmem:[%s2366 + $0x81] sm:$0xff]
      %v2737 = vld [vmem:[%s2366 + $0x91] sm:$0xff]
      %v2738 = vld [vmem:[%s2366 + $0x99] sm:$0xff]
      %v2739 = vld [vmem:[%s2366 + $0xa9] sm:$0xff]
      %v2740 = vld [vmem:[%s2366 + $0xb1] sm:$0xff]
      %v2741 = vld [vmem:[%s2366 + $0xc1] sm:$0xff]
      %v2742 = vld [vmem:[%s2366 + $0xc9] sm:$0xff]
      %v2743 = vld [vmem:[%s2366 + $0xd9] sm:$0xff]
      %v2744 = vld [vmem:[%s2366 + $0xe1] sm:$0xff]
      %v2745 = vld [vmem:[%s2366 + $0xf1] sm:$0xff]
      %v2746 = vld [vmem:[%s2366 + $0xf9] sm:$0xff]
      %v2747 = vld [vmem:[%s2366 + $0x109] sm:$0xff]
      %v2748 = vld [vmem:[%s2366 + $0x111] sm:$0xff]
      %v2749 = vld [vmem:[%s2366 + $0x121] sm:$0xff]
      %v2750 = vld [vmem:[%s2366 + $0x129] sm:$0xff]
      %v2751 = vld [vmem:[%s2366 + $0x139] sm:$0xff]
      %v2752 = vld [vmem:[%s2366 + $0x141] sm:$0xff]
      %v2753 = vld [vmem:[%s2366 + $0x151] sm:$0xff]
      %v2754 = vld [vmem:[%s2366 + $0x159] sm:$0xff]
      %v2755 = vld [vmem:[%s2366 + $0x169] sm:$0xff]
      %v2756 = vld [vmem:[%s2366 + $0x171] sm:$0xff]
      %v2757 = vpack.c.bf16 %v2726, %v2725
      %v2758 = vpack.c.bf16 %v2728, %v2727
      %v2759 = vpack.c.bf16 %v2730, %v2729
      %v2760 = vpack.c.bf16 %v2732, %v2731
      %v2761 = vpack.c.bf16 %v2734, %v2733
      %v2762 = vpack.c.bf16 %v2736, %v2735
      %v2763 = vpack.c.bf16 %v2738, %v2737
      %v2764 = vpack.c.bf16 %v2740, %v2739
      %v2765 = vpack.c.bf16 %v2742, %v2741
      %v2766 = vpack.c.bf16 %v2744, %v2743
      %v2767 = vpack.c.bf16 %v2746, %v2745
      %v2768 = vpack.c.bf16 %v2748, %v2747
      %v2769 = vpack.c.bf16 %v2750, %v2749
      %v2770 = vpack.c.bf16 %v2752, %v2751
      %v2771 = vpack.c.bf16 %v2754, %v2753
      %v2772 = vpack.c.bf16 %v2756, %v2755
      %v2773 = vld [vmem:[%s177] sm:$0xff]
      %v2774 = vld [vmem:[%s177 + $0x8] sm:$0xff]
      %v2775 = vld [vmem:[%s177 + $0x10] sm:$0xff]
      %v2776 = vld [vmem:[%s177 + $0x18] sm:$0xff]
      %v2777 = vld [vmem:[%s177 + $0x20] sm:$0xff]
      %v2778 = vld [vmem:[%s177 + $0x28] sm:$0xff]
      %v2779 = vld [vmem:[%s177 + $0x30] sm:$0xff]
      %v2780 = vld [vmem:[%s177 + $0x38] sm:$0xff]
      %v2781 = vld [vmem:[%s177 + $0x40] sm:$0xff]
      %v2782 = vld [vmem:[%s177 + $0x48] sm:$0xff]
      %v2783 = vld [vmem:[%s177 + $0x50] sm:$0xff]
      %v2784 = vld [vmem:[%s177 + $0x58] sm:$0xff]
      %v2785 = vld [vmem:[%s177 + $0x60] sm:$0xff]
      %v2786 = vld [vmem:[%s177 + $0x68] sm:$0xff]
      %v2787 = vld [vmem:[%s177 + $0x70] sm:$0xff]
      %v2788 = vld [vmem:[%s177 + $0x78] sm:$0xff]
      %v2789 = vld [vmem:[%s177 + $0x80] sm:$0xff]
      %v2790 = vld [vmem:[%s177 + $0x88] sm:$0xff]
      %v2791 = vld [vmem:[%s177 + $0x90] sm:$0xff]
      %v2792 = vld [vmem:[%s177 + $0x98] sm:$0xff]
      %v2793 = vld [vmem:[%s177 + $0xa0] sm:$0xff]
      %v2794 = vld [vmem:[%s177 + $0xa8] sm:$0xff]
      %v2795 = vld [vmem:[%s177 + $0xb0] sm:$0xff]
      %v2796 = vld [vmem:[%s177 + $0xb8] sm:$0xff]
      %v2797 = vld [vmem:[%s177 + $0xc0] sm:$0xff]
      %v2798 = vld [vmem:[%s177 + $0xc8] sm:$0xff]
      %v2799 = vld [vmem:[%s177 + $0xd0] sm:$0xff]
      %v2800 = vld [vmem:[%s177 + $0xd8] sm:$0xff]
      %v2801 = vld [vmem:[%s177 + $0xe0] sm:$0xff]
      %v2802 = vld [vmem:[%s177 + $0xe8] sm:$0xff]
      %v2803 = vld [vmem:[%s177 + $0xf0] sm:$0xff]
      %v2804 = vld [vmem:[%s177 + $0xf8] sm:$0xff]
      %s2805 = scalar_lea.vmem %s1, 14
      %v2806 = vld [vmem:[%s2805] sm:$0x3]
      %v2808 = vsel %vm297, %v2757, 0
      %v2811 = vsel %vm297, %v2758, 0
      %v2814 = vsel %vm297, %v2759, 0
      %v2817 = vsel %vm297, %v2760, 0
      %v2820 = vsel %vm297, %v2761, 0
      %v2823 = vsel %vm297, %v2762, 0
      %v2826 = vsel %vm297, %v2763, 0
      %v2829 = vsel %vm297, %v2764, 0
      %v2832 = vsel %vm297, %v2765, 0
      %v2835 = vsel %vm297, %v2766, 0
      %v2838 = vsel %vm297, %v2767, 0
      %v2841 = vsel %vm297, %v2768, 0
      %v2844 = vsel %vm297, %v2769, 0
      %v2847 = vsel %vm297, %v2770, 0
      %v2850 = vsel %vm297, %v2771, 0
      %v2853 = vsel %vm297, %v2772, 0
      %v2856 = vsel %vm346, %v2806, 0
      %2858 = vmatprep.subr.bf16.mxu0 0
      %2859 = vmatpush1.bf16.msra.mxu0 %v2856
      %2860 = vmatprep.subr.bf16.mxu0 0
      %2861 = vmatpush1.bf16.msra.mxu0 0
      %2862 = vmatprep.subr.bf16.mxu0 0
      %2863 = vmatpush1.bf16.msra.mxu0 0
      %2864 = vmatprep.subr.bf16.mxu0 0
      %2865 = vmatpush1.bf16.msra.mxu0 0
      %2866 = vmatprep.subr.bf16.mxu0 0
      %2867 = vmatpush1.bf16.msra.mxu0 0
      %2868 = vmatprep.subr.bf16.mxu0 0
      %2869 = vmatpush1.bf16.msra.mxu0 0
      %2870 = vmatprep.subr.bf16.mxu0 0
      %2871 = vmatpush1.bf16.msra.mxu0 0
      %2872 = vmatprep.subr.bf16.mxu0 0
      %2873 = vmatpush1.bf16.msra.mxu0 0
      %2874 = vmatprep.subr.bf16.mxu0 0
      %2875 = vmatpush1.bf16.msra.mxu0 0
      %2876 = vmatprep.subr.bf16.mxu0 0
      %2877 = vmatpush1.bf16.msra.mxu0 0
      %2878 = vmatprep.subr.bf16.mxu0 0
      %2879 = vmatpush1.bf16.msra.mxu0 0
      %2880 = vmatprep.subr.bf16.mxu0 0
      %2881 = vmatpush1.bf16.msra.mxu0 0
      %2882 = vmatprep.subr.bf16.mxu0 0
      %2883 = vmatpush1.bf16.msra.mxu0 0
      %2884 = vmatprep.subr.bf16.mxu0 0
      %2885 = vmatpush1.bf16.msra.mxu0 0
      %2886 = vmatprep.subr.bf16.mxu0 0
      %2887 = vmatpush1.bf16.msra.mxu0 0
      %2888 = vmatprep.subr.bf16.mxu0 0
      %2889 = vmatpush1.bf16.msra.mxu0 0
      %2890 = vmatprep.mubr.bf16.mxu0 0
      %2891 = vmatmul.mubr.bf16.gmra.mrb[0].mxu0 %v2808
      %v2892 = vpop.f32.mrb[0].mxu0
      %v2893 = vadd.f32 0.0, %v2892
      %v2894 = vpop.f32.mrb[0].mxu0
      %v2895 = vpop.f32.mrb[0].mxu0
      %v2896 = vadd.f32 0.0, %v2895
      %v2897 = vpop.f32.mrb[0].mxu0
      %2898 = vmatprep.mubr.bf16.mxu0 0
      %2899 = vmatmul.mubr.bf16.gmra.mrb[0].mxu0 %v2811
      %v2900 = vpop.f32.mrb[0].mxu0
      %v2901 = vadd.f32 0.0, %v2900
      %v2902 = vpop.f32.mrb[0].mxu0
      %v2903 = vpop.f32.mrb[0].mxu0
      %v2904 = vadd.f32 0.0, %v2903
      %v2905 = vpop.f32.mrb[0].mxu0
      %2906 = vmatprep.mubr.bf16.mxu0 0
      %2907 = vmatmul.mubr.bf16.gmra.mrb[0].mxu0 %v2814
      %v2908 = vpop.f32.mrb[0].mxu0
      %v2909 = vadd.f32 0.0, %v2908
      %v2910 = vpop.f32.mrb[0].mxu0
      %v2911 = vpop.f32.mrb[0].mxu0
      %v2912 = vadd.f32 0.0, %v2911
      %v2913 = vpop.f32.mrb[0].mxu0
      %2914 = vmatprep.mubr.bf16.mxu0 0
      %2915 = vmatmul.mubr.bf16.gmra.mrb[0].mxu0 %v2817
      %v2916 = vpop.f32.mrb[0].mxu0
      %v2917 = vadd.f32 0.0, %v2916
      %v2918 = vpop.f32.mrb[0].mxu0
      %v2919 = vpop.f32.mrb[0].mxu0
      %v2920 = vadd.f32 0.0, %v2919
      %v2921 = vpop.f32.mrb[0].mxu0
      %2922 = vmatprep.mubr.bf16.mxu0 0
      %2923 = vmatmul.mubr.bf16.gmra.mrb[0].mxu0 %v2820
      %v2924 = vpop.f32.mrb[0].mxu0
      %v2925 = vadd.f32 0.0, %v2924
      %v2926 = vpop.f32.mrb[0].mxu0
      %v2927 = vpop.f32.mrb[0].mxu0
      %v2928 = vadd.f32 0.0, %v2927
      %v2929 = vpop.f32.mrb[0].mxu0
      %2930 = vmatprep.mubr.bf16.mxu0 0
      %2931 = vmatmul.mubr.bf16.gmra.mrb[0].mxu0 %v2823
      %v2932 = vpop.f32.mrb[0].mxu0
      %v2933 = vadd.f32 0.0, %v2932
      %v2934 = vpop.f32.mrb[0].mxu0
      %v2935 = vpop.f32.mrb[0].mxu0
      %v2936 = vadd.f32 0.0, %v2935
      %v2937 = vpop.f32.mrb[0].mxu0
      %2938 = vmatprep.mubr.bf16.mxu0 0
      %2939 = vmatmul.mubr.bf16.gmra.mrb[0].mxu0 %v2826
      %v2940 = vpop.f32.mrb[0].mxu0
      %v2941 = vadd.f32 0.0, %v2940
      %v2942 = vpop.f32.mrb[0].mxu0
      %v2943 = vpop.f32.mrb[0].mxu0
      %v2944 = vadd.f32 0.0, %v2943
      %v2945 = vpop.f32.mrb[0].mxu0
      %2946 = vmatprep.mubr.bf16.mxu0 0
      %2947 = vmatmul.mubr.bf16.gmra.mrb[0].mxu0 %v2829
      %v2948 = vpop.f32.mrb[0].mxu0
      %v2949 = vadd.f32 0.0, %v2948
      %v2950 = vpop.f32.mrb[0].mxu0
      %v2951 = vpop.f32.mrb[0].mxu0
      %v2952 = vadd.f32 0.0, %v2951
      %v2953 = vpop.f32.mrb[0].mxu0
      %2954 = vmatprep.mubr.bf16.mxu0 0
      %2955 = vmatmul.mubr.bf16.gmra.mrb[0].mxu0 %v2832
      %v2956 = vpop.f32.mrb[0].mxu0
      %v2957 = vadd.f32 0.0, %v2956
      %v2958 = vpop.f32.mrb[0].mxu0
      %v2959 = vpop.f32.mrb[0].mxu0
      %v2960 = vadd.f32 0.0, %v2959
      %v2961 = vpop.f32.mrb[0].mxu0
      %2962 = vmatprep.mubr.bf16.mxu0 0
      %2963 = vmatmul.mubr.bf16.gmra.mrb[0].mxu0 %v2835
      %v2964 = vpop.f32.mrb[0].mxu0
      %v2965 = vadd.f32 0.0, %v2964
      %v2966 = vpop.f32.mrb[0].mxu0
      %v2967 = vpop.f32.mrb[0].mxu0
      %v2968 = vadd.f32 0.0, %v2967
      %v2969 = vpop.f32.mrb[0].mxu0
      %2970 = vmatprep.mubr.bf16.mxu0 0
      %2971 = vmatmul.mubr.bf16.gmra.mrb[0].mxu0 %v2838
      %v2972 = vpop.f32.mrb[0].mxu0
      %v2973 = vadd.f32 0.0, %v2972
      %v2974 = vpop.f32.mrb[0].mxu0
      %v2975 = vpop.f32.mrb[0].mxu0
      %v2976 = vadd.f32 0.0, %v2975
      %v2977 = vpop.f32.mrb[0].mxu0
      %2978 = vmatprep.mubr.bf16.mxu0 0
      %2979 = vmatmul.mubr.bf16.gmra.mrb[0].mxu0 %v2841
      %v2980 = vpop.f32.mrb[0].mxu0
      %v2981 = vadd.f32 0.0, %v2980
      %v2982 = vpop.f32.mrb[0].mxu0
      %v2983 = vpop.f32.mrb[0].mxu0
      %v2984 = vadd.f32 0.0, %v2983
      %v2985 = vpop.f32.mrb[0].mxu0
      %2986 = vmatprep.mubr.bf16.mxu0 0
      %2987 = vmatmul.mubr.bf16.gmra.mrb[0].mxu0 %v2844
      %v2988 = vpop.f32.mrb[0].mxu0
      %v2989 = vadd.f32 0.0, %v2988
      %v2990 = vpop.f32.mrb[0].mxu0
      %v2991 = vpop.f32.mrb[0].mxu0
      %v2992 = vadd.f32 0.0, %v2991
      %v2993 = vpop.f32.mrb[0].mxu0
      %2994 = vmatprep.mubr.bf16.mxu0 0
      %2995 = vmatmul.mubr.bf16.gmra.mrb[0].mxu0 %v2847
      %v2996 = vpop.f32.mrb[0].mxu0
      %v2997 = vadd.f32 0.0, %v2996
      %v2998 = vpop.f32.mrb[0].mxu0
      %v2999 = vpop.f32.mrb[0].mxu0
      %v3000 = vadd.f32 0.0, %v2999
      %v3001 = vpop.f32.mrb[0].mxu0
      %3002 = vmatprep.mubr.bf16.mxu0 0
      %3003 = vmatmul.mubr.bf16.gmra.mrb[0].mxu0 %v2850
      %v3004 = vpop.f32.mrb[0].mxu0
      %v3005 = vadd.f32 0.0, %v3004
      %v3006 = vpop.f32.mrb[0].mxu0
      %v3007 = vpop.f32.mrb[0].mxu0
      %v3008 = vadd.f32 0.0, %v3007
      %v3009 = vpop.f32.mrb[0].mxu0
      %3010 = vmatprep.mubr.bf16.mxu0 0
      %3011 = vmatmul.mubr.bf16.gmra.mrb[0].mxu0 %v2853
      %v3012 = vpop.f32.mrb[0].mxu0
      %v3013 = vadd.f32 0.0, %v3012
      %v3014 = vpop.f32.mrb[0].mxu0
      %v3015 = vpop.f32.mrb[0].mxu0
      %v3016 = vadd.f32 0.0, %v3015
      %v3017 = vpop.f32.mrb[0].mxu0
      %3018 = vdwg.mxu0
      %v3019 = vadd.f32 %v2773, %v2893
      %v3020 = vadd.f32 %v2774, %v2896
      %v3021 = vadd.f32 %v2775, %v2901
      %v3022 = vadd.f32 %v2776, %v2904
      %v3023 = vadd.f32 %v2777, %v2909
      %v3024 = vadd.f32 %v2778, %v2912
      %v3025 = vadd.f32 %v2779, %v2917
      %v3026 = vadd.f32 %v2780, %v2920
      %v3027 = vadd.f32 %v2781, %v2925
      %v3028 = vadd.f32 %v2782, %v2928
      %v3029 = vadd.f32 %v2783, %v2933
      %v3030 = vadd.f32 %v2784, %v2936
      %v3031 = vadd.f32 %v2785, %v2941
      %v3032 = vadd.f32 %v2786, %v2944
      %v3033 = vadd.f32 %v2787, %v2949
      %v3034 = vadd.f32 %v2788, %v2952
      %v3035 = vadd.f32 %v2789, %v2957
      %v3036 = vadd.f32 %v2790, %v2960
      %v3037 = vadd.f32 %v2791, %v2965
      %v3038 = vadd.f32 %v2792, %v2968
      %v3039 = vadd.f32 %v2793, %v2973
      %v3040 = vadd.f32 %v2794, %v2976
      %v3041 = vadd.f32 %v2795, %v2981
      %v3042 = vadd.f32 %v2796, %v2984
      %v3043 = vadd.f32 %v2797, %v2989
      %v3044 = vadd.f32 %v2798, %v2992
      %v3045 = vadd.f32 %v2799, %v2997
      %v3046 = vadd.f32 %v2800, %v3000
      %v3047 = vadd.f32 %v2801, %v3005
      %v3048 = vadd.f32 %v2802, %v3008
      %v3049 = vadd.f32 %v2803, %v3013
      %v3050 = vadd.f32 %v2804, %v3016
      %3051 = vst [vmem:[%s177] sm:$0xff] %v3019
      %3052 = vst [vmem:[%s177 + $0x8] sm:$0xff] %v3020
      %3053 = vst [vmem:[%s177 + $0x10] sm:$0xff] %v3021
      %3054 = vst [vmem:[%s177 + $0x18] sm:$0xff] %v3022
      %3055 = vst [vmem:[%s177 + $0x20] sm:$0xff] %v3023
      %3056 = vst [vmem:[%s177 + $0x28] sm:$0xff] %v3024
      %3057 = vst [vmem:[%s177 + $0x30] sm:$0xff] %v3025
      %3058 = vst [vmem:[%s177 + $0x38] sm:$0xff] %v3026
      %3059 = vst [vmem:[%s177 + $0x40] sm:$0xff] %v3027
      %3060 = vst [vmem:[%s177 + $0x48] sm:$0xff] %v3028
      %3061 = vst [vmem:[%s177 + $0x50] sm:$0xff] %v3029
      %3062 = vst [vmem:[%s177 + $0x58] sm:$0xff] %v3030
      %3063 = vst [vmem:[%s177 + $0x60] sm:$0xff] %v3031
      %3064 = vst [vmem:[%s177 + $0x68] sm:$0xff] %v3032
      %3065 = vst [vmem:[%s177 + $0x70] sm:$0xff] %v3033
      %3066 = vst [vmem:[%s177 + $0x78] sm:$0xff] %v3034
      %3067 = vst [vmem:[%s177 + $0x80] sm:$0xff] %v3035
      %3068 = vst [vmem:[%s177 + $0x88] sm:$0xff] %v3036
      %3069 = vst [vmem:[%s177 + $0x90] sm:$0xff] %v3037
      %3070 = vst [vmem:[%s177 + $0x98] sm:$0xff] %v3038
      %3071 = vst [vmem:[%s177 + $0xa0] sm:$0xff] %v3039
      %3072 = vst [vmem:[%s177 + $0xa8] sm:$0xff] %v3040
      %3073 = vst [vmem:[%s177 + $0xb0] sm:$0xff] %v3041
      %3074 = vst [vmem:[%s177 + $0xb8] sm:$0xff] %v3042
      %3075 = vst [vmem:[%s177 + $0xc0] sm:$0xff] %v3043
      %3076 = vst [vmem:[%s177 + $0xc8] sm:$0xff] %v3044
      %3077 = vst [vmem:[%s177 + $0xd0] sm:$0xff] %v3045
      %3078 = vst [vmem:[%s177 + $0xd8] sm:$0xff] %v3046
      %3079 = vst [vmem:[%s177 + $0xe0] sm:$0xff] %v3047
      %3080 = vst [vmem:[%s177 + $0xe8] sm:$0xff] %v3048
      %3081 = vst [vmem:[%s177 + $0xf0] sm:$0xff] %v3049
      %3082 = vst [vmem:[%s177 + $0xf8] sm:$0xff] %v3050
      %v3083 = vld [vmem:[%s2366 + $0x2] sm:$0xff]
      %v3084 = vld [vmem:[%s2366 + $0xa] sm:$0xff]
      %v3085 = vld [vmem:[%s2366 + $0x1a] sm:$0xff]
      %v3086 = vld [vmem:[%s2366 + $0x22] sm:$0xff]
      %v3087 = vld [vmem:[%s2366 + $0x32] sm:$0xff]
      %v3088 = vld [vmem:[%s2366 + $0x3a] sm:$0xff]
      %v3089 = vld [vmem:[%s2366 + $0x4a] sm:$0xff]
      %v3090 = vld [vmem:[%s2366 + $0x52] sm:$0xff]
      %v3091 = vld [vmem:[%s2366 + $0x62] sm:$0xff]
      %v3092 = vld [vmem:[%s2366 + $0x6a] sm:$0xff]
      %v3093 = vld [vmem:[%s2366 + $0x7a] sm:$0xff]
      %v3094 = vld [vmem:[%s2366 + $0x82] sm:$0xff]
      %v3095 = vld [vmem:[%s2366 + $0x92] sm:$0xff]
      %v3096 = vld [vmem:[%s2366 + $0x9a] sm:$0xff]
      %v3097 = vld [vmem:[%s2366 + $0xaa] sm:$0xff]
      %v3098 = vld [vmem:[%s2366 + $0xb2] sm:$0xff]
      %v3099 = vld [vmem:[%s2366 + $0xc2] sm:$0xff]
      %v3100 = vld [vmem:[%s2366 + $0xca] sm:$0xff]
      %v3101 = vld [vmem:[%s2366 + $0xda] sm:$0xff]
      %v3102 = vld [vmem:[%s2366 + $0xe2] sm:$0xff]
      %v3103 = vld [vmem:[%s2366 + $0xf2] sm:$0xff]
      %v3104 = vld [vmem:[%s2366 + $0xfa] sm:$0xff]
      %v3105 = vld [vmem:[%s2366 + $0x10a] sm:$0xff]
      %v3106 = vld [vmem:[%s2366 + $0x112] sm:$0xff]
      %v3107 = vld [vmem:[%s2366 + $0x122] sm:$0xff]
      %v3108 = vld [vmem:[%s2366 + $0x12a] sm:$0xff]
      %v3109 = vld [vmem:[%s2366 + $0x13a] sm:$0xff]
      %v3110 = vld [vmem:[%s2366 + $0x142] sm:$0xff]
      %v3111 = vld [vmem:[%s2366 + $0x152] sm:$0xff]
      %v3112 = vld [vmem:[%s2366 + $0x15a] sm:$0xff]
      %v3113 = vld [vmem:[%s2366 + $0x16a] sm:$0xff]
      %v3114 = vld [vmem:[%s2366 + $0x172] sm:$0xff]
      %v3115 = vpack.c.bf16 %v3084, %v3083
      %v3116 = vpack.c.bf16 %v3086, %v3085
      %v3117 = vpack.c.bf16 %v3088, %v3087
      %v3118 = vpack.c.bf16 %v3090, %v3089
      %v3119 = vpack.c.bf16 %v3092, %v3091
      %v3120 = vpack.c.bf16 %v3094, %v3093
      %v3121 = vpack.c.bf16 %v3096, %v3095
      %v3122 = vpack.c.bf16 %v3098, %v3097
      %v3123 = vpack.c.bf16 %v3100, %v3099
      %v3124 = vpack.c.bf16 %v3102, %v3101
      %v3125 = vpack.c.bf16 %v3104, %v3103
      %v3126 = vpack.c.bf16 %v3106, %v3105
      %v3127 = vpack.c.bf16 %v3108, %v3107
      %v3128 = vpack.c.bf16 %v3110, %v3109
      %v3129 = vpack.c.bf16 %v3112, %v3111
      %v3130 = vpack.c.bf16 %v3114, %v3113
      %v3131 = vld [vmem:[%s177] sm:$0xff]
      %v3132 = vld [vmem:[%s177 + $0x8] sm:$0xff]
      %v3133 = vld [vmem:[%s177 + $0x10] sm:$0xff]
      %v3134 = vld [vmem:[%s177 + $0x18] sm:$0xff]
      %v3135 = vld [vmem:[%s177 + $0x20] sm:$0xff]
      %v3136 = vld [vmem:[%s177 + $0x28] sm:$0xff]
      %v3137 = vld [vmem:[%s177 + $0x30] sm:$0xff]
      %v3138 = vld [vmem:[%s177 + $0x38] sm:$0xff]
      %v3139 = vld [vmem:[%s177 + $0x40] sm:$0xff]
      %v3140 = vld [vmem:[%s177 + $0x48] sm:$0xff]
      %v3141 = vld [vmem:[%s177 + $0x50] sm:$0xff]
      %v3142 = vld [vmem:[%s177 + $0x58] sm:$0xff]
      %v3143 = vld [vmem:[%s177 + $0x60] sm:$0xff]
      %v3144 = vld [vmem:[%s177 + $0x68] sm:$0xff]
      %v3145 = vld [vmem:[%s177 + $0x70] sm:$0xff]
      %v3146 = vld [vmem:[%s177 + $0x78] sm:$0xff]
      %v3147 = vld [vmem:[%s177 + $0x80] sm:$0xff]
      %v3148 = vld [vmem:[%s177 + $0x88] sm:$0xff]
      %v3149 = vld [vmem:[%s177 + $0x90] sm:$0xff]
      %v3150 = vld [vmem:[%s177 + $0x98] sm:$0xff]
      %v3151 = vld [vmem:[%s177 + $0xa0] sm:$0xff]
      %v3152 = vld [vmem:[%s177 + $0xa8] sm:$0xff]
      %v3153 = vld [vmem:[%s177 + $0xb0] sm:$0xff]
      %v3154 = vld [vmem:[%s177 + $0xb8] sm:$0xff]
      %v3155 = vld [vmem:[%s177 + $0xc0] sm:$0xff]
      %v3156 = vld [vmem:[%s177 + $0xc8] sm:$0xff]
      %v3157 = vld [vmem:[%s177 + $0xd0] sm:$0xff]
      %v3158 = vld [vmem:[%s177 + $0xd8] sm:$0xff]
      %v3159 = vld [vmem:[%s177 + $0xe0] sm:$0xff]
      %v3160 = vld [vmem:[%s177 + $0xe8] sm:$0xff]
      %v3161 = vld [vmem:[%s177 + $0xf0] sm:$0xff]
      %v3162 = vld [vmem:[%s177 + $0xf8] sm:$0xff]
      %s3163 = scalar_lea.vmem %s1, 16
      %v3164 = vld [vmem:[%s3163] sm:$0x3]
      %v3166 = vsel %vm297, %v3115, 0
      %v3169 = vsel %vm297, %v3116, 0
      %v3172 = vsel %vm297, %v3117, 0
      %v3175 = vsel %vm297, %v3118, 0
      %v3178 = vsel %vm297, %v3119, 0
      %v3181 = vsel %vm297, %v3120, 0
      %v3184 = vsel %vm297, %v3121, 0
      %v3187 = vsel %vm297, %v3122, 0
      %v3190 = vsel %vm297, %v3123, 0
      %v3193 = vsel %vm297, %v3124, 0
      %v3196 = vsel %vm297, %v3125, 0
      %v3199 = vsel %vm297, %v3126, 0
      %v3202 = vsel %vm297, %v3127, 0
      %v3205 = vsel %vm297, %v3128, 0
      %v3208 = vsel %vm297, %v3129, 0
      %v3211 = vsel %vm297, %v3130, 0
      %v3214 = vsel %vm346, %v3164, 0
      %3216 = vmatprep.subr.bf16.mxu0 0
      %3217 = vmatpush1.bf16.msra.mxu0 %v3214
      %3218 = vmatprep.subr.bf16.mxu0 0
      %3219 = vmatpush1.bf16.msra.mxu0 0
      %3220 = vmatprep.subr.bf16.mxu0 0
      %3221 = vmatpush1.bf16.msra.mxu0 0
      %3222 = vmatprep.subr.bf16.mxu0 0
      %3223 = vmatpush1.bf16.msra.mxu0 0
      %3224 = vmatprep.subr.bf16.mxu0 0
      %3225 = vmatpush1.bf16.msra.mxu0 0
      %3226 = vmatprep.subr.bf16.mxu0 0
      %3227 = vmatpush1.bf16.msra.mxu0 0
      %3228 = vmatprep.subr.bf16.mxu0 0
      %3229 = vmatpush1.bf16.msra.mxu0 0
      %3230 = vmatprep.subr.bf16.mxu0 0
      %3231 = vmatpush1.bf16.msra.mxu0 0
      %3232 = vmatprep.subr.bf16.mxu0 0
      %3233 = vmatpush1.bf16.msra.mxu0 0
      %3234 = vmatprep.subr.bf16.mxu0 0
      %3235 = vmatpush1.bf16.msra.mxu0 0
      %3236 = vmatprep.subr.bf16.mxu0 0
      %3237 = vmatpush1.bf16.msra.mxu0 0
      %3238 = vmatprep.subr.bf16.mxu0 0
      %3239 = vmatpush1.bf16.msra.mxu0 0
      %3240 = vmatprep.subr.bf16.mxu0 0
      %3241 = vmatpush1.bf16.msra.mxu0 0
      %3242 = vmatprep.subr.bf16.mxu0 0
      %3243 = vmatpush1.bf16.msra.mxu0 0
      %3244 = vmatprep.subr.bf16.mxu0 0
      %3245 = vmatpush1.bf16.msra.mxu0 0
      %3246 = vmatprep.subr.bf16.mxu0 0
      %3247 = vmatpush1.bf16.msra.mxu0 0
      %3248 = vmatprep.mubr.bf16.mxu0 0
      %3249 = vmatmul.mubr.bf16.gmra.mrb[0].mxu0 %v3166
      %v3250 = vpop.f32.mrb[0].mxu0
      %v3251 = vadd.f32 0.0, %v3250
      %v3252 = vpop.f32.mrb[0].mxu0
      %v3253 = vpop.f32.mrb[0].mxu0
      %v3254 = vadd.f32 0.0, %v3253
      %v3255 = vpop.f32.mrb[0].mxu0
      %3256 = vmatprep.mubr.bf16.mxu0 0
      %3257 = vmatmul.mubr.bf16.gmra.mrb[0].mxu0 %v3169
      %v3258 = vpop.f32.mrb[0].mxu0
      %v3259 = vadd.f32 0.0, %v3258
      %v3260 = vpop.f32.mrb[0].mxu0
      %v3261 = vpop.f32.mrb[0].mxu0
      %v3262 = vadd.f32 0.0, %v3261
      %v3263 = vpop.f32.mrb[0].mxu0
      %3264 = vmatprep.mubr.bf16.mxu0 0
      %3265 = vmatmul.mubr.bf16.gmra.mrb[0].mxu0 %v3172
      %v3266 = vpop.f32.mrb[0].mxu0
      %v3267 = vadd.f32 0.0, %v3266
      %v3268 = vpop.f32.mrb[0].mxu0
      %v3269 = vpop.f32.mrb[0].mxu0
      %v3270 = vadd.f32 0.0, %v3269
      %v3271 = vpop.f32.mrb[0].mxu0
      %3272 = vmatprep.mubr.bf16.mxu0 0
      %3273 = vmatmul.mubr.bf16.gmra.mrb[0].mxu0 %v3175
      %v3274 = vpop.f32.mrb[0].mxu0
      %v3275 = vadd.f32 0.0, %v3274
      %v3276 = vpop.f32.mrb[0].mxu0
      %v3277 = vpop.f32.mrb[0].mxu0
      %v3278 = vadd.f32 0.0, %v3277
      %v3279 = vpop.f32.mrb[0].mxu0
      %3280 = vmatprep.mubr.bf16.mxu0 0
      %3281 = vmatmul.mubr.bf16.gmra.mrb[0].mxu0 %v3178
      %v3282 = vpop.f32.mrb[0].mxu0
      %v3283 = vadd.f32 0.0, %v3282
      %v3284 = vpop.f32.mrb[0].mxu0
      %v3285 = vpop.f32.mrb[0].mxu0
      %v3286 = vadd.f32 0.0, %v3285
      %v3287 = vpop.f32.mrb[0].mxu0
      %3288 = vmatprep.mubr.bf16.mxu0 0
      %3289 = vmatmul.mubr.bf16.gmra.mrb[0].mxu0 %v3181
      %v3290 = vpop.f32.mrb[0].mxu0
      %v3291 = vadd.f32 0.0, %v3290
      %v3292 = vpop.f32.mrb[0].mxu0
      %v3293 = vpop.f32.mrb[0].mxu0
      %v3294 = vadd.f32 0.0, %v3293
      %v3295 = vpop.f32.mrb[0].mxu0
      %3296 = vmatprep.mubr.bf16.mxu0 0
      %3297 = vmatmul.mubr.bf16.gmra.mrb[0].mxu0 %v3184
      %v3298 = vpop.f32.mrb[0].mxu0
      %v3299 = vadd.f32 0.0, %v3298
      %v3300 = vpop.f32.mrb[0].mxu0
      %v3301 = vpop.f32.mrb[0].mxu0
      %v3302 = vadd.f32 0.0, %v3301
      %v3303 = vpop.f32.mrb[0].mxu0
      %3304 = vmatprep.mubr.bf16.mxu0 0
      %3305 = vmatmul.mubr.bf16.gmra.mrb[0].mxu0 %v3187
      %v3306 = vpop.f32.mrb[0].mxu0
      %v3307 = vadd.f32 0.0, %v3306
      %v3308 = vpop.f32.mrb[0].mxu0
      %v3309 = vpop.f32.mrb[0].mxu0
      %v3310 = vadd.f32 0.0, %v3309
      %v3311 = vpop.f32.mrb[0].mxu0
      %3312 = vmatprep.mubr.bf16.mxu0 0
      %3313 = vmatmul.mubr.bf16.gmra.mrb[0].mxu0 %v3190
      %v3314 = vpop.f32.mrb[0].mxu0
      %v3315 = vadd.f32 0.0, %v3314
      %v3316 = vpop.f32.mrb[0].mxu0
      %v3317 = vpop.f32.mrb[0].mxu0
      %v3318 = vadd.f32 0.0, %v3317
      %v3319 = vpop.f32.mrb[0].mxu0
      %3320 = vmatprep.mubr.bf16.mxu0 0
      %3321 = vmatmul.mubr.bf16.gmra.mrb[0].mxu0 %v3193
      %v3322 = vpop.f32.mrb[0].mxu0
      %v3323 = vadd.f32 0.0, %v3322
      %v3324 = vpop.f32.mrb[0].mxu0
      %v3325 = vpop.f32.mrb[0].mxu0
      %v3326 = vadd.f32 0.0, %v3325
      %v3327 = vpop.f32.mrb[0].mxu0
      %3328 = vmatprep.mubr.bf16.mxu0 0
      %3329 = vmatmul.mubr.bf16.gmra.mrb[0].mxu0 %v3196
      %v3330 = vpop.f32.mrb[0].mxu0
      %v3331 = vadd.f32 0.0, %v3330
      %v3332 = vpop.f32.mrb[0].mxu0
      %v3333 = vpop.f32.mrb[0].mxu0
      %v3334 = vadd.f32 0.0, %v3333
      %v3335 = vpop.f32.mrb[0].mxu0
      %3336 = vmatprep.mubr.bf16.mxu0 0
      %3337 = vmatmul.mubr.bf16.gmra.mrb[0].mxu0 %v3199
      %v3338 = vpop.f32.mrb[0].mxu0
      %v3339 = vadd.f32 0.0, %v3338
      %v3340 = vpop.f32.mrb[0].mxu0
      %v3341 = vpop.f32.mrb[0].mxu0
      %v3342 = vadd.f32 0.0, %v3341
      %v3343 = vpop.f32.mrb[0].mxu0
      %3344 = vmatprep.mubr.bf16.mxu0 0
      %3345 = vmatmul.mubr.bf16.gmra.mrb[0].mxu0 %v3202
      %v3346 = vpop.f32.mrb[0].mxu0
      %v3347 = vadd.f32 0.0, %v3346
      %v3348 = vpop.f32.mrb[0].mxu0
      %v3349 = vpop.f32.mrb[0].mxu0
      %v3350 = vadd.f32 0.0, %v3349
      %v3351 = vpop.f32.mrb[0].mxu0
      %3352 = vmatprep.mubr.bf16.mxu0 0
      %3353 = vmatmul.mubr.bf16.gmra.mrb[0].mxu0 %v3205
      %v3354 = vpop.f32.mrb[0].mxu0
      %v3355 = vadd.f32 0.0, %v3354
      %v3356 = vpop.f32.mrb[0].mxu0
      %v3357 = vpop.f32.mrb[0].mxu0
      %v3358 = vadd.f32 0.0, %v3357
      %v3359 = vpop.f32.mrb[0].mxu0
      %3360 = vmatprep.mubr.bf16.mxu0 0
      %3361 = vmatmul.mubr.bf16.gmra.mrb[0].mxu0 %v3208
      %v3362 = vpop.f32.mrb[0].mxu0
      %v3363 = vadd.f32 0.0, %v3362
      %v3364 = vpop.f32.mrb[0].mxu0
      %v3365 = vpop.f32.mrb[0].mxu0
      %v3366 = vadd.f32 0.0, %v3365
      %v3367 = vpop.f32.mrb[0].mxu0
      %3368 = vmatprep.mubr.bf16.mxu0 0
      %3369 = vmatmul.mubr.bf16.gmra.mrb[0].mxu0 %v3211
      %v3370 = vpop.f32.mrb[0].mxu0
      %v3371 = vadd.f32 0.0, %v3370
      %v3372 = vpop.f32.mrb[0].mxu0
      %v3373 = vpop.f32.mrb[0].mxu0
      %v3374 = vadd.f32 0.0, %v3373
      %v3375 = vpop.f32.mrb[0].mxu0
      %3376 = vdwg.mxu0
      %v3377 = vadd.f32 %v3131, %v3251
      %v3378 = vadd.f32 %v3132, %v3254
      %v3379 = vadd.f32 %v3133, %v3259
      %v3380 = vadd.f32 %v3134, %v3262
      %v3381 = vadd.f32 %v3135, %v3267
      %v3382 = vadd.f32 %v3136, %v3270
      %v3383 = vadd.f32 %v3137, %v3275
      %v3384 = vadd.f32 %v3138, %v3278
      %v3385 = vadd.f32 %v3139, %v3283
      %v3386 = vadd.f32 %v3140, %v3286
      %v3387 = vadd.f32 %v3141, %v3291
      %v3388 = vadd.f32 %v3142, %v3294
      %v3389 = vadd.f32 %v3143, %v3299
      %v3390 = vadd.f32 %v3144, %v3302
      %v3391 = vadd.f32 %v3145, %v3307
      %v3392 = vadd.f32 %v3146, %v3310
      %v3393 = vadd.f32 %v3147, %v3315
      %v3394 = vadd.f32 %v3148, %v3318
      %v3395 = vadd.f32 %v3149, %v3323
      %v3396 = vadd.f32 %v3150, %v3326
      %v3397 = vadd.f32 %v3151, %v3331
      %v3398 = vadd.f32 %v3152, %v3334
      %v3399 = vadd.f32 %v3153, %v3339
      %v3400 = vadd.f32 %v3154, %v3342
      %v3401 = vadd.f32 %v3155, %v3347
      %v3402 = vadd.f32 %v3156, %v3350
      %v3403 = vadd.f32 %v3157, %v3355
      %v3404 = vadd.f32 %v3158, %v3358
      %v3405 = vadd.f32 %v3159, %v3363
      %v3406 = vadd.f32 %v3160, %v3366
      %v3407 = vadd.f32 %v3161, %v3371
      %v3408 = vadd.f32 %v3162, %v3374
      %3409 = vst [vmem:[%s177] sm:$0xff] %v3377
      %3410 = vst [vmem:[%s177 + $0x8] sm:$0xff] %v3378
      %3411 = vst [vmem:[%s177 + $0x10] sm:$0xff] %v3379
      %3412 = vst [vmem:[%s177 + $0x18] sm:$0xff] %v3380
      %3413 = vst [vmem:[%s177 + $0x20] sm:$0xff] %v3381
      %3414 = vst [vmem:[%s177 + $0x28] sm:$0xff] %v3382
      %3415 = vst [vmem:[%s177 + $0x30] sm:$0xff] %v3383
      %3416 = vst [vmem:[%s177 + $0x38] sm:$0xff] %v3384
      %3417 = vst [vmem:[%s177 + $0x40] sm:$0xff] %v3385
      %3418 = vst [vmem:[%s177 + $0x48] sm:$0xff] %v3386
      %3419 = vst [vmem:[%s177 + $0x50] sm:$0xff] %v3387
      %3420 = vst [vmem:[%s177 + $0x58] sm:$0xff] %v3388
      %3421 = vst [vmem:[%s177 + $0x60] sm:$0xff] %v3389
      %3422 = vst [vmem:[%s177 + $0x68] sm:$0xff] %v3390
      %3423 = vst [vmem:[%s177 + $0x70] sm:$0xff] %v3391
      %3424 = vst [vmem:[%s177 + $0x78] sm:$0xff] %v3392
      %3425 = vst [vmem:[%s177 + $0x80] sm:$0xff] %v3393
      %3426 = vst [vmem:[%s177 + $0x88] sm:$0xff] %v3394
      %3427 = vst [vmem:[%s177 + $0x90] sm:$0xff] %v3395
      %3428 = vst [vmem:[%s177 + $0x98] sm:$0xff] %v3396
      %3429 = vst [vmem:[%s177 + $0xa0] sm:$0xff] %v3397
      %3430 = vst [vmem:[%s177 + $0xa8] sm:$0xff] %v3398
      %3431 = vst [vmem:[%s177 + $0xb0] sm:$0xff] %v3399
      %3432 = vst [vmem:[%s177 + $0xb8] sm:$0xff] %v3400
      %3433 = vst [vmem:[%s177 + $0xc0] sm:$0xff] %v3401
      %3434 = vst [vmem:[%s177 + $0xc8] sm:$0xff] %v3402
      %3435 = vst [vmem:[%s177 + $0xd0] sm:$0xff] %v3403
      %3436 = vst [vmem:[%s177 + $0xd8] sm:$0xff] %v3404
      %3437 = vst [vmem:[%s177 + $0xe0] sm:$0xff] %v3405
      %3438 = vst [vmem:[%s177 + $0xe8] sm:$0xff] %v3406
      %3439 = vst [vmem:[%s177 + $0xf0] sm:$0xff] %v3407
      %3440 = vst [vmem:[%s177 + $0xf8] sm:$0xff] %v3408
      %v3441 = vld [vmem:[%s177] sm:$0xff]
      %v3442 = vld [vmem:[%s177 + $0x8] sm:$0xff]
      %v3443 = vld [vmem:[%s177 + $0x10] sm:$0xff]
      %v3444 = vld [vmem:[%s177 + $0x18] sm:$0xff]
      %v3445 = vld [vmem:[%s177 + $0x20] sm:$0xff]
      %v3446 = vld [vmem:[%s177 + $0x28] sm:$0xff]
      %v3447 = vld [vmem:[%s177 + $0x30] sm:$0xff]
      %v3448 = vld [vmem:[%s177 + $0x38] sm:$0xff]
      %v3449 = vld [vmem:[%s177 + $0x40] sm:$0xff]
      %v3450 = vld [vmem:[%s177 + $0x48] sm:$0xff]
      %v3451 = vld [vmem:[%s177 + $0x50] sm:$0xff]
      %v3452 = vld [vmem:[%s177 + $0x58] sm:$0xff]
      %v3453 = vld [vmem:[%s177 + $0x60] sm:$0xff]
      %v3454 = vld [vmem:[%s177 + $0x68] sm:$0xff]
      %v3455 = vld [vmem:[%s177 + $0x70] sm:$0xff]
      %v3456 = vld [vmem:[%s177 + $0x78] sm:$0xff]
      %v3457 = vld [vmem:[%s177 + $0x80] sm:$0xff]
      %v3458 = vld [vmem:[%s177 + $0x88] sm:$0xff]
      %v3459 = vld [vmem:[%s177 + $0x90] sm:$0xff]
      %v3460 = vld [vmem:[%s177 + $0x98] sm:$0xff]
      %v3461 = vld [vmem:[%s177 + $0xa0] sm:$0xff]
      %v3462 = vld [vmem:[%s177 + $0xa8] sm:$0xff]
      %v3463 = vld [vmem:[%s177 + $0xb0] sm:$0xff]
      %v3464 = vld [vmem:[%s177 + $0xb8] sm:$0xff]
      %v3465 = vld [vmem:[%s177 + $0xc0] sm:$0xff]
      %v3466 = vld [vmem:[%s177 + $0xc8] sm:$0xff]
      %v3467 = vld [vmem:[%s177 + $0xd0] sm:$0xff]
      %v3468 = vld [vmem:[%s177 + $0xd8] sm:$0xff]
      %v3469 = vld [vmem:[%s177 + $0xe0] sm:$0xff]
      %v3470 = vld [vmem:[%s177 + $0xe8] sm:$0xff]
      %v3471 = vld [vmem:[%s177 + $0xf0] sm:$0xff]
      %v3472 = vld [vmem:[%s177 + $0xf8] sm:$0xff]
      %v3473 = vadd.f32 %v3441, %v3442
      %v3474 = vadd.f32 %v3473, %v3443
      %v3475 = vadd.f32 %v3474, %v3444
      %v3476 = vadd.f32 %v3475, %v3445
      %v3477 = vadd.f32 %v3476, %v3446
      %v3478 = vadd.f32 %v3477, %v3447
      %v3479 = vadd.f32 %v3478, %v3448
      %v3480 = vadd.f32 %v3479, %v3449
      %v3481 = vadd.f32 %v3480, %v3450
      %v3482 = vadd.f32 %v3481, %v3451
      %v3483 = vadd.f32 %v3482, %v3452
      %v3484 = vadd.f32 %v3483, %v3453
      %v3485 = vadd.f32 %v3484, %v3454
      %v3486 = vadd.f32 %v3485, %v3455
      %v3487 = vadd.f32 %v3486, %v3456
      %v3488 = vadd.f32 %v3487, %v3457
      %v3489 = vadd.f32 %v3488, %v3458
      %v3490 = vadd.f32 %v3489, %v3459
      %v3491 = vadd.f32 %v3490, %v3460
      %v3492 = vadd.f32 %v3491, %v3461
      %v3493 = vadd.f32 %v3492, %v3462
      %v3494 = vadd.f32 %v3493, %v3463
      %v3495 = vadd.f32 %v3494, %v3464
      %v3496 = vadd.f32 %v3495, %v3465
      %v3497 = vadd.f32 %v3496, %v3466
      %v3498 = vadd.f32 %v3497, %v3467
      %v3499 = vadd.f32 %v3498, %v3468
      %v3500 = vadd.f32 %v3499, %v3469
      %v3501 = vadd.f32 %v3500, %v3470
      %v3502 = vadd.f32 %v3501, %v3471
      %v3503 = vadd.f32 %v3502, %v3472
      %v3504 = vrot.slane %v3503, 4
      %v3505 = vadd.f32 %v3503, %v3504
      %v3506 = vrot.slane %v3505, 2
      %v3507 = vadd.f32 %v3505, %v3506
      %v3508 = vrot.slane %v3507, 1
      %v3509 = vadd.f32 %v3507, %v3508
      %v3510 = vmul.f32 %v3441, %v3441
      %v3511 = vmul.f32 %v3442, %v3442
      %v3512 = vmul.f32 %v3443, %v3443
      %v3513 = vmul.f32 %v3444, %v3444
      %v3514 = vmul.f32 %v3445, %v3445
      %v3515 = vmul.f32 %v3446, %v3446
      %v3516 = vmul.f32 %v3447, %v3447
      %v3517 = vmul.f32 %v3448, %v3448
      %v3518 = vmul.f32 %v3449, %v3449
      %v3519 = vmul.f32 %v3450, %v3450
      %v3520 = vmul.f32 %v3451, %v3451
      %v3521 = vmul.f32 %v3452, %v3452
      %v3522 = vmul.f32 %v3453, %v3453
      %v3523 = vmul.f32 %v3454, %v3454
      %v3524 = vmul.f32 %v3455, %v3455
      %v3525 = vmul.f32 %v3456, %v3456
      %v3526 = vmul.f32 %v3457, %v3457
      %v3527 = vmul.f32 %v3458, %v3458
      %v3528 = vmul.f32 %v3459, %v3459
      %v3529 = vmul.f32 %v3460, %v3460
      %v3530 = vmul.f32 %v3461, %v3461
      %v3531 = vmul.f32 %v3462, %v3462
      %v3532 = vmul.f32 %v3463, %v3463
      %v3533 = vmul.f32 %v3464, %v3464
      %v3534 = vmul.f32 %v3465, %v3465
      %v3535 = vmul.f32 %v3466, %v3466
      %v3536 = vmul.f32 %v3467, %v3467
      %v3537 = vmul.f32 %v3468, %v3468
      %v3538 = vmul.f32 %v3469, %v3469
      %v3539 = vmul.f32 %v3470, %v3470
      %v3540 = vmul.f32 %v3471, %v3471
      %v3541 = vmul.f32 %v3472, %v3472
      %v3542 = vadd.f32 %v3510, %v3511
      %v3543 = vadd.f32 %v3542, %v3512
      %v3544 = vadd.f32 %v3543, %v3513
      %v3545 = vadd.f32 %v3544, %v3514
      %v3546 = vadd.f32 %v3545, %v3515
      %v3547 = vadd.f32 %v3546, %v3516
      %v3548 = vadd.f32 %v3547, %v3517
      %v3549 = vadd.f32 %v3548, %v3518
      %v3550 = vadd.f32 %v3549, %v3519
      %v3551 = vadd.f32 %v3550, %v3520
      %v3552 = vadd.f32 %v3551, %v3521
      %v3553 = vadd.f32 %v3552, %v3522
      %v3554 = vadd.f32 %v3553, %v3523
      %v3555 = vadd.f32 %v3554, %v3524
      %v3556 = vadd.f32 %v3555, %v3525
      %v3557 = vadd.f32 %v3556, %v3526
      %v3558 = vadd.f32 %v3557, %v3527
      %v3559 = vadd.f32 %v3558, %v3528
      %v3560 = vadd.f32 %v3559, %v3529
      %v3561 = vadd.f32 %v3560, %v3530
      %v3562 = vadd.f32 %v3561, %v3531
      %v3563 = vadd.f32 %v3562, %v3532
      %v3564 = vadd.f32 %v3563, %v3533
      %v3565 = vadd.f32 %v3564, %v3534
      %v3566 = vadd.f32 %v3565, %v3535
      %v3567 = vadd.f32 %v3566, %v3536
      %v3568 = vadd.f32 %v3567, %v3537
      %v3569 = vadd.f32 %v3568, %v3538
      %v3570 = vadd.f32 %v3569, %v3539
      %v3571 = vadd.f32 %v3570, %v3540
      %v3572 = vadd.f32 %v3571, %v3541
      %v3573 = vrot.slane %v3572, 4
      %v3574 = vadd.f32 %v3572, %v3573
      %v3575 = vrot.slane %v3574, 2
      %v3576 = vadd.f32 %v3574, %v3575
      %v3577 = vrot.slane %v3576, 1
      %v3578 = vadd.f32 %v3576, %v3577
      %vm3579 = vcmask 1040384
      %v3580 = vsel %vm3579, %v3509, %v3578
      %v3581 = vsel %vm346, %v3580, 0.0
      %3582 = vst [vmem:[%s182] sm:$0xff] %v3581
      %s3583 = smul.u32 32, %s15
      %p3584 = scmp.lt.s32.totalorder %s3583, 63
      %s3585 = scalar_select %p3584, %s3583, 63
      %s3586 = smul.addr %s3585, 8
      %s3587 = scalar_lea.vmem %s2, %s3586
      %p3588 = scmp.lt.s32.totalorder %s15, 1
      %s3589 = scalar_select %p3588, %s15, 1
      %s3590 = smul.addr %s3589, 8
      %s3591 = scalar_lea.vmem %s3, %s3590
      // Predicated region
      $region29: #{decoder_block_forward.8} parent=27 // pred_check
        %p3592 = pneg %p80
      $region30: #{decoder_block_forward.8} parent=27 // pred_check_branch
        %3594 = sbr.rel (%p3592) target = $region32
      $region31: #{decoder_block_forward.8} parent=27 // pred_region
        %s3595 = smul.u32 32, %s15
      $region32: #{decoder_block_forward.8} parent=27 // pred_fallthru
        _
      // Predicated region
      $region33: #{decoder_block_forward.8} parent=27 // pred_check
        %p3596 = pneg %p106
      $region34: #{decoder_block_forward.8} parent=27 // pred_check_branch
        %3598 = sbr.rel (%p3596) target = $region36
      $region35: #{decoder_block_forward.8} parent=27 // pred_region
        _
      $region36: #{decoder_block_forward.8} parent=27 // pred_fallthru
        _
    $region28: #{decoder_block_forward.8} parent=5 // pred_fallthru
      _
    %p3599 = scmp.le.s32.totalorder 2, %s10
    // Predicated region
    $region37: #{decoder_block_forward.8} parent=5 // pred_check
      %p3600 = pneg %p3599
    $region38: #{decoder_block_forward.8} parent=5 // pred_check_branch
      %3602 = sbr.rel (%p3600) target = $region40
    $region39: #{decoder_block_forward.8} parent=5 // pred_region
      %s3603 = ssub.s32 %s10, 2
      // Predicated region
      $region41: #{decoder_block_forward.8} parent=39 // pred_check
        %p3604 = pneg %p86
      $region42: #{decoder_block_forward.8} parent=39 // pred_check_branch
        %3606 = sbr.rel (%p3604) target = $region44
      $region43: #{decoder_block_forward.8} parent=39 // pred_region
        %s3607 = smul.u32 32, %s16
        %p3608 = scmp.lt.s32.totalorder %s3607, 63
        %s3609 = scalar_select %p3608, %s3607, 63
        %s3610 = smul.addr %s3609, 8
        %s3611 = scalar_lea.vmem %s2, %s3610
      $region44: #{decoder_block_forward.8} parent=39 // pred_fallthru
        _
      // Predicated region
      $region45: #{decoder_block_forward.8} parent=39 // pred_check
        %p3612 = pneg %p112
      $region46: #{decoder_block_forward.8} parent=39 // pred_check_branch
        %3614 = sbr.rel (%p3612) target = $region48
      $region47: #{decoder_block_forward.8} parent=39 // pred_region
        %p3615 = scmp.lt.s32.totalorder %s16, 1
        %s3616 = scalar_select %p3615, %s16, 1
        %s3617 = smul.addr %s3616, 8
        %s3618 = scalar_lea.vmem %s3, %s3617
      $region48: #{decoder_block_forward.8} parent=39 // pred_fallthru
        _
    $region40: #{decoder_block_forward.8} parent=5 // pred_fallthru
      _
  $region6: #{decoder_block_forward.8} parent=0 // loop_footer
    %s14 = sadd.s32 1, %s10
  $region7: #{decoder_block_forward.8} parent=0 // loop_footer_branch
    %9 = sbr.rel target = $region3
  $region8: #{decoder_block_forward.8} parent=0 // loop_exit
    _

</llo_original>
